<compile_context>
chip_gen: v6e
topology: v6e:2x2x1
jax: 0.10.0
libtpu: 0.0.40
codegen_flags: <defaults>
</compile_context>

<pallas_src>
import functools

import jax
import jax.numpy as jnp
import numpy as np
from jax.experimental import pallas as pl
from jax.experimental.pallas import tpu as pltpu

BN_EPS = 1e-5
LRELU_SLOPE = 0.2
KSIZE = 4
STRIDE = 2


# ---------------------------------------------------------------------------
# Fused Pallas kernel
# ---------------------------------------------------------------------------
def _bn_lrelu(y, pk, inv_m):
    """Training-mode BatchNorm (batch stats, biased var) + LeakyReLU(0.2).

    y:  (M, C) f32 conv output, one row per (batch, out_y, out_x).
    pk: (3, C) packed per-channel params: rows = [conv bias, BN gamma, BN beta].
    Single-pass statistics; gamma/rsqrt and beta-mean*scale folded into one
    scale+shift application.
    """
    y = y + pk[0:1, :]                                      # conv bias
    mean = jnp.sum(y, axis=0, keepdims=True) * inv_m        # E[y]
    ex2 = jnp.sum(y * y, axis=0, keepdims=True) * inv_m     # E[y^2]
    var = ex2 - mean * mean                                 # biased variance
    scale = pk[1:2, :] * jax.lax.rsqrt(var + BN_EPS)        # gamma / sqrt(var+eps)
    shift = pk[2:3, :] - mean * scale                       # beta - mean*scale
    y = y * scale + shift
    return jnp.where(y > 0, y, LRELU_SLOPE * y)


def _disc_fused_kernel(p1_ref, base2_ref, w1_ref, pk1_ref, w2_ref, pk2_ref,
                       w3t_ref, b3_ref, o_ref, *, n, s1, s2, c1, c2):
    m1 = n * s1 * s1          # rows of block-1 feature map (N*13*13 = 338)
    m2 = n * s2 * s2          # rows of block-2 feature map (N*5*5  = 50)

    # ---- Block 1: conv1 as im2col matmul + BN + LeakyReLU -------------------
    y1 = jnp.dot(p1_ref[...], w1_ref[...], preferred_element_type=jnp.float32)
    y1 = _bn_lrelu(y1, pk1_ref[...], 1.0 / m1)                       # (m1, c1)

    # ---- Block 2: conv2 + BN + LeakyReLU, activations stay on-chip ----------
    # The stride-2 4x4 im2col gather is performed per filter tap with a one-hot
    # selection matrix built from a lane iota (one small MXU matmul gathers the
    # rows of that tap for the whole batch) -- no strided slicing, no HBM.
    cols = jax.lax.broadcasted_iota(jnp.int32, (m2, m1), 1)
    delta = cols - base2_ref[...]                                    # (m2, m1)
    y2 = jnp.zeros((m2, c2), jnp.float32)
    for kh in range(KSIZE):
        for kw in range(KSIZE):
            t = kh * KSIZE + kw
            sel = jnp.where(delta == (kh * s1 + kw),
                            jnp.float32(1), jnp.float32(0))          # (m2, m1)
            tap = jnp.dot(sel, y1, preferred_element_type=jnp.float32)  # (m2, c1)
            y2 = y2 + jnp.dot(tap, w2_ref[t * c1:(t + 1) * c1, :],
                              preferred_element_type=jnp.float32)
    y2 = _bn_lrelu(y2, pk2_ref[...], 1.0 / m2)                       # (m2, c2)

    # ---- Block 3: final conv (1x1 spatial output) ----------------------------
    # Instead of a 99%-padded (n, 512)@(512, 1) MXU pass, do a VPU elementwise
    # multiply with the spatially zero-padded weight plane and reduce; the tiny
    # per-batch row reduction is a (n, m2) one-hot matmul.
    prod = y2 * w3t_ref[...]                                         # (m2, c2)
    rr = jax.lax.broadcasted_iota(jnp.int32, (n, m2), 0)
    cc = jax.lax.broadcasted_iota(jnp.int32, (n, m2), 1)
    per_b = jnp.where((cc >= rr * (s2 * s2)) & (cc < (rr + 1) * (s2 * s2)),
                      jnp.float32(1), jnp.float32(0))                # (n, m2)
    per_chan = jnp.dot(per_b, prod, preferred_element_type=jnp.float32)  # (n, c2)
    o_ref[...] = jnp.sum(per_chan, axis=1, keepdims=True) + b3_ref[...]  # (n, 1)


# ---------------------------------------------------------------------------
# Wrapper (parameter packing, block-1 patch extraction, pallas_call)
# ---------------------------------------------------------------------------
def _conv2_row_base(n, s_in, s_out, stride):
    """Flattened row index (into the (n*s_in^2, C) block-1 map) of the top-left
    input pixel of every block-2 output position.  Shape (n*s_out^2, 1) int32."""
    r = np.arange(n * s_out * s_out)
    b, p = np.divmod(r, s_out * s_out)
    oi, oj = np.divmod(p, s_out)
    base = b * (s_in * s_in) + stride * oi * s_in + stride * oj
    return jnp.asarray(base[:, None], jnp.int32)


def dcgan_discriminator_forward(image_nchw, params):
    """image_nchw: (N, 1, 28, 28) float32 (PyTorch layout).  Returns (N, 1)."""
    n, cin, h, _ = image_nchw.shape
    assert cin == 1, "patch-feature ordering below assumes im_chan == 1"
    s1 = (h - KSIZE) // STRIDE + 1                       # 13
    s2 = (s1 - KSIZE) // STRIDE + 1                      # 5
    assert (s2 - KSIZE) // STRIDE + 1 == 1               # final conv -> 1x1
    c1 = params["w1"].shape[1]
    c2 = params["w2"].shape[1]
    m1, m2 = n * s1 * s1, n * s2 * s2

    x = image_nchw.astype(jnp.float32)

    # Block-1 im2col as ONE fused XLA patch-extraction op (no Python stack of
    # strided slices).  With cin == 1 the feature order is exactly (kh, kw),
    # matching the (KH, KW, Cin, Cout) flattening of w1.
    pat = jax.lax.conv_general_dilated_patches(
        x, filter_shape=(KSIZE, KSIZE), window_strides=(STRIDE, STRIDE),
        padding="VALID")                                  # (n, 16, s1, s1)
    p1 = jnp.transpose(pat, (0, 2, 3, 1)).reshape(m1, KSIZE * KSIZE * cin)

    base2 = _conv2_row_base(n, s1, s2, STRIDE)            # (m2, 1) int32

    # Pack tiny per-channel params (bias, gamma, beta) into one operand per
    # block; zero-pad conv3's weight onto the full s2 x s2 plane and tile it
    # over the batch so the final layer is a masked elementwise reduce.
    pk1 = jnp.concatenate([params["b1"], params["g1"], params["beta1"]], axis=0)
    pk2 = jnp.concatenate([params["b2"], params["g2"], params["beta2"]], axis=0)
    w3_sp = params["w3"].reshape(KSIZE, KSIZE, c2)
    w3_sp = jnp.pad(w3_sp, ((0, s2 - KSIZE), (0, s2 - KSIZE), (0, 0)))
    w3t = jnp.tile(w3_sp.reshape(s2 * s2, c2), (n, 1))    # (m2, c2)

    kernel = functools.partial(_disc_fused_kernel,
                               n=n, s1=s1, s2=s2, c1=c1, c2=c2)

    flops = 2 * (m1 * KSIZE * KSIZE * cin * c1
                 + KSIZE * KSIZE * (m2 * m1 * c1 + m2 * c1 * c2)
                 + n * m2 * c2)
    bytes_accessed = 4 * (p1.size + base2.size + params["w1"].size + pk1.size
                          + params["w2"].size + pk2.size + w3t.size
                          + params["b3"].size + n)

    # TODO(synk): bf16 MXU inputs (v6e/v7x) would halve matmul DMA bytes; kept
    # f32 here since the network is latency/overhead-bound, not compute-bound.
    out = pl.pallas_call(
        kernel,
        out_shape=jax.ShapeDtypeStruct((n, 1), jnp.float32),
        in_specs=[pl.BlockSpec(memory_space=pltpu.MemorySpace.VMEM)] * 8,
        out_specs=pl.BlockSpec(memory_space=pltpu.MemorySpace.VMEM),
        cost_estimate=pl.CostEstimate(flops=flops, transcendentals=c1 + c2,
                                      bytes_accessed=bytes_accessed),
    )(p1, base2, params["w1"], pk1, params["w2"], pk2, w3t, params["b3"])
    return out


# ---------------------------------------------------------------------------
# Parameter init (matches the module's _initialize_weights: conv AND BN
# weights ~ N(0, 0.02), conv biases / BN betas = 0)
# ---------------------------------------------------------------------------
def init_params(key, im_chan=1, hidden_dim=16):
    ks = jax.random.split(key, 5)

    def conv_w(k, cin, cout):
        # Conv weight in (KH, KW, Cin, Cout), flattened for im2col matmul.
        w = 0.02 * jax.random.normal(k, (KSIZE, KSIZE, cin, cout), jnp.float32)
        return w.reshape(KSIZE * KSIZE * cin, cout)

    return {
        "w1": conv_w(ks[0], im_chan, hidden_dim),
        "b1": jnp.zeros((1, hidden_dim), jnp.float32),
        "g1": 0.02 * jax.random.normal(ks[1], (1, hidden_dim), jnp.float32),
        "beta1": jnp.zeros((1, hidden_dim), jnp.float32),
        "w2": conv_w(ks[2], hidden_dim, hidden_dim * 2),
        "b2": jnp.zeros((1, hidden_dim * 2), jnp.float32),
        "g2": 0.02 * jax.random.normal(ks[3], (1, hidden_dim * 2), jnp.float32),
        "beta2": jnp.zeros((1, hidden_dim * 2), jnp.float32),
        "w3": conv_w(ks[4], hidden_dim * 2, 1),
        "b3": jnp.zeros((1, 1), jnp.float32),
    }


# ---------------------------------------------------------------------------
# Pure-JAX reference (for correctness check)
# ---------------------------------------------------------------------------
def _ref_forward(image_nchw, params, im_chan=1, hidden_dim=16):
    x = jnp.transpose(image_nchw, (0, 2, 3, 1)).astype(jnp.float32)

    def conv(x, w_mat, b, cin, cout):
        w = w_mat.reshape(KSIZE, KSIZE, cin, cout)
        y = jax.lax.conv_general_dilated(
            x, w, (STRIDE, STRIDE), "VALID",
            dimension_numbers=("NHWC", "HWIO", "NHWC"))
        return y + b.reshape(1, 1, 1, cout)

    def bn_lrelu(y, g, beta):
        mean = jnp.mean(y, axis=(0, 1, 2), keepdims=True)
        var = jnp.mean(jnp.square(y - mean), axis=(0, 1, 2), keepdims=True)
        y = (y - mean) * jax.lax.rsqrt(var + BN_EPS)
        y = y * g.reshape(1, 1, 1, -1) + beta.reshape(1, 1, 1, -1)
        return jnp.where(y > 0, y, LRELU_SLOPE * y)

    y = bn_lrelu(conv(x, params["w1"], params["b1"], im_chan, hidden_dim),
                 params["g1"], params["beta1"])
    y = bn_lrelu(conv(y, params["w2"], params["b2"], hidden_dim, hidden_dim * 2),
                 params["g2"], params["beta2"])
    y = conv(y, params["w3"], params["b3"], hidden_dim * 2, 1)
    return y.reshape(y.shape[0], -1)


if __name__ == "__main__":
    key = jax.random.PRNGKey(0)
    pkey, xkey = jax.random.split(key)
    params = init_params(pkey, im_chan=1, hidden_dim=16)

    # Deterministic example input, PyTorch NCHW convention: (N, im_chan, 28, 28).
    image = jax.random.normal(xkey, (2, 1, 28, 28), jnp.float32)

    fwd = jax.jit(dcgan_discriminator_forward)
    out = jax.block_until_ready(fwd(image, params))
    assert out.shape == (2, 1), out.shape

    ref = _ref_forward(image, params)
    assert jnp.allclose(out, ref, atol=1e-4, rtol=1e-4), (out, ref)

    print("KERNEL_OK")
</pallas_src>

<mosaic_0001>
module attributes {stable_mosaic.version = 11 : i64} {
  func.func @_disc_fused_kernel(%arg0: memref<338x16xf32, #tpu.memory_space<vmem>>, %arg1: memref<50x1xi32, #tpu.memory_space<vmem>>, %arg2: memref<16x16xf32, #tpu.memory_space<vmem>>, %arg3: memref<3x16xf32, #tpu.memory_space<vmem>>, %arg4: memref<256x32xf32, #tpu.memory_space<vmem>>, %arg5: memref<3x32xf32, #tpu.memory_space<vmem>>, %arg6: memref<50x32xf32, #tpu.memory_space<vmem>>, %arg7: memref<1x1xf32, #tpu.memory_space<vmem>>, %arg8: memref<2x1xf32, #tpu.memory_space<vmem>>) attributes {dimension_semantics = [], scalar_prefetch = 0 : i64, scratch_operands = 0 : i64, tpu.core_type = #tpu.core_type<tc>} {
    %c0 = arith.constant 0 : index
    %c0_0 = arith.constant 0 : index
    %0 = vector.load %arg0[%c0, %c0_0] : memref<338x16xf32, #tpu.memory_space<vmem>>, vector<338x16xf32>
    %c0_1 = arith.constant 0 : index
    %c0_2 = arith.constant 0 : index
    %1 = vector.load %arg2[%c0_1, %c0_2] : memref<16x16xf32, #tpu.memory_space<vmem>>, vector<16x16xf32>
    %cst = arith.constant dense<0.000000e+00> : vector<338x16xf32>
    %2 = tpu.matmul %0, %1, %cst {dimension_numbers = #tpu.dot_dimension_numbers<[1], [0], [0], [1], [0, 0, 1, 1], [], []>} : vector<338x16xf32>, vector<16x16xf32>, vector<338x16xf32> -> vector<338x16xf32>
    %c0_3 = arith.constant 0 : index
    %c0_4 = arith.constant 0 : index
    %3 = vector.load %arg3[%c0_3, %c0_4] : memref<3x16xf32, #tpu.memory_space<vmem>>, vector<3x16xf32>
    %4 = vector.extract_strided_slice %3 {offsets = [0, 0], sizes = [1, 16], strides = [1, 1]} : vector<3x16xf32> to vector<1x16xf32>
    %5 = vector.broadcast %4 : vector<1x16xf32> to vector<338x16xf32>
    %6 = arith.addf %2, %5 : vector<338x16xf32>
    %cst_5 = arith.constant dense<0.000000e+00> : vector<16xf32>
    %7 = vector.multi_reduction <add>, %6, %cst_5 [0] : vector<338x16xf32> to vector<16xf32>
    %8 = vector.shape_cast %7 : vector<16xf32> to vector<1x16xf32>
    %cst_6 = arith.constant 2.958580e-03 : f32
    %9 = vector.broadcast %cst_6 : f32 to vector<1x16xf32>
    %10 = arith.mulf %8, %9 : vector<1x16xf32>
    %11 = arith.mulf %6, %6 : vector<338x16xf32>
    %cst_7 = arith.constant dense<0.000000e+00> : vector<16xf32>
    %12 = vector.multi_reduction <add>, %11, %cst_7 [0] : vector<338x16xf32> to vector<16xf32>
    %13 = vector.shape_cast %12 : vector<16xf32> to vector<1x16xf32>
    %cst_8 = arith.constant 2.958580e-03 : f32
    %14 = vector.broadcast %cst_8 : f32 to vector<1x16xf32>
    %15 = arith.mulf %13, %14 : vector<1x16xf32>
    %16 = arith.mulf %10, %10 : vector<1x16xf32>
    %17 = arith.subf %15, %16 : vector<1x16xf32>
    %18 = vector.extract_strided_slice %3 {offsets = [1, 0], sizes = [1, 16], strides = [1, 1]} : vector<3x16xf32> to vector<1x16xf32>
    %cst_9 = arith.constant 9.99999974E-6 : f32
    %19 = vector.broadcast %cst_9 : f32 to vector<1x16xf32>
    %20 = arith.addf %17, %19 : vector<1x16xf32>
    %21 = math.rsqrt %20 : vector<1x16xf32>
    %22 = arith.mulf %18, %21 : vector<1x16xf32>
    %23 = vector.extract_strided_slice %3 {offsets = [2, 0], sizes = [1, 16], strides = [1, 1]} : vector<3x16xf32> to vector<1x16xf32>
    %24 = arith.mulf %10, %22 : vector<1x16xf32>
    %25 = arith.subf %23, %24 : vector<1x16xf32>
    %26 = vector.broadcast %22 : vector<1x16xf32> to vector<338x16xf32>
    %27 = arith.mulf %6, %26 : vector<338x16xf32>
    %28 = vector.broadcast %25 : vector<1x16xf32> to vector<338x16xf32>
    %29 = arith.addf %27, %28 : vector<338x16xf32>
    %cst_10 = arith.constant 0.000000e+00 : f32
    %30 = vector.broadcast %cst_10 : f32 to vector<338x16xf32>
    %31 = arith.cmpf ogt, %29, %30 : vector<338x16xf32>
    %cst_11 = arith.constant 2.000000e-01 : f32
    %32 = vector.broadcast %cst_11 : f32 to vector<338x16xf32>
    %33 = arith.mulf %32, %29 : vector<338x16xf32>
    %34 = arith.select %31, %29, %33 : vector<338x16xi1>, vector<338x16xf32>
    %35 = tpu.iota {dimensions = array<i32: 1>} : vector<50x338xi32>
    %c0_12 = arith.constant 0 : index
    %c0_13 = arith.constant 0 : index
    %36 = vector.load %arg1[%c0_12, %c0_13] : memref<50x1xi32, #tpu.memory_space<vmem>>, vector<50x1xi32>
    %37 = vector.broadcast %36 : vector<50x1xi32> to vector<50x338xi32>
    %38 = arith.subi %35, %37 : vector<50x338xi32>
    %cst_14 = arith.constant 0.000000e+00 : f32
    %39 = vector.broadcast %cst_14 : f32 to vector<50x32xf32>
    %c0_i32 = arith.constant 0 : i32
    %40 = vector.broadcast %c0_i32 : i32 to vector<50x338xi32>
    %41 = arith.cmpi eq, %38, %40 : vector<50x338xi32>
    %cst_15 = arith.constant 1.000000e+00 : f32
    %cst_16 = arith.constant 0.000000e+00 : f32
    %42 = vector.broadcast %cst_15 : f32 to vector<50x338xf32>
    %43 = vector.broadcast %cst_16 : f32 to vector<50x338xf32>
    %44 = arith.select %41, %42, %43 : vector<50x338xi1>, vector<50x338xf32>
    %cst_17 = arith.constant dense<0.000000e+00> : vector<50x16xf32>
    %45 = tpu.matmul %44, %34, %cst_17 {dimension_numbers = #tpu.dot_dimension_numbers<[1], [0], [0], [1], [0, 0, 1, 1], [], []>} : vector<50x338xf32>, vector<338x16xf32>, vector<50x16xf32> -> vector<50x16xf32>
    %c0_18 = arith.constant 0 : index
    %c0_19 = arith.constant 0 : index
    %46 = vector.load %arg4[%c0_18, %c0_19] : memref<256x32xf32, #tpu.memory_space<vmem>>, vector<16x32xf32>
    %cst_20 = arith.constant dense<0.000000e+00> : vector<50x32xf32>
    %47 = tpu.matmul %45, %46, %cst_20 {dimension_numbers = #tpu.dot_dimension_numbers<[1], [0], [0], [1], [0, 0, 1, 1], [], []>} : vector<50x16xf32>, vector<16x32xf32>, vector<50x32xf32> -> vector<50x32xf32>
    %48 = arith.addf %39, %47 : vector<50x32xf32>
    %c1_i32 = arith.constant 1 : i32
    %49 = vector.broadcast %c1_i32 : i32 to vector<50x338xi32>
    %50 = arith.cmpi eq, %38, %49 : vector<50x338xi32>
    %cst_21 = arith.constant 1.000000e+00 : f32
    %cst_22 = arith.constant 0.000000e+00 : f32
    %51 = vector.broadcast %cst_21 : f32 to vector<50x338xf32>
    %52 = vector.broadcast %cst_22 : f32 to vector<50x338xf32>
    %53 = arith.select %50, %51, %52 : vector<50x338xi1>, vector<50x338xf32>
    %cst_23 = arith.constant dense<0.000000e+00> : vector<50x16xf32>
    %54 = tpu.matmul %53, %34, %cst_23 {dimension_numbers = #tpu.dot_dimension_numbers<[1], [0], [0], [1], [0, 0, 1, 1], [], []>} : vector<50x338xf32>, vector<338x16xf32>, vector<50x16xf32> -> vector<50x16xf32>
    %c16 = arith.constant 16 : index
    %c0_24 = arith.constant 0 : index
    %55 = vector.load %arg4[%c16, %c0_24] : memref<256x32xf32, #tpu.memory_space<vmem>>, vector<16x32xf32>
    %cst_25 = arith.constant dense<0.000000e+00> : vector<50x32xf32>
    %56 = tpu.matmul %54, %55, %cst_25 {dimension_numbers = #tpu.dot_dimension_numbers<[1], [0], [0], [1], [0, 0, 1, 1], [], []>} : vector<50x16xf32>, vector<16x32xf32>, vector<50x32xf32> -> vector<50x32xf32>
    %57 = arith.addf %48, %56 : vector<50x32xf32>
    %c2_i32 = arith.constant 2 : i32
    %58 = vector.broadcast %c2_i32 : i32 to vector<50x338xi32>
    %59 = arith.cmpi eq, %38, %58 : vector<50x338xi32>
    %cst_26 = arith.constant 1.000000e+00 : f32
    %cst_27 = arith.constant 0.000000e+00 : f32
    %60 = vector.broadcast %cst_26 : f32 to vector<50x338xf32>
    %61 = vector.broadcast %cst_27 : f32 to vector<50x338xf32>
    %62 = arith.select %59, %60, %61 : vector<50x338xi1>, vector<50x338xf32>
    %cst_28 = arith.constant dense<0.000000e+00> : vector<50x16xf32>
    %63 = tpu.matmul %62, %34, %cst_28 {dimension_numbers = #tpu.dot_dimension_numbers<[1], [0], [0], [1], [0, 0, 1, 1], [], []>} : vector<50x338xf32>, vector<338x16xf32>, vector<50x16xf32> -> vector<50x16xf32>
    %c32 = arith.constant 32 : index
    %c0_29 = arith.constant 0 : index
    %64 = vector.load %arg4[%c32, %c0_29] : memref<256x32xf32, #tpu.memory_space<vmem>>, vector<16x32xf32>
    %cst_30 = arith.constant dense<0.000000e+00> : vector<50x32xf32>
    %65 = tpu.matmul %63, %64, %cst_30 {dimension_numbers = #tpu.dot_dimension_numbers<[1], [0], [0], [1], [0, 0, 1, 1], [], []>} : vector<50x16xf32>, vector<16x32xf32>, vector<50x32xf32> -> vector<50x32xf32>
    %66 = arith.addf %57, %65 : vector<50x32xf32>
    %c3_i32 = arith.constant 3 : i32
    %67 = vector.broadcast %c3_i32 : i32 to vector<50x338xi32>
    %68 = arith.cmpi eq, %38, %67 : vector<50x338xi32>
    %cst_31 = arith.constant 1.000000e+00 : f32
    %cst_32 = arith.constant 0.000000e+00 : f32
    %69 = vector.broadcast %cst_31 : f32 to vector<50x338xf32>
    %70 = vector.broadcast %cst_32 : f32 to vector<50x338xf32>
    %71 = arith.select %68, %69, %70 : vector<50x338xi1>, vector<50x338xf32>
    %cst_33 = arith.constant dense<0.000000e+00> : vector<50x16xf32>
    %72 = tpu.matmul %71, %34, %cst_33 {dimension_numbers = #tpu.dot_dimension_numbers<[1], [0], [0], [1], [0, 0, 1, 1], [], []>} : vector<50x338xf32>, vector<338x16xf32>, vector<50x16xf32> -> vector<50x16xf32>
    %c48 = arith.constant 48 : index
    %c0_34 = arith.constant 0 : index
    %73 = vector.load %arg4[%c48, %c0_34] : memref<256x32xf32, #tpu.memory_space<vmem>>, vector<16x32xf32>
    %cst_35 = arith.constant dense<0.000000e+00> : vector<50x32xf32>
    %74 = tpu.matmul %72, %73, %cst_35 {dimension_numbers = #tpu.dot_dimension_numbers<[1], [0], [0], [1], [0, 0, 1, 1], [], []>} : vector<50x16xf32>, vector<16x32xf32>, vector<50x32xf32> -> vector<50x32xf32>
    %75 = arith.addf %66, %74 : vector<50x32xf32>
    %c13_i32 = arith.constant 13 : i32
    %76 = vector.broadcast %c13_i32 : i32 to vector<50x338xi32>
    %77 = arith.cmpi eq, %38, %76 : vector<50x338xi32>
    %cst_36 = arith.constant 1.000000e+00 : f32
    %cst_37 = arith.constant 0.000000e+00 : f32
    %78 = vector.broadcast %cst_36 : f32 to vector<50x338xf32>
    %79 = vector.broadcast %cst_37 : f32 to vector<50x338xf32>
    %80 = arith.select %77, %78, %79 : vector<50x338xi1>, vector<50x338xf32>
    %cst_38 = arith.constant dense<0.000000e+00> : vector<50x16xf32>
    %81 = tpu.matmul %80, %34, %cst_38 {dimension_numbers = #tpu.dot_dimension_numbers<[1], [0], [0], [1], [0, 0, 1, 1], [], []>} : vector<50x338xf32>, vector<338x16xf32>, vector<50x16xf32> -> vector<50x16xf32>
    %c64 = arith.constant 64 : index
    %c0_39 = arith.constant 0 : index
    %82 = vector.load %arg4[%c64, %c0_39] : memref<256x32xf32, #tpu.memory_space<vmem>>, vector<16x32xf32>
    %cst_40 = arith.constant dense<0.000000e+00> : vector<50x32xf32>
    %83 = tpu.matmul %81, %82, %cst_40 {dimension_numbers = #tpu.dot_dimension_numbers<[1], [0], [0], [1], [0, 0, 1, 1], [], []>} : vector<50x16xf32>, vector<16x32xf32>, vector<50x32xf32> -> vector<50x32xf32>
    %84 = arith.addf %75, %83 : vector<50x32xf32>
    %c14_i32 = arith.constant 14 : i32
    %85 = vector.broadcast %c14_i32 : i32 to vector<50x338xi32>
    %86 = arith.cmpi eq, %38, %85 : vector<50x338xi32>
    %cst_41 = arith.constant 1.000000e+00 : f32
    %cst_42 = arith.constant 0.000000e+00 : f32
    %87 = vector.broadcast %cst_41 : f32 to vector<50x338xf32>
    %88 = vector.broadcast %cst_42 : f32 to vector<50x338xf32>
    %89 = arith.select %86, %87, %88 : vector<50x338xi1>, vector<50x338xf32>
    %cst_43 = arith.constant dense<0.000000e+00> : vector<50x16xf32>
    %90 = tpu.matmul %89, %34, %cst_43 {dimension_numbers = #tpu.dot_dimension_numbers<[1], [0], [0], [1], [0, 0, 1, 1], [], []>} : vector<50x338xf32>, vector<338x16xf32>, vector<50x16xf32> -> vector<50x16xf32>
    %c80 = arith.constant 80 : index
    %c0_44 = arith.constant 0 : index
    %91 = vector.load %arg4[%c80, %c0_44] : memref<256x32xf32, #tpu.memory_space<vmem>>, vector<16x32xf32>
    %cst_45 = arith.constant dense<0.000000e+00> : vector<50x32xf32>
    %92 = tpu.matmul %90, %91, %cst_45 {dimension_numbers = #tpu.dot_dimension_numbers<[1], [0], [0], [1], [0, 0, 1, 1], [], []>} : vector<50x16xf32>, vector<16x32xf32>, vector<50x32xf32> -> vector<50x32xf32>
    %93 = arith.addf %84, %92 : vector<50x32xf32>
    %c15_i32 = arith.constant 15 : i32
    %94 = vector.broadcast %c15_i32 : i32 to vector<50x338xi32>
    %95 = arith.cmpi eq, %38, %94 : vector<50x338xi32>
    %cst_46 = arith.constant 1.000000e+00 : f32
    %cst_47 = arith.constant 0.000000e+00 : f32
    %96 = vector.broadcast %cst_46 : f32 to vector<50x338xf32>
    %97 = vector.broadcast %cst_47 : f32 to vector<50x338xf32>
    %98 = arith.select %95, %96, %97 : vector<50x338xi1>, vector<50x338xf32>
    %cst_48 = arith.constant dense<0.000000e+00> : vector<50x16xf32>
    %99 = tpu.matmul %98, %34, %cst_48 {dimension_numbers = #tpu.dot_dimension_numbers<[1], [0], [0], [1], [0, 0, 1, 1], [], []>} : vector<50x338xf32>, vector<338x16xf32>, vector<50x16xf32> -> vector<50x16xf32>
    %c96 = arith.constant 96 : index
    %c0_49 = arith.constant 0 : index
    %100 = vector.load %arg4[%c96, %c0_49] : memref<256x32xf32, #tpu.memory_space<vmem>>, vector<16x32xf32>
    %cst_50 = arith.constant dense<0.000000e+00> : vector<50x32xf32>
    %101 = tpu.matmul %99, %100, %cst_50 {dimension_numbers = #tpu.dot_dimension_numbers<[1], [0], [0], [1], [0, 0, 1, 1], [], []>} : vector<50x16xf32>, vector<16x32xf32>, vector<50x32xf32> -> vector<50x32xf32>
    %102 = arith.addf %93, %101 : vector<50x32xf32>
    %c16_i32 = arith.constant 16 : i32
    %103 = vector.broadcast %c16_i32 : i32 to vector<50x338xi32>
    %104 = arith.cmpi eq, %38, %103 : vector<50x338xi32>
    %cst_51 = arith.constant 1.000000e+00 : f32
    %cst_52 = arith.constant 0.000000e+00 : f32
    %105 = vector.broadcast %cst_51 : f32 to vector<50x338xf32>
    %106 = vector.broadcast %cst_52 : f32 to vector<50x338xf32>
    %107 = arith.select %104, %105, %106 : vector<50x338xi1>, vector<50x338xf32>
    %cst_53 = arith.constant dense<0.000000e+00> : vector<50x16xf32>
    %108 = tpu.matmul %107, %34, %cst_53 {dimension_numbers = #tpu.dot_dimension_numbers<[1], [0], [0], [1], [0, 0, 1, 1], [], []>} : vector<50x338xf32>, vector<338x16xf32>, vector<50x16xf32> -> vector<50x16xf32>
    %c112 = arith.constant 112 : index
    %c0_54 = arith.constant 0 : index
    %109 = vector.load %arg4[%c112, %c0_54] : memref<256x32xf32, #tpu.memory_space<vmem>>, vector<16x32xf32>
    %cst_55 = arith.constant dense<0.000000e+00> : vector<50x32xf32>
    %110 = tpu.matmul %108, %109, %cst_55 {dimension_numbers = #tpu.dot_dimension_numbers<[1], [0], [0], [1], [0, 0, 1, 1], [], []>} : vector<50x16xf32>, vector<16x32xf32>, vector<50x32xf32> -> vector<50x32xf32>
    %111 = arith.addf %102, %110 : vector<50x32xf32>
    %c26_i32 = arith.constant 26 : i32
    %112 = vector.broadcast %c26_i32 : i32 to vector<50x338xi32>
    %113 = arith.cmpi eq, %38, %112 : vector<50x338xi32>
    %cst_56 = arith.constant 1.000000e+00 : f32
    %cst_57 = arith.constant 0.000000e+00 : f32
    %114 = vector.broadcast %cst_56 : f32 to vector<50x338xf32>
    %115 = vector.broadcast %cst_57 : f32 to vector<50x338xf32>
    %116 = arith.select %113, %114, %115 : vector<50x338xi1>, vector<50x338xf32>
    %cst_58 = arith.constant dense<0.000000e+00> : vector<50x16xf32>
    %117 = tpu.matmul %116, %34, %cst_58 {dimension_numbers = #tpu.dot_dimension_numbers<[1], [0], [0], [1], [0, 0, 1, 1], [], []>} : vector<50x338xf32>, vector<338x16xf32>, vector<50x16xf32> -> vector<50x16xf32>
    %c128 = arith.constant 128 : index
    %c0_59 = arith.constant 0 : index
    %118 = vector.load %arg4[%c128, %c0_59] : memref<256x32xf32, #tpu.memory_space<vmem>>, vector<16x32xf32>
    %cst_60 = arith.constant dense<0.000000e+00> : vector<50x32xf32>
    %119 = tpu.matmul %117, %118, %cst_60 {dimension_numbers = #tpu.dot_dimension_numbers<[1], [0], [0], [1], [0, 0, 1, 1], [], []>} : vector<50x16xf32>, vector<16x32xf32>, vector<50x32xf32> -> vector<50x32xf32>
    %120 = arith.addf %111, %119 : vector<50x32xf32>
    %c27_i32 = arith.constant 27 : i32
    %121 = vector.broadcast %c27_i32 : i32 to vector<50x338xi32>
    %122 = arith.cmpi eq, %38, %121 : vector<50x338xi32>
    %cst_61 = arith.constant 1.000000e+00 : f32
    %cst_62 = arith.constant 0.000000e+00 : f32
    %123 = vector.broadcast %cst_61 : f32 to vector<50x338xf32>
    %124 = vector.broadcast %cst_62 : f32 to vector<50x338xf32>
    %125 = arith.select %122, %123, %124 : vector<50x338xi1>, vector<50x338xf32>
    %cst_63 = arith.constant dense<0.000000e+00> : vector<50x16xf32>
    %126 = tpu.matmul %125, %34, %cst_63 {dimension_numbers = #tpu.dot_dimension_numbers<[1], [0], [0], [1], [0, 0, 1, 1], [], []>} : vector<50x338xf32>, vector<338x16xf32>, vector<50x16xf32> -> vector<50x16xf32>
    %c144 = arith.constant 144 : index
    %c0_64 = arith.constant 0 : index
    %127 = vector.load %arg4[%c144, %c0_64] : memref<256x32xf32, #tpu.memory_space<vmem>>, vector<16x32xf32>
    %cst_65 = arith.constant dense<0.000000e+00> : vector<50x32xf32>
    %128 = tpu.matmul %126, %127, %cst_65 {dimension_numbers = #tpu.dot_dimension_numbers<[1], [0], [0], [1], [0, 0, 1, 1], [], []>} : vector<50x16xf32>, vector<16x32xf32>, vector<50x32xf32> -> vector<50x32xf32>
    %129 = arith.addf %120, %128 : vector<50x32xf32>
    %c28_i32 = arith.constant 28 : i32
    %130 = vector.broadcast %c28_i32 : i32 to vector<50x338xi32>
    %131 = arith.cmpi eq, %38, %130 : vector<50x338xi32>
    %cst_66 = arith.constant 1.000000e+00 : f32
    %cst_67 = arith.constant 0.000000e+00 : f32
    %132 = vector.broadcast %cst_66 : f32 to vector<50x338xf32>
    %133 = vector.broadcast %cst_67 : f32 to vector<50x338xf32>
    %134 = arith.select %131, %132, %133 : vector<50x338xi1>, vector<50x338xf32>
    %cst_68 = arith.constant dense<0.000000e+00> : vector<50x16xf32>
    %135 = tpu.matmul %134, %34, %cst_68 {dimension_numbers = #tpu.dot_dimension_numbers<[1], [0], [0], [1], [0, 0, 1, 1], [], []>} : vector<50x338xf32>, vector<338x16xf32>, vector<50x16xf32> -> vector<50x16xf32>
    %c160 = arith.constant 160 : index
    %c0_69 = arith.constant 0 : index
    %136 = vector.load %arg4[%c160, %c0_69] : memref<256x32xf32, #tpu.memory_space<vmem>>, vector<16x32xf32>
    %cst_70 = arith.constant dense<0.000000e+00> : vector<50x32xf32>
    %137 = tpu.matmul %135, %136, %cst_70 {dimension_numbers = #tpu.dot_dimension_numbers<[1], [0], [0], [1], [0, 0, 1, 1], [], []>} : vector<50x16xf32>, vector<16x32xf32>, vector<50x32xf32> -> vector<50x32xf32>
    %138 = arith.addf %129, %137 : vector<50x32xf32>
    %c29_i32 = arith.constant 29 : i32
    %139 = vector.broadcast %c29_i32 : i32 to vector<50x338xi32>
    %140 = arith.cmpi eq, %38, %139 : vector<50x338xi32>
    %cst_71 = arith.constant 1.000000e+00 : f32
    %cst_72 = arith.constant 0.000000e+00 : f32
    %141 = vector.broadcast %cst_71 : f32 to vector<50x338xf32>
    %142 = vector.broadcast %cst_72 : f32 to vector<50x338xf32>
    %143 = arith.select %140, %141, %142 : vector<50x338xi1>, vector<50x338xf32>
    %cst_73 = arith.constant dense<0.000000e+00> : vector<50x16xf32>
    %144 = tpu.matmul %143, %34, %cst_73 {dimension_numbers = #tpu.dot_dimension_numbers<[1], [0], [0], [1], [0, 0, 1, 1], [], []>} : vector<50x338xf32>, vector<338x16xf32>, vector<50x16xf32> -> vector<50x16xf32>
    %c176 = arith.constant 176 : index
    %c0_74 = arith.constant 0 : index
    %145 = vector.load %arg4[%c176, %c0_74] : memref<256x32xf32, #tpu.memory_space<vmem>>, vector<16x32xf32>
    %cst_75 = arith.constant dense<0.000000e+00> : vector<50x32xf32>
    %146 = tpu.matmul %144, %145, %cst_75 {dimension_numbers = #tpu.dot_dimension_numbers<[1], [0], [0], [1], [0, 0, 1, 1], [], []>} : vector<50x16xf32>, vector<16x32xf32>, vector<50x32xf32> -> vector<50x32xf32>
    %147 = arith.addf %138, %146 : vector<50x32xf32>
    %c39_i32 = arith.constant 39 : i32
    %148 = vector.broadcast %c39_i32 : i32 to vector<50x338xi32>
    %149 = arith.cmpi eq, %38, %148 : vector<50x338xi32>
    %cst_76 = arith.constant 1.000000e+00 : f32
    %cst_77 = arith.constant 0.000000e+00 : f32
    %150 = vector.broadcast %cst_76 : f32 to vector<50x338xf32>
    %151 = vector.broadcast %cst_77 : f32 to vector<50x338xf32>
    %152 = arith.select %149, %150, %151 : vector<50x338xi1>, vector<50x338xf32>
    %cst_78 = arith.constant dense<0.000000e+00> : vector<50x16xf32>
    %153 = tpu.matmul %152, %34, %cst_78 {dimension_numbers = #tpu.dot_dimension_numbers<[1], [0], [0], [1], [0, 0, 1, 1], [], []>} : vector<50x338xf32>, vector<338x16xf32>, vector<50x16xf32> -> vector<50x16xf32>
    %c192 = arith.constant 192 : index
    %c0_79 = arith.constant 0 : index
    %154 = vector.load %arg4[%c192, %c0_79] : memref<256x32xf32, #tpu.memory_space<vmem>>, vector<16x32xf32>
    %cst_80 = arith.constant dense<0.000000e+00> : vector<50x32xf32>
    %155 = tpu.matmul %153, %154, %cst_80 {dimension_numbers = #tpu.dot_dimension_numbers<[1], [0], [0], [1], [0, 0, 1, 1], [], []>} : vector<50x16xf32>, vector<16x32xf32>, vector<50x32xf32> -> vector<50x32xf32>
    %156 = arith.addf %147, %155 : vector<50x32xf32>
    %c40_i32 = arith.constant 40 : i32
    %157 = vector.broadcast %c40_i32 : i32 to vector<50x338xi32>
    %158 = arith.cmpi eq, %38, %157 : vector<50x338xi32>
    %cst_81 = arith.constant 1.000000e+00 : f32
    %cst_82 = arith.constant 0.000000e+00 : f32
    %159 = vector.broadcast %cst_81 : f32 to vector<50x338xf32>
    %160 = vector.broadcast %cst_82 : f32 to vector<50x338xf32>
    %161 = arith.select %158, %159, %160 : vector<50x338xi1>, vector<50x338xf32>
    %cst_83 = arith.constant dense<0.000000e+00> : vector<50x16xf32>
    %162 = tpu.matmul %161, %34, %cst_83 {dimension_numbers = #tpu.dot_dimension_numbers<[1], [0], [0], [1], [0, 0, 1, 1], [], []>} : vector<50x338xf32>, vector<338x16xf32>, vector<50x16xf32> -> vector<50x16xf32>
    %c208 = arith.constant 208 : index
    %c0_84 = arith.constant 0 : index
    %163 = vector.load %arg4[%c208, %c0_84] : memref<256x32xf32, #tpu.memory_space<vmem>>, vector<16x32xf32>
    %cst_85 = arith.constant dense<0.000000e+00> : vector<50x32xf32>
    %164 = tpu.matmul %162, %163, %cst_85 {dimension_numbers = #tpu.dot_dimension_numbers<[1], [0], [0], [1], [0, 0, 1, 1], [], []>} : vector<50x16xf32>, vector<16x32xf32>, vector<50x32xf32> -> vector<50x32xf32>
    %165 = arith.addf %156, %164 : vector<50x32xf32>
    %c41_i32 = arith.constant 41 : i32
    %166 = vector.broadcast %c41_i32 : i32 to vector<50x338xi32>
    %167 = arith.cmpi eq, %38, %166 : vector<50x338xi32>
    %cst_86 = arith.constant 1.000000e+00 : f32
    %cst_87 = arith.constant 0.000000e+00 : f32
    %168 = vector.broadcast %cst_86 : f32 to vector<50x338xf32>
    %169 = vector.broadcast %cst_87 : f32 to vector<50x338xf32>
    %170 = arith.select %167, %168, %169 : vector<50x338xi1>, vector<50x338xf32>
    %cst_88 = arith.constant dense<0.000000e+00> : vector<50x16xf32>
    %171 = tpu.matmul %170, %34, %cst_88 {dimension_numbers = #tpu.dot_dimension_numbers<[1], [0], [0], [1], [0, 0, 1, 1], [], []>} : vector<50x338xf32>, vector<338x16xf32>, vector<50x16xf32> -> vector<50x16xf32>
    %c224 = arith.constant 224 : index
    %c0_89 = arith.constant 0 : index
    %172 = vector.load %arg4[%c224, %c0_89] : memref<256x32xf32, #tpu.memory_space<vmem>>, vector<16x32xf32>
    %cst_90 = arith.constant dense<0.000000e+00> : vector<50x32xf32>
    %173 = tpu.matmul %171, %172, %cst_90 {dimension_numbers = #tpu.dot_dimension_numbers<[1], [0], [0], [1], [0, 0, 1, 1], [], []>} : vector<50x16xf32>, vector<16x32xf32>, vector<50x32xf32> -> vector<50x32xf32>
    %174 = arith.addf %165, %173 : vector<50x32xf32>
    %c42_i32 = arith.constant 42 : i32
    %175 = vector.broadcast %c42_i32 : i32 to vector<50x338xi32>
    %176 = arith.cmpi eq, %38, %175 : vector<50x338xi32>
    %cst_91 = arith.constant 1.000000e+00 : f32
    %cst_92 = arith.constant 0.000000e+00 : f32
    %177 = vector.broadcast %cst_91 : f32 to vector<50x338xf32>
    %178 = vector.broadcast %cst_92 : f32 to vector<50x338xf32>
    %179 = arith.select %176, %177, %178 : vector<50x338xi1>, vector<50x338xf32>
    %cst_93 = arith.constant dense<0.000000e+00> : vector<50x16xf32>
    %180 = tpu.matmul %179, %34, %cst_93 {dimension_numbers = #tpu.dot_dimension_numbers<[1], [0], [0], [1], [0, 0, 1, 1], [], []>} : vector<50x338xf32>, vector<338x16xf32>, vector<50x16xf32> -> vector<50x16xf32>
    %c240 = arith.constant 240 : index
    %c0_94 = arith.constant 0 : index
    %181 = vector.load %arg4[%c240, %c0_94] : memref<256x32xf32, #tpu.memory_space<vmem>>, vector<16x32xf32>
    %cst_95 = arith.constant dense<0.000000e+00> : vector<50x32xf32>
    %182 = tpu.matmul %180, %181, %cst_95 {dimension_numbers = #tpu.dot_dimension_numbers<[1], [0], [0], [1], [0, 0, 1, 1], [], []>} : vector<50x16xf32>, vector<16x32xf32>, vector<50x32xf32> -> vector<50x32xf32>
    %183 = arith.addf %174, %182 : vector<50x32xf32>
    %c0_96 = arith.constant 0 : index
    %c0_97 = arith.constant 0 : index
    %184 = vector.load %arg5[%c0_96, %c0_97] : memref<3x32xf32, #tpu.memory_space<vmem>>, vector<3x32xf32>
    %185 = vector.extract_strided_slice %184 {offsets = [0, 0], sizes = [1, 32], strides = [1, 1]} : vector<3x32xf32> to vector<1x32xf32>
    %186 = vector.broadcast %185 : vector<1x32xf32> to vector<50x32xf32>
    %187 = arith.addf %183, %186 : vector<50x32xf32>
    %cst_98 = arith.constant dense<0.000000e+00> : vector<32xf32>
    %188 = vector.multi_reduction <add>, %187, %cst_98 [0] : vector<50x32xf32> to vector<32xf32>
    %189 = vector.shape_cast %188 : vector<32xf32> to vector<1x32xf32>
    %cst_99 = arith.constant 2.000000e-02 : f32
    %190 = vector.broadcast %cst_99 : f32 to vector<1x32xf32>
    %191 = arith.mulf %189, %190 : vector<1x32xf32>
    %192 = arith.mulf %187, %187 : vector<50x32xf32>
    %cst_100 = arith.constant dense<0.000000e+00> : vector<32xf32>
    %193 = vector.multi_reduction <add>, %192, %cst_100 [0] : vector<50x32xf32> to vector<32xf32>
    %194 = vector.shape_cast %193 : vector<32xf32> to vector<1x32xf32>
    %cst_101 = arith.constant 2.000000e-02 : f32
    %195 = vector.broadcast %cst_101 : f32 to vector<1x32xf32>
    %196 = arith.mulf %194, %195 : vector<1x32xf32>
    %197 = arith.mulf %191, %191 : vector<1x32xf32>
    %198 = arith.subf %196, %197 : vector<1x32xf32>
    %199 = vector.extract_strided_slice %184 {offsets = [1, 0], sizes = [1, 32], strides = [1, 1]} : vector<3x32xf32> to vector<1x32xf32>
    %cst_102 = arith.constant 9.99999974E-6 : f32
    %200 = vector.broadcast %cst_102 : f32 to vector<1x32xf32>
    %201 = arith.addf %198, %200 : vector<1x32xf32>
    %202 = math.rsqrt %201 : vector<1x32xf32>
    %203 = arith.mulf %199, %202 : vector<1x32xf32>
    %204 = vector.extract_strided_slice %184 {offsets = [2, 0], sizes = [1, 32], strides = [1, 1]} : vector<3x32xf32> to vector<1x32xf32>
    %205 = arith.mulf %191, %203 : vector<1x32xf32>
    %206 = arith.subf %204, %205 : vector<1x32xf32>
    %207 = vector.broadcast %203 : vector<1x32xf32> to vector<50x32xf32>
    %208 = arith.mulf %187, %207 : vector<50x32xf32>
    %209 = vector.broadcast %206 : vector<1x32xf32> to vector<50x32xf32>
    %210 = arith.addf %208, %209 : vector<50x32xf32>
    %cst_103 = arith.constant 0.000000e+00 : f32
    %211 = vector.broadcast %cst_103 : f32 to vector<50x32xf32>
    %212 = arith.cmpf ogt, %210, %211 : vector<50x32xf32>
    %cst_104 = arith.constant 2.000000e-01 : f32
    %213 = vector.broadcast %cst_104 : f32 to vector<50x32xf32>
    %214 = arith.mulf %213, %210 : vector<50x32xf32>
    %215 = arith.select %212, %210, %214 : vector<50x32xi1>, vector<50x32xf32>
    %c0_105 = arith.constant 0 : index
    %c0_106 = arith.constant 0 : index
    %216 = vector.load %arg6[%c0_105, %c0_106] : memref<50x32xf32, #tpu.memory_space<vmem>>, vector<50x32xf32>
    %217 = arith.mulf %215, %216 : vector<50x32xf32>
    %218 = tpu.iota {dimensions = array<i32: 0>} : vector<2x50xi32>
    %219 = tpu.iota {dimensions = array<i32: 1>} : vector<2x50xi32>
    %c25_i32 = arith.constant 25 : i32
    %220 = vector.broadcast %c25_i32 : i32 to vector<2x50xi32>
    %221 = arith.muli %218, %220 : vector<2x50xi32>
    %222 = arith.cmpi sge, %219, %221 : vector<2x50xi32>
    %c1_i32_107 = arith.constant 1 : i32
    %223 = vector.broadcast %c1_i32_107 : i32 to vector<2x50xi32>
    %224 = arith.addi %218, %223 : vector<2x50xi32>
    %c25_i32_108 = arith.constant 25 : i32
    %225 = vector.broadcast %c25_i32_108 : i32 to vector<2x50xi32>
    %226 = arith.muli %224, %225 : vector<2x50xi32>
    %227 = arith.cmpi slt, %219, %226 : vector<2x50xi32>
    %228 = arith.andi %222, %227 : vector<2x50xi1>
    %cst_109 = arith.constant 1.000000e+00 : f32
    %cst_110 = arith.constant 0.000000e+00 : f32
    %229 = vector.broadcast %cst_109 : f32 to vector<2x50xf32>
    %230 = vector.broadcast %cst_110 : f32 to vector<2x50xf32>
    %231 = arith.select %228, %229, %230 : vector<2x50xi1>, vector<2x50xf32>
    %cst_111 = arith.constant dense<0.000000e+00> : vector<2x32xf32>
    %232 = tpu.matmul %231, %217, %cst_111 {dimension_numbers = #tpu.dot_dimension_numbers<[1], [0], [0], [1], [0, 0, 1, 1], [], []>} : vector<2x50xf32>, vector<50x32xf32>, vector<2x32xf32> -> vector<2x32xf32>
    %cst_112 = arith.constant dense<0.000000e+00> : vector<2xf32>
    %233 = vector.multi_reduction <add>, %232, %cst_112 [1] : vector<2x32xf32> to vector<2xf32>
    %234 = vector.shape_cast %233 : vector<2xf32> to vector<2x1xf32>
    %c0_113 = arith.constant 0 : index
    %c0_114 = arith.constant 0 : index
    %235 = vector.load %arg7[%c0_113, %c0_114] : memref<1x1xf32, #tpu.memory_space<vmem>>, vector<1x1xf32>
    %236 = vector.broadcast %235 : vector<1x1xf32> to vector<2x1xf32>
    %237 = arith.addf %234, %236 : vector<2x1xf32>
    %c0_115 = arith.constant 0 : index
    %c0_116 = arith.constant 0 : index
    %238 = vector.load %arg8[%c0_115, %c0_116] : memref<2x1xf32, #tpu.memory_space<vmem>>, vector<2x1xf32>
    tpu.vector_store %arg8[%c0_115, %c0_116], %237 {strides = array<i32>} : memref<2x1xf32, #tpu.memory_space<vmem>>, vector<2x1xf32>,
    return
  }
}

</mosaic_0001>

<llo_original>
// kernel: tile.7
$region0: #{tile.7}
  %s0 = inlined_call_operand.vmem [shape: f32[2,25,32], index: 0, kind: input, shape index: {}]
  %s1 = inlined_call_operand.vmem [shape: f32[50,32], index: 1, kind: output, shape index: {}]
  $region1: #{tile.7} parent=0
    #allocation0 [shape = 'u8[131072]{0}', space=vmem, size = 0x20000, scoped, tag = 'scoped mem for input reshape']
    %s3 = sshll.u32 1, 2
    %s4 = ssub.s32 %s3, 1
    %s5 = smul.addr 2, 31
    %s6 = scalar_lea.vmem %s0, %s5
    %v7 = vld [vmem:[%s6] sm:%s4]
    %s8 = scalar_lea.vmem [#allocation0], 248
    %9 = vst [vmem:[%s8] sm:%s4] %v7
    %s10 = smul.addr 2, 30
    %s11 = scalar_lea.vmem %s0, %s10
    %v12 = vld [vmem:[%s11] sm:%s4]
    %s13 = scalar_lea.vmem [#allocation0], 240
    %14 = vst [vmem:[%s13] sm:%s4] %v12
    %s15 = smul.addr 2, 29
    %s16 = scalar_lea.vmem %s0, %s15
    %v17 = vld [vmem:[%s16] sm:%s4]
    %s18 = scalar_lea.vmem [#allocation0], 232
    %19 = vst [vmem:[%s18] sm:%s4] %v17
    %s20 = smul.addr 2, 28
    %s21 = scalar_lea.vmem %s0, %s20
    %v22 = vld [vmem:[%s21] sm:%s4]
    %s23 = scalar_lea.vmem [#allocation0], 224
    %24 = vst [vmem:[%s23] sm:%s4] %v22
    %s25 = smul.addr 2, 27
    %s26 = scalar_lea.vmem %s0, %s25
    %v27 = vld [vmem:[%s26] sm:%s4]
    %s28 = scalar_lea.vmem [#allocation0], 216
    %29 = vst [vmem:[%s28] sm:%s4] %v27
    %s30 = smul.addr 2, 26
    %s31 = scalar_lea.vmem %s0, %s30
    %v32 = vld [vmem:[%s31] sm:%s4]
    %s33 = scalar_lea.vmem [#allocation0], 208
    %34 = vst [vmem:[%s33] sm:%s4] %v32
    %s35 = smul.addr 2, 25
    %s36 = scalar_lea.vmem %s0, %s35
    %v37 = vld [vmem:[%s36] sm:%s4]
    %s38 = scalar_lea.vmem [#allocation0], 200
    %39 = vst [vmem:[%s38] sm:%s4] %v37
    %s40 = smul.addr 2, 24
    %s41 = scalar_lea.vmem %s0, %s40
    %v42 = vld [vmem:[%s41] sm:%s4]
    %s43 = scalar_lea.vmem [#allocation0], 192
    %44 = vst [vmem:[%s43] sm:%s4] %v42
    %s45 = smul.addr 2, 23
    %s46 = scalar_lea.vmem %s0, %s45
    %v47 = vld [vmem:[%s46] sm:%s4]
    %s48 = scalar_lea.vmem [#allocation0], 184
    %49 = vst [vmem:[%s48] sm:%s4] %v47
    %s50 = smul.addr 2, 22
    %s51 = scalar_lea.vmem %s0, %s50
    %v52 = vld [vmem:[%s51] sm:%s4]
    %s53 = scalar_lea.vmem [#allocation0], 176
    %54 = vst [vmem:[%s53] sm:%s4] %v52
    %s55 = smul.addr 2, 21
    %s56 = scalar_lea.vmem %s0, %s55
    %v57 = vld [vmem:[%s56] sm:%s4]
    %s58 = scalar_lea.vmem [#allocation0], 168
    %59 = vst [vmem:[%s58] sm:%s4] %v57
    %s60 = smul.addr 2, 20
    %s61 = scalar_lea.vmem %s0, %s60
    %v62 = vld [vmem:[%s61] sm:%s4]
    %s63 = scalar_lea.vmem [#allocation0], 160
    %64 = vst [vmem:[%s63] sm:%s4] %v62
    %s65 = smul.addr 2, 19
    %s66 = scalar_lea.vmem %s0, %s65
    %v67 = vld [vmem:[%s66] sm:%s4]
    %s68 = scalar_lea.vmem [#allocation0], 152
    %69 = vst [vmem:[%s68] sm:%s4] %v67
    %s70 = smul.addr 2, 18
    %s71 = scalar_lea.vmem %s0, %s70
    %v72 = vld [vmem:[%s71] sm:%s4]
    %s73 = scalar_lea.vmem [#allocation0], 144
    %74 = vst [vmem:[%s73] sm:%s4] %v72
    %s75 = smul.addr 2, 17
    %s76 = scalar_lea.vmem %s0, %s75
    %v77 = vld [vmem:[%s76] sm:%s4]
    %s78 = scalar_lea.vmem [#allocation0], 136
    %79 = vst [vmem:[%s78] sm:%s4] %v77
    %s80 = smul.addr 2, 16
    %s81 = scalar_lea.vmem %s0, %s80
    %v82 = vld [vmem:[%s81] sm:%s4]
    %s83 = scalar_lea.vmem [#allocation0], 128
    %84 = vst [vmem:[%s83] sm:%s4] %v82
    %s85 = smul.addr 2, 15
    %s86 = scalar_lea.vmem %s0, %s85
    %v87 = vld [vmem:[%s86] sm:%s4]
    %s88 = scalar_lea.vmem [#allocation0], 120
    %89 = vst [vmem:[%s88] sm:%s4] %v87
    %s90 = smul.addr 2, 14
    %s91 = scalar_lea.vmem %s0, %s90
    %v92 = vld [vmem:[%s91] sm:%s4]
    %s93 = scalar_lea.vmem [#allocation0], 112
    %94 = vst [vmem:[%s93] sm:%s4] %v92
    %s95 = smul.addr 2, 13
    %s96 = scalar_lea.vmem %s0, %s95
    %v97 = vld [vmem:[%s96] sm:%s4]
    %s98 = scalar_lea.vmem [#allocation0], 104
    %99 = vst [vmem:[%s98] sm:%s4] %v97
    %s100 = smul.addr 2, 12
    %s101 = scalar_lea.vmem %s0, %s100
    %v102 = vld [vmem:[%s101] sm:%s4]
    %s103 = scalar_lea.vmem [#allocation0], 96
    %104 = vst [vmem:[%s103] sm:%s4] %v102
    %s105 = smul.addr 2, 11
    %s106 = scalar_lea.vmem %s0, %s105
    %v107 = vld [vmem:[%s106] sm:%s4]
    %s108 = scalar_lea.vmem [#allocation0], 88
    %109 = vst [vmem:[%s108] sm:%s4] %v107
    %s110 = smul.addr 2, 10
    %s111 = scalar_lea.vmem %s0, %s110
    %v112 = vld [vmem:[%s111] sm:%s4]
    %s113 = scalar_lea.vmem [#allocation0], 80
    %114 = vst [vmem:[%s113] sm:%s4] %v112
    %s115 = smul.addr 2, 9
    %s116 = scalar_lea.vmem %s0, %s115
    %v117 = vld [vmem:[%s116] sm:%s4]
    %s118 = scalar_lea.vmem [#allocation0], 72
    %119 = vst [vmem:[%s118] sm:%s4] %v117
    %s120 = smul.addr 2, 8
    %s121 = scalar_lea.vmem %s0, %s120
    %v122 = vld [vmem:[%s121] sm:%s4]
    %s123 = scalar_lea.vmem [#allocation0], 64
    %124 = vst [vmem:[%s123] sm:%s4] %v122
    %s125 = smul.addr 2, 7
    %s126 = scalar_lea.vmem %s0, %s125
    %v127 = vld [vmem:[%s126] sm:%s4]
    %s128 = scalar_lea.vmem [#allocation0], 56
    %129 = vst [vmem:[%s128] sm:%s4] %v127
    %s130 = smul.addr 2, 6
    %s131 = scalar_lea.vmem %s0, %s130
    %v132 = vld [vmem:[%s131] sm:%s4]
    %s133 = scalar_lea.vmem [#allocation0], 48
    %134 = vst [vmem:[%s133] sm:%s4] %v132
    %s135 = smul.addr 2, 5
    %s136 = scalar_lea.vmem %s0, %s135
    %v137 = vld [vmem:[%s136] sm:%s4]
    %s138 = scalar_lea.vmem [#allocation0], 40
    %139 = vst [vmem:[%s138] sm:%s4] %v137
    %s140 = smul.addr 2, 4
    %s141 = scalar_lea.vmem %s0, %s140
    %v142 = vld [vmem:[%s141] sm:%s4]
    %s143 = scalar_lea.vmem [#allocation0], 32
    %144 = vst [vmem:[%s143] sm:%s4] %v142
    %s145 = smul.addr 2, 3
    %s146 = scalar_lea.vmem %s0, %s145
    %v147 = vld [vmem:[%s146] sm:%s4]
    %s148 = scalar_lea.vmem [#allocation0], 24
    %149 = vst [vmem:[%s148] sm:%s4] %v147
    %s150 = smul.addr 2, 2
    %s151 = scalar_lea.vmem %s0, %s150
    %v152 = vld [vmem:[%s151] sm:%s4]
    %s153 = scalar_lea.vmem [#allocation0], 16
    %154 = vst [vmem:[%s153] sm:%s4] %v152
    %s155 = scalar_lea.vmem %s0, 2
    %v156 = vld [vmem:[%s155] sm:%s4]
    %s157 = scalar_lea.vmem [#allocation0], 8
    %158 = vst [vmem:[%s157] sm:%s4] %v156
    %v159 = vld [vmem:[%s0] sm:%s4]
    %160 = vst [vmem:[#allocation0] sm:%s4] %v159
    %v161 = vld [vmem:[#allocation0] ss:$8 sm:$0xf]
    %v162 = vld [vmem:[#allocation0] ss:$8 sm:$0xf0]
    %vm163 = vcmask 1047556
    %v164 = vsel %vm163, %v162, %v161
    %vm165 = vcmask 203776
    %166 = vst.msk [vmem:[%s1] sm:$0xff] %vm165, %v164
    %s167 = scalar_lea.vmem [#allocation0], 64
    %v168 = vld [vmem:[%s167] ss:$8 sm:$0xf]
    %s169 = scalar_lea.vmem [#allocation0], 64
    %v170 = vld [vmem:[%s169] ss:$8 sm:$0xf0]
    %vm171 = vcmask 1047556
    %v172 = vsel %vm171, %v170, %v168
    %vm173 = vcmask 203776
    %s174 = scalar_lea.vmem %s1, 8
    %175 = vst.msk [vmem:[%s174] sm:$0xff] %vm173, %v172
    %s176 = scalar_lea.vmem [#allocation0], 128
    %v177 = vld [vmem:[%s176] ss:$8 sm:$0xf]
    %s178 = scalar_lea.vmem [#allocation0], 128
    %v179 = vld [vmem:[%s178] ss:$8 sm:$0xf0]
    %vm180 = vcmask 1047556
    %v181 = vsel %vm180, %v179, %v177
    %vm182 = vcmask 203776
    %s183 = scalar_lea.vmem %s1, 16
    %184 = vst.msk [vmem:[%s183] sm:$0xff] %vm182, %v181
    %s185 = scalar_lea.vmem [#allocation0], 192
    %v186 = vld [vmem:[%s185] ss:$8 sm:$0xf]
    %s187 = scalar_lea.vmem [#allocation0], 192
    %v188 = vld [vmem:[%s187] ss:$8 sm:$0xf0]
    %vm189 = vcmask 1047556
    %v190 = vsel %vm189, %v188, %v186
    %vm191 = vcmask 203776
    %s192 = scalar_lea.vmem %s1, 24
    %193 = vst.msk [vmem:[%s192] sm:$0xff] %vm191, %v190
    %s194 = scalar_lea.vmem [#allocation0], 1
    %v195 = vld [vmem:[%s194] ss:$8 sm:$0xf]
    %s196 = scalar_lea.vmem [#allocation0], 1
    %v197 = vld [vmem:[%s196] ss:$8 sm:$0xf0]
    %vm198 = vcmask 1047556
    %v199 = vsel %vm198, %v197, %v195
    %200 = vrot.lane.b32.xlu0 %v199, 25
    %v201 = vpop.permute.xlu0 %200
    %vm202 = vcmask 408776
    %203 = vst.msk [vmem:[%s1] sm:$0xff] %vm202, %v201
    %s204 = scalar_lea.vmem [#allocation0], 65
    %v205 = vld [vmem:[%s204] ss:$8 sm:$0xf]
    %s206 = scalar_lea.vmem [#allocation0], 65
    %v207 = vld [vmem:[%s206] ss:$8 sm:$0xf0]
    %vm208 = vcmask 1047556
    %v209 = vsel %vm208, %v207, %v205
    %210 = vrot.lane.b32.xlu0 %v209, 25
    %v211 = vpop.permute.xlu0 %210
    %vm212 = vcmask 408776
    %s213 = scalar_lea.vmem %s1, 8
    %214 = vst.msk [vmem:[%s213] sm:$0xff] %vm212, %v211
    %s215 = scalar_lea.vmem [#allocation0], 129
    %v216 = vld [vmem:[%s215] ss:$8 sm:$0xf]
    %s217 = scalar_lea.vmem [#allocation0], 129
    %v218 = vld [vmem:[%s217] ss:$8 sm:$0xf0]
    %vm219 = vcmask 1047556
    %v220 = vsel %vm219, %v218, %v216
    %221 = vrot.lane.b32.xlu0 %v220, 25
    %v222 = vpop.permute.xlu0 %221
    %vm223 = vcmask 408776
    %s224 = scalar_lea.vmem %s1, 16
    %225 = vst.msk [vmem:[%s224] sm:$0xff] %vm223, %v222
    %s226 = scalar_lea.vmem [#allocation0], 193
    %v227 = vld [vmem:[%s226] ss:$8 sm:$0xf]
    %s228 = scalar_lea.vmem [#allocation0], 193
    %v229 = vld [vmem:[%s228] ss:$8 sm:$0xf0]
    %vm230 = vcmask 1047556
    %v231 = vsel %vm230, %v229, %v227
    %232 = vrot.lane.b32.xlu0 %v231, 25
    %v233 = vpop.permute.xlu0 %232
    %vm234 = vcmask 408776
    %s235 = scalar_lea.vmem %s1, 24
    %236 = vst.msk [vmem:[%s235] sm:$0xff] %vm234, %v233

// kernel: dcgan_discriminator_forward.1
$region0: #{dcgan_discriminator_forward.1}
  #allocation0 [shape = 'u32[]', space=smem, size = 0x4, offset = 0x4, fixed_abs, tag = 'smem constant byte address 0x4 - core index']
  #allocation1 [shape = 'u32[144,128]{1,0:T(1,128)}', space=vmem, size = 0x12000, scoped, tag = 'internal scratch']
  #allocation2 [shape = 'f32[1,1]{1,0:T(1,128)S(1)}', space=vmem, size = 0x200, scoped, tag = 'scoped memory for dcgan_discriminator_forward.1']
  %s0 = inlined_call_operand.vmem [shape: f32[338,16], index: 0, kind: input, shape index: {}]
  %s1 = inlined_call_operand.vmem [shape: s32[50,1], index: 1, kind: input, shape index: {}]
  %s2 = inlined_call_operand.vmem [shape: f32[16,16], index: 2, kind: input, shape index: {}]
  %s3 = inlined_call_operand.vmem [shape: f32[3,16], index: 3, kind: input, shape index: {}]
  %s4 = inlined_call_operand.vmem [shape: f32[256,32], index: 4, kind: input, shape index: {}]
  %s5 = inlined_call_operand.vmem [shape: f32[3,32], index: 5, kind: input, shape index: {}]
  %s6 = inlined_call_operand.vmem [shape: f32[50,32], index: 6, kind: input, shape index: {}]
  %s7 = inlined_call_operand.<no memory space> [shape: f32[1,1], index: 7, kind: input, shape index: {}]
  %s8 = inlined_call_operand.vmem [shape: f32[2,1], index: 8, kind: output, shape index: {}]
  %s9 = sld [smem:[#allocation0]]
  $region42: #{dcgan_discriminator_forward.1} parent=0
    _
  %s11 = ssub.s32 1, %s9
  %s12 = scalar_select 0, %s11, %s9
  %v13 = vstv %s7
  %14 = vst [vmem:[#allocation2] sm:$0x1] %v13
  // Predicated region
  $region2: #{dcgan_discriminator_forward.1} parent=0 // pred_check
    _
  $region3: #{dcgan_discriminator_forward.1} parent=0 // pred_check_branch
    %16 = sbr.rel (0) target = $region5
  $region4: #{dcgan_discriminator_forward.1} parent=0 // pred_region
    _
  $region5: #{dcgan_discriminator_forward.1} parent=0 // pred_fallthru
    _
  // Predicated region
  $region6: #{dcgan_discriminator_forward.1} parent=0 // pred_check
    _
  $region7: #{dcgan_discriminator_forward.1} parent=0 // pred_check_branch
    %18 = sbr.rel (0) target = $region9
  $region8: #{dcgan_discriminator_forward.1} parent=0 // pred_region
    _
  $region9: #{dcgan_discriminator_forward.1} parent=0 // pred_fallthru
    _
  // Predicated region
  $region10: #{dcgan_discriminator_forward.1} parent=0 // pred_check
    _
  $region11: #{dcgan_discriminator_forward.1} parent=0 // pred_check_branch
    %20 = sbr.rel (0) target = $region13
  $region12: #{dcgan_discriminator_forward.1} parent=0 // pred_region
    _
  $region13: #{dcgan_discriminator_forward.1} parent=0 // pred_fallthru
    _
  // Predicated region
  $region14: #{dcgan_discriminator_forward.1} parent=0 // pred_check
    _
  $region15: #{dcgan_discriminator_forward.1} parent=0 // pred_check_branch
    %22 = sbr.rel (0) target = $region17
  $region16: #{dcgan_discriminator_forward.1} parent=0 // pred_region
    _
  $region17: #{dcgan_discriminator_forward.1} parent=0 // pred_fallthru
    _
  // Predicated region
  $region18: #{dcgan_discriminator_forward.1} parent=0 // pred_check
    _
  $region19: #{dcgan_discriminator_forward.1} parent=0 // pred_check_branch
    %24 = sbr.rel (0) target = $region21
  $region20: #{dcgan_discriminator_forward.1} parent=0 // pred_region
    _
  $region21: #{dcgan_discriminator_forward.1} parent=0 // pred_fallthru
    _
  // Predicated region
  $region22: #{dcgan_discriminator_forward.1} parent=0 // pred_check
    _
  $region23: #{dcgan_discriminator_forward.1} parent=0 // pred_check_branch
    %26 = sbr.rel (0) target = $region25
  $region24: #{dcgan_discriminator_forward.1} parent=0 // pred_region
    _
  $region25: #{dcgan_discriminator_forward.1} parent=0 // pred_fallthru
    _
  // Predicated region
  $region26: #{dcgan_discriminator_forward.1} parent=0 // pred_check
    _
  $region27: #{dcgan_discriminator_forward.1} parent=0 // pred_check_branch
    %28 = sbr.rel (0) target = $region29
  $region28: #{dcgan_discriminator_forward.1} parent=0 // pred_region
    _
  $region29: #{dcgan_discriminator_forward.1} parent=0 // pred_fallthru
    _
  // Predicated region
  $region30: #{dcgan_discriminator_forward.1} parent=0 // pred_check
    _
  $region31: #{dcgan_discriminator_forward.1} parent=0 // pred_check_branch
    %30 = sbr.rel (0) target = $region33
  $region32: #{dcgan_discriminator_forward.1} parent=0 // pred_region
    _
  $region33: #{dcgan_discriminator_forward.1} parent=0 // pred_fallthru
    _
  %v31 = vld [vmem:[%s0] sm:$0xff]
  %v32 = vld [vmem:[%s0 + $0x8] sm:$0xff]
  %v33 = vld [vmem:[%s0 + $0x10] sm:$0xff]
  %v34 = vld [vmem:[%s0 + $0x18] sm:$0xff]
  %v35 = vld [vmem:[%s0 + $0x20] sm:$0xff]
  %v36 = vld [vmem:[%s0 + $0x28] sm:$0xff]
  %v37 = vld [vmem:[%s0 + $0x30] sm:$0xff]
  %v38 = vld [vmem:[%s0 + $0x38] sm:$0xff]
  %v39 = vld [vmem:[%s0 + $0x40] sm:$0xff]
  %v40 = vld [vmem:[%s0 + $0x48] sm:$0xff]
  %v41 = vld [vmem:[%s0 + $0x50] sm:$0xff]
  %v42 = vld [vmem:[%s0 + $0x58] sm:$0xff]
  %v43 = vld [vmem:[%s0 + $0x60] sm:$0xff]
  %v44 = vld [vmem:[%s0 + $0x68] sm:$0xff]
  %v45 = vld [vmem:[%s0 + $0x70] sm:$0xff]
  %v46 = vld [vmem:[%s0 + $0x78] sm:$0xff]
  %v47 = vld [vmem:[%s0 + $0x80] sm:$0xff]
  %v48 = vld [vmem:[%s0 + $0x88] sm:$0xff]
  %v49 = vld [vmem:[%s0 + $0x90] sm:$0xff]
  %v50 = vld [vmem:[%s0 + $0x98] sm:$0xff]
  %v51 = vld [vmem:[%s0 + $0xa0] sm:$0xff]
  %v52 = vld [vmem:[%s0 + $0xa8] sm:$0xff]
  %v53 = vld [vmem:[%s0 + $0xb0] sm:$0xff]
  %v54 = vld [vmem:[%s0 + $0xb8] sm:$0xff]
  %v55 = vld [vmem:[%s0 + $0xc0] sm:$0xff]
  %v56 = vld [vmem:[%s0 + $0xc8] sm:$0xff]
  %v57 = vld [vmem:[%s0 + $0xd0] sm:$0xff]
  %v58 = vld [vmem:[%s0 + $0xd8] sm:$0xff]
  %v59 = vld [vmem:[%s0 + $0xe0] sm:$0xff]
  %v60 = vld [vmem:[%s0 + $0xe8] sm:$0xff]
  %v61 = vld [vmem:[%s0 + $0xf0] sm:$0xff]
  %v62 = vld [vmem:[%s0 + $0xf8] sm:$0xff]
  %v63 = vld [vmem:[%s0 + $0x100] sm:$0xff]
  %v64 = vld [vmem:[%s0 + $0x108] sm:$0xff]
  %v65 = vld [vmem:[%s0 + $0x110] sm:$0xff]
  %v66 = vld [vmem:[%s0 + $0x118] sm:$0xff]
  %v67 = vld [vmem:[%s0 + $0x120] sm:$0xff]
  %v68 = vld [vmem:[%s0 + $0x128] sm:$0xff]
  %v69 = vld [vmem:[%s0 + $0x130] sm:$0xff]
  %v70 = vld [vmem:[%s0 + $0x138] sm:$0xff]
  %v71 = vld [vmem:[%s0 + $0x140] sm:$0xff]
  %v72 = vld [vmem:[%s0 + $0x148] sm:$0xff]
  %v73 = vld [vmem:[%s0 + $0x150] sm:$0x3]
  %v74 = vld [vmem:[%s2] sm:$0xff]
  %v75 = vld [vmem:[%s2 + $0x8] sm:$0xff]
  %v76 = vld [vmem:[%s3] sm:$0x7]
  %v77 = vlaneseq
  %v78 = vshrl.u32 %v77, 7
  %v79 = vsub.s32 0, %v78
  %v80 = vrot.slane %v76, %v79
  %vm81 = vcmask 130048
  %v83 = vsel %vm81, %v31, 0
  %v86 = vsel %vm81, %v32, 0
  %v89 = vsel %vm81, %v33, 0
  %v92 = vsel %vm81, %v34, 0
  %v95 = vsel %vm81, %v35, 0
  %v98 = vsel %vm81, %v36, 0
  %v101 = vsel %vm81, %v37, 0
  %v104 = vsel %vm81, %v38, 0
  %v107 = vsel %vm81, %v39, 0
  %v110 = vsel %vm81, %v40, 0
  %v113 = vsel %vm81, %v41, 0
  %v116 = vsel %vm81, %v42, 0
  %v119 = vsel %vm81, %v43, 0
  %v122 = vsel %vm81, %v44, 0
  %v125 = vsel %vm81, %v45, 0
  %v128 = vsel %vm81, %v46, 0
  %v131 = vsel %vm81, %v47, 0
  %v134 = vsel %vm81, %v48, 0
  %v137 = vsel %vm81, %v49, 0
  %v140 = vsel %vm81, %v50, 0
  %v143 = vsel %vm81, %v51, 0
  %v146 = vsel %vm81, %v52, 0
  %v149 = vsel %vm81, %v53, 0
  %v152 = vsel %vm81, %v54, 0
  %v155 = vsel %vm81, %v55, 0
  %v158 = vsel %vm81, %v56, 0
  %v161 = vsel %vm81, %v57, 0
  %v164 = vsel %vm81, %v58, 0
  %v167 = vsel %vm81, %v59, 0
  %v170 = vsel %vm81, %v60, 0
  %v173 = vsel %vm81, %v61, 0
  %v176 = vsel %vm81, %v62, 0
  %v179 = vsel %vm81, %v63, 0
  %v182 = vsel %vm81, %v64, 0
  %v185 = vsel %vm81, %v65, 0
  %v188 = vsel %vm81, %v66, 0
  %v191 = vsel %vm81, %v67, 0
  %v194 = vsel %vm81, %v68, 0
  %v197 = vsel %vm81, %v69, 0
  %v200 = vsel %vm81, %v70, 0
  %v203 = vsel %vm81, %v71, 0
  %v206 = vsel %vm81, %v72, 0
  %v209 = vsel %vm81, %v73, 0
  %211 = vmatprep.subr.mxu0 0.0
  %212 = vmatpush1.msra.mxu0 0.0
  %213 = vmatprep.subr.mxu0 0.0
  %214 = vmatpush1.msra.mxu0 0.0
  %215 = vmatprep.subr.mxu0 0.0
  %216 = vmatpush1.msra.mxu0 0.0
  %217 = vmatprep.subr.mxu0 0.0
  %218 = vmatpush1.msra.mxu0 0.0
  %219 = vmatprep.subr.mxu0 0.0
  %220 = vmatpush1.msra.mxu0 0.0
  %221 = vmatprep.subr.mxu0 0.0
  %222 = vmatpush1.msra.mxu0 0.0
  %223 = vmatprep.subr.mxu0 0.0
  %224 = vmatpush1.msra.mxu0 0.0
  %225 = vmatprep.subr.mxu0 0.0
  %226 = vmatpush1.msra.mxu0 0.0
  %227 = vmatprep.subr.mxu0 0.0
  %228 = vmatpush1.msra.mxu0 0.0
  %229 = vmatprep.subr.mxu0 0.0
  %230 = vmatpush1.msra.mxu0 0.0
  %231 = vmatprep.subr.mxu0 0.0
  %232 = vmatpush1.msra.mxu0 0.0
  %233 = vmatprep.subr.mxu0 0.0
  %234 = vmatpush1.msra.mxu0 0.0
  %235 = vmatprep.subr.mxu0 0.0
  %236 = vmatpush1.msra.mxu0 0.0
  %237 = vmatprep.subr.mxu0 0.0
  %238 = vmatpush1.msra.mxu0 0.0
  %239 = vmatprep.subr.mxu0 0.0
  %240 = vmatpush1.msra.mxu0 %v75
  %241 = vmatprep.subr.mxu0 0.0
  %242 = vmatpush1.msra.mxu0 %v74
  %243 = vmatprep.subr.mxu0 0.0
  %244 = vmatpush2.msra.mxu0 0.0
  %245 = vmatprep.subr.mxu0 0.0
  %246 = vmatpush2.msra.mxu0 0.0
  %247 = vmatprep.subr.mxu0 0.0
  %248 = vmatpush2.msra.mxu0 0.0
  %249 = vmatprep.subr.mxu0 0.0
  %250 = vmatpush2.msra.mxu0 0.0
  %251 = vmatprep.subr.mxu0 0.0
  %252 = vmatpush2.msra.mxu0 0.0
  %253 = vmatprep.subr.mxu0 0.0
  %254 = vmatpush2.msra.mxu0 0.0
  %255 = vmatprep.subr.mxu0 0.0
  %256 = vmatpush2.msra.mxu0 0.0
  %257 = vmatprep.subr.mxu0 0.0
  %258 = vmatpush2.msra.mxu0 0.0
  %259 = vmatprep.subr.mxu0 0.0
  %260 = vmatpush2.msra.mxu0 0.0
  %261 = vmatprep.subr.mxu0 0.0
  %262 = vmatpush2.msra.mxu0 0.0
  %263 = vmatprep.subr.mxu0 0.0
  %264 = vmatpush2.msra.mxu0 0.0
  %265 = vmatprep.subr.mxu0 0.0
  %266 = vmatpush2.msra.mxu0 0.0
  %267 = vmatprep.subr.mxu0 0.0
  %268 = vmatpush2.msra.mxu0 0.0
  %269 = vmatprep.subr.mxu0 0.0
  %270 = vmatpush2.msra.mxu0 0.0
  %271 = vmatprep.subr.mxu0 0.0
  %272 = vmatpush2.msra.mxu0 0.0
  %273 = vmatprep.subr.mxu0 0.0
  %274 = vmatpush2.msra.mxu0 0.0
  %275 = vmatprep.mubr.f32.mxu0 0.0
  %276 = vmatmul.mubr.f32.gmra.mxu0 %v83
  %v277 = vpop.f32.mrf.mxu0
  %v278 = vadd.f32 %v80, %v277
  %v279 = vpop.f32.mrf.mxu0
  %280 = vmatprep.mubr.f32.mxu0 0.0
  %281 = vmatmul.mubr.f32.gmra.mxu0 %v86
  %v282 = vpop.f32.mrf.mxu0
  %v283 = vadd.f32 %v80, %v282
  %v284 = vpop.f32.mrf.mxu0
  %285 = vmatprep.mubr.f32.mxu0 0.0
  %286 = vmatmul.mubr.f32.gmra.mxu0 %v89
  %v287 = vpop.f32.mrf.mxu0
  %v288 = vadd.f32 %v80, %v287
  %v289 = vpop.f32.mrf.mxu0
  %290 = vmatprep.mubr.f32.mxu0 0.0
  %291 = vmatmul.mubr.f32.gmra.mxu0 %v92
  %v292 = vpop.f32.mrf.mxu0
  %v293 = vadd.f32 %v80, %v292
  %v294 = vpop.f32.mrf.mxu0
  %295 = vmatprep.mubr.f32.mxu0 0.0
  %296 = vmatmul.mubr.f32.gmra.mxu0 %v95
  %v297 = vpop.f32.mrf.mxu0
  %v298 = vadd.f32 %v80, %v297
  %v299 = vpop.f32.mrf.mxu0
  %300 = vmatprep.mubr.f32.mxu0 0.0
  %301 = vmatmul.mubr.f32.gmra.mxu0 %v98
  %v302 = vpop.f32.mrf.mxu0
  %v303 = vadd.f32 %v80, %v302
  %v304 = vpop.f32.mrf.mxu0
  %305 = vmatprep.mubr.f32.mxu0 0.0
  %306 = vmatmul.mubr.f32.gmra.mxu0 %v101
  %v307 = vpop.f32.mrf.mxu0
  %v308 = vadd.f32 %v80, %v307
  %v309 = vpop.f32.mrf.mxu0
  %310 = vmatprep.mubr.f32.mxu0 0.0
  %311 = vmatmul.mubr.f32.gmra.mxu0 %v104
  %v312 = vpop.f32.mrf.mxu0
  %v313 = vadd.f32 %v80, %v312
  %v314 = vpop.f32.mrf.mxu0
  %315 = vmatprep.mubr.f32.mxu0 0.0
  %316 = vmatmul.mubr.f32.gmra.mxu0 %v107
  %v317 = vpop.f32.mrf.mxu0
  %v318 = vadd.f32 %v80, %v317
  %v319 = vpop.f32.mrf.mxu0
  %320 = vmatprep.mubr.f32.mxu0 0.0
  %321 = vmatmul.mubr.f32.gmra.mxu0 %v110
  %v322 = vpop.f32.mrf.mxu0
  %v323 = vadd.f32 %v80, %v322
  %v324 = vpop.f32.mrf.mxu0
  %325 = vmatprep.mubr.f32.mxu0 0.0
  %326 = vmatmul.mubr.f32.gmra.mxu0 %v113
  %v327 = vpop.f32.mrf.mxu0
  %v328 = vadd.f32 %v80, %v327
  %v329 = vpop.f32.mrf.mxu0
  %330 = vmatprep.mubr.f32.mxu0 0.0
  %331 = vmatmul.mubr.f32.gmra.mxu0 %v116
  %v332 = vpop.f32.mrf.mxu0
  %v333 = vadd.f32 %v80, %v332
  %v334 = vpop.f32.mrf.mxu0
  %335 = vmatprep.mubr.f32.mxu0 0.0
  %336 = vmatmul.mubr.f32.gmra.mxu0 %v119
  %v337 = vpop.f32.mrf.mxu0
  %v338 = vadd.f32 %v80, %v337
  %v339 = vpop.f32.mrf.mxu0
  %340 = vmatprep.mubr.f32.mxu0 0.0
  %341 = vmatmul.mubr.f32.gmra.mxu0 %v122
  %v342 = vpop.f32.mrf.mxu0
  %v343 = vadd.f32 %v80, %v342
  %v344 = vpop.f32.mrf.mxu0
  %345 = vmatprep.mubr.f32.mxu0 0.0
  %346 = vmatmul.mubr.f32.gmra.mxu0 %v125
  %v347 = vpop.f32.mrf.mxu0
  %v348 = vadd.f32 %v80, %v347
  %v349 = vpop.f32.mrf.mxu0
  %350 = vmatprep.mubr.f32.mxu0 0.0
  %351 = vmatmul.mubr.f32.gmra.mxu0 %v128
  %v352 = vpop.f32.mrf.mxu0
  %v353 = vadd.f32 %v80, %v352
  %v354 = vpop.f32.mrf.mxu0
  %355 = vmatprep.mubr.f32.mxu0 0.0
  %356 = vmatmul.mubr.f32.gmra.mxu0 %v131
  %v357 = vpop.f32.mrf.mxu0
  %v358 = vadd.f32 %v80, %v357
  %v359 = vpop.f32.mrf.mxu0
  %360 = vmatprep.mubr.f32.mxu0 0.0
  %361 = vmatmul.mubr.f32.gmra.mxu0 %v134
  %v362 = vpop.f32.mrf.mxu0
  %v363 = vadd.f32 %v80, %v362
  %v364 = vpop.f32.mrf.mxu0
  %365 = vmatprep.mubr.f32.mxu0 0.0
  %366 = vmatmul.mubr.f32.gmra.mxu0 %v137
  %v367 = vpop.f32.mrf.mxu0
  %v368 = vadd.f32 %v80, %v367
  %v369 = vpop.f32.mrf.mxu0
  %370 = vmatprep.mubr.f32.mxu0 0.0
  %371 = vmatmul.mubr.f32.gmra.mxu0 %v140
  %v372 = vpop.f32.mrf.mxu0
  %v373 = vadd.f32 %v80, %v372
  %v374 = vpop.f32.mrf.mxu0
  %375 = vmatprep.mubr.f32.mxu0 0.0
  %376 = vmatmul.mubr.f32.gmra.mxu0 %v143
  %v377 = vpop.f32.mrf.mxu0
  %v378 = vadd.f32 %v80, %v377
  %v379 = vpop.f32.mrf.mxu0
  %380 = vmatprep.mubr.f32.mxu0 0.0
  %381 = vmatmul.mubr.f32.gmra.mxu0 %v146
  %v382 = vpop.f32.mrf.mxu0
  %v383 = vadd.f32 %v80, %v382
  %v384 = vpop.f32.mrf.mxu0
  %385 = vmatprep.mubr.f32.mxu0 0.0
  %386 = vmatmul.mubr.f32.gmra.mxu0 %v149
  %v387 = vpop.f32.mrf.mxu0
  %v388 = vadd.f32 %v80, %v387
  %v389 = vpop.f32.mrf.mxu0
  %390 = vmatprep.mubr.f32.mxu0 0.0
  %391 = vmatmul.mubr.f32.gmra.mxu0 %v152
  %v392 = vpop.f32.mrf.mxu0
  %v393 = vadd.f32 %v80, %v392
  %v394 = vpop.f32.mrf.mxu0
  %395 = vmatprep.mubr.f32.mxu0 0.0
  %396 = vmatmul.mubr.f32.gmra.mxu0 %v155
  %v397 = vpop.f32.mrf.mxu0
  %v398 = vadd.f32 %v80, %v397
  %v399 = vpop.f32.mrf.mxu0
  %400 = vmatprep.mubr.f32.mxu0 0.0
  %401 = vmatmul.mubr.f32.gmra.mxu0 %v158
  %v402 = vpop.f32.mrf.mxu0
  %v403 = vadd.f32 %v80, %v402
  %v404 = vpop.f32.mrf.mxu0
  %405 = vmatprep.mubr.f32.mxu0 0.0
  %406 = vmatmul.mubr.f32.gmra.mxu0 %v161
  %v407 = vpop.f32.mrf.mxu0
  %v408 = vadd.f32 %v80, %v407
  %v409 = vpop.f32.mrf.mxu0
  %410 = vmatprep.mubr.f32.mxu0 0.0
  %411 = vmatmul.mubr.f32.gmra.mxu0 %v164
  %v412 = vpop.f32.mrf.mxu0
  %v413 = vadd.f32 %v80, %v412
  %v414 = vpop.f32.mrf.mxu0
  %415 = vmatprep.mubr.f32.mxu0 0.0
  %416 = vmatmul.mubr.f32.gmra.mxu0 %v167
  %v417 = vpop.f32.mrf.mxu0
  %v418 = vadd.f32 %v80, %v417
  %v419 = vpop.f32.mrf.mxu0
  %420 = vmatprep.mubr.f32.mxu0 0.0
  %421 = vmatmul.mubr.f32.gmra.mxu0 %v170
  %v422 = vpop.f32.mrf.mxu0
  %v423 = vadd.f32 %v80, %v422
  %v424 = vpop.f32.mrf.mxu0
  %425 = vmatprep.mubr.f32.mxu0 0.0
  %426 = vmatmul.mubr.f32.gmra.mxu0 %v173
  %v427 = vpop.f32.mrf.mxu0
  %v428 = vadd.f32 %v80, %v427
  %v429 = vpop.f32.mrf.mxu0
  %430 = vmatprep.mubr.f32.mxu0 0.0
  %431 = vmatmul.mubr.f32.gmra.mxu0 %v176
  %v432 = vpop.f32.mrf.mxu0
  %v433 = vadd.f32 %v80, %v432
  %v434 = vpop.f32.mrf.mxu0
  %435 = vmatprep.mubr.f32.mxu0 0.0
  %436 = vmatmul.mubr.f32.gmra.mxu0 %v179
  %v437 = vpop.f32.mrf.mxu0
  %v438 = vadd.f32 %v80, %v437
  %v439 = vpop.f32.mrf.mxu0
  %440 = vmatprep.mubr.f32.mxu0 0.0
  %441 = vmatmul.mubr.f32.gmra.mxu0 %v182
  %v442 = vpop.f32.mrf.mxu0
  %v443 = vadd.f32 %v80, %v442
  %v444 = vpop.f32.mrf.mxu0
  %445 = vmatprep.mubr.f32.mxu0 0.0
  %446 = vmatmul.mubr.f32.gmra.mxu0 %v185
  %v447 = vpop.f32.mrf.mxu0
  %v448 = vadd.f32 %v80, %v447
  %v449 = vpop.f32.mrf.mxu0
  %450 = vmatprep.mubr.f32.mxu0 0.0
  %451 = vmatmul.mubr.f32.gmra.mxu0 %v188
  %v452 = vpop.f32.mrf.mxu0
  %v453 = vadd.f32 %v80, %v452
  %v454 = vpop.f32.mrf.mxu0
  %455 = vmatprep.mubr.f32.mxu0 0.0
  %456 = vmatmul.mubr.f32.gmra.mxu0 %v191
  %v457 = vpop.f32.mrf.mxu0
  %v458 = vadd.f32 %v80, %v457
  %v459 = vpop.f32.mrf.mxu0
  %460 = vmatprep.mubr.f32.mxu0 0.0
  %461 = vmatmul.mubr.f32.gmra.mxu0 %v194
  %v462 = vpop.f32.mrf.mxu0
  %v463 = vadd.f32 %v80, %v462
  %v464 = vpop.f32.mrf.mxu0
  %465 = vmatprep.mubr.f32.mxu0 0.0
  %466 = vmatmul.mubr.f32.gmra.mxu0 %v197
  %v467 = vpop.f32.mrf.mxu0
  %v468 = vadd.f32 %v80, %v467
  %v469 = vpop.f32.mrf.mxu0
  %470 = vmatprep.mubr.f32.mxu0 0.0
  %471 = vmatmul.mubr.f32.gmra.mxu0 %v200
  %v472 = vpop.f32.mrf.mxu0
  %v473 = vadd.f32 %v80, %v472
  %v474 = vpop.f32.mrf.mxu0
  %475 = vmatprep.mubr.f32.mxu0 0.0
  %476 = vmatmul.mubr.f32.gmra.mxu0 %v203
  %v477 = vpop.f32.mrf.mxu0
  %v478 = vadd.f32 %v80, %v477
  %v479 = vpop.f32.mrf.mxu0
  %480 = vmatprep.mubr.f32.mxu0 0.0
  %481 = vmatmul.mubr.f32.gmra.mxu0 %v206
  %v482 = vpop.f32.mrf.mxu0
  %v483 = vadd.f32 %v80, %v482
  %v484 = vpop.f32.mrf.mxu0
  %485 = vmatprep.mubr.f32.mxu0 0.0
  %486 = vmatmul.mubr.f32.gmra.mxu0 %v209
  %v487 = vpop.f32.mrf.mxu0
  %v488 = vadd.f32 %v80, %v487
  %v489 = vpop.f32.mrf.mxu0
  %490 = vdwg.mxu0
  %v491 = vsel %vm81, %v278, 0.0
  %v492 = vsel %vm81, %v283, 0.0
  %v493 = vadd.f32 %v491, %v492
  %v494 = vsel %vm81, %v288, 0.0
  %v495 = vadd.f32 %v493, %v494
  %v496 = vsel %vm81, %v293, 0.0
  %v497 = vadd.f32 %v495, %v496
  %v498 = vsel %vm81, %v298, 0.0
  %v499 = vadd.f32 %v497, %v498
  %v500 = vsel %vm81, %v303, 0.0
  %v501 = vadd.f32 %v499, %v500
  %v502 = vsel %vm81, %v308, 0.0
  %v503 = vadd.f32 %v501, %v502
  %v504 = vsel %vm81, %v313, 0.0
  %v505 = vadd.f32 %v503, %v504
  %v506 = vsel %vm81, %v318, 0.0
  %v507 = vadd.f32 %v505, %v506
  %v508 = vsel %vm81, %v323, 0.0
  %v509 = vadd.f32 %v507, %v508
  %v510 = vsel %vm81, %v328, 0.0
  %v511 = vadd.f32 %v509, %v510
  %v512 = vsel %vm81, %v333, 0.0
  %v513 = vadd.f32 %v511, %v512
  %v514 = vsel %vm81, %v338, 0.0
  %v515 = vadd.f32 %v513, %v514
  %v516 = vsel %vm81, %v343, 0.0
  %v517 = vadd.f32 %v515, %v516
  %v518 = vsel %vm81, %v348, 0.0
  %v519 = vadd.f32 %v517, %v518
  %v520 = vsel %vm81, %v353, 0.0
  %v521 = vadd.f32 %v519, %v520
  %v522 = vsel %vm81, %v358, 0.0
  %v523 = vadd.f32 %v521, %v522
  %v524 = vsel %vm81, %v363, 0.0
  %v525 = vadd.f32 %v523, %v524
  %v526 = vsel %vm81, %v368, 0.0
  %v527 = vadd.f32 %v525, %v526
  %v528 = vsel %vm81, %v373, 0.0
  %v529 = vadd.f32 %v527, %v528
  %v530 = vsel %vm81, %v378, 0.0
  %v531 = vadd.f32 %v529, %v530
  %v532 = vsel %vm81, %v383, 0.0
  %v533 = vadd.f32 %v531, %v532
  %v534 = vsel %vm81, %v388, 0.0
  %v535 = vadd.f32 %v533, %v534
  %v536 = vsel %vm81, %v393, 0.0
  %v537 = vadd.f32 %v535, %v536
  %v538 = vsel %vm81, %v398, 0.0
  %v539 = vadd.f32 %v537, %v538
  %v540 = vsel %vm81, %v403, 0.0
  %v541 = vadd.f32 %v539, %v540
  %v542 = vsel %vm81, %v408, 0.0
  %v543 = vadd.f32 %v541, %v542
  %v544 = vsel %vm81, %v413, 0.0
  %v545 = vadd.f32 %v543, %v544
  %v546 = vsel %vm81, %v418, 0.0
  %v547 = vadd.f32 %v545, %v546
  %v548 = vsel %vm81, %v423, 0.0
  %v549 = vadd.f32 %v547, %v548
  %v550 = vsel %vm81, %v428, 0.0
  %v551 = vadd.f32 %v549, %v550
  %v552 = vsel %vm81, %v433, 0.0
  %v553 = vadd.f32 %v551, %v552
  %v554 = vsel %vm81, %v438, 0.0
  %v555 = vadd.f32 %v553, %v554
  %v556 = vsel %vm81, %v443, 0.0
  %v557 = vadd.f32 %v555, %v556
  %v558 = vsel %vm81, %v448, 0.0
  %v559 = vadd.f32 %v557, %v558
  %v560 = vsel %vm81, %v453, 0.0
  %v561 = vadd.f32 %v559, %v560
  %v562 = vsel %vm81, %v458, 0.0
  %v563 = vadd.f32 %v561, %v562
  %v564 = vsel %vm81, %v463, 0.0
  %v565 = vadd.f32 %v563, %v564
  %v566 = vsel %vm81, %v468, 0.0
  %v567 = vadd.f32 %v565, %v566
  %v568 = vsel %vm81, %v473, 0.0
  %v569 = vadd.f32 %v567, %v568
  %v570 = vsel %vm81, %v478, 0.0
  %v571 = vadd.f32 %v569, %v570
  %v572 = vsel %vm81, %v483, 0.0
  %v573 = vadd.f32 %v571, %v572
  %vm574 = vcmask 123904
  %v575 = vsel %vm574, %v488, 0.0
  %v576 = vadd.f32 %v573, %v575
  %v577 = vrot.slane %v576, 4
  %v578 = vadd.f32 %v576, %v577
  %v579 = vrot.slane %v578, 2
  %v580 = vadd.f32 %v578, %v579
  %v581 = vrot.slane %v580, 1
  %v582 = vadd.f32 %v580, %v581
  %v583 = vmul.f32 %v582, 0.00295858
  %v584 = vmul.f32 %v278, %v278
  %v585 = vmul.f32 %v283, %v283
  %v586 = vmul.f32 %v288, %v288
  %v587 = vmul.f32 %v293, %v293
  %v588 = vmul.f32 %v298, %v298
  %v589 = vmul.f32 %v303, %v303
  %v590 = vmul.f32 %v308, %v308
  %v591 = vmul.f32 %v313, %v313
  %v592 = vmul.f32 %v318, %v318
  %v593 = vmul.f32 %v323, %v323
  %v594 = vmul.f32 %v328, %v328
  %v595 = vmul.f32 %v333, %v333
  %v596 = vmul.f32 %v338, %v338
  %v597 = vmul.f32 %v343, %v343
  %v598 = vmul.f32 %v348, %v348
  %v599 = vmul.f32 %v353, %v353
  %v600 = vmul.f32 %v358, %v358
  %v601 = vmul.f32 %v363, %v363
  %v602 = vmul.f32 %v368, %v368
  %v603 = vmul.f32 %v373, %v373
  %v604 = vmul.f32 %v378, %v378
  %v605 = vmul.f32 %v383, %v383
  %v606 = vmul.f32 %v388, %v388
  %v607 = vmul.f32 %v393, %v393
  %v608 = vmul.f32 %v398, %v398
  %v609 = vmul.f32 %v403, %v403
  %v610 = vmul.f32 %v408, %v408
  %v611 = vmul.f32 %v413, %v413
  %v612 = vmul.f32 %v418, %v418
  %v613 = vmul.f32 %v423, %v423
  %v614 = vmul.f32 %v428, %v428
  %v615 = vmul.f32 %v433, %v433
  %v616 = vmul.f32 %v438, %v438
  %v617 = vmul.f32 %v443, %v443
  %v618 = vmul.f32 %v448, %v448
  %v619 = vmul.f32 %v453, %v453
  %v620 = vmul.f32 %v458, %v458
  %v621 = vmul.f32 %v463, %v463
  %v622 = vmul.f32 %v468, %v468
  %v623 = vmul.f32 %v473, %v473
  %v624 = vmul.f32 %v478, %v478
  %v625 = vmul.f32 %v483, %v483
  %v626 = vmul.f32 %v488, %v488
  %v627 = vsel %vm81, %v584, 0.0
  %v628 = vsel %vm81, %v585, 0.0
  %v629 = vadd.f32 %v627, %v628
  %v630 = vsel %vm81, %v586, 0.0
  %v631 = vadd.f32 %v629, %v630
  %v632 = vsel %vm81, %v587, 0.0
  %v633 = vadd.f32 %v631, %v632
  %v634 = vsel %vm81, %v588, 0.0
  %v635 = vadd.f32 %v633, %v634
  %v636 = vsel %vm81, %v589, 0.0
  %v637 = vadd.f32 %v635, %v636
  %v638 = vsel %vm81, %v590, 0.0
  %v639 = vadd.f32 %v637, %v638
  %v640 = vsel %vm81, %v591, 0.0
  %v641 = vadd.f32 %v639, %v640
  %v642 = vsel %vm81, %v592, 0.0
  %v643 = vadd.f32 %v641, %v642
  %v644 = vsel %vm81, %v593, 0.0
  %v645 = vadd.f32 %v643, %v644
  %v646 = vsel %vm81, %v594, 0.0
  %v647 = vadd.f32 %v645, %v646
  %v648 = vsel %vm81, %v595, 0.0
  %v649 = vadd.f32 %v647, %v648
  %v650 = vsel %vm81, %v596, 0.0
  %v651 = vadd.f32 %v649, %v650
  %v652 = vsel %vm81, %v597, 0.0
  %v653 = vadd.f32 %v651, %v652
  %v654 = vsel %vm81, %v598, 0.0
  %v655 = vadd.f32 %v653, %v654
  %v656 = vsel %vm81, %v599, 0.0
  %v657 = vadd.f32 %v655, %v656
  %v658 = vsel %vm81, %v600, 0.0
  %v659 = vadd.f32 %v657, %v658
  %v660 = vsel %vm81, %v601, 0.0
  %v661 = vadd.f32 %v659, %v660
  %v662 = vsel %vm81, %v602, 0.0
  %v663 = vadd.f32 %v661, %v662
  %v664 = vsel %vm81, %v603, 0.0
  %v665 = vadd.f32 %v663, %v664
  %v666 = vsel %vm81, %v604, 0.0
  %v667 = vadd.f32 %v665, %v666
  %v668 = vsel %vm81, %v605, 0.0
  %v669 = vadd.f32 %v667, %v668
  %v670 = vsel %vm81, %v606, 0.0
  %v671 = vadd.f32 %v669, %v670
  %v672 = vsel %vm81, %v607, 0.0
  %v673 = vadd.f32 %v671, %v672
  %v674 = vsel %vm81, %v608, 0.0
  %v675 = vadd.f32 %v673, %v674
  %v676 = vsel %vm81, %v609, 0.0
  %v677 = vadd.f32 %v675, %v676
  %v678 = vsel %vm81, %v610, 0.0
  %v679 = vadd.f32 %v677, %v678
  %v680 = vsel %vm81, %v611, 0.0
  %v681 = vadd.f32 %v679, %v680
  %v682 = vsel %vm81, %v612, 0.0
  %v683 = vadd.f32 %v681, %v682
  %v684 = vsel %vm81, %v613, 0.0
  %v685 = vadd.f32 %v683, %v684
  %v686 = vsel %vm81, %v614, 0.0
  %v687 = vadd.f32 %v685, %v686
  %v688 = vsel %vm81, %v615, 0.0
  %v689 = vadd.f32 %v687, %v688
  %v690 = vsel %vm81, %v616, 0.0
  %v691 = vadd.f32 %v689, %v690
  %v692 = vsel %vm81, %v617, 0.0
  %v693 = vadd.f32 %v691, %v692
  %v694 = vsel %vm81, %v618, 0.0
  %v695 = vadd.f32 %v693, %v694
  %v696 = vsel %vm81, %v619, 0.0
  %v697 = vadd.f32 %v695, %v696
  %v698 = vsel %vm81, %v620, 0.0
  %v699 = vadd.f32 %v697, %v698
  %v700 = vsel %vm81, %v621, 0.0
  %v701 = vadd.f32 %v699, %v700
  %v702 = vsel %vm81, %v622, 0.0
  %v703 = vadd.f32 %v701, %v702
  %v704 = vsel %vm81, %v623, 0.0
  %v705 = vadd.f32 %v703, %v704
  %v706 = vsel %vm81, %v624, 0.0
  %v707 = vadd.f32 %v705, %v706
  %v708 = vsel %vm81, %v625, 0.0
  %v709 = vadd.f32 %v707, %v708
  %v710 = vsel %vm574, %v626, 0.0
  %v711 = vadd.f32 %v709, %v710
  %v712 = vrot.slane %v711, 4
  %v713 = vadd.f32 %v711, %v712
  %v714 = vrot.slane %v713, 2
  %v715 = vadd.f32 %v713, %v714
  %v716 = vrot.slane %v715, 1
  %v717 = vadd.f32 %v715, %v716
  %v718 = vmul.f32 %v717, 0.00295858
  %v719 = vmul.f32 %v583, %v583
  %v720 = vsub.f32 %v718, %v719
  %v721 = vadd.f32 %v720, 1e-05
  %v722 = vrsqrt.pop %v721
  %v723 = vmul.f32 %v76, %v722
  %v724 = vmul.f32 %v583, %v723
  %v726 = vrot.slane %v724, 7
  %v728 = vsub.f32 %v76, %v726
  %v729 = vlaneseq
  %v730 = vshrl.u32 %v729, 7
  %v731 = vsub.s32 1, %v730
  %v732 = vrot.slane %v723, %v731
  %v733 = vmul.f32 %v278, %v732
  %v734 = vmul.f32 %v283, %v732
  %v735 = vmul.f32 %v288, %v732
  %v736 = vmul.f32 %v293, %v732
  %v737 = vmul.f32 %v298, %v732
  %v738 = vmul.f32 %v303, %v732
  %v739 = vmul.f32 %v308, %v732
  %v740 = vmul.f32 %v313, %v732
  %v741 = vmul.f32 %v318, %v732
  %v742 = vmul.f32 %v323, %v732
  %v743 = vmul.f32 %v328, %v732
  %v744 = vmul.f32 %v333, %v732
  %v745 = vmul.f32 %v338, %v732
  %v746 = vmul.f32 %v343, %v732
  %v747 = vmul.f32 %v348, %v732
  %v748 = vmul.f32 %v353, %v732
  %v749 = vmul.f32 %v358, %v732
  %v750 = vmul.f32 %v363, %v732
  %v751 = vmul.f32 %v368, %v732
  %v752 = vmul.f32 %v373, %v732
  %v753 = vmul.f32 %v378, %v732
  %v754 = vmul.f32 %v383, %v732
  %v755 = vmul.f32 %v388, %v732
  %v756 = vmul.f32 %v393, %v732
  %v757 = vmul.f32 %v398, %v732
  %v758 = vmul.f32 %v403, %v732
  %v759 = vmul.f32 %v408, %v732
  %v760 = vmul.f32 %v413, %v732
  %v761 = vmul.f32 %v418, %v732
  %v762 = vmul.f32 %v423, %v732
  %v763 = vmul.f32 %v428, %v732
  %v764 = vmul.f32 %v433, %v732
  %v765 = vmul.f32 %v438, %v732
  %v766 = vmul.f32 %v443, %v732
  %v767 = vmul.f32 %v448, %v732
  %v768 = vmul.f32 %v453, %v732
  %v769 = vmul.f32 %v458, %v732
  %v770 = vmul.f32 %v463, %v732
  %v771 = vmul.f32 %v468, %v732
  %v772 = vmul.f32 %v473, %v732
  %v773 = vmul.f32 %v478, %v732
  %v774 = vmul.f32 %v483, %v732
  %v775 = vmul.f32 %v488, %v732
  %v776 = vlaneseq
  %v777 = vshrl.u32 %v776, 7
  %v778 = vsub.s32 2, %v777
  %v779 = vrot.slane %v728, %v778
  %v780 = vadd.f32 %v733, %v779
  %v781 = vadd.f32 %v734, %v779
  %v782 = vadd.f32 %v735, %v779
  %v783 = vadd.f32 %v736, %v779
  %v784 = vadd.f32 %v737, %v779
  %v785 = vadd.f32 %v738, %v779
  %v786 = vadd.f32 %v739, %v779
  %v787 = vadd.f32 %v740, %v779
  %v788 = vadd.f32 %v741, %v779
  %v789 = vadd.f32 %v742, %v779
  %v790 = vadd.f32 %v743, %v779
  %v791 = vadd.f32 %v744, %v779
  %v792 = vadd.f32 %v745, %v779
  %v793 = vadd.f32 %v746, %v779
  %v794 = vadd.f32 %v747, %v779
  %v795 = vadd.f32 %v748, %v779
  %v796 = vadd.f32 %v749, %v779
  %v797 = vadd.f32 %v750, %v779
  %v798 = vadd.f32 %v751, %v779
  %v799 = vadd.f32 %v752, %v779
  %v800 = vadd.f32 %v753, %v779
  %v801 = vadd.f32 %v754, %v779
  %v802 = vadd.f32 %v755, %v779
  %v803 = vadd.f32 %v756, %v779
  %v804 = vadd.f32 %v757, %v779
  %v805 = vadd.f32 %v758, %v779
  %v806 = vadd.f32 %v759, %v779
  %v807 = vadd.f32 %v760, %v779
  %v808 = vadd.f32 %v761, %v779
  %v809 = vadd.f32 %v762, %v779
  %v810 = vadd.f32 %v763, %v779
  %v811 = vadd.f32 %v764, %v779
  %v812 = vadd.f32 %v765, %v779
  %v813 = vadd.f32 %v766, %v779
  %v814 = vadd.f32 %v767, %v779
  %v815 = vadd.f32 %v768, %v779
  %v816 = vadd.f32 %v769, %v779
  %v817 = vadd.f32 %v770, %v779
  %v818 = vadd.f32 %v771, %v779
  %v819 = vadd.f32 %v772, %v779
  %v820 = vadd.f32 %v773, %v779
  %v821 = vadd.f32 %v774, %v779
  %v822 = vadd.f32 %v775, %v779
  %vm823 = vcmp.gt.f32.partialorder %v780, 0.0
  %vm824 = vcmp.gt.f32.partialorder %v781, 0.0
  %vm825 = vcmp.gt.f32.partialorder %v782, 0.0
  %vm826 = vcmp.gt.f32.partialorder %v783, 0.0
  %vm827 = vcmp.gt.f32.partialorder %v784, 0.0
  %vm828 = vcmp.gt.f32.partialorder %v785, 0.0
  %vm829 = vcmp.gt.f32.partialorder %v786, 0.0
  %vm830 = vcmp.gt.f32.partialorder %v787, 0.0
  %vm831 = vcmp.gt.f32.partialorder %v788, 0.0
  %vm832 = vcmp.gt.f32.partialorder %v789, 0.0
  %vm833 = vcmp.gt.f32.partialorder %v790, 0.0
  %vm834 = vcmp.gt.f32.partialorder %v791, 0.0
  %vm835 = vcmp.gt.f32.partialorder %v792, 0.0
  %vm836 = vcmp.gt.f32.partialorder %v793, 0.0
  %vm837 = vcmp.gt.f32.partialorder %v794, 0.0
  %vm838 = vcmp.gt.f32.partialorder %v795, 0.0
  %vm839 = vcmp.gt.f32.partialorder %v796, 0.0
  %vm840 = vcmp.gt.f32.partialorder %v797, 0.0
  %vm841 = vcmp.gt.f32.partialorder %v798, 0.0
  %vm842 = vcmp.gt.f32.partialorder %v799, 0.0
  %vm843 = vcmp.gt.f32.partialorder %v800, 0.0
  %vm844 = vcmp.gt.f32.partialorder %v801, 0.0
  %vm845 = vcmp.gt.f32.partialorder %v802, 0.0
  %vm846 = vcmp.gt.f32.partialorder %v803, 0.0
  %vm847 = vcmp.gt.f32.partialorder %v804, 0.0
  %vm848 = vcmp.gt.f32.partialorder %v805, 0.0
  %vm849 = vcmp.gt.f32.partialorder %v806, 0.0
  %vm850 = vcmp.gt.f32.partialorder %v807, 0.0
  %vm851 = vcmp.gt.f32.partialorder %v808, 0.0
  %vm852 = vcmp.gt.f32.partialorder %v809, 0.0
  %vm853 = vcmp.gt.f32.partialorder %v810, 0.0
  %vm854 = vcmp.gt.f32.partialorder %v811, 0.0
  %vm855 = vcmp.gt.f32.partialorder %v812, 0.0
  %vm856 = vcmp.gt.f32.partialorder %v813, 0.0
  %vm857 = vcmp.gt.f32.partialorder %v814, 0.0
  %vm858 = vcmp.gt.f32.partialorder %v815, 0.0
  %vm859 = vcmp.gt.f32.partialorder %v816, 0.0
  %vm860 = vcmp.gt.f32.partialorder %v817, 0.0
  %vm861 = vcmp.gt.f32.partialorder %v818, 0.0
  %vm862 = vcmp.gt.f32.partialorder %v819, 0.0
  %vm863 = vcmp.gt.f32.partialorder %v820, 0.0
  %vm864 = vcmp.gt.f32.partialorder %v821, 0.0
  %vm865 = vcmp.gt.f32.partialorder %v822, 0.0
  %v866 = vmul.f32 %v780, 0.2
  %v867 = vmul.f32 %v781, 0.2
  %v868 = vmul.f32 %v782, 0.2
  %v869 = vmul.f32 %v783, 0.2
  %v870 = vmul.f32 %v784, 0.2
  %v871 = vmul.f32 %v785, 0.2
  %v872 = vmul.f32 %v786, 0.2
  %v873 = vmul.f32 %v787, 0.2
  %v874 = vmul.f32 %v788, 0.2
  %v875 = vmul.f32 %v789, 0.2
  %v876 = vmul.f32 %v790, 0.2
  %v877 = vmul.f32 %v791, 0.2
  %v878 = vmul.f32 %v792, 0.2
  %v879 = vmul.f32 %v793, 0.2
  %v880 = vmul.f32 %v794, 0.2
  %v881 = vmul.f32 %v795, 0.2
  %v882 = vmul.f32 %v796, 0.2
  %v883 = vmul.f32 %v797, 0.2
  %v884 = vmul.f32 %v798, 0.2
  %v885 = vmul.f32 %v799, 0.2
  %v886 = vmul.f32 %v800, 0.2
  %v887 = vmul.f32 %v801, 0.2
  %v888 = vmul.f32 %v802, 0.2
  %v889 = vmul.f32 %v803, 0.2
  %v890 = vmul.f32 %v804, 0.2
  %v891 = vmul.f32 %v805, 0.2
  %v892 = vmul.f32 %v806, 0.2
  %v893 = vmul.f32 %v807, 0.2
  %v894 = vmul.f32 %v808, 0.2
  %v895 = vmul.f32 %v809, 0.2
  %v896 = vmul.f32 %v810, 0.2
  %v897 = vmul.f32 %v811, 0.2
  %v898 = vmul.f32 %v812, 0.2
  %v899 = vmul.f32 %v813, 0.2
  %v900 = vmul.f32 %v814, 0.2
  %v901 = vmul.f32 %v815, 0.2
  %v902 = vmul.f32 %v816, 0.2
  %v903 = vmul.f32 %v817, 0.2
  %v904 = vmul.f32 %v818, 0.2
  %v905 = vmul.f32 %v819, 0.2
  %v906 = vmul.f32 %v820, 0.2
  %v907 = vmul.f32 %v821, 0.2
  %v908 = vmul.f32 %v822, 0.2
  %v909 = vsel %vm823, %v780, %v866
  %v910 = vsel %vm824, %v781, %v867
  %v911 = vsel %vm825, %v782, %v868
  %v912 = vsel %vm826, %v783, %v869
  %v913 = vsel %vm827, %v784, %v870
  %v914 = vsel %vm828, %v785, %v871
  %v915 = vsel %vm829, %v786, %v872
  %v916 = vsel %vm830, %v787, %v873
  %v917 = vsel %vm831, %v788, %v874
  %v918 = vsel %vm832, %v789, %v875
  %v919 = vsel %vm833, %v790, %v876
  %v920 = vsel %vm834, %v791, %v877
  %v921 = vsel %vm835, %v792, %v878
  %v922 = vsel %vm836, %v793, %v879
  %v923 = vsel %vm837, %v794, %v880
  %v924 = vsel %vm838, %v795, %v881
  %v925 = vsel %vm839, %v796, %v882
  %v926 = vsel %vm840, %v797, %v883
  %v927 = vsel %vm841, %v798, %v884
  %v928 = vsel %vm842, %v799, %v885
  %v929 = vsel %vm843, %v800, %v886
  %v930 = vsel %vm844, %v801, %v887
  %v931 = vsel %vm845, %v802, %v888
  %v932 = vsel %vm846, %v803, %v889
  %v933 = vsel %vm847, %v804, %v890
  %v934 = vsel %vm848, %v805, %v891
  %v935 = vsel %vm849, %v806, %v892
  %v936 = vsel %vm850, %v807, %v893
  %v937 = vsel %vm851, %v808, %v894
  %v938 = vsel %vm852, %v809, %v895
  %v939 = vsel %vm853, %v810, %v896
  %v940 = vsel %vm854, %v811, %v897
  %v941 = vsel %vm855, %v812, %v898
  %v942 = vsel %vm856, %v813, %v899
  %v943 = vsel %vm857, %v814, %v900
  %v944 = vsel %vm858, %v815, %v901
  %v945 = vsel %vm859, %v816, %v902
  %v946 = vsel %vm860, %v817, %v903
  %v947 = vsel %vm861, %v818, %v904
  %v948 = vsel %vm862, %v819, %v905
  %v949 = vsel %vm863, %v820, %v906
  %v950 = vsel %vm864, %v821, %v907
  %v951 = vsel %vm865, %v822, %v908
  %v952 = vlaneseq
  %v953 = vand.u32 %v952, 127
  %v954 = vadd.s32 %v953, 128
  %v955 = vadd.s32 %v953, 256
  %v956 = vld [vmem:[%s1] sm:$0xff]
  %v957 = vld [vmem:[%s1 + $0x8] sm:$0xff]
  %v958 = vld [vmem:[%s1 + $0x10] sm:$0xff]
  %v959 = vld [vmem:[%s1 + $0x18] sm:$0xff]
  %v960 = vld [vmem:[%s1 + $0x20] sm:$0xff]
  %v961 = vld [vmem:[%s1 + $0x28] sm:$0xff]
  %v962 = vld [vmem:[%s1 + $0x30] sm:$0x3]
  %963 = vset.pattern.permute.xlu0 0
  %964 = vperm.xlu0 %963, %v956
  %v965 = vpop.permute.xlu0 %964
  %966 = vset.pattern.permute.xlu0 0
  %967 = vperm.xlu0 %966, %v957
  %v968 = vpop.permute.xlu0 %967
  %969 = vset.pattern.permute.xlu0 0
  %970 = vperm.xlu0 %969, %v958
  %v971 = vpop.permute.xlu0 %970
  %972 = vset.pattern.permute.xlu0 0
  %973 = vperm.xlu0 %972, %v959
  %v974 = vpop.permute.xlu0 %973
  %975 = vset.pattern.permute.xlu0 0
  %976 = vperm.xlu0 %975, %v960
  %v977 = vpop.permute.xlu0 %976
  %978 = vset.pattern.permute.xlu0 0
  %979 = vperm.xlu0 %978, %v961
  %v980 = vpop.permute.xlu0 %979
  %981 = vset.pattern.permute.xlu0 0
  %982 = vperm.xlu0 %981, %v962
  %v983 = vpop.permute.xlu0 %982
  %v984 = vsub.s32 %v953, %v965
  %v985 = vsub.s32 %v954, %v965
  %v986 = vsub.s32 %v955, %v965
  %v987 = vsub.s32 %v953, %v968
  %v988 = vsub.s32 %v954, %v968
  %v989 = vsub.s32 %v955, %v968
  %v990 = vsub.s32 %v953, %v971
  %v991 = vsub.s32 %v954, %v971
  %v992 = vsub.s32 %v955, %v971
  %v993 = vsub.s32 %v953, %v974
  %v994 = vsub.s32 %v954, %v974
  %v995 = vsub.s32 %v955, %v974
  %v996 = vsub.s32 %v953, %v977
  %v997 = vsub.s32 %v954, %v977
  %v998 = vsub.s32 %v955, %v977
  %v999 = vsub.s32 %v953, %v980
  %v1000 = vsub.s32 %v954, %v980
  %v1001 = vsub.s32 %v955, %v980
  %v1002 = vsub.s32 %v953, %v983
  %v1003 = vsub.s32 %v954, %v983
  %v1004 = vsub.s32 %v955, %v983
  %vm1005 = vcmp.eq.s32.totalorder %v984, 0
  %vm1006 = vcmp.eq.s32.totalorder %v985, 0
  %vm1007 = vcmp.eq.s32.totalorder %v986, 0
  %vm1008 = vcmp.eq.s32.totalorder %v987, 0
  %vm1009 = vcmp.eq.s32.totalorder %v988, 0
  %vm1010 = vcmp.eq.s32.totalorder %v989, 0
  %vm1011 = vcmp.eq.s32.totalorder %v990, 0
  %vm1012 = vcmp.eq.s32.totalorder %v991, 0
  %vm1013 = vcmp.eq.s32.totalorder %v992, 0
  %vm1014 = vcmp.eq.s32.totalorder %v993, 0
  %vm1015 = vcmp.eq.s32.totalorder %v994, 0
  %vm1016 = vcmp.eq.s32.totalorder %v995, 0
  %vm1017 = vcmp.eq.s32.totalorder %v996, 0
  %vm1018 = vcmp.eq.s32.totalorder %v997, 0
  %vm1019 = vcmp.eq.s32.totalorder %v998, 0
  %vm1020 = vcmp.eq.s32.totalorder %v999, 0
  %vm1021 = vcmp.eq.s32.totalorder %v1000, 0
  %vm1022 = vcmp.eq.s32.totalorder %v1001, 0
  %vm1023 = vcmp.eq.s32.totalorder %v1002, 0
  %vm1024 = vcmp.eq.s32.totalorder %v1003, 0
  %vm1025 = vcmp.eq.s32.totalorder %v1004, 0
  %v1026 = vsel %vm1005, 1.0, 0.0
  %v1027 = vsel %vm1006, 1.0, 0.0
  %v1028 = vsel %vm1007, 1.0, 0.0
  %v1029 = vsel %vm1008, 1.0, 0.0
  %v1030 = vsel %vm1009, 1.0, 0.0
  %v1031 = vsel %vm1010, 1.0, 0.0
  %v1032 = vsel %vm1011, 1.0, 0.0
  %v1033 = vsel %vm1012, 1.0, 0.0
  %v1034 = vsel %vm1013, 1.0, 0.0
  %v1035 = vsel %vm1014, 1.0, 0.0
  %v1036 = vsel %vm1015, 1.0, 0.0
  %v1037 = vsel %vm1016, 1.0, 0.0
  %v1038 = vsel %vm1017, 1.0, 0.0
  %v1039 = vsel %vm1018, 1.0, 0.0
  %v1040 = vsel %vm1019, 1.0, 0.0
  %v1041 = vsel %vm1020, 1.0, 0.0
  %v1042 = vsel %vm1021, 1.0, 0.0
  %v1043 = vsel %vm1022, 1.0, 0.0
  %v1044 = vsel %vm1023, 1.0, 0.0
  %v1045 = vsel %vm1024, 1.0, 0.0
  %v1046 = vsel %vm1025, 1.0, 0.0
  %vm1047 = vcmask 670720
  %v1049 = vsel %vm1047, %v1028, 0
  %v1052 = vsel %vm1047, %v1031, 0
  %v1055 = vsel %vm1047, %v1034, 0
  %v1058 = vsel %vm1047, %v1037, 0
  %v1061 = vsel %vm1047, %v1040, 0
  %v1064 = vsel %vm1047, %v1043, 0
  %v1067 = vsel %vm1047, %v1046, 0
  %vm1069 = vcmask 1041408
  %v1071 = vsel %vm1069, %v951, 0
  %1073 = vmatprep.subr.mxu0 0.0
  %1074 = vmatpush1.msra.mxu0 %v924
  %1075 = vmatprep.subr.mxu0 0.0
  %1076 = vmatpush1.msra.mxu0 %v923
  %1077 = vmatprep.subr.mxu0 0.0
  %1078 = vmatpush1.msra.mxu0 %v922
  %1079 = vmatprep.subr.mxu0 0.0
  %1080 = vmatpush1.msra.mxu0 %v921
  %1081 = vmatprep.subr.mxu0 0.0
  %1082 = vmatpush1.msra.mxu0 %v920
  %1083 = vmatprep.subr.mxu0 0.0
  %1084 = vmatpush1.msra.mxu0 %v919
  %1085 = vmatprep.subr.mxu0 0.0
  %1086 = vmatpush1.msra.mxu0 %v918
  %1087 = vmatprep.subr.mxu0 0.0
  %1088 = vmatpush1.msra.mxu0 %v917
  %1089 = vmatprep.subr.mxu0 0.0
  %1090 = vmatpush1.msra.mxu0 %v916
  %1091 = vmatprep.subr.mxu0 0.0
  %1092 = vmatpush1.msra.mxu0 %v915
  %1093 = vmatprep.subr.mxu0 0.0
  %1094 = vmatpush1.msra.mxu0 %v914
  %1095 = vmatprep.subr.mxu0 0.0
  %1096 = vmatpush1.msra.mxu0 %v913
  %1097 = vmatprep.subr.mxu0 0.0
  %1098 = vmatpush1.msra.mxu0 %v912
  %1099 = vmatprep.subr.mxu0 0.0
  %1100 = vmatpush1.msra.mxu0 %v911
  %1101 = vmatprep.subr.mxu0 0.0
  %1102 = vmatpush1.msra.mxu0 %v910
  %1103 = vmatprep.subr.mxu0 0.0
  %1104 = vmatpush1.msra.mxu0 %v909
  %1105 = vmatprep.subr.mxu0 0.0
  %1106 = vmatpush2.msra.mxu0 %v940
  %1107 = vmatprep.subr.mxu0 0.0
  %1108 = vmatpush2.msra.mxu0 %v939
  %1109 = vmatprep.subr.mxu0 0.0
  %1110 = vmatpush2.msra.mxu0 %v938
  %1111 = vmatprep.subr.mxu0 0.0
  %1112 = vmatpush2.msra.mxu0 %v937
  %1113 = vmatprep.subr.mxu0 0.0
  %1114 = vmatpush2.msra.mxu0 %v936
  %1115 = vmatprep.subr.mxu0 0.0
  %1116 = vmatpush2.msra.mxu0 %v935
  %1117 = vmatprep.subr.mxu0 0.0
  %1118 = vmatpush2.msra.mxu0 %v934
  %1119 = vmatprep.subr.mxu0 0.0
  %1120 = vmatpush2.msra.mxu0 %v933
  %1121 = vmatprep.subr.mxu0 0.0
  %1122 = vmatpush2.msra.mxu0 %v932
  %1123 = vmatprep.subr.mxu0 0.0
  %1124 = vmatpush2.msra.mxu0 %v931
  %1125 = vmatprep.subr.mxu0 0.0
  %1126 = vmatpush2.msra.mxu0 %v930
  %1127 = vmatprep.subr.mxu0 0.0
  %1128 = vmatpush2.msra.mxu0 %v929
  %1129 = vmatprep.subr.mxu0 0.0
  %1130 = vmatpush2.msra.mxu0 %v928
  %1131 = vmatprep.subr.mxu0 0.0
  %1132 = vmatpush2.msra.mxu0 %v927
  %1133 = vmatprep.subr.mxu0 0.0
  %1134 = vmatpush2.msra.mxu0 %v926
  %1135 = vmatprep.subr.mxu0 0.0
  %1136 = vmatpush2.msra.mxu0 %v925
  %1137 = vmatprep.mubr.f32.mxu0 %v1027
  %1138 = vmatmul.mubr.f32.gmra.mxu0 %v1026
  %v1139 = vpop.f32.mrf.mxu0
  %v1140 = vadd.f32 0.0, %v1139
  %v1141 = vpop.f32.mrf.mxu0
  %1142 = vmatprep.mubr.f32.mxu0 %v1030
  %1143 = vmatmul.mubr.f32.gmra.mxu0 %v1029
  %v1144 = vpop.f32.mrf.mxu0
  %v1145 = vadd.f32 0.0, %v1144
  %v1146 = vpop.f32.mrf.mxu0
  %1147 = vmatprep.mubr.f32.mxu0 %v1033
  %1148 = vmatmul.mubr.f32.gmra.mxu0 %v1032
  %v1149 = vpop.f32.mrf.mxu0
  %v1150 = vadd.f32 0.0, %v1149
  %v1151 = vpop.f32.mrf.mxu0
  %1152 = vmatprep.mubr.f32.mxu0 %v1036
  %1153 = vmatmul.mubr.f32.gmra.mxu0 %v1035
  %v1154 = vpop.f32.mrf.mxu0
  %v1155 = vadd.f32 0.0, %v1154
  %v1156 = vpop.f32.mrf.mxu0
  %1157 = vmatprep.mubr.f32.mxu0 %v1039
  %1158 = vmatmul.mubr.f32.gmra.mxu0 %v1038
  %v1159 = vpop.f32.mrf.mxu0
  %v1160 = vadd.f32 0.0, %v1159
  %v1161 = vpop.f32.mrf.mxu0
  %1162 = vmatprep.mubr.f32.mxu0 %v1042
  %1163 = vmatmul.mubr.f32.gmra.mxu0 %v1041
  %v1164 = vpop.f32.mrf.mxu0
  %v1165 = vadd.f32 0.0, %v1164
  %v1166 = vpop.f32.mrf.mxu0
  %1167 = vmatprep.mubr.f32.mxu0 %v1045
  %1168 = vmatmul.mubr.f32.gmra.mxu0 %v1044
  %v1169 = vpop.f32.mrf.mxu0
  %v1170 = vadd.f32 0.0, %v1169
  %v1171 = vpop.f32.mrf.mxu0
  %1172 = vdwg.mxu0
  %1173 = vmatprep.subr.mxu0 0.0
  %1174 = vmatpush1.msra.mxu0 0.0
  %1175 = vmatprep.subr.mxu0 0.0
  %1176 = vmatpush1.msra.mxu0 0.0
  %1177 = vmatprep.subr.mxu0 0.0
  %1178 = vmatpush1.msra.mxu0 0.0
  %1179 = vmatprep.subr.mxu0 0.0
  %1180 = vmatpush1.msra.mxu0 0.0
  %1181 = vmatprep.subr.mxu0 0.0
  %1182 = vmatpush1.msra.mxu0 0.0
  %1183 = vmatprep.subr.mxu0 0.0
  %1184 = vmatpush1.msra.mxu0 %v1071
  %1185 = vmatprep.subr.mxu0 0.0
  %1186 = vmatpush1.msra.mxu0 %v950
  %1187 = vmatprep.subr.mxu0 0.0
  %1188 = vmatpush1.msra.mxu0 %v949
  %1189 = vmatprep.subr.mxu0 0.0
  %1190 = vmatpush1.msra.mxu0 %v948
  %1191 = vmatprep.subr.mxu0 0.0
  %1192 = vmatpush1.msra.mxu0 %v947
  %1193 = vmatprep.subr.mxu0 0.0
  %1194 = vmatpush1.msra.mxu0 %v946
  %1195 = vmatprep.subr.mxu0 0.0
  %1196 = vmatpush1.msra.mxu0 %v945
  %1197 = vmatprep.subr.mxu0 0.0
  %1198 = vmatpush1.msra.mxu0 %v944
  %1199 = vmatprep.subr.mxu0 0.0
  %1200 = vmatpush1.msra.mxu0 %v943
  %1201 = vmatprep.subr.mxu0 0.0
  %1202 = vmatpush1.msra.mxu0 %v942
  %1203 = vmatprep.subr.mxu0 0.0
  %1204 = vmatpush1.msra.mxu0 %v941
  %1205 = vmatprep.subr.mxu0 0.0
  %1206 = vmatpush2.msra.mxu0 0.0
  %1207 = vmatprep.subr.mxu0 0.0
  %1208 = vmatpush2.msra.mxu0 0.0
  %1209 = vmatprep.subr.mxu0 0.0
  %1210 = vmatpush2.msra.mxu0 0.0
  %1211 = vmatprep.subr.mxu0 0.0
  %1212 = vmatpush2.msra.mxu0 0.0
  %1213 = vmatprep.subr.mxu0 0.0
  %1214 = vmatpush2.msra.mxu0 0.0
  %1215 = vmatprep.subr.mxu0 0.0
  %1216 = vmatpush2.msra.mxu0 0.0
  %1217 = vmatprep.subr.mxu0 0.0
  %1218 = vmatpush2.msra.mxu0 0.0
  %1219 = vmatprep.subr.mxu0 0.0
  %1220 = vmatpush2.msra.mxu0 0.0
  %1221 = vmatprep.subr.mxu0 0.0
  %1222 = vmatpush2.msra.mxu0 0.0
  %1223 = vmatprep.subr.mxu0 0.0
  %1224 = vmatpush2.msra.mxu0 0.0
  %1225 = vmatprep.subr.mxu0 0.0
  %1226 = vmatpush2.msra.mxu0 0.0
  %1227 = vmatprep.subr.mxu0 0.0
  %1228 = vmatpush2.msra.mxu0 0.0
  %1229 = vmatprep.subr.mxu0 0.0
  %1230 = vmatpush2.msra.mxu0 0.0
  %1231 = vmatprep.subr.mxu0 0.0
  %1232 = vmatpush2.msra.mxu0 0.0
  %1233 = vmatprep.subr.mxu0 0.0
  %1234 = vmatpush2.msra.mxu0 0.0
  %1235 = vmatprep.subr.mxu0 0.0
  %1236 = vmatpush2.msra.mxu0 0.0
  %1237 = vmatprep.mubr.f32.mxu0 0.0
  %1238 = vmatmul.mubr.f32.gmra.mxu0 %v1049
  %v1239 = vpop.f32.mrf.mxu0
  %v1240 = vadd.f32 %v1140, %v1239
  %v1241 = vpop.f32.mrf.mxu0
  %1242 = vmatprep.mubr.f32.mxu0 0.0
  %1243 = vmatmul.mubr.f32.gmra.mxu0 %v1052
  %v1244 = vpop.f32.mrf.mxu0
  %v1245 = vadd.f32 %v1145, %v1244
  %v1246 = vpop.f32.mrf.mxu0
  %1247 = vmatprep.mubr.f32.mxu0 0.0
  %1248 = vmatmul.mubr.f32.gmra.mxu0 %v1055
  %v1249 = vpop.f32.mrf.mxu0
  %v1250 = vadd.f32 %v1150, %v1249
  %v1251 = vpop.f32.mrf.mxu0
  %1252 = vmatprep.mubr.f32.mxu0 0.0
  %1253 = vmatmul.mubr.f32.gmra.mxu0 %v1058
  %v1254 = vpop.f32.mrf.mxu0
  %v1255 = vadd.f32 %v1155, %v1254
  %v1256 = vpop.f32.mrf.mxu0
  %1257 = vmatprep.mubr.f32.mxu0 0.0
  %1258 = vmatmul.mubr.f32.gmra.mxu0 %v1061
  %v1259 = vpop.f32.mrf.mxu0
  %v1260 = vadd.f32 %v1160, %v1259
  %v1261 = vpop.f32.mrf.mxu0
  %1262 = vmatprep.mubr.f32.mxu0 0.0
  %1263 = vmatmul.mubr.f32.gmra.mxu0 %v1064
  %v1264 = vpop.f32.mrf.mxu0
  %v1265 = vadd.f32 %v1165, %v1264
  %v1266 = vpop.f32.mrf.mxu0
  %1267 = vmatprep.mubr.f32.mxu0 0.0
  %1268 = vmatmul.mubr.f32.gmra.mxu0 %v1067
  %v1269 = vpop.f32.mrf.mxu0
  %v1270 = vadd.f32 %v1170, %v1269
  %v1271 = vpop.f32.mrf.mxu0
  %1272 = vdwg.mxu0
  %v1273 = vld [vmem:[%s4] sm:$0xff]
  %v1274 = vld [vmem:[%s4 + $0x8] sm:$0xff]
  %vm1275 = vcmp.eq.s32.totalorder %v984, 1
  %vm1276 = vcmp.eq.s32.totalorder %v985, 1
  %vm1277 = vcmp.eq.s32.totalorder %v986, 1
  %vm1278 = vcmp.eq.s32.totalorder %v987, 1
  %vm1279 = vcmp.eq.s32.totalorder %v988, 1
  %vm1280 = vcmp.eq.s32.totalorder %v989, 1
  %vm1281 = vcmp.eq.s32.totalorder %v990, 1
  %vm1282 = vcmp.eq.s32.totalorder %v991, 1
  %vm1283 = vcmp.eq.s32.totalorder %v992, 1
  %vm1284 = vcmp.eq.s32.totalorder %v993, 1
  %vm1285 = vcmp.eq.s32.totalorder %v994, 1
  %vm1286 = vcmp.eq.s32.totalorder %v995, 1
  %vm1287 = vcmp.eq.s32.totalorder %v996, 1
  %vm1288 = vcmp.eq.s32.totalorder %v997, 1
  %vm1289 = vcmp.eq.s32.totalorder %v998, 1
  %vm1290 = vcmp.eq.s32.totalorder %v999, 1
  %vm1291 = vcmp.eq.s32.totalorder %v1000, 1
  %vm1292 = vcmp.eq.s32.totalorder %v1001, 1
  %vm1293 = vcmp.eq.s32.totalorder %v1002, 1
  %vm1294 = vcmp.eq.s32.totalorder %v1003, 1
  %vm1295 = vcmp.eq.s32.totalorder %v1004, 1
  %v1296 = vsel %vm1275, 1.0, 0.0
  %v1297 = vsel %vm1276, 1.0, 0.0
  %v1298 = vsel %vm1277, 1.0, 0.0
  %v1299 = vsel %vm1278, 1.0, 0.0
  %v1300 = vsel %vm1279, 1.0, 0.0
  %v1301 = vsel %vm1280, 1.0, 0.0
  %v1302 = vsel %vm1281, 1.0, 0.0
  %v1303 = vsel %vm1282, 1.0, 0.0
  %v1304 = vsel %vm1283, 1.0, 0.0
  %v1305 = vsel %vm1284, 1.0, 0.0
  %v1306 = vsel %vm1285, 1.0, 0.0
  %v1307 = vsel %vm1286, 1.0, 0.0
  %v1308 = vsel %vm1287, 1.0, 0.0
  %v1309 = vsel %vm1288, 1.0, 0.0
  %v1310 = vsel %vm1289, 1.0, 0.0
  %v1311 = vsel %vm1290, 1.0, 0.0
  %v1312 = vsel %vm1291, 1.0, 0.0
  %v1313 = vsel %vm1292, 1.0, 0.0
  %v1314 = vsel %vm1293, 1.0, 0.0
  %v1315 = vsel %vm1294, 1.0, 0.0
  %v1316 = vsel %vm1295, 1.0, 0.0
  %v1318 = vsel %vm1047, %v1298, 0
  %v1321 = vsel %vm1047, %v1301, 0
  %v1324 = vsel %vm1047, %v1304, 0
  %v1327 = vsel %vm1047, %v1307, 0
  %v1330 = vsel %vm1047, %v1310, 0
  %v1333 = vsel %vm1047, %v1313, 0
  %v1336 = vsel %vm1047, %v1316, 0
  %1338 = vmatprep.subr.mxu0 0.0
  %1339 = vmatpush1.msra.mxu0 %v924
  %1340 = vmatprep.subr.mxu0 0.0
  %1341 = vmatpush1.msra.mxu0 %v923
  %1342 = vmatprep.subr.mxu0 0.0
  %1343 = vmatpush1.msra.mxu0 %v922
  %1344 = vmatprep.subr.mxu0 0.0
  %1345 = vmatpush1.msra.mxu0 %v921
  %1346 = vmatprep.subr.mxu0 0.0
  %1347 = vmatpush1.msra.mxu0 %v920
  %1348 = vmatprep.subr.mxu0 0.0
  %1349 = vmatpush1.msra.mxu0 %v919
  %1350 = vmatprep.subr.mxu0 0.0
  %1351 = vmatpush1.msra.mxu0 %v918
  %1352 = vmatprep.subr.mxu0 0.0
  %1353 = vmatpush1.msra.mxu0 %v917
  %1354 = vmatprep.subr.mxu0 0.0
  %1355 = vmatpush1.msra.mxu0 %v916
  %1356 = vmatprep.subr.mxu0 0.0
  %1357 = vmatpush1.msra.mxu0 %v915
  %1358 = vmatprep.subr.mxu0 0.0
  %1359 = vmatpush1.msra.mxu0 %v914
  %1360 = vmatprep.subr.mxu0 0.0
  %1361 = vmatpush1.msra.mxu0 %v913
  %1362 = vmatprep.subr.mxu0 0.0
  %1363 = vmatpush1.msra.mxu0 %v912
  %1364 = vmatprep.subr.mxu0 0.0
  %1365 = vmatpush1.msra.mxu0 %v911
  %1366 = vmatprep.subr.mxu0 0.0
  %1367 = vmatpush1.msra.mxu0 %v910
  %1368 = vmatprep.subr.mxu0 0.0
  %1369 = vmatpush1.msra.mxu0 %v909
  %1370 = vmatprep.subr.mxu0 0.0
  %1371 = vmatpush2.msra.mxu0 %v940
  %1372 = vmatprep.subr.mxu0 0.0
  %1373 = vmatpush2.msra.mxu0 %v939
  %1374 = vmatprep.subr.mxu0 0.0
  %1375 = vmatpush2.msra.mxu0 %v938
  %1376 = vmatprep.subr.mxu0 0.0
  %1377 = vmatpush2.msra.mxu0 %v937
  %1378 = vmatprep.subr.mxu0 0.0
  %1379 = vmatpush2.msra.mxu0 %v936
  %1380 = vmatprep.subr.mxu0 0.0
  %1381 = vmatpush2.msra.mxu0 %v935
  %1382 = vmatprep.subr.mxu0 0.0
  %1383 = vmatpush2.msra.mxu0 %v934
  %1384 = vmatprep.subr.mxu0 0.0
  %1385 = vmatpush2.msra.mxu0 %v933
  %1386 = vmatprep.subr.mxu0 0.0
  %1387 = vmatpush2.msra.mxu0 %v932
  %1388 = vmatprep.subr.mxu0 0.0
  %1389 = vmatpush2.msra.mxu0 %v931
  %1390 = vmatprep.subr.mxu0 0.0
  %1391 = vmatpush2.msra.mxu0 %v930
  %1392 = vmatprep.subr.mxu0 0.0
  %1393 = vmatpush2.msra.mxu0 %v929
  %1394 = vmatprep.subr.mxu0 0.0
  %1395 = vmatpush2.msra.mxu0 %v928
  %1396 = vmatprep.subr.mxu0 0.0
  %1397 = vmatpush2.msra.mxu0 %v927
  %1398 = vmatprep.subr.mxu0 0.0
  %1399 = vmatpush2.msra.mxu0 %v926
  %1400 = vmatprep.subr.mxu0 0.0
  %1401 = vmatpush2.msra.mxu0 %v925
  %1402 = vmatprep.mubr.f32.mxu0 %v1297
  %1403 = vmatmul.mubr.f32.gmra.mxu0 %v1296
  %v1404 = vpop.f32.mrf.mxu0
  %v1405 = vadd.f32 0.0, %v1404
  %v1406 = vpop.f32.mrf.mxu0
  %1407 = vmatprep.mubr.f32.mxu0 %v1300
  %1408 = vmatmul.mubr.f32.gmra.mxu0 %v1299
  %v1409 = vpop.f32.mrf.mxu0
  %v1410 = vadd.f32 0.0, %v1409
  %v1411 = vpop.f32.mrf.mxu0
  %1412 = vmatprep.mubr.f32.mxu0 %v1303
  %1413 = vmatmul.mubr.f32.gmra.mxu0 %v1302
  %v1414 = vpop.f32.mrf.mxu0
  %v1415 = vadd.f32 0.0, %v1414
  %v1416 = vpop.f32.mrf.mxu0
  %1417 = vmatprep.mubr.f32.mxu0 %v1306
  %1418 = vmatmul.mubr.f32.gmra.mxu0 %v1305
  %v1419 = vpop.f32.mrf.mxu0
  %v1420 = vadd.f32 0.0, %v1419
  %v1421 = vpop.f32.mrf.mxu0
  %1422 = vmatprep.mubr.f32.mxu0 %v1309
  %1423 = vmatmul.mubr.f32.gmra.mxu0 %v1308
  %v1424 = vpop.f32.mrf.mxu0
  %v1425 = vadd.f32 0.0, %v1424
  %v1426 = vpop.f32.mrf.mxu0
  %1427 = vmatprep.mubr.f32.mxu0 %v1312
  %1428 = vmatmul.mubr.f32.gmra.mxu0 %v1311
  %v1429 = vpop.f32.mrf.mxu0
  %v1430 = vadd.f32 0.0, %v1429
  %v1431 = vpop.f32.mrf.mxu0
  %1432 = vmatprep.mubr.f32.mxu0 %v1315
  %1433 = vmatmul.mubr.f32.gmra.mxu0 %v1314
  %v1434 = vpop.f32.mrf.mxu0
  %v1435 = vadd.f32 0.0, %v1434
  %v1436 = vpop.f32.mrf.mxu0
  %1437 = vdwg.mxu0
  %1438 = vmatprep.subr.mxu0 0.0
  %1439 = vmatpush1.msra.mxu0 0.0
  %1440 = vmatprep.subr.mxu0 0.0
  %1441 = vmatpush1.msra.mxu0 0.0
  %1442 = vmatprep.subr.mxu0 0.0
  %1443 = vmatpush1.msra.mxu0 0.0
  %1444 = vmatprep.subr.mxu0 0.0
  %1445 = vmatpush1.msra.mxu0 0.0
  %1446 = vmatprep.subr.mxu0 0.0
  %1447 = vmatpush1.msra.mxu0 0.0
  %1448 = vmatprep.subr.mxu0 0.0
  %1449 = vmatpush1.msra.mxu0 %v1071
  %1450 = vmatprep.subr.mxu0 0.0
  %1451 = vmatpush1.msra.mxu0 %v950
  %1452 = vmatprep.subr.mxu0 0.0
  %1453 = vmatpush1.msra.mxu0 %v949
  %1454 = vmatprep.subr.mxu0 0.0
  %1455 = vmatpush1.msra.mxu0 %v948
  %1456 = vmatprep.subr.mxu0 0.0
  %1457 = vmatpush1.msra.mxu0 %v947
  %1458 = vmatprep.subr.mxu0 0.0
  %1459 = vmatpush1.msra.mxu0 %v946
  %1460 = vmatprep.subr.mxu0 0.0
  %1461 = vmatpush1.msra.mxu0 %v945
  %1462 = vmatprep.subr.mxu0 0.0
  %1463 = vmatpush1.msra.mxu0 %v944
  %1464 = vmatprep.subr.mxu0 0.0
  %1465 = vmatpush1.msra.mxu0 %v943
  %1466 = vmatprep.subr.mxu0 0.0
  %1467 = vmatpush1.msra.mxu0 %v942
  %1468 = vmatprep.subr.mxu0 0.0
  %1469 = vmatpush1.msra.mxu0 %v941
  %1470 = vmatprep.subr.mxu0 0.0
  %1471 = vmatpush2.msra.mxu0 0.0
  %1472 = vmatprep.subr.mxu0 0.0
  %1473 = vmatpush2.msra.mxu0 0.0
  %1474 = vmatprep.subr.mxu0 0.0
  %1475 = vmatpush2.msra.mxu0 0.0
  %1476 = vmatprep.subr.mxu0 0.0
  %1477 = vmatpush2.msra.mxu0 0.0
  %1478 = vmatprep.subr.mxu0 0.0
  %1479 = vmatpush2.msra.mxu0 0.0
  %1480 = vmatprep.subr.mxu0 0.0
  %1481 = vmatpush2.msra.mxu0 0.0
  %1482 = vmatprep.subr.mxu0 0.0
  %1483 = vmatpush2.msra.mxu0 0.0
  %1484 = vmatprep.subr.mxu0 0.0
  %1485 = vmatpush2.msra.mxu0 0.0
  %1486 = vmatprep.subr.mxu0 0.0
  %1487 = vmatpush2.msra.mxu0 0.0
  %1488 = vmatprep.subr.mxu0 0.0
  %1489 = vmatpush2.msra.mxu0 0.0
  %1490 = vmatprep.subr.mxu0 0.0
  %1491 = vmatpush2.msra.mxu0 0.0
  %1492 = vmatprep.subr.mxu0 0.0
  %1493 = vmatpush2.msra.mxu0 0.0
  %1494 = vmatprep.subr.mxu0 0.0
  %1495 = vmatpush2.msra.mxu0 0.0
  %1496 = vmatprep.subr.mxu0 0.0
  %1497 = vmatpush2.msra.mxu0 0.0
  %1498 = vmatprep.subr.mxu0 0.0
  %1499 = vmatpush2.msra.mxu0 0.0
  %1500 = vmatprep.subr.mxu0 0.0
  %1501 = vmatpush2.msra.mxu0 0.0
  %1502 = vmatprep.mubr.f32.mxu0 0.0
  %1503 = vmatmul.mubr.f32.gmra.mxu0 %v1318
  %v1504 = vpop.f32.mrf.mxu0
  %v1505 = vadd.f32 %v1405, %v1504
  %v1506 = vpop.f32.mrf.mxu0
  %1507 = vmatprep.mubr.f32.mxu0 0.0
  %1508 = vmatmul.mubr.f32.gmra.mxu0 %v1321
  %v1509 = vpop.f32.mrf.mxu0
  %v1510 = vadd.f32 %v1410, %v1509
  %v1511 = vpop.f32.mrf.mxu0
  %1512 = vmatprep.mubr.f32.mxu0 0.0
  %1513 = vmatmul.mubr.f32.gmra.mxu0 %v1324
  %v1514 = vpop.f32.mrf.mxu0
  %v1515 = vadd.f32 %v1415, %v1514
  %v1516 = vpop.f32.mrf.mxu0
  %1517 = vmatprep.mubr.f32.mxu0 0.0
  %1518 = vmatmul.mubr.f32.gmra.mxu0 %v1327
  %v1519 = vpop.f32.mrf.mxu0
  %v1520 = vadd.f32 %v1420, %v1519
  %v1521 = vpop.f32.mrf.mxu0
  %1522 = vmatprep.mubr.f32.mxu0 0.0
  %1523 = vmatmul.mubr.f32.gmra.mxu0 %v1330
  %v1524 = vpop.f32.mrf.mxu0
  %v1525 = vadd.f32 %v1425, %v1524
  %v1526 = vpop.f32.mrf.mxu0
  %1527 = vmatprep.mubr.f32.mxu0 0.0
  %1528 = vmatmul.mubr.f32.gmra.mxu0 %v1333
  %v1529 = vpop.f32.mrf.mxu0
  %v1530 = vadd.f32 %v1430, %v1529
  %v1531 = vpop.f32.mrf.mxu0
  %1532 = vmatprep.mubr.f32.mxu0 0.0
  %1533 = vmatmul.mubr.f32.gmra.mxu0 %v1336
  %v1534 = vpop.f32.mrf.mxu0
  %v1535 = vadd.f32 %v1435, %v1534
  %v1536 = vpop.f32.mrf.mxu0
  %1537 = vdwg.mxu0
  %v1538 = vld [vmem:[%s4 + $0x10] sm:$0xff]
  %v1539 = vld [vmem:[%s4 + $0x18] sm:$0xff]
  %v1541 = vsel %vm81, %v1505, 0
  %v1544 = vsel %vm81, %v1510, 0
  %v1547 = vsel %vm81, %v1515, 0
  %v1550 = vsel %vm81, %v1520, 0
  %v1553 = vsel %vm81, %v1525, 0
  %v1556 = vsel %vm81, %v1530, 0
  %v1559 = vsel %vm81, %v1535, 0
  %1561 = vmatprep.subr.mxu0 0.0
  %1562 = vmatpush1.msra.mxu0 0.0
  %1563 = vmatprep.subr.mxu0 0.0
  %1564 = vmatpush1.msra.mxu0 0.0
  %1565 = vmatprep.subr.mxu0 0.0
  %1566 = vmatpush1.msra.mxu0 0.0
  %1567 = vmatprep.subr.mxu0 0.0
  %1568 = vmatpush1.msra.mxu0 0.0
  %1569 = vmatprep.subr.mxu0 0.0
  %1570 = vmatpush1.msra.mxu0 0.0
  %1571 = vmatprep.subr.mxu0 0.0
  %1572 = vmatpush1.msra.mxu0 0.0
  %1573 = vmatprep.subr.mxu0 0.0
  %1574 = vmatpush1.msra.mxu0 0.0
  %1575 = vmatprep.subr.mxu0 0.0
  %1576 = vmatpush1.msra.mxu0 0.0
  %1577 = vmatprep.subr.mxu0 0.0
  %1578 = vmatpush1.msra.mxu0 0.0
  %1579 = vmatprep.subr.mxu0 0.0
  %1580 = vmatpush1.msra.mxu0 0.0
  %1581 = vmatprep.subr.mxu0 0.0
  %1582 = vmatpush1.msra.mxu0 0.0
  %1583 = vmatprep.subr.mxu0 0.0
  %1584 = vmatpush1.msra.mxu0 0.0
  %1585 = vmatprep.subr.mxu0 0.0
  %1586 = vmatpush1.msra.mxu0 0.0
  %1587 = vmatprep.subr.mxu0 0.0
  %1588 = vmatpush1.msra.mxu0 0.0
  %1589 = vmatprep.subr.mxu0 0.0
  %1590 = vmatpush1.msra.mxu0 %v1539
  %1591 = vmatprep.subr.mxu0 0.0
  %1592 = vmatpush1.msra.mxu0 %v1538
  %1593 = vmatprep.subr.mxu0 0.0
  %1594 = vmatpush2.msra.mxu0 0.0
  %1595 = vmatprep.subr.mxu0 0.0
  %1596 = vmatpush2.msra.mxu0 0.0
  %1597 = vmatprep.subr.mxu0 0.0
  %1598 = vmatpush2.msra.mxu0 0.0
  %1599 = vmatprep.subr.mxu0 0.0
  %1600 = vmatpush2.msra.mxu0 0.0
  %1601 = vmatprep.subr.mxu0 0.0
  %1602 = vmatpush2.msra.mxu0 0.0
  %1603 = vmatprep.subr.mxu0 0.0
  %1604 = vmatpush2.msra.mxu0 0.0
  %1605 = vmatprep.subr.mxu0 0.0
  %1606 = vmatpush2.msra.mxu0 0.0
  %1607 = vmatprep.subr.mxu0 0.0
  %1608 = vmatpush2.msra.mxu0 0.0
  %1609 = vmatprep.subr.mxu0 0.0
  %1610 = vmatpush2.msra.mxu0 0.0
  %1611 = vmatprep.subr.mxu0 0.0
  %1612 = vmatpush2.msra.mxu0 0.0
  %1613 = vmatprep.subr.mxu0 0.0
  %1614 = vmatpush2.msra.mxu0 0.0
  %1615 = vmatprep.subr.mxu0 0.0
  %1616 = vmatpush2.msra.mxu0 0.0
  %1617 = vmatprep.subr.mxu0 0.0
  %1618 = vmatpush2.msra.mxu0 0.0
  %1619 = vmatprep.subr.mxu0 0.0
  %1620 = vmatpush2.msra.mxu0 0.0
  %1621 = vmatprep.subr.mxu0 0.0
  %1622 = vmatpush2.msra.mxu0 0.0
  %1623 = vmatprep.subr.mxu0 0.0
  %1624 = vmatpush2.msra.mxu0 0.0
  %1625 = vmatprep.mubr.f32.mxu0 0.0
  %1626 = vmatmul.mubr.f32.gmra.mxu0 %v1541
  %v1627 = vpop.f32.mrf.mxu0
  %v1628 = vadd.f32 0.0, %v1627
  %v1629 = vpop.f32.mrf.mxu0
  %1630 = vmatprep.mubr.f32.mxu0 0.0
  %1631 = vmatmul.mubr.f32.gmra.mxu0 %v1544
  %v1632 = vpop.f32.mrf.mxu0
  %v1633 = vadd.f32 0.0, %v1632
  %v1634 = vpop.f32.mrf.mxu0
  %1635 = vmatprep.mubr.f32.mxu0 0.0
  %1636 = vmatmul.mubr.f32.gmra.mxu0 %v1547
  %v1637 = vpop.f32.mrf.mxu0
  %v1638 = vadd.f32 0.0, %v1637
  %v1639 = vpop.f32.mrf.mxu0
  %1640 = vmatprep.mubr.f32.mxu0 0.0
  %1641 = vmatmul.mubr.f32.gmra.mxu0 %v1550
  %v1642 = vpop.f32.mrf.mxu0
  %v1643 = vadd.f32 0.0, %v1642
  %v1644 = vpop.f32.mrf.mxu0
  %1645 = vmatprep.mubr.f32.mxu0 0.0
  %1646 = vmatmul.mubr.f32.gmra.mxu0 %v1553
  %v1647 = vpop.f32.mrf.mxu0
  %v1648 = vadd.f32 0.0, %v1647
  %v1649 = vpop.f32.mrf.mxu0
  %1650 = vmatprep.mubr.f32.mxu0 0.0
  %1651 = vmatmul.mubr.f32.gmra.mxu0 %v1556
  %v1652 = vpop.f32.mrf.mxu0
  %v1653 = vadd.f32 0.0, %v1652
  %v1654 = vpop.f32.mrf.mxu0
  %1655 = vmatprep.mubr.f32.mxu0 0.0
  %1656 = vmatmul.mubr.f32.gmra.mxu0 %v1559
  %v1657 = vpop.f32.mrf.mxu0
  %v1658 = vadd.f32 0.0, %v1657
  %v1659 = vpop.f32.mrf.mxu0
  %1660 = vdwg.mxu0
  %v1662 = vsel %vm81, %v1240, 0
  %v1665 = vsel %vm81, %v1245, 0
  %v1668 = vsel %vm81, %v1250, 0
  %v1671 = vsel %vm81, %v1255, 0
  %v1674 = vsel %vm81, %v1260, 0
  %v1677 = vsel %vm81, %v1265, 0
  %v1680 = vsel %vm81, %v1270, 0
  %1682 = vmatprep.subr.mxu0 0.0
  %1683 = vmatpush1.msra.mxu0 0.0
  %1684 = vmatprep.subr.mxu0 0.0
  %1685 = vmatpush1.msra.mxu0 0.0
  %1686 = vmatprep.subr.mxu0 0.0
  %1687 = vmatpush1.msra.mxu0 0.0
  %1688 = vmatprep.subr.mxu0 0.0
  %1689 = vmatpush1.msra.mxu0 0.0
  %1690 = vmatprep.subr.mxu0 0.0
  %1691 = vmatpush1.msra.mxu0 0.0
  %1692 = vmatprep.subr.mxu0 0.0
  %1693 = vmatpush1.msra.mxu0 0.0
  %1694 = vmatprep.subr.mxu0 0.0
  %1695 = vmatpush1.msra.mxu0 0.0
  %1696 = vmatprep.subr.mxu0 0.0
  %1697 = vmatpush1.msra.mxu0 0.0
  %1698 = vmatprep.subr.mxu0 0.0
  %1699 = vmatpush1.msra.mxu0 0.0
  %1700 = vmatprep.subr.mxu0 0.0
  %1701 = vmatpush1.msra.mxu0 0.0
  %1702 = vmatprep.subr.mxu0 0.0
  %1703 = vmatpush1.msra.mxu0 0.0
  %1704 = vmatprep.subr.mxu0 0.0
  %1705 = vmatpush1.msra.mxu0 0.0
  %1706 = vmatprep.subr.mxu0 0.0
  %1707 = vmatpush1.msra.mxu0 0.0
  %1708 = vmatprep.subr.mxu0 0.0
  %1709 = vmatpush1.msra.mxu0 0.0
  %1710 = vmatprep.subr.mxu0 0.0
  %1711 = vmatpush1.msra.mxu0 %v1274
  %1712 = vmatprep.subr.mxu0 0.0
  %1713 = vmatpush1.msra.mxu0 %v1273
  %1714 = vmatprep.subr.mxu0 0.0
  %1715 = vmatpush2.msra.mxu0 0.0
  %1716 = vmatprep.subr.mxu0 0.0
  %1717 = vmatpush2.msra.mxu0 0.0
  %1718 = vmatprep.subr.mxu0 0.0
  %1719 = vmatpush2.msra.mxu0 0.0
  %1720 = vmatprep.subr.mxu0 0.0
  %1721 = vmatpush2.msra.mxu0 0.0
  %1722 = vmatprep.subr.mxu0 0.0
  %1723 = vmatpush2.msra.mxu0 0.0
  %1724 = vmatprep.subr.mxu0 0.0
  %1725 = vmatpush2.msra.mxu0 0.0
  %1726 = vmatprep.subr.mxu0 0.0
  %1727 = vmatpush2.msra.mxu0 0.0
  %1728 = vmatprep.subr.mxu0 0.0
  %1729 = vmatpush2.msra.mxu0 0.0
  %1730 = vmatprep.subr.mxu0 0.0
  %1731 = vmatpush2.msra.mxu0 0.0
  %1732 = vmatprep.subr.mxu0 0.0
  %1733 = vmatpush2.msra.mxu0 0.0
  %1734 = vmatprep.subr.mxu0 0.0
  %1735 = vmatpush2.msra.mxu0 0.0
  %1736 = vmatprep.subr.mxu0 0.0
  %1737 = vmatpush2.msra.mxu0 0.0
  %1738 = vmatprep.subr.mxu0 0.0
  %1739 = vmatpush2.msra.mxu0 0.0
  %1740 = vmatprep.subr.mxu0 0.0
  %1741 = vmatpush2.msra.mxu0 0.0
  %1742 = vmatprep.subr.mxu0 0.0
  %1743 = vmatpush2.msra.mxu0 0.0
  %1744 = vmatprep.subr.mxu0 0.0
  %1745 = vmatpush2.msra.mxu0 0.0
  %1746 = vmatprep.mubr.f32.mxu0 0.0
  %1747 = vmatmul.mubr.f32.gmra.mxu0 %v1662
  %v1748 = vpop.f32.mrf.mxu0
  %v1749 = vadd.f32 %v1628, %v1748
  %v1750 = vpop.f32.mrf.mxu0
  %1751 = vmatprep.mubr.f32.mxu0 0.0
  %1752 = vmatmul.mubr.f32.gmra.mxu0 %v1665
  %v1753 = vpop.f32.mrf.mxu0
  %v1754 = vadd.f32 %v1633, %v1753
  %v1755 = vpop.f32.mrf.mxu0
  %1756 = vmatprep.mubr.f32.mxu0 0.0
  %1757 = vmatmul.mubr.f32.gmra.mxu0 %v1668
  %v1758 = vpop.f32.mrf.mxu0
  %v1759 = vadd.f32 %v1638, %v1758
  %v1760 = vpop.f32.mrf.mxu0
  %1761 = vmatprep.mubr.f32.mxu0 0.0
  %1762 = vmatmul.mubr.f32.gmra.mxu0 %v1671
  %v1763 = vpop.f32.mrf.mxu0
  %v1764 = vadd.f32 %v1643, %v1763
  %v1765 = vpop.f32.mrf.mxu0
  %1766 = vmatprep.mubr.f32.mxu0 0.0
  %1767 = vmatmul.mubr.f32.gmra.mxu0 %v1674
  %v1768 = vpop.f32.mrf.mxu0
  %v1769 = vadd.f32 %v1648, %v1768
  %v1770 = vpop.f32.mrf.mxu0
  %1771 = vmatprep.mubr.f32.mxu0 0.0
  %1772 = vmatmul.mubr.f32.gmra.mxu0 %v1677
  %v1773 = vpop.f32.mrf.mxu0
  %v1774 = vadd.f32 %v1653, %v1773
  %v1775 = vpop.f32.mrf.mxu0
  %1776 = vmatprep.mubr.f32.mxu0 0.0
  %1777 = vmatmul.mubr.f32.gmra.mxu0 %v1680
  %v1778 = vpop.f32.mrf.mxu0
  %v1779 = vadd.f32 %v1658, %v1778
  %v1780 = vpop.f32.mrf.mxu0
  %1781 = vdwg.mxu0
  %vm1782 = vcmp.eq.s32.totalorder %v984, 2
  %vm1783 = vcmp.eq.s32.totalorder %v985, 2
  %vm1784 = vcmp.eq.s32.totalorder %v986, 2
  %vm1785 = vcmp.eq.s32.totalorder %v987, 2
  %vm1786 = vcmp.eq.s32.totalorder %v988, 2
  %vm1787 = vcmp.eq.s32.totalorder %v989, 2
  %vm1788 = vcmp.eq.s32.totalorder %v990, 2
  %vm1789 = vcmp.eq.s32.totalorder %v991, 2
  %vm1790 = vcmp.eq.s32.totalorder %v992, 2
  %vm1791 = vcmp.eq.s32.totalorder %v993, 2
  %vm1792 = vcmp.eq.s32.totalorder %v994, 2
  %vm1793 = vcmp.eq.s32.totalorder %v995, 2
  %vm1794 = vcmp.eq.s32.totalorder %v996, 2
  %vm1795 = vcmp.eq.s32.totalorder %v997, 2
  %vm1796 = vcmp.eq.s32.totalorder %v998, 2
  %vm1797 = vcmp.eq.s32.totalorder %v999, 2
  %vm1798 = vcmp.eq.s32.totalorder %v1000, 2
  %vm1799 = vcmp.eq.s32.totalorder %v1001, 2
  %vm1800 = vcmp.eq.s32.totalorder %v1002, 2
  %vm1801 = vcmp.eq.s32.totalorder %v1003, 2
  %vm1802 = vcmp.eq.s32.totalorder %v1004, 2
  %v1803 = vsel %vm1782, 1.0, 0.0
  %v1804 = vsel %vm1783, 1.0, 0.0
  %v1805 = vsel %vm1784, 1.0, 0.0
  %v1806 = vsel %vm1785, 1.0, 0.0
  %v1807 = vsel %vm1786, 1.0, 0.0
  %v1808 = vsel %vm1787, 1.0, 0.0
  %v1809 = vsel %vm1788, 1.0, 0.0
  %v1810 = vsel %vm1789, 1.0, 0.0
  %v1811 = vsel %vm1790, 1.0, 0.0
  %v1812 = vsel %vm1791, 1.0, 0.0
  %v1813 = vsel %vm1792, 1.0, 0.0
  %v1814 = vsel %vm1793, 1.0, 0.0
  %v1815 = vsel %vm1794, 1.0, 0.0
  %v1816 = vsel %vm1795, 1.0, 0.0
  %v1817 = vsel %vm1796, 1.0, 0.0
  %v1818 = vsel %vm1797, 1.0, 0.0
  %v1819 = vsel %vm1798, 1.0, 0.0
  %v1820 = vsel %vm1799, 1.0, 0.0
  %v1821 = vsel %vm1800, 1.0, 0.0
  %v1822 = vsel %vm1801, 1.0, 0.0
  %v1823 = vsel %vm1802, 1.0, 0.0
  %v1825 = vsel %vm1047, %v1805, 0
  %v1828 = vsel %vm1047, %v1808, 0
  %v1831 = vsel %vm1047, %v1811, 0
  %v1834 = vsel %vm1047, %v1814, 0
  %v1837 = vsel %vm1047, %v1817, 0
  %v1840 = vsel %vm1047, %v1820, 0
  %v1843 = vsel %vm1047, %v1823, 0
  %1845 = vmatprep.subr.mxu0 0.0
  %1846 = vmatpush1.msra.mxu0 %v924
  %1847 = vmatprep.subr.mxu0 0.0
  %1848 = vmatpush1.msra.mxu0 %v923
  %1849 = vmatprep.subr.mxu0 0.0
  %1850 = vmatpush1.msra.mxu0 %v922
  %1851 = vmatprep.subr.mxu0 0.0
  %1852 = vmatpush1.msra.mxu0 %v921
  %1853 = vmatprep.subr.mxu0 0.0
  %1854 = vmatpush1.msra.mxu0 %v920
  %1855 = vmatprep.subr.mxu0 0.0
  %1856 = vmatpush1.msra.mxu0 %v919
  %1857 = vmatprep.subr.mxu0 0.0
  %1858 = vmatpush1.msra.mxu0 %v918
  %1859 = vmatprep.subr.mxu0 0.0
  %1860 = vmatpush1.msra.mxu0 %v917
  %1861 = vmatprep.subr.mxu0 0.0
  %1862 = vmatpush1.msra.mxu0 %v916
  %1863 = vmatprep.subr.mxu0 0.0
  %1864 = vmatpush1.msra.mxu0 %v915
  %1865 = vmatprep.subr.mxu0 0.0
  %1866 = vmatpush1.msra.mxu0 %v914
  %1867 = vmatprep.subr.mxu0 0.0
  %1868 = vmatpush1.msra.mxu0 %v913
  %1869 = vmatprep.subr.mxu0 0.0
  %1870 = vmatpush1.msra.mxu0 %v912
  %1871 = vmatprep.subr.mxu0 0.0
  %1872 = vmatpush1.msra.mxu0 %v911
  %1873 = vmatprep.subr.mxu0 0.0
  %1874 = vmatpush1.msra.mxu0 %v910
  %1875 = vmatprep.subr.mxu0 0.0
  %1876 = vmatpush1.msra.mxu0 %v909
  %1877 = vmatprep.subr.mxu0 0.0
  %1878 = vmatpush2.msra.mxu0 %v940
  %1879 = vmatprep.subr.mxu0 0.0
  %1880 = vmatpush2.msra.mxu0 %v939
  %1881 = vmatprep.subr.mxu0 0.0
  %1882 = vmatpush2.msra.mxu0 %v938
  %1883 = vmatprep.subr.mxu0 0.0
  %1884 = vmatpush2.msra.mxu0 %v937
  %1885 = vmatprep.subr.mxu0 0.0
  %1886 = vmatpush2.msra.mxu0 %v936
  %1887 = vmatprep.subr.mxu0 0.0
  %1888 = vmatpush2.msra.mxu0 %v935
  %1889 = vmatprep.subr.mxu0 0.0
  %1890 = vmatpush2.msra.mxu0 %v934
  %1891 = vmatprep.subr.mxu0 0.0
  %1892 = vmatpush2.msra.mxu0 %v933
  %1893 = vmatprep.subr.mxu0 0.0
  %1894 = vmatpush2.msra.mxu0 %v932
  %1895 = vmatprep.subr.mxu0 0.0
  %1896 = vmatpush2.msra.mxu0 %v931
  %1897 = vmatprep.subr.mxu0 0.0
  %1898 = vmatpush2.msra.mxu0 %v930
  %1899 = vmatprep.subr.mxu0 0.0
  %1900 = vmatpush2.msra.mxu0 %v929
  %1901 = vmatprep.subr.mxu0 0.0
  %1902 = vmatpush2.msra.mxu0 %v928
  %1903 = vmatprep.subr.mxu0 0.0
  %1904 = vmatpush2.msra.mxu0 %v927
  %1905 = vmatprep.subr.mxu0 0.0
  %1906 = vmatpush2.msra.mxu0 %v926
  %1907 = vmatprep.subr.mxu0 0.0
  %1908 = vmatpush2.msra.mxu0 %v925
  %1909 = vmatprep.mubr.f32.mxu0 %v1804
  %1910 = vmatmul.mubr.f32.gmra.mxu0 %v1803
  %v1911 = vpop.f32.mrf.mxu0
  %v1912 = vadd.f32 0.0, %v1911
  %v1913 = vpop.f32.mrf.mxu0
  %1914 = vmatprep.mubr.f32.mxu0 %v1807
  %1915 = vmatmul.mubr.f32.gmra.mxu0 %v1806
  %v1916 = vpop.f32.mrf.mxu0
  %v1917 = vadd.f32 0.0, %v1916
  %v1918 = vpop.f32.mrf.mxu0
  %1919 = vmatprep.mubr.f32.mxu0 %v1810
  %1920 = vmatmul.mubr.f32.gmra.mxu0 %v1809
  %v1921 = vpop.f32.mrf.mxu0
  %v1922 = vadd.f32 0.0, %v1921
  %v1923 = vpop.f32.mrf.mxu0
  %1924 = vmatprep.mubr.f32.mxu0 %v1813
  %1925 = vmatmul.mubr.f32.gmra.mxu0 %v1812
  %v1926 = vpop.f32.mrf.mxu0
  %v1927 = vadd.f32 0.0, %v1926
  %v1928 = vpop.f32.mrf.mxu0
  %1929 = vmatprep.mubr.f32.mxu0 %v1816
  %1930 = vmatmul.mubr.f32.gmra.mxu0 %v1815
  %v1931 = vpop.f32.mrf.mxu0
  %v1932 = vadd.f32 0.0, %v1931
  %v1933 = vpop.f32.mrf.mxu0
  %1934 = vmatprep.mubr.f32.mxu0 %v1819
  %1935 = vmatmul.mubr.f32.gmra.mxu0 %v1818
  %v1936 = vpop.f32.mrf.mxu0
  %v1937 = vadd.f32 0.0, %v1936
  %v1938 = vpop.f32.mrf.mxu0
  %1939 = vmatprep.mubr.f32.mxu0 %v1822
  %1940 = vmatmul.mubr.f32.gmra.mxu0 %v1821
  %v1941 = vpop.f32.mrf.mxu0
  %v1942 = vadd.f32 0.0, %v1941
  %v1943 = vpop.f32.mrf.mxu0
  %1944 = vdwg.mxu0
  %1945 = vmatprep.subr.mxu0 0.0
  %1946 = vmatpush1.msra.mxu0 0.0
  %1947 = vmatprep.subr.mxu0 0.0
  %1948 = vmatpush1.msra.mxu0 0.0
  %1949 = vmatprep.subr.mxu0 0.0
  %1950 = vmatpush1.msra.mxu0 0.0
  %1951 = vmatprep.subr.mxu0 0.0
  %1952 = vmatpush1.msra.mxu0 0.0
  %1953 = vmatprep.subr.mxu0 0.0
  %1954 = vmatpush1.msra.mxu0 0.0
  %1955 = vmatprep.subr.mxu0 0.0
  %1956 = vmatpush1.msra.mxu0 %v1071
  %1957 = vmatprep.subr.mxu0 0.0
  %1958 = vmatpush1.msra.mxu0 %v950
  %1959 = vmatprep.subr.mxu0 0.0
  %1960 = vmatpush1.msra.mxu0 %v949
  %1961 = vmatprep.subr.mxu0 0.0
  %1962 = vmatpush1.msra.mxu0 %v948
  %1963 = vmatprep.subr.mxu0 0.0
  %1964 = vmatpush1.msra.mxu0 %v947
  %1965 = vmatprep.subr.mxu0 0.0
  %1966 = vmatpush1.msra.mxu0 %v946
  %1967 = vmatprep.subr.mxu0 0.0
  %1968 = vmatpush1.msra.mxu0 %v945
  %1969 = vmatprep.subr.mxu0 0.0
  %1970 = vmatpush1.msra.mxu0 %v944
  %1971 = vmatprep.subr.mxu0 0.0
  %1972 = vmatpush1.msra.mxu0 %v943
  %1973 = vmatprep.subr.mxu0 0.0
  %1974 = vmatpush1.msra.mxu0 %v942
  %1975 = vmatprep.subr.mxu0 0.0
  %1976 = vmatpush1.msra.mxu0 %v941
  %1977 = vmatprep.subr.mxu0 0.0
  %1978 = vmatpush2.msra.mxu0 0.0
  %1979 = vmatprep.subr.mxu0 0.0
  %1980 = vmatpush2.msra.mxu0 0.0
  %1981 = vmatprep.subr.mxu0 0.0
  %1982 = vmatpush2.msra.mxu0 0.0
  %1983 = vmatprep.subr.mxu0 0.0
  %1984 = vmatpush2.msra.mxu0 0.0
  %1985 = vmatprep.subr.mxu0 0.0
  %1986 = vmatpush2.msra.mxu0 0.0
  %1987 = vmatprep.subr.mxu0 0.0
  %1988 = vmatpush2.msra.mxu0 0.0
  %1989 = vmatprep.subr.mxu0 0.0
  %1990 = vmatpush2.msra.mxu0 0.0
  %1991 = vmatprep.subr.mxu0 0.0
  %1992 = vmatpush2.msra.mxu0 0.0
  %1993 = vmatprep.subr.mxu0 0.0
  %1994 = vmatpush2.msra.mxu0 0.0
  %1995 = vmatprep.subr.mxu0 0.0
  %1996 = vmatpush2.msra.mxu0 0.0
  %1997 = vmatprep.subr.mxu0 0.0
  %1998 = vmatpush2.msra.mxu0 0.0
  %1999 = vmatprep.subr.mxu0 0.0
  %2000 = vmatpush2.msra.mxu0 0.0
  %2001 = vmatprep.subr.mxu0 0.0
  %2002 = vmatpush2.msra.mxu0 0.0
  %2003 = vmatprep.subr.mxu0 0.0
  %2004 = vmatpush2.msra.mxu0 0.0
  %2005 = vmatprep.subr.mxu0 0.0
  %2006 = vmatpush2.msra.mxu0 0.0
  %2007 = vmatprep.subr.mxu0 0.0
  %2008 = vmatpush2.msra.mxu0 0.0
  %2009 = vmatprep.mubr.f32.mxu0 0.0
  %2010 = vmatmul.mubr.f32.gmra.mxu0 %v1825
  %v2011 = vpop.f32.mrf.mxu0
  %v2012 = vadd.f32 %v1912, %v2011
  %v2013 = vpop.f32.mrf.mxu0
  %2014 = vmatprep.mubr.f32.mxu0 0.0
  %2015 = vmatmul.mubr.f32.gmra.mxu0 %v1828
  %v2016 = vpop.f32.mrf.mxu0
  %v2017 = vadd.f32 %v1917, %v2016
  %v2018 = vpop.f32.mrf.mxu0
  %2019 = vmatprep.mubr.f32.mxu0 0.0
  %2020 = vmatmul.mubr.f32.gmra.mxu0 %v1831
  %v2021 = vpop.f32.mrf.mxu0
  %v2022 = vadd.f32 %v1922, %v2021
  %v2023 = vpop.f32.mrf.mxu0
  %2024 = vmatprep.mubr.f32.mxu0 0.0
  %2025 = vmatmul.mubr.f32.gmra.mxu0 %v1834
  %v2026 = vpop.f32.mrf.mxu0
  %v2027 = vadd.f32 %v1927, %v2026
  %v2028 = vpop.f32.mrf.mxu0
  %2029 = vmatprep.mubr.f32.mxu0 0.0
  %2030 = vmatmul.mubr.f32.gmra.mxu0 %v1837
  %v2031 = vpop.f32.mrf.mxu0
  %v2032 = vadd.f32 %v1932, %v2031
  %v2033 = vpop.f32.mrf.mxu0
  %2034 = vmatprep.mubr.f32.mxu0 0.0
  %2035 = vmatmul.mubr.f32.gmra.mxu0 %v1840
  %v2036 = vpop.f32.mrf.mxu0
  %v2037 = vadd.f32 %v1937, %v2036
  %v2038 = vpop.f32.mrf.mxu0
  %2039 = vmatprep.mubr.f32.mxu0 0.0
  %2040 = vmatmul.mubr.f32.gmra.mxu0 %v1843
  %v2041 = vpop.f32.mrf.mxu0
  %v2042 = vadd.f32 %v1942, %v2041
  %v2043 = vpop.f32.mrf.mxu0
  %2044 = vdwg.mxu0
  %v2045 = vld [vmem:[%s4 + $0x20] sm:$0xff]
  %v2046 = vld [vmem:[%s4 + $0x28] sm:$0xff]
  %v2048 = vsel %vm81, %v2012, 0
  %v2051 = vsel %vm81, %v2017, 0
  %v2054 = vsel %vm81, %v2022, 0
  %v2057 = vsel %vm81, %v2027, 0
  %v2060 = vsel %vm81, %v2032, 0
  %v2063 = vsel %vm81, %v2037, 0
  %v2066 = vsel %vm81, %v2042, 0
  %2068 = vmatprep.subr.mxu0 0.0
  %2069 = vmatpush1.msra.mxu0 0.0
  %2070 = vmatprep.subr.mxu0 0.0
  %2071 = vmatpush1.msra.mxu0 0.0
  %2072 = vmatprep.subr.mxu0 0.0
  %2073 = vmatpush1.msra.mxu0 0.0
  %2074 = vmatprep.subr.mxu0 0.0
  %2075 = vmatpush1.msra.mxu0 0.0
  %2076 = vmatprep.subr.mxu0 0.0
  %2077 = vmatpush1.msra.mxu0 0.0
  %2078 = vmatprep.subr.mxu0 0.0
  %2079 = vmatpush1.msra.mxu0 0.0
  %2080 = vmatprep.subr.mxu0 0.0
  %2081 = vmatpush1.msra.mxu0 0.0
  %2082 = vmatprep.subr.mxu0 0.0
  %2083 = vmatpush1.msra.mxu0 0.0
  %2084 = vmatprep.subr.mxu0 0.0
  %2085 = vmatpush1.msra.mxu0 0.0
  %2086 = vmatprep.subr.mxu0 0.0
  %2087 = vmatpush1.msra.mxu0 0.0
  %2088 = vmatprep.subr.mxu0 0.0
  %2089 = vmatpush1.msra.mxu0 0.0
  %2090 = vmatprep.subr.mxu0 0.0
  %2091 = vmatpush1.msra.mxu0 0.0
  %2092 = vmatprep.subr.mxu0 0.0
  %2093 = vmatpush1.msra.mxu0 0.0
  %2094 = vmatprep.subr.mxu0 0.0
  %2095 = vmatpush1.msra.mxu0 0.0
  %2096 = vmatprep.subr.mxu0 0.0
  %2097 = vmatpush1.msra.mxu0 %v2046
  %2098 = vmatprep.subr.mxu0 0.0
  %2099 = vmatpush1.msra.mxu0 %v2045
  %2100 = vmatprep.subr.mxu0 0.0
  %2101 = vmatpush2.msra.mxu0 0.0
  %2102 = vmatprep.subr.mxu0 0.0
  %2103 = vmatpush2.msra.mxu0 0.0
  %2104 = vmatprep.subr.mxu0 0.0
  %2105 = vmatpush2.msra.mxu0 0.0
  %2106 = vmatprep.subr.mxu0 0.0
  %2107 = vmatpush2.msra.mxu0 0.0
  %2108 = vmatprep.subr.mxu0 0.0
  %2109 = vmatpush2.msra.mxu0 0.0
  %2110 = vmatprep.subr.mxu0 0.0
  %2111 = vmatpush2.msra.mxu0 0.0
  %2112 = vmatprep.subr.mxu0 0.0
  %2113 = vmatpush2.msra.mxu0 0.0
  %2114 = vmatprep.subr.mxu0 0.0
  %2115 = vmatpush2.msra.mxu0 0.0
  %2116 = vmatprep.subr.mxu0 0.0
  %2117 = vmatpush2.msra.mxu0 0.0
  %2118 = vmatprep.subr.mxu0 0.0
  %2119 = vmatpush2.msra.mxu0 0.0
  %2120 = vmatprep.subr.mxu0 0.0
  %2121 = vmatpush2.msra.mxu0 0.0
  %2122 = vmatprep.subr.mxu0 0.0
  %2123 = vmatpush2.msra.mxu0 0.0
  %2124 = vmatprep.subr.mxu0 0.0
  %2125 = vmatpush2.msra.mxu0 0.0
  %2126 = vmatprep.subr.mxu0 0.0
  %2127 = vmatpush2.msra.mxu0 0.0
  %2128 = vmatprep.subr.mxu0 0.0
  %2129 = vmatpush2.msra.mxu0 0.0
  %2130 = vmatprep.subr.mxu0 0.0
  %2131 = vmatpush2.msra.mxu0 0.0
  %2132 = vmatprep.mubr.f32.mxu0 0.0
  %2133 = vmatmul.mubr.f32.gmra.mxu0 %v2048
  %v2134 = vpop.f32.mrf.mxu0
  %v2135 = vadd.f32 0.0, %v2134
  %v2136 = vpop.f32.mrf.mxu0
  %2137 = vmatprep.mubr.f32.mxu0 0.0
  %2138 = vmatmul.mubr.f32.gmra.mxu0 %v2051
  %v2139 = vpop.f32.mrf.mxu0
  %v2140 = vadd.f32 0.0, %v2139
  %v2141 = vpop.f32.mrf.mxu0
  %2142 = vmatprep.mubr.f32.mxu0 0.0
  %2143 = vmatmul.mubr.f32.gmra.mxu0 %v2054
  %v2144 = vpop.f32.mrf.mxu0
  %v2145 = vadd.f32 0.0, %v2144
  %v2146 = vpop.f32.mrf.mxu0
  %2147 = vmatprep.mubr.f32.mxu0 0.0
  %2148 = vmatmul.mubr.f32.gmra.mxu0 %v2057
  %v2149 = vpop.f32.mrf.mxu0
  %v2150 = vadd.f32 0.0, %v2149
  %v2151 = vpop.f32.mrf.mxu0
  %2152 = vmatprep.mubr.f32.mxu0 0.0
  %2153 = vmatmul.mubr.f32.gmra.mxu0 %v2060
  %v2154 = vpop.f32.mrf.mxu0
  %v2155 = vadd.f32 0.0, %v2154
  %v2156 = vpop.f32.mrf.mxu0
  %2157 = vmatprep.mubr.f32.mxu0 0.0
  %2158 = vmatmul.mubr.f32.gmra.mxu0 %v2063
  %v2159 = vpop.f32.mrf.mxu0
  %v2160 = vadd.f32 0.0, %v2159
  %v2161 = vpop.f32.mrf.mxu0
  %2162 = vmatprep.mubr.f32.mxu0 0.0
  %2163 = vmatmul.mubr.f32.gmra.mxu0 %v2066
  %v2164 = vpop.f32.mrf.mxu0
  %v2165 = vadd.f32 0.0, %v2164
  %v2166 = vpop.f32.mrf.mxu0
  %2167 = vdwg.mxu0
  %v2168 = vadd.f32 %v1749, %v2135
  %v2169 = vadd.f32 %v1754, %v2140
  %v2170 = vadd.f32 %v1759, %v2145
  %v2171 = vadd.f32 %v1764, %v2150
  %v2172 = vadd.f32 %v1769, %v2155
  %v2173 = vadd.f32 %v1774, %v2160
  %v2174 = vadd.f32 %v1779, %v2165
  %vm2175 = vcmp.eq.s32.totalorder %v984, 3
  %vm2176 = vcmp.eq.s32.totalorder %v985, 3
  %vm2177 = vcmp.eq.s32.totalorder %v986, 3
  %vm2178 = vcmp.eq.s32.totalorder %v987, 3
  %vm2179 = vcmp.eq.s32.totalorder %v988, 3
  %vm2180 = vcmp.eq.s32.totalorder %v989, 3
  %vm2181 = vcmp.eq.s32.totalorder %v990, 3
  %vm2182 = vcmp.eq.s32.totalorder %v991, 3
  %vm2183 = vcmp.eq.s32.totalorder %v992, 3
  %vm2184 = vcmp.eq.s32.totalorder %v993, 3
  %vm2185 = vcmp.eq.s32.totalorder %v994, 3
  %vm2186 = vcmp.eq.s32.totalorder %v995, 3
  %vm2187 = vcmp.eq.s32.totalorder %v996, 3
  %vm2188 = vcmp.eq.s32.totalorder %v997, 3
  %vm2189 = vcmp.eq.s32.totalorder %v998, 3
  %vm2190 = vcmp.eq.s32.totalorder %v999, 3
  %vm2191 = vcmp.eq.s32.totalorder %v1000, 3
  %vm2192 = vcmp.eq.s32.totalorder %v1001, 3
  %vm2193 = vcmp.eq.s32.totalorder %v1002, 3
  %vm2194 = vcmp.eq.s32.totalorder %v1003, 3
  %vm2195 = vcmp.eq.s32.totalorder %v1004, 3
  %v2196 = vsel %vm2175, 1.0, 0.0
  %v2197 = vsel %vm2176, 1.0, 0.0
  %v2198 = vsel %vm2177, 1.0, 0.0
  %v2199 = vsel %vm2178, 1.0, 0.0
  %v2200 = vsel %vm2179, 1.0, 0.0
  %v2201 = vsel %vm2180, 1.0, 0.0
  %v2202 = vsel %vm2181, 1.0, 0.0
  %v2203 = vsel %vm2182, 1.0, 0.0
  %v2204 = vsel %vm2183, 1.0, 0.0
  %v2205 = vsel %vm2184, 1.0, 0.0
  %v2206 = vsel %vm2185, 1.0, 0.0
  %v2207 = vsel %vm2186, 1.0, 0.0
  %v2208 = vsel %vm2187, 1.0, 0.0
  %v2209 = vsel %vm2188, 1.0, 0.0
  %v2210 = vsel %vm2189, 1.0, 0.0
  %v2211 = vsel %vm2190, 1.0, 0.0
  %v2212 = vsel %vm2191, 1.0, 0.0
  %v2213 = vsel %vm2192, 1.0, 0.0
  %v2214 = vsel %vm2193, 1.0, 0.0
  %v2215 = vsel %vm2194, 1.0, 0.0
  %v2216 = vsel %vm2195, 1.0, 0.0
  %v2218 = vsel %vm1047, %v2198, 0
  %v2221 = vsel %vm1047, %v2201, 0
  %v2224 = vsel %vm1047, %v2204, 0
  %v2227 = vsel %vm1047, %v2207, 0
  %v2230 = vsel %vm1047, %v2210, 0
  %v2233 = vsel %vm1047, %v2213, 0
  %v2236 = vsel %vm1047, %v2216, 0
  %2238 = vmatprep.subr.mxu0 0.0
  %2239 = vmatpush1.msra.mxu0 %v924
  %2240 = vmatprep.subr.mxu0 0.0
  %2241 = vmatpush1.msra.mxu0 %v923
  %2242 = vmatprep.subr.mxu0 0.0
  %2243 = vmatpush1.msra.mxu0 %v922
  %2244 = vmatprep.subr.mxu0 0.0
  %2245 = vmatpush1.msra.mxu0 %v921
  %2246 = vmatprep.subr.mxu0 0.0
  %2247 = vmatpush1.msra.mxu0 %v920
  %2248 = vmatprep.subr.mxu0 0.0
  %2249 = vmatpush1.msra.mxu0 %v919
  %2250 = vmatprep.subr.mxu0 0.0
  %2251 = vmatpush1.msra.mxu0 %v918
  %2252 = vmatprep.subr.mxu0 0.0
  %2253 = vmatpush1.msra.mxu0 %v917
  %2254 = vmatprep.subr.mxu0 0.0
  %2255 = vmatpush1.msra.mxu0 %v916
  %2256 = vmatprep.subr.mxu0 0.0
  %2257 = vmatpush1.msra.mxu0 %v915
  %2258 = vmatprep.subr.mxu0 0.0
  %2259 = vmatpush1.msra.mxu0 %v914
  %2260 = vmatprep.subr.mxu0 0.0
  %2261 = vmatpush1.msra.mxu0 %v913
  %2262 = vmatprep.subr.mxu0 0.0
  %2263 = vmatpush1.msra.mxu0 %v912
  %2264 = vmatprep.subr.mxu0 0.0
  %2265 = vmatpush1.msra.mxu0 %v911
  %2266 = vmatprep.subr.mxu0 0.0
  %2267 = vmatpush1.msra.mxu0 %v910
  %2268 = vmatprep.subr.mxu0 0.0
  %2269 = vmatpush1.msra.mxu0 %v909
  %2270 = vmatprep.subr.mxu0 0.0
  %2271 = vmatpush2.msra.mxu0 %v940
  %2272 = vmatprep.subr.mxu0 0.0
  %2273 = vmatpush2.msra.mxu0 %v939
  %2274 = vmatprep.subr.mxu0 0.0
  %2275 = vmatpush2.msra.mxu0 %v938
  %2276 = vmatprep.subr.mxu0 0.0
  %2277 = vmatpush2.msra.mxu0 %v937
  %2278 = vmatprep.subr.mxu0 0.0
  %2279 = vmatpush2.msra.mxu0 %v936
  %2280 = vmatprep.subr.mxu0 0.0
  %2281 = vmatpush2.msra.mxu0 %v935
  %2282 = vmatprep.subr.mxu0 0.0
  %2283 = vmatpush2.msra.mxu0 %v934
  %2284 = vmatprep.subr.mxu0 0.0
  %2285 = vmatpush2.msra.mxu0 %v933
  %2286 = vmatprep.subr.mxu0 0.0
  %2287 = vmatpush2.msra.mxu0 %v932
  %2288 = vmatprep.subr.mxu0 0.0
  %2289 = vmatpush2.msra.mxu0 %v931
  %2290 = vmatprep.subr.mxu0 0.0
  %2291 = vmatpush2.msra.mxu0 %v930
  %2292 = vmatprep.subr.mxu0 0.0
  %2293 = vmatpush2.msra.mxu0 %v929
  %2294 = vmatprep.subr.mxu0 0.0
  %2295 = vmatpush2.msra.mxu0 %v928
  %2296 = vmatprep.subr.mxu0 0.0
  %2297 = vmatpush2.msra.mxu0 %v927
  %2298 = vmatprep.subr.mxu0 0.0
  %2299 = vmatpush2.msra.mxu0 %v926
  %2300 = vmatprep.subr.mxu0 0.0
  %2301 = vmatpush2.msra.mxu0 %v925
  %2302 = vmatprep.mubr.f32.mxu0 %v2197
  %2303 = vmatmul.mubr.f32.gmra.mxu0 %v2196
  %v2304 = vpop.f32.mrf.mxu0
  %v2305 = vadd.f32 0.0, %v2304
  %v2306 = vpop.f32.mrf.mxu0
  %2307 = vmatprep.mubr.f32.mxu0 %v2200
  %2308 = vmatmul.mubr.f32.gmra.mxu0 %v2199
  %v2309 = vpop.f32.mrf.mxu0
  %v2310 = vadd.f32 0.0, %v2309
  %v2311 = vpop.f32.mrf.mxu0
  %2312 = vmatprep.mubr.f32.mxu0 %v2203
  %2313 = vmatmul.mubr.f32.gmra.mxu0 %v2202
  %v2314 = vpop.f32.mrf.mxu0
  %v2315 = vadd.f32 0.0, %v2314
  %v2316 = vpop.f32.mrf.mxu0
  %2317 = vmatprep.mubr.f32.mxu0 %v2206
  %2318 = vmatmul.mubr.f32.gmra.mxu0 %v2205
  %v2319 = vpop.f32.mrf.mxu0
  %v2320 = vadd.f32 0.0, %v2319
  %v2321 = vpop.f32.mrf.mxu0
  %2322 = vmatprep.mubr.f32.mxu0 %v2209
  %2323 = vmatmul.mubr.f32.gmra.mxu0 %v2208
  %v2324 = vpop.f32.mrf.mxu0
  %v2325 = vadd.f32 0.0, %v2324
  %v2326 = vpop.f32.mrf.mxu0
  %2327 = vmatprep.mubr.f32.mxu0 %v2212
  %2328 = vmatmul.mubr.f32.gmra.mxu0 %v2211
  %v2329 = vpop.f32.mrf.mxu0
  %v2330 = vadd.f32 0.0, %v2329
  %v2331 = vpop.f32.mrf.mxu0
  %2332 = vmatprep.mubr.f32.mxu0 %v2215
  %2333 = vmatmul.mubr.f32.gmra.mxu0 %v2214
  %v2334 = vpop.f32.mrf.mxu0
  %v2335 = vadd.f32 0.0, %v2334
  %v2336 = vpop.f32.mrf.mxu0
  %2337 = vdwg.mxu0
  %2338 = vmatprep.subr.mxu0 0.0
  %2339 = vmatpush1.msra.mxu0 0.0
  %2340 = vmatprep.subr.mxu0 0.0
  %2341 = vmatpush1.msra.mxu0 0.0
  %2342 = vmatprep.subr.mxu0 0.0
  %2343 = vmatpush1.msra.mxu0 0.0
  %2344 = vmatprep.subr.mxu0 0.0
  %2345 = vmatpush1.msra.mxu0 0.0
  %2346 = vmatprep.subr.mxu0 0.0
  %2347 = vmatpush1.msra.mxu0 0.0
  %2348 = vmatprep.subr.mxu0 0.0
  %2349 = vmatpush1.msra.mxu0 %v1071
  %2350 = vmatprep.subr.mxu0 0.0
  %2351 = vmatpush1.msra.mxu0 %v950
  %2352 = vmatprep.subr.mxu0 0.0
  %2353 = vmatpush1.msra.mxu0 %v949
  %2354 = vmatprep.subr.mxu0 0.0
  %2355 = vmatpush1.msra.mxu0 %v948
  %2356 = vmatprep.subr.mxu0 0.0
  %2357 = vmatpush1.msra.mxu0 %v947
  %2358 = vmatprep.subr.mxu0 0.0
  %2359 = vmatpush1.msra.mxu0 %v946
  %2360 = vmatprep.subr.mxu0 0.0
  %2361 = vmatpush1.msra.mxu0 %v945
  %2362 = vmatprep.subr.mxu0 0.0
  %2363 = vmatpush1.msra.mxu0 %v944
  %2364 = vmatprep.subr.mxu0 0.0
  %2365 = vmatpush1.msra.mxu0 %v943
  %2366 = vmatprep.subr.mxu0 0.0
  %2367 = vmatpush1.msra.mxu0 %v942
  %2368 = vmatprep.subr.mxu0 0.0
  %2369 = vmatpush1.msra.mxu0 %v941
  %2370 = vmatprep.subr.mxu0 0.0
  %2371 = vmatpush2.msra.mxu0 0.0
  %2372 = vmatprep.subr.mxu0 0.0
  %2373 = vmatpush2.msra.mxu0 0.0
  %2374 = vmatprep.subr.mxu0 0.0
  %2375 = vmatpush2.msra.mxu0 0.0
  %2376 = vmatprep.subr.mxu0 0.0
  %2377 = vmatpush2.msra.mxu0 0.0
  %2378 = vmatprep.subr.mxu0 0.0
  %2379 = vmatpush2.msra.mxu0 0.0
  %2380 = vmatprep.subr.mxu0 0.0
  %2381 = vmatpush2.msra.mxu0 0.0
  %2382 = vmatprep.subr.mxu0 0.0
  %2383 = vmatpush2.msra.mxu0 0.0
  %2384 = vmatprep.subr.mxu0 0.0
  %2385 = vmatpush2.msra.mxu0 0.0
  %2386 = vmatprep.subr.mxu0 0.0
  %2387 = vmatpush2.msra.mxu0 0.0
  %2388 = vmatprep.subr.mxu0 0.0
  %2389 = vmatpush2.msra.mxu0 0.0
  %2390 = vmatprep.subr.mxu0 0.0
  %2391 = vmatpush2.msra.mxu0 0.0
  %2392 = vmatprep.subr.mxu0 0.0
  %2393 = vmatpush2.msra.mxu0 0.0
  %2394 = vmatprep.subr.mxu0 0.0
  %2395 = vmatpush2.msra.mxu0 0.0
  %2396 = vmatprep.subr.mxu0 0.0
  %2397 = vmatpush2.msra.mxu0 0.0
  %2398 = vmatprep.subr.mxu0 0.0
  %2399 = vmatpush2.msra.mxu0 0.0
  %2400 = vmatprep.subr.mxu0 0.0
  %2401 = vmatpush2.msra.mxu0 0.0
  %2402 = vmatprep.mubr.f32.mxu0 0.0
  %2403 = vmatmul.mubr.f32.gmra.mxu0 %v2218
  %v2404 = vpop.f32.mrf.mxu0
  %v2405 = vadd.f32 %v2305, %v2404
  %v2406 = vpop.f32.mrf.mxu0
  %2407 = vmatprep.mubr.f32.mxu0 0.0
  %2408 = vmatmul.mubr.f32.gmra.mxu0 %v2221
  %v2409 = vpop.f32.mrf.mxu0
  %v2410 = vadd.f32 %v2310, %v2409
  %v2411 = vpop.f32.mrf.mxu0
  %2412 = vmatprep.mubr.f32.mxu0 0.0
  %2413 = vmatmul.mubr.f32.gmra.mxu0 %v2224
  %v2414 = vpop.f32.mrf.mxu0
  %v2415 = vadd.f32 %v2315, %v2414
  %v2416 = vpop.f32.mrf.mxu0
  %2417 = vmatprep.mubr.f32.mxu0 0.0
  %2418 = vmatmul.mubr.f32.gmra.mxu0 %v2227
  %v2419 = vpop.f32.mrf.mxu0
  %v2420 = vadd.f32 %v2320, %v2419
  %v2421 = vpop.f32.mrf.mxu0
  %2422 = vmatprep.mubr.f32.mxu0 0.0
  %2423 = vmatmul.mubr.f32.gmra.mxu0 %v2230
  %v2424 = vpop.f32.mrf.mxu0
  %v2425 = vadd.f32 %v2325, %v2424
  %v2426 = vpop.f32.mrf.mxu0
  %2427 = vmatprep.mubr.f32.mxu0 0.0
  %2428 = vmatmul.mubr.f32.gmra.mxu0 %v2233
  %v2429 = vpop.f32.mrf.mxu0
  %v2430 = vadd.f32 %v2330, %v2429
  %v2431 = vpop.f32.mrf.mxu0
  %2432 = vmatprep.mubr.f32.mxu0 0.0
  %2433 = vmatmul.mubr.f32.gmra.mxu0 %v2236
  %v2434 = vpop.f32.mrf.mxu0
  %v2435 = vadd.f32 %v2335, %v2434
  %v2436 = vpop.f32.mrf.mxu0
  %2437 = vdwg.mxu0
  %v2438 = vld [vmem:[%s4 + $0x30] sm:$0xff]
  %v2439 = vld [vmem:[%s4 + $0x38] sm:$0xff]
  %v2441 = vsel %vm81, %v2405, 0
  %v2444 = vsel %vm81, %v2410, 0
  %v2447 = vsel %vm81, %v2415, 0
  %v2450 = vsel %vm81, %v2420, 0
  %v2453 = vsel %vm81, %v2425, 0
  %v2456 = vsel %vm81, %v2430, 0
  %v2459 = vsel %vm81, %v2435, 0
  %2461 = vmatprep.subr.mxu0 0.0
  %2462 = vmatpush1.msra.mxu0 0.0
  %2463 = vmatprep.subr.mxu0 0.0
  %2464 = vmatpush1.msra.mxu0 0.0
  %2465 = vmatprep.subr.mxu0 0.0
  %2466 = vmatpush1.msra.mxu0 0.0
  %2467 = vmatprep.subr.mxu0 0.0
  %2468 = vmatpush1.msra.mxu0 0.0
  %2469 = vmatprep.subr.mxu0 0.0
  %2470 = vmatpush1.msra.mxu0 0.0
  %2471 = vmatprep.subr.mxu0 0.0
  %2472 = vmatpush1.msra.mxu0 0.0
  %2473 = vmatprep.subr.mxu0 0.0
  %2474 = vmatpush1.msra.mxu0 0.0
  %2475 = vmatprep.subr.mxu0 0.0
  %2476 = vmatpush1.msra.mxu0 0.0
  %2477 = vmatprep.subr.mxu0 0.0
  %2478 = vmatpush1.msra.mxu0 0.0
  %2479 = vmatprep.subr.mxu0 0.0
  %2480 = vmatpush1.msra.mxu0 0.0
  %2481 = vmatprep.subr.mxu0 0.0
  %2482 = vmatpush1.msra.mxu0 0.0
  %2483 = vmatprep.subr.mxu0 0.0
  %2484 = vmatpush1.msra.mxu0 0.0
  %2485 = vmatprep.subr.mxu0 0.0
  %2486 = vmatpush1.msra.mxu0 0.0
  %2487 = vmatprep.subr.mxu0 0.0
  %2488 = vmatpush1.msra.mxu0 0.0
  %2489 = vmatprep.subr.mxu0 0.0
  %2490 = vmatpush1.msra.mxu0 %v2439
  %2491 = vmatprep.subr.mxu0 0.0
  %2492 = vmatpush1.msra.mxu0 %v2438
  %2493 = vmatprep.subr.mxu0 0.0
  %2494 = vmatpush2.msra.mxu0 0.0
  %2495 = vmatprep.subr.mxu0 0.0
  %2496 = vmatpush2.msra.mxu0 0.0
  %2497 = vmatprep.subr.mxu0 0.0
  %2498 = vmatpush2.msra.mxu0 0.0
  %2499 = vmatprep.subr.mxu0 0.0
  %2500 = vmatpush2.msra.mxu0 0.0
  %2501 = vmatprep.subr.mxu0 0.0
  %2502 = vmatpush2.msra.mxu0 0.0
  %2503 = vmatprep.subr.mxu0 0.0
  %2504 = vmatpush2.msra.mxu0 0.0
  %2505 = vmatprep.subr.mxu0 0.0
  %2506 = vmatpush2.msra.mxu0 0.0
  %2507 = vmatprep.subr.mxu0 0.0
  %2508 = vmatpush2.msra.mxu0 0.0
  %2509 = vmatprep.subr.mxu0 0.0
  %2510 = vmatpush2.msra.mxu0 0.0
  %2511 = vmatprep.subr.mxu0 0.0
  %2512 = vmatpush2.msra.mxu0 0.0
  %2513 = vmatprep.subr.mxu0 0.0
  %2514 = vmatpush2.msra.mxu0 0.0
  %2515 = vmatprep.subr.mxu0 0.0
  %2516 = vmatpush2.msra.mxu0 0.0
  %2517 = vmatprep.subr.mxu0 0.0
  %2518 = vmatpush2.msra.mxu0 0.0
  %2519 = vmatprep.subr.mxu0 0.0
  %2520 = vmatpush2.msra.mxu0 0.0
  %2521 = vmatprep.subr.mxu0 0.0
  %2522 = vmatpush2.msra.mxu0 0.0
  %2523 = vmatprep.subr.mxu0 0.0
  %2524 = vmatpush2.msra.mxu0 0.0
  %2525 = vmatprep.mubr.f32.mxu0 0.0
  %2526 = vmatmul.mubr.f32.gmra.mxu0 %v2441
  %v2527 = vpop.f32.mrf.mxu0
  %v2528 = vadd.f32 0.0, %v2527
  %v2529 = vpop.f32.mrf.mxu0
  %2530 = vmatprep.mubr.f32.mxu0 0.0
  %2531 = vmatmul.mubr.f32.gmra.mxu0 %v2444
  %v2532 = vpop.f32.mrf.mxu0
  %v2533 = vadd.f32 0.0, %v2532
  %v2534 = vpop.f32.mrf.mxu0
  %2535 = vmatprep.mubr.f32.mxu0 0.0
  %2536 = vmatmul.mubr.f32.gmra.mxu0 %v2447
  %v2537 = vpop.f32.mrf.mxu0
  %v2538 = vadd.f32 0.0, %v2537
  %v2539 = vpop.f32.mrf.mxu0
  %2540 = vmatprep.mubr.f32.mxu0 0.0
  %2541 = vmatmul.mubr.f32.gmra.mxu0 %v2450
  %v2542 = vpop.f32.mrf.mxu0
  %v2543 = vadd.f32 0.0, %v2542
  %v2544 = vpop.f32.mrf.mxu0
  %2545 = vmatprep.mubr.f32.mxu0 0.0
  %2546 = vmatmul.mubr.f32.gmra.mxu0 %v2453
  %v2547 = vpop.f32.mrf.mxu0
  %v2548 = vadd.f32 0.0, %v2547
  %v2549 = vpop.f32.mrf.mxu0
  %2550 = vmatprep.mubr.f32.mxu0 0.0
  %2551 = vmatmul.mubr.f32.gmra.mxu0 %v2456
  %v2552 = vpop.f32.mrf.mxu0
  %v2553 = vadd.f32 0.0, %v2552
  %v2554 = vpop.f32.mrf.mxu0
  %2555 = vmatprep.mubr.f32.mxu0 0.0
  %2556 = vmatmul.mubr.f32.gmra.mxu0 %v2459
  %v2557 = vpop.f32.mrf.mxu0
  %v2558 = vadd.f32 0.0, %v2557
  %v2559 = vpop.f32.mrf.mxu0
  %2560 = vdwg.mxu0
  %v2561 = vadd.f32 %v2168, %v2528
  %v2562 = vadd.f32 %v2169, %v2533
  %v2563 = vadd.f32 %v2170, %v2538
  %v2564 = vadd.f32 %v2171, %v2543
  %v2565 = vadd.f32 %v2172, %v2548
  %v2566 = vadd.f32 %v2173, %v2553
  %v2567 = vadd.f32 %v2174, %v2558
  %vm2568 = vcmp.eq.s32.totalorder %v984, 13
  %vm2569 = vcmp.eq.s32.totalorder %v985, 13
  %vm2570 = vcmp.eq.s32.totalorder %v986, 13
  %vm2571 = vcmp.eq.s32.totalorder %v987, 13
  %vm2572 = vcmp.eq.s32.totalorder %v988, 13
  %vm2573 = vcmp.eq.s32.totalorder %v989, 13
  %vm2574 = vcmp.eq.s32.totalorder %v990, 13
  %vm2575 = vcmp.eq.s32.totalorder %v991, 13
  %vm2576 = vcmp.eq.s32.totalorder %v992, 13
  %vm2577 = vcmp.eq.s32.totalorder %v993, 13
  %vm2578 = vcmp.eq.s32.totalorder %v994, 13
  %vm2579 = vcmp.eq.s32.totalorder %v995, 13
  %vm2580 = vcmp.eq.s32.totalorder %v996, 13
  %vm2581 = vcmp.eq.s32.totalorder %v997, 13
  %vm2582 = vcmp.eq.s32.totalorder %v998, 13
  %vm2583 = vcmp.eq.s32.totalorder %v999, 13
  %vm2584 = vcmp.eq.s32.totalorder %v1000, 13
  %vm2585 = vcmp.eq.s32.totalorder %v1001, 13
  %vm2586 = vcmp.eq.s32.totalorder %v1002, 13
  %vm2587 = vcmp.eq.s32.totalorder %v1003, 13
  %vm2588 = vcmp.eq.s32.totalorder %v1004, 13
  %v2589 = vsel %vm2568, 1.0, 0.0
  %v2590 = vsel %vm2569, 1.0, 0.0
  %v2591 = vsel %vm2570, 1.0, 0.0
  %v2592 = vsel %vm2571, 1.0, 0.0
  %v2593 = vsel %vm2572, 1.0, 0.0
  %v2594 = vsel %vm2573, 1.0, 0.0
  %v2595 = vsel %vm2574, 1.0, 0.0
  %v2596 = vsel %vm2575, 1.0, 0.0
  %v2597 = vsel %vm2576, 1.0, 0.0
  %v2598 = vsel %vm2577, 1.0, 0.0
  %v2599 = vsel %vm2578, 1.0, 0.0
  %v2600 = vsel %vm2579, 1.0, 0.0
  %v2601 = vsel %vm2580, 1.0, 0.0
  %v2602 = vsel %vm2581, 1.0, 0.0
  %v2603 = vsel %vm2582, 1.0, 0.0
  %v2604 = vsel %vm2583, 1.0, 0.0
  %v2605 = vsel %vm2584, 1.0, 0.0
  %v2606 = vsel %vm2585, 1.0, 0.0
  %v2607 = vsel %vm2586, 1.0, 0.0
  %v2608 = vsel %vm2587, 1.0, 0.0
  %v2609 = vsel %vm2588, 1.0, 0.0
  %v2611 = vsel %vm1047, %v2591, 0
  %v2614 = vsel %vm1047, %v2594, 0
  %v2617 = vsel %vm1047, %v2597, 0
  %v2620 = vsel %vm1047, %v2600, 0
  %v2623 = vsel %vm1047, %v2603, 0
  %v2626 = vsel %vm1047, %v2606, 0
  %v2629 = vsel %vm1047, %v2609, 0
  %2631 = vmatprep.subr.mxu0 0.0
  %2632 = vmatpush1.msra.mxu0 %v924
  %2633 = vmatprep.subr.mxu0 0.0
  %2634 = vmatpush1.msra.mxu0 %v923
  %2635 = vmatprep.subr.mxu0 0.0
  %2636 = vmatpush1.msra.mxu0 %v922
  %2637 = vmatprep.subr.mxu0 0.0
  %2638 = vmatpush1.msra.mxu0 %v921
  %2639 = vmatprep.subr.mxu0 0.0
  %2640 = vmatpush1.msra.mxu0 %v920
  %2641 = vmatprep.subr.mxu0 0.0
  %2642 = vmatpush1.msra.mxu0 %v919
  %2643 = vmatprep.subr.mxu0 0.0
  %2644 = vmatpush1.msra.mxu0 %v918
  %2645 = vmatprep.subr.mxu0 0.0
  %2646 = vmatpush1.msra.mxu0 %v917
  %2647 = vmatprep.subr.mxu0 0.0
  %2648 = vmatpush1.msra.mxu0 %v916
  %2649 = vmatprep.subr.mxu0 0.0
  %2650 = vmatpush1.msra.mxu0 %v915
  %2651 = vmatprep.subr.mxu0 0.0
  %2652 = vmatpush1.msra.mxu0 %v914
  %2653 = vmatprep.subr.mxu0 0.0
  %2654 = vmatpush1.msra.mxu0 %v913
  %2655 = vmatprep.subr.mxu0 0.0
  %2656 = vmatpush1.msra.mxu0 %v912
  %2657 = vmatprep.subr.mxu0 0.0
  %2658 = vmatpush1.msra.mxu0 %v911
  %2659 = vmatprep.subr.mxu0 0.0
  %2660 = vmatpush1.msra.mxu0 %v910
  %2661 = vmatprep.subr.mxu0 0.0
  %2662 = vmatpush1.msra.mxu0 %v909
  %2663 = vmatprep.subr.mxu0 0.0
  %2664 = vmatpush2.msra.mxu0 %v940
  %2665 = vmatprep.subr.mxu0 0.0
  %2666 = vmatpush2.msra.mxu0 %v939
  %2667 = vmatprep.subr.mxu0 0.0
  %2668 = vmatpush2.msra.mxu0 %v938
  %2669 = vmatprep.subr.mxu0 0.0
  %2670 = vmatpush2.msra.mxu0 %v937
  %2671 = vmatprep.subr.mxu0 0.0
  %2672 = vmatpush2.msra.mxu0 %v936
  %2673 = vmatprep.subr.mxu0 0.0
  %2674 = vmatpush2.msra.mxu0 %v935
  %2675 = vmatprep.subr.mxu0 0.0
  %2676 = vmatpush2.msra.mxu0 %v934
  %2677 = vmatprep.subr.mxu0 0.0
  %2678 = vmatpush2.msra.mxu0 %v933
  %2679 = vmatprep.subr.mxu0 0.0
  %2680 = vmatpush2.msra.mxu0 %v932
  %2681 = vmatprep.subr.mxu0 0.0
  %2682 = vmatpush2.msra.mxu0 %v931
  %2683 = vmatprep.subr.mxu0 0.0
  %2684 = vmatpush2.msra.mxu0 %v930
  %2685 = vmatprep.subr.mxu0 0.0
  %2686 = vmatpush2.msra.mxu0 %v929
  %2687 = vmatprep.subr.mxu0 0.0
  %2688 = vmatpush2.msra.mxu0 %v928
  %2689 = vmatprep.subr.mxu0 0.0
  %2690 = vmatpush2.msra.mxu0 %v927
  %2691 = vmatprep.subr.mxu0 0.0
  %2692 = vmatpush2.msra.mxu0 %v926
  %2693 = vmatprep.subr.mxu0 0.0
  %2694 = vmatpush2.msra.mxu0 %v925
  %2695 = vmatprep.mubr.f32.mxu0 %v2590
  %2696 = vmatmul.mubr.f32.gmra.mxu0 %v2589
  %v2697 = vpop.f32.mrf.mxu0
  %v2698 = vadd.f32 0.0, %v2697
  %v2699 = vpop.f32.mrf.mxu0
  %2700 = vmatprep.mubr.f32.mxu0 %v2593
  %2701 = vmatmul.mubr.f32.gmra.mxu0 %v2592
  %v2702 = vpop.f32.mrf.mxu0
  %v2703 = vadd.f32 0.0, %v2702
  %v2704 = vpop.f32.mrf.mxu0
  %2705 = vmatprep.mubr.f32.mxu0 %v2596
  %2706 = vmatmul.mubr.f32.gmra.mxu0 %v2595
  %v2707 = vpop.f32.mrf.mxu0
  %v2708 = vadd.f32 0.0, %v2707
  %v2709 = vpop.f32.mrf.mxu0
  %2710 = vmatprep.mubr.f32.mxu0 %v2599
  %2711 = vmatmul.mubr.f32.gmra.mxu0 %v2598
  %v2712 = vpop.f32.mrf.mxu0
  %v2713 = vadd.f32 0.0, %v2712
  %v2714 = vpop.f32.mrf.mxu0
  %2715 = vmatprep.mubr.f32.mxu0 %v2602
  %2716 = vmatmul.mubr.f32.gmra.mxu0 %v2601
  %v2717 = vpop.f32.mrf.mxu0
  %v2718 = vadd.f32 0.0, %v2717
  %v2719 = vpop.f32.mrf.mxu0
  %2720 = vmatprep.mubr.f32.mxu0 %v2605
  %2721 = vmatmul.mubr.f32.gmra.mxu0 %v2604
  %v2722 = vpop.f32.mrf.mxu0
  %v2723 = vadd.f32 0.0, %v2722
  %v2724 = vpop.f32.mrf.mxu0
  %2725 = vmatprep.mubr.f32.mxu0 %v2608
  %2726 = vmatmul.mubr.f32.gmra.mxu0 %v2607
  %v2727 = vpop.f32.mrf.mxu0
  %v2728 = vadd.f32 0.0, %v2727
  %v2729 = vpop.f32.mrf.mxu0
  %2730 = vdwg.mxu0
  %2731 = vmatprep.subr.mxu0 0.0
  %2732 = vmatpush1.msra.mxu0 0.0
  %2733 = vmatprep.subr.mxu0 0.0
  %2734 = vmatpush1.msra.mxu0 0.0
  %2735 = vmatprep.subr.mxu0 0.0
  %2736 = vmatpush1.msra.mxu0 0.0
  %2737 = vmatprep.subr.mxu0 0.0
  %2738 = vmatpush1.msra.mxu0 0.0
  %2739 = vmatprep.subr.mxu0 0.0
  %2740 = vmatpush1.msra.mxu0 0.0
  %2741 = vmatprep.subr.mxu0 0.0
  %2742 = vmatpush1.msra.mxu0 %v1071
  %2743 = vmatprep.subr.mxu0 0.0
  %2744 = vmatpush1.msra.mxu0 %v950
  %2745 = vmatprep.subr.mxu0 0.0
  %2746 = vmatpush1.msra.mxu0 %v949
  %2747 = vmatprep.subr.mxu0 0.0
  %2748 = vmatpush1.msra.mxu0 %v948
  %2749 = vmatprep.subr.mxu0 0.0
  %2750 = vmatpush1.msra.mxu0 %v947
  %2751 = vmatprep.subr.mxu0 0.0
  %2752 = vmatpush1.msra.mxu0 %v946
  %2753 = vmatprep.subr.mxu0 0.0
  %2754 = vmatpush1.msra.mxu0 %v945
  %2755 = vmatprep.subr.mxu0 0.0
  %2756 = vmatpush1.msra.mxu0 %v944
  %2757 = vmatprep.subr.mxu0 0.0
  %2758 = vmatpush1.msra.mxu0 %v943
  %2759 = vmatprep.subr.mxu0 0.0
  %2760 = vmatpush1.msra.mxu0 %v942
  %2761 = vmatprep.subr.mxu0 0.0
  %2762 = vmatpush1.msra.mxu0 %v941
  %2763 = vmatprep.subr.mxu0 0.0
  %2764 = vmatpush2.msra.mxu0 0.0
  %2765 = vmatprep.subr.mxu0 0.0
  %2766 = vmatpush2.msra.mxu0 0.0
  %2767 = vmatprep.subr.mxu0 0.0
  %2768 = vmatpush2.msra.mxu0 0.0
  %2769 = vmatprep.subr.mxu0 0.0
  %2770 = vmatpush2.msra.mxu0 0.0
  %2771 = vmatprep.subr.mxu0 0.0
  %2772 = vmatpush2.msra.mxu0 0.0
  %2773 = vmatprep.subr.mxu0 0.0
  %2774 = vmatpush2.msra.mxu0 0.0
  %2775 = vmatprep.subr.mxu0 0.0
  %2776 = vmatpush2.msra.mxu0 0.0
  %2777 = vmatprep.subr.mxu0 0.0
  %2778 = vmatpush2.msra.mxu0 0.0
  %2779 = vmatprep.subr.mxu0 0.0
  %2780 = vmatpush2.msra.mxu0 0.0
  %2781 = vmatprep.subr.mxu0 0.0
  %2782 = vmatpush2.msra.mxu0 0.0
  %2783 = vmatprep.subr.mxu0 0.0
  %2784 = vmatpush2.msra.mxu0 0.0
  %2785 = vmatprep.subr.mxu0 0.0
  %2786 = vmatpush2.msra.mxu0 0.0
  %2787 = vmatprep.subr.mxu0 0.0
  %2788 = vmatpush2.msra.mxu0 0.0
  %2789 = vmatprep.subr.mxu0 0.0
  %2790 = vmatpush2.msra.mxu0 0.0
  %2791 = vmatprep.subr.mxu0 0.0
  %2792 = vmatpush2.msra.mxu0 0.0
  %2793 = vmatprep.subr.mxu0 0.0
  %2794 = vmatpush2.msra.mxu0 0.0
  %2795 = vmatprep.mubr.f32.mxu0 0.0
  %2796 = vmatmul.mubr.f32.gmra.mxu0 %v2611
  %v2797 = vpop.f32.mrf.mxu0
  %v2798 = vadd.f32 %v2698, %v2797
  %v2799 = vpop.f32.mrf.mxu0
  %2800 = vmatprep.mubr.f32.mxu0 0.0
  %2801 = vmatmul.mubr.f32.gmra.mxu0 %v2614
  %v2802 = vpop.f32.mrf.mxu0
  %v2803 = vadd.f32 %v2703, %v2802
  %v2804 = vpop.f32.mrf.mxu0
  %2805 = vmatprep.mubr.f32.mxu0 0.0
  %2806 = vmatmul.mubr.f32.gmra.mxu0 %v2617
  %v2807 = vpop.f32.mrf.mxu0
  %v2808 = vadd.f32 %v2708, %v2807
  %v2809 = vpop.f32.mrf.mxu0
  %2810 = vmatprep.mubr.f32.mxu0 0.0
  %2811 = vmatmul.mubr.f32.gmra.mxu0 %v2620
  %v2812 = vpop.f32.mrf.mxu0
  %v2813 = vadd.f32 %v2713, %v2812
  %v2814 = vpop.f32.mrf.mxu0
  %2815 = vmatprep.mubr.f32.mxu0 0.0
  %2816 = vmatmul.mubr.f32.gmra.mxu0 %v2623
  %v2817 = vpop.f32.mrf.mxu0
  %v2818 = vadd.f32 %v2718, %v2817
  %v2819 = vpop.f32.mrf.mxu0
  %2820 = vmatprep.mubr.f32.mxu0 0.0
  %2821 = vmatmul.mubr.f32.gmra.mxu0 %v2626
  %v2822 = vpop.f32.mrf.mxu0
  %v2823 = vadd.f32 %v2723, %v2822
  %v2824 = vpop.f32.mrf.mxu0
  %2825 = vmatprep.mubr.f32.mxu0 0.0
  %2826 = vmatmul.mubr.f32.gmra.mxu0 %v2629
  %v2827 = vpop.f32.mrf.mxu0
  %v2828 = vadd.f32 %v2728, %v2827
  %v2829 = vpop.f32.mrf.mxu0
  %2830 = vdwg.mxu0
  %v2831 = vld [vmem:[%s4 + $0x40] sm:$0xff]
  %v2832 = vld [vmem:[%s4 + $0x48] sm:$0xff]
  %v2834 = vsel %vm81, %v2798, 0
  %v2837 = vsel %vm81, %v2803, 0
  %v2840 = vsel %vm81, %v2808, 0
  %v2843 = vsel %vm81, %v2813, 0
  %v2846 = vsel %vm81, %v2818, 0
  %v2849 = vsel %vm81, %v2823, 0
  %v2852 = vsel %vm81, %v2828, 0
  %2854 = vmatprep.subr.mxu0 0.0
  %2855 = vmatpush1.msra.mxu0 0.0
  %2856 = vmatprep.subr.mxu0 0.0
  %2857 = vmatpush1.msra.mxu0 0.0
  %2858 = vmatprep.subr.mxu0 0.0
  %2859 = vmatpush1.msra.mxu0 0.0
  %2860 = vmatprep.subr.mxu0 0.0
  %2861 = vmatpush1.msra.mxu0 0.0
  %2862 = vmatprep.subr.mxu0 0.0
  %2863 = vmatpush1.msra.mxu0 0.0
  %2864 = vmatprep.subr.mxu0 0.0
  %2865 = vmatpush1.msra.mxu0 0.0
  %2866 = vmatprep.subr.mxu0 0.0
  %2867 = vmatpush1.msra.mxu0 0.0
  %2868 = vmatprep.subr.mxu0 0.0
  %2869 = vmatpush1.msra.mxu0 0.0
  %2870 = vmatprep.subr.mxu0 0.0
  %2871 = vmatpush1.msra.mxu0 0.0
  %2872 = vmatprep.subr.mxu0 0.0
  %2873 = vmatpush1.msra.mxu0 0.0
  %2874 = vmatprep.subr.mxu0 0.0
  %2875 = vmatpush1.msra.mxu0 0.0
  %2876 = vmatprep.subr.mxu0 0.0
  %2877 = vmatpush1.msra.mxu0 0.0
  %2878 = vmatprep.subr.mxu0 0.0
  %2879 = vmatpush1.msra.mxu0 0.0
  %2880 = vmatprep.subr.mxu0 0.0
  %2881 = vmatpush1.msra.mxu0 0.0
  %2882 = vmatprep.subr.mxu0 0.0
  %2883 = vmatpush1.msra.mxu0 %v2832
  %2884 = vmatprep.subr.mxu0 0.0
  %2885 = vmatpush1.msra.mxu0 %v2831
  %2886 = vmatprep.subr.mxu0 0.0
  %2887 = vmatpush2.msra.mxu0 0.0
  %2888 = vmatprep.subr.mxu0 0.0
  %2889 = vmatpush2.msra.mxu0 0.0
  %2890 = vmatprep.subr.mxu0 0.0
  %2891 = vmatpush2.msra.mxu0 0.0
  %2892 = vmatprep.subr.mxu0 0.0
  %2893 = vmatpush2.msra.mxu0 0.0
  %2894 = vmatprep.subr.mxu0 0.0
  %2895 = vmatpush2.msra.mxu0 0.0
  %2896 = vmatprep.subr.mxu0 0.0
  %2897 = vmatpush2.msra.mxu0 0.0
  %2898 = vmatprep.subr.mxu0 0.0
  %2899 = vmatpush2.msra.mxu0 0.0
  %2900 = vmatprep.subr.mxu0 0.0
  %2901 = vmatpush2.msra.mxu0 0.0
  %2902 = vmatprep.subr.mxu0 0.0
  %2903 = vmatpush2.msra.mxu0 0.0
  %2904 = vmatprep.subr.mxu0 0.0
  %2905 = vmatpush2.msra.mxu0 0.0
  %2906 = vmatprep.subr.mxu0 0.0
  %2907 = vmatpush2.msra.mxu0 0.0
  %2908 = vmatprep.subr.mxu0 0.0
  %2909 = vmatpush2.msra.mxu0 0.0
  %2910 = vmatprep.subr.mxu0 0.0
  %2911 = vmatpush2.msra.mxu0 0.0
  %2912 = vmatprep.subr.mxu0 0.0
  %2913 = vmatpush2.msra.mxu0 0.0
  %2914 = vmatprep.subr.mxu0 0.0
  %2915 = vmatpush2.msra.mxu0 0.0
  %2916 = vmatprep.subr.mxu0 0.0
  %2917 = vmatpush2.msra.mxu0 0.0
  %2918 = vmatprep.mubr.f32.mxu0 0.0
  %2919 = vmatmul.mubr.f32.gmra.mxu0 %v2834
  %v2920 = vpop.f32.mrf.mxu0
  %v2921 = vadd.f32 0.0, %v2920
  %v2922 = vpop.f32.mrf.mxu0
  %2923 = vmatprep.mubr.f32.mxu0 0.0
  %2924 = vmatmul.mubr.f32.gmra.mxu0 %v2837
  %v2925 = vpop.f32.mrf.mxu0
  %v2926 = vadd.f32 0.0, %v2925
  %v2927 = vpop.f32.mrf.mxu0
  %2928 = vmatprep.mubr.f32.mxu0 0.0
  %2929 = vmatmul.mubr.f32.gmra.mxu0 %v2840
  %v2930 = vpop.f32.mrf.mxu0
  %v2931 = vadd.f32 0.0, %v2930
  %v2932 = vpop.f32.mrf.mxu0
  %2933 = vmatprep.mubr.f32.mxu0 0.0
  %2934 = vmatmul.mubr.f32.gmra.mxu0 %v2843
  %v2935 = vpop.f32.mrf.mxu0
  %v2936 = vadd.f32 0.0, %v2935
  %v2937 = vpop.f32.mrf.mxu0
  %2938 = vmatprep.mubr.f32.mxu0 0.0
  %2939 = vmatmul.mubr.f32.gmra.mxu0 %v2846
  %v2940 = vpop.f32.mrf.mxu0
  %v2941 = vadd.f32 0.0, %v2940
  %v2942 = vpop.f32.mrf.mxu0
  %2943 = vmatprep.mubr.f32.mxu0 0.0
  %2944 = vmatmul.mubr.f32.gmra.mxu0 %v2849
  %v2945 = vpop.f32.mrf.mxu0
  %v2946 = vadd.f32 0.0, %v2945
  %v2947 = vpop.f32.mrf.mxu0
  %2948 = vmatprep.mubr.f32.mxu0 0.0
  %2949 = vmatmul.mubr.f32.gmra.mxu0 %v2852
  %v2950 = vpop.f32.mrf.mxu0
  %v2951 = vadd.f32 0.0, %v2950
  %v2952 = vpop.f32.mrf.mxu0
  %2953 = vdwg.mxu0
  %v2954 = vadd.f32 %v2561, %v2921
  %v2955 = vadd.f32 %v2562, %v2926
  %v2956 = vadd.f32 %v2563, %v2931
  %v2957 = vadd.f32 %v2564, %v2936
  %v2958 = vadd.f32 %v2565, %v2941
  %v2959 = vadd.f32 %v2566, %v2946
  %v2960 = vadd.f32 %v2567, %v2951
  %vm2961 = vcmp.eq.s32.totalorder %v984, 14
  %vm2962 = vcmp.eq.s32.totalorder %v985, 14
  %vm2963 = vcmp.eq.s32.totalorder %v986, 14
  %vm2964 = vcmp.eq.s32.totalorder %v987, 14
  %vm2965 = vcmp.eq.s32.totalorder %v988, 14
  %vm2966 = vcmp.eq.s32.totalorder %v989, 14
  %vm2967 = vcmp.eq.s32.totalorder %v990, 14
  %vm2968 = vcmp.eq.s32.totalorder %v991, 14
  %vm2969 = vcmp.eq.s32.totalorder %v992, 14
  %vm2970 = vcmp.eq.s32.totalorder %v993, 14
  %vm2971 = vcmp.eq.s32.totalorder %v994, 14
  %vm2972 = vcmp.eq.s32.totalorder %v995, 14
  %vm2973 = vcmp.eq.s32.totalorder %v996, 14
  %vm2974 = vcmp.eq.s32.totalorder %v997, 14
  %vm2975 = vcmp.eq.s32.totalorder %v998, 14
  %vm2976 = vcmp.eq.s32.totalorder %v999, 14
  %vm2977 = vcmp.eq.s32.totalorder %v1000, 14
  %vm2978 = vcmp.eq.s32.totalorder %v1001, 14
  %vm2979 = vcmp.eq.s32.totalorder %v1002, 14
  %vm2980 = vcmp.eq.s32.totalorder %v1003, 14
  %vm2981 = vcmp.eq.s32.totalorder %v1004, 14
  %v2982 = vsel %vm2961, 1.0, 0.0
  %v2983 = vsel %vm2962, 1.0, 0.0
  %v2984 = vsel %vm2963, 1.0, 0.0
  %v2985 = vsel %vm2964, 1.0, 0.0
  %v2986 = vsel %vm2965, 1.0, 0.0
  %v2987 = vsel %vm2966, 1.0, 0.0
  %v2988 = vsel %vm2967, 1.0, 0.0
  %v2989 = vsel %vm2968, 1.0, 0.0
  %v2990 = vsel %vm2969, 1.0, 0.0
  %v2991 = vsel %vm2970, 1.0, 0.0
  %v2992 = vsel %vm2971, 1.0, 0.0
  %v2993 = vsel %vm2972, 1.0, 0.0
  %v2994 = vsel %vm2973, 1.0, 0.0
  %v2995 = vsel %vm2974, 1.0, 0.0
  %v2996 = vsel %vm2975, 1.0, 0.0
  %v2997 = vsel %vm2976, 1.0, 0.0
  %v2998 = vsel %vm2977, 1.0, 0.0
  %v2999 = vsel %vm2978, 1.0, 0.0
  %v3000 = vsel %vm2979, 1.0, 0.0
  %v3001 = vsel %vm2980, 1.0, 0.0
  %v3002 = vsel %vm2981, 1.0, 0.0
  %v3004 = vsel %vm1047, %v2984, 0
  %v3007 = vsel %vm1047, %v2987, 0
  %v3010 = vsel %vm1047, %v2990, 0
  %v3013 = vsel %vm1047, %v2993, 0
  %v3016 = vsel %vm1047, %v2996, 0
  %v3019 = vsel %vm1047, %v2999, 0
  %v3022 = vsel %vm1047, %v3002, 0
  %3024 = vmatprep.subr.mxu0 0.0
  %3025 = vmatpush1.msra.mxu0 %v924
  %3026 = vmatprep.subr.mxu0 0.0
  %3027 = vmatpush1.msra.mxu0 %v923
  %3028 = vmatprep.subr.mxu0 0.0
  %3029 = vmatpush1.msra.mxu0 %v922
  %3030 = vmatprep.subr.mxu0 0.0
  %3031 = vmatpush1.msra.mxu0 %v921
  %3032 = vmatprep.subr.mxu0 0.0
  %3033 = vmatpush1.msra.mxu0 %v920
  %3034 = vmatprep.subr.mxu0 0.0
  %3035 = vmatpush1.msra.mxu0 %v919
  %3036 = vmatprep.subr.mxu0 0.0
  %3037 = vmatpush1.msra.mxu0 %v918
  %3038 = vmatprep.subr.mxu0 0.0
  %3039 = vmatpush1.msra.mxu0 %v917
  %3040 = vmatprep.subr.mxu0 0.0
  %3041 = vmatpush1.msra.mxu0 %v916
  %3042 = vmatprep.subr.mxu0 0.0
  %3043 = vmatpush1.msra.mxu0 %v915
  %3044 = vmatprep.subr.mxu0 0.0
  %3045 = vmatpush1.msra.mxu0 %v914
  %3046 = vmatprep.subr.mxu0 0.0
  %3047 = vmatpush1.msra.mxu0 %v913
  %3048 = vmatprep.subr.mxu0 0.0
  %3049 = vmatpush1.msra.mxu0 %v912
  %3050 = vmatprep.subr.mxu0 0.0
  %3051 = vmatpush1.msra.mxu0 %v911
  %3052 = vmatprep.subr.mxu0 0.0
  %3053 = vmatpush1.msra.mxu0 %v910
  %3054 = vmatprep.subr.mxu0 0.0
  %3055 = vmatpush1.msra.mxu0 %v909
  %3056 = vmatprep.subr.mxu0 0.0
  %3057 = vmatpush2.msra.mxu0 %v940
  %3058 = vmatprep.subr.mxu0 0.0
  %3059 = vmatpush2.msra.mxu0 %v939
  %3060 = vmatprep.subr.mxu0 0.0
  %3061 = vmatpush2.msra.mxu0 %v938
  %3062 = vmatprep.subr.mxu0 0.0
  %3063 = vmatpush2.msra.mxu0 %v937
  %3064 = vmatprep.subr.mxu0 0.0
  %3065 = vmatpush2.msra.mxu0 %v936
  %3066 = vmatprep.subr.mxu0 0.0
  %3067 = vmatpush2.msra.mxu0 %v935
  %3068 = vmatprep.subr.mxu0 0.0
  %3069 = vmatpush2.msra.mxu0 %v934
  %3070 = vmatprep.subr.mxu0 0.0
  %3071 = vmatpush2.msra.mxu0 %v933
  %3072 = vmatprep.subr.mxu0 0.0
  %3073 = vmatpush2.msra.mxu0 %v932
  %3074 = vmatprep.subr.mxu0 0.0
  %3075 = vmatpush2.msra.mxu0 %v931
  %3076 = vmatprep.subr.mxu0 0.0
  %3077 = vmatpush2.msra.mxu0 %v930
  %3078 = vmatprep.subr.mxu0 0.0
  %3079 = vmatpush2.msra.mxu0 %v929
  %3080 = vmatprep.subr.mxu0 0.0
  %3081 = vmatpush2.msra.mxu0 %v928
  %3082 = vmatprep.subr.mxu0 0.0
  %3083 = vmatpush2.msra.mxu0 %v927
  %3084 = vmatprep.subr.mxu0 0.0
  %3085 = vmatpush2.msra.mxu0 %v926
  %3086 = vmatprep.subr.mxu0 0.0
  %3087 = vmatpush2.msra.mxu0 %v925
  %3088 = vmatprep.mubr.f32.mxu0 %v2983
  %3089 = vmatmul.mubr.f32.gmra.mxu0 %v2982
  %v3090 = vpop.f32.mrf.mxu0
  %v3091 = vadd.f32 0.0, %v3090
  %v3092 = vpop.f32.mrf.mxu0
  %3093 = vmatprep.mubr.f32.mxu0 %v2986
  %3094 = vmatmul.mubr.f32.gmra.mxu0 %v2985
  %v3095 = vpop.f32.mrf.mxu0
  %v3096 = vadd.f32 0.0, %v3095
  %v3097 = vpop.f32.mrf.mxu0
  %3098 = vmatprep.mubr.f32.mxu0 %v2989
  %3099 = vmatmul.mubr.f32.gmra.mxu0 %v2988
  %v3100 = vpop.f32.mrf.mxu0
  %v3101 = vadd.f32 0.0, %v3100
  %v3102 = vpop.f32.mrf.mxu0
  %3103 = vmatprep.mubr.f32.mxu0 %v2992
  %3104 = vmatmul.mubr.f32.gmra.mxu0 %v2991
  %v3105 = vpop.f32.mrf.mxu0
  %v3106 = vadd.f32 0.0, %v3105
  %v3107 = vpop.f32.mrf.mxu0
  %3108 = vmatprep.mubr.f32.mxu0 %v2995
  %3109 = vmatmul.mubr.f32.gmra.mxu0 %v2994
  %v3110 = vpop.f32.mrf.mxu0
  %v3111 = vadd.f32 0.0, %v3110
  %v3112 = vpop.f32.mrf.mxu0
  %3113 = vmatprep.mubr.f32.mxu0 %v2998
  %3114 = vmatmul.mubr.f32.gmra.mxu0 %v2997
  %v3115 = vpop.f32.mrf.mxu0
  %v3116 = vadd.f32 0.0, %v3115
  %v3117 = vpop.f32.mrf.mxu0
  %3118 = vmatprep.mubr.f32.mxu0 %v3001
  %3119 = vmatmul.mubr.f32.gmra.mxu0 %v3000
  %v3120 = vpop.f32.mrf.mxu0
  %v3121 = vadd.f32 0.0, %v3120
  %v3122 = vpop.f32.mrf.mxu0
  %3123 = vdwg.mxu0
  %3124 = vmatprep.subr.mxu0 0.0
  %3125 = vmatpush1.msra.mxu0 0.0
  %3126 = vmatprep.subr.mxu0 0.0
  %3127 = vmatpush1.msra.mxu0 0.0
  %3128 = vmatprep.subr.mxu0 0.0
  %3129 = vmatpush1.msra.mxu0 0.0
  %3130 = vmatprep.subr.mxu0 0.0
  %3131 = vmatpush1.msra.mxu0 0.0
  %3132 = vmatprep.subr.mxu0 0.0
  %3133 = vmatpush1.msra.mxu0 0.0
  %3134 = vmatprep.subr.mxu0 0.0
  %3135 = vmatpush1.msra.mxu0 %v1071
  %3136 = vmatprep.subr.mxu0 0.0
  %3137 = vmatpush1.msra.mxu0 %v950
  %3138 = vmatprep.subr.mxu0 0.0
  %3139 = vmatpush1.msra.mxu0 %v949
  %3140 = vmatprep.subr.mxu0 0.0
  %3141 = vmatpush1.msra.mxu0 %v948
  %3142 = vmatprep.subr.mxu0 0.0
  %3143 = vmatpush1.msra.mxu0 %v947
  %3144 = vmatprep.subr.mxu0 0.0
  %3145 = vmatpush1.msra.mxu0 %v946
  %3146 = vmatprep.subr.mxu0 0.0
  %3147 = vmatpush1.msra.mxu0 %v945
  %3148 = vmatprep.subr.mxu0 0.0
  %3149 = vmatpush1.msra.mxu0 %v944
  %3150 = vmatprep.subr.mxu0 0.0
  %3151 = vmatpush1.msra.mxu0 %v943
  %3152 = vmatprep.subr.mxu0 0.0
  %3153 = vmatpush1.msra.mxu0 %v942
  %3154 = vmatprep.subr.mxu0 0.0
  %3155 = vmatpush1.msra.mxu0 %v941
  %3156 = vmatprep.subr.mxu0 0.0
  %3157 = vmatpush2.msra.mxu0 0.0
  %3158 = vmatprep.subr.mxu0 0.0
  %3159 = vmatpush2.msra.mxu0 0.0
  %3160 = vmatprep.subr.mxu0 0.0
  %3161 = vmatpush2.msra.mxu0 0.0
  %3162 = vmatprep.subr.mxu0 0.0
  %3163 = vmatpush2.msra.mxu0 0.0
  %3164 = vmatprep.subr.mxu0 0.0
  %3165 = vmatpush2.msra.mxu0 0.0
  %3166 = vmatprep.subr.mxu0 0.0
  %3167 = vmatpush2.msra.mxu0 0.0
  %3168 = vmatprep.subr.mxu0 0.0
  %3169 = vmatpush2.msra.mxu0 0.0
  %3170 = vmatprep.subr.mxu0 0.0
  %3171 = vmatpush2.msra.mxu0 0.0
  %3172 = vmatprep.subr.mxu0 0.0
  %3173 = vmatpush2.msra.mxu0 0.0
  %3174 = vmatprep.subr.mxu0 0.0
  %3175 = vmatpush2.msra.mxu0 0.0
  %3176 = vmatprep.subr.mxu0 0.0
  %3177 = vmatpush2.msra.mxu0 0.0
  %3178 = vmatprep.subr.mxu0 0.0
  %3179 = vmatpush2.msra.mxu0 0.0
  %3180 = vmatprep.subr.mxu0 0.0
  %3181 = vmatpush2.msra.mxu0 0.0
  %3182 = vmatprep.subr.mxu0 0.0
  %3183 = vmatpush2.msra.mxu0 0.0
  %3184 = vmatprep.subr.mxu0 0.0
  %3185 = vmatpush2.msra.mxu0 0.0
  %3186 = vmatprep.subr.mxu0 0.0
  %3187 = vmatpush2.msra.mxu0 0.0
  %3188 = vmatprep.mubr.f32.mxu0 0.0
  %3189 = vmatmul.mubr.f32.gmra.mxu0 %v3004
  %v3190 = vpop.f32.mrf.mxu0
  %v3191 = vadd.f32 %v3091, %v3190
  %v3192 = vpop.f32.mrf.mxu0
  %3193 = vmatprep.mubr.f32.mxu0 0.0
  %3194 = vmatmul.mubr.f32.gmra.mxu0 %v3007
  %v3195 = vpop.f32.mrf.mxu0
  %v3196 = vadd.f32 %v3096, %v3195
  %v3197 = vpop.f32.mrf.mxu0
  %3198 = vmatprep.mubr.f32.mxu0 0.0
  %3199 = vmatmul.mubr.f32.gmra.mxu0 %v3010
  %v3200 = vpop.f32.mrf.mxu0
  %v3201 = vadd.f32 %v3101, %v3200
  %v3202 = vpop.f32.mrf.mxu0
  %3203 = vmatprep.mubr.f32.mxu0 0.0
  %3204 = vmatmul.mubr.f32.gmra.mxu0 %v3013
  %v3205 = vpop.f32.mrf.mxu0
  %v3206 = vadd.f32 %v3106, %v3205
  %v3207 = vpop.f32.mrf.mxu0
  %3208 = vmatprep.mubr.f32.mxu0 0.0
  %3209 = vmatmul.mubr.f32.gmra.mxu0 %v3016
  %v3210 = vpop.f32.mrf.mxu0
  %v3211 = vadd.f32 %v3111, %v3210
  %v3212 = vpop.f32.mrf.mxu0
  %3213 = vmatprep.mubr.f32.mxu0 0.0
  %3214 = vmatmul.mubr.f32.gmra.mxu0 %v3019
  %v3215 = vpop.f32.mrf.mxu0
  %v3216 = vadd.f32 %v3116, %v3215
  %v3217 = vpop.f32.mrf.mxu0
  %3218 = vmatprep.mubr.f32.mxu0 0.0
  %3219 = vmatmul.mubr.f32.gmra.mxu0 %v3022
  %v3220 = vpop.f32.mrf.mxu0
  %v3221 = vadd.f32 %v3121, %v3220
  %v3222 = vpop.f32.mrf.mxu0
  %3223 = vdwg.mxu0
  %v3224 = vld [vmem:[%s4 + $0x50] sm:$0xff]
  %v3225 = vld [vmem:[%s4 + $0x58] sm:$0xff]
  %v3227 = vsel %vm81, %v3191, 0
  %v3230 = vsel %vm81, %v3196, 0
  %v3233 = vsel %vm81, %v3201, 0
  %v3236 = vsel %vm81, %v3206, 0
  %v3239 = vsel %vm81, %v3211, 0
  %v3242 = vsel %vm81, %v3216, 0
  %v3245 = vsel %vm81, %v3221, 0
  %3247 = vmatprep.subr.mxu0 0.0
  %3248 = vmatpush1.msra.mxu0 0.0
  %3249 = vmatprep.subr.mxu0 0.0
  %3250 = vmatpush1.msra.mxu0 0.0
  %3251 = vmatprep.subr.mxu0 0.0
  %3252 = vmatpush1.msra.mxu0 0.0
  %3253 = vmatprep.subr.mxu0 0.0
  %3254 = vmatpush1.msra.mxu0 0.0
  %3255 = vmatprep.subr.mxu0 0.0
  %3256 = vmatpush1.msra.mxu0 0.0
  %3257 = vmatprep.subr.mxu0 0.0
  %3258 = vmatpush1.msra.mxu0 0.0
  %3259 = vmatprep.subr.mxu0 0.0
  %3260 = vmatpush1.msra.mxu0 0.0
  %3261 = vmatprep.subr.mxu0 0.0
  %3262 = vmatpush1.msra.mxu0 0.0
  %3263 = vmatprep.subr.mxu0 0.0
  %3264 = vmatpush1.msra.mxu0 0.0
  %3265 = vmatprep.subr.mxu0 0.0
  %3266 = vmatpush1.msra.mxu0 0.0
  %3267 = vmatprep.subr.mxu0 0.0
  %3268 = vmatpush1.msra.mxu0 0.0
  %3269 = vmatprep.subr.mxu0 0.0
  %3270 = vmatpush1.msra.mxu0 0.0
  %3271 = vmatprep.subr.mxu0 0.0
  %3272 = vmatpush1.msra.mxu0 0.0
  %3273 = vmatprep.subr.mxu0 0.0
  %3274 = vmatpush1.msra.mxu0 0.0
  %3275 = vmatprep.subr.mxu0 0.0
  %3276 = vmatpush1.msra.mxu0 %v3225
  %3277 = vmatprep.subr.mxu0 0.0
  %3278 = vmatpush1.msra.mxu0 %v3224
  %3279 = vmatprep.subr.mxu0 0.0
  %3280 = vmatpush2.msra.mxu0 0.0
  %3281 = vmatprep.subr.mxu0 0.0
  %3282 = vmatpush2.msra.mxu0 0.0
  %3283 = vmatprep.subr.mxu0 0.0
  %3284 = vmatpush2.msra.mxu0 0.0
  %3285 = vmatprep.subr.mxu0 0.0
  %3286 = vmatpush2.msra.mxu0 0.0
  %3287 = vmatprep.subr.mxu0 0.0
  %3288 = vmatpush2.msra.mxu0 0.0
  %3289 = vmatprep.subr.mxu0 0.0
  %3290 = vmatpush2.msra.mxu0 0.0
  %3291 = vmatprep.subr.mxu0 0.0
  %3292 = vmatpush2.msra.mxu0 0.0
  %3293 = vmatprep.subr.mxu0 0.0
  %3294 = vmatpush2.msra.mxu0 0.0
  %3295 = vmatprep.subr.mxu0 0.0
  %3296 = vmatpush2.msra.mxu0 0.0
  %3297 = vmatprep.subr.mxu0 0.0
  %3298 = vmatpush2.msra.mxu0 0.0
  %3299 = vmatprep.subr.mxu0 0.0
  %3300 = vmatpush2.msra.mxu0 0.0
  %3301 = vmatprep.subr.mxu0 0.0
  %3302 = vmatpush2.msra.mxu0 0.0
  %3303 = vmatprep.subr.mxu0 0.0
  %3304 = vmatpush2.msra.mxu0 0.0
  %3305 = vmatprep.subr.mxu0 0.0
  %3306 = vmatpush2.msra.mxu0 0.0
  %3307 = vmatprep.subr.mxu0 0.0
  %3308 = vmatpush2.msra.mxu0 0.0
  %3309 = vmatprep.subr.mxu0 0.0
  %3310 = vmatpush2.msra.mxu0 0.0
  %3311 = vmatprep.mubr.f32.mxu0 0.0
  %3312 = vmatmul.mubr.f32.gmra.mxu0 %v3227
  %v3313 = vpop.f32.mrf.mxu0
  %v3314 = vadd.f32 0.0, %v3313
  %v3315 = vpop.f32.mrf.mxu0
  %3316 = vmatprep.mubr.f32.mxu0 0.0
  %3317 = vmatmul.mubr.f32.gmra.mxu0 %v3230
  %v3318 = vpop.f32.mrf.mxu0
  %v3319 = vadd.f32 0.0, %v3318
  %v3320 = vpop.f32.mrf.mxu0
  %3321 = vmatprep.mubr.f32.mxu0 0.0
  %3322 = vmatmul.mubr.f32.gmra.mxu0 %v3233
  %v3323 = vpop.f32.mrf.mxu0
  %v3324 = vadd.f32 0.0, %v3323
  %v3325 = vpop.f32.mrf.mxu0
  %3326 = vmatprep.mubr.f32.mxu0 0.0
  %3327 = vmatmul.mubr.f32.gmra.mxu0 %v3236
  %v3328 = vpop.f32.mrf.mxu0
  %v3329 = vadd.f32 0.0, %v3328
  %v3330 = vpop.f32.mrf.mxu0
  %3331 = vmatprep.mubr.f32.mxu0 0.0
  %3332 = vmatmul.mubr.f32.gmra.mxu0 %v3239
  %v3333 = vpop.f32.mrf.mxu0
  %v3334 = vadd.f32 0.0, %v3333
  %v3335 = vpop.f32.mrf.mxu0
  %3336 = vmatprep.mubr.f32.mxu0 0.0
  %3337 = vmatmul.mubr.f32.gmra.mxu0 %v3242
  %v3338 = vpop.f32.mrf.mxu0
  %v3339 = vadd.f32 0.0, %v3338
  %v3340 = vpop.f32.mrf.mxu0
  %3341 = vmatprep.mubr.f32.mxu0 0.0
  %3342 = vmatmul.mubr.f32.gmra.mxu0 %v3245
  %v3343 = vpop.f32.mrf.mxu0
  %v3344 = vadd.f32 0.0, %v3343
  %v3345 = vpop.f32.mrf.mxu0
  %3346 = vdwg.mxu0
  %v3347 = vadd.f32 %v2954, %v3314
  %v3348 = vadd.f32 %v2955, %v3319
  %v3349 = vadd.f32 %v2956, %v3324
  %v3350 = vadd.f32 %v2957, %v3329
  %v3351 = vadd.f32 %v2958, %v3334
  %v3352 = vadd.f32 %v2959, %v3339
  %v3353 = vadd.f32 %v2960, %v3344
  %vm3354 = vcmp.eq.s32.totalorder %v984, 15
  %vm3355 = vcmp.eq.s32.totalorder %v985, 15
  %vm3356 = vcmp.eq.s32.totalorder %v986, 15
  %vm3357 = vcmp.eq.s32.totalorder %v987, 15
  %vm3358 = vcmp.eq.s32.totalorder %v988, 15
  %vm3359 = vcmp.eq.s32.totalorder %v989, 15
  %vm3360 = vcmp.eq.s32.totalorder %v990, 15
  %vm3361 = vcmp.eq.s32.totalorder %v991, 15
  %vm3362 = vcmp.eq.s32.totalorder %v992, 15
  %vm3363 = vcmp.eq.s32.totalorder %v993, 15
  %vm3364 = vcmp.eq.s32.totalorder %v994, 15
  %vm3365 = vcmp.eq.s32.totalorder %v995, 15
  %vm3366 = vcmp.eq.s32.totalorder %v996, 15
  %vm3367 = vcmp.eq.s32.totalorder %v997, 15
  %vm3368 = vcmp.eq.s32.totalorder %v998, 15
  %vm3369 = vcmp.eq.s32.totalorder %v999, 15
  %vm3370 = vcmp.eq.s32.totalorder %v1000, 15
  %vm3371 = vcmp.eq.s32.totalorder %v1001, 15
  %vm3372 = vcmp.eq.s32.totalorder %v1002, 15
  %vm3373 = vcmp.eq.s32.totalorder %v1003, 15
  %vm3374 = vcmp.eq.s32.totalorder %v1004, 15
  %v3375 = vsel %vm3354, 1.0, 0.0
  %v3376 = vsel %vm3355, 1.0, 0.0
  %v3377 = vsel %vm3356, 1.0, 0.0
  %v3378 = vsel %vm3357, 1.0, 0.0
  %v3379 = vsel %vm3358, 1.0, 0.0
  %v3380 = vsel %vm3359, 1.0, 0.0
  %v3381 = vsel %vm3360, 1.0, 0.0
  %v3382 = vsel %vm3361, 1.0, 0.0
  %v3383 = vsel %vm3362, 1.0, 0.0
  %v3384 = vsel %vm3363, 1.0, 0.0
  %v3385 = vsel %vm3364, 1.0, 0.0
  %v3386 = vsel %vm3365, 1.0, 0.0
  %v3387 = vsel %vm3366, 1.0, 0.0
  %v3388 = vsel %vm3367, 1.0, 0.0
  %v3389 = vsel %vm3368, 1.0, 0.0
  %v3390 = vsel %vm3369, 1.0, 0.0
  %v3391 = vsel %vm3370, 1.0, 0.0
  %v3392 = vsel %vm3371, 1.0, 0.0
  %v3393 = vsel %vm3372, 1.0, 0.0
  %v3394 = vsel %vm3373, 1.0, 0.0
  %v3395 = vsel %vm3374, 1.0, 0.0
  %v3397 = vsel %vm1047, %v3377, 0
  %v3400 = vsel %vm1047, %v3380, 0
  %v3403 = vsel %vm1047, %v3383, 0
  %v3406 = vsel %vm1047, %v3386, 0
  %v3409 = vsel %vm1047, %v3389, 0
  %v3412 = vsel %vm1047, %v3392, 0
  %v3415 = vsel %vm1047, %v3395, 0
  %3417 = vmatprep.subr.mxu0 0.0
  %3418 = vmatpush1.msra.mxu0 %v924
  %3419 = vmatprep.subr.mxu0 0.0
  %3420 = vmatpush1.msra.mxu0 %v923
  %3421 = vmatprep.subr.mxu0 0.0
  %3422 = vmatpush1.msra.mxu0 %v922
  %3423 = vmatprep.subr.mxu0 0.0
  %3424 = vmatpush1.msra.mxu0 %v921
  %3425 = vmatprep.subr.mxu0 0.0
  %3426 = vmatpush1.msra.mxu0 %v920
  %3427 = vmatprep.subr.mxu0 0.0
  %3428 = vmatpush1.msra.mxu0 %v919
  %3429 = vmatprep.subr.mxu0 0.0
  %3430 = vmatpush1.msra.mxu0 %v918
  %3431 = vmatprep.subr.mxu0 0.0
  %3432 = vmatpush1.msra.mxu0 %v917
  %3433 = vmatprep.subr.mxu0 0.0
  %3434 = vmatpush1.msra.mxu0 %v916
  %3435 = vmatprep.subr.mxu0 0.0
  %3436 = vmatpush1.msra.mxu0 %v915
  %3437 = vmatprep.subr.mxu0 0.0
  %3438 = vmatpush1.msra.mxu0 %v914
  %3439 = vmatprep.subr.mxu0 0.0
  %3440 = vmatpush1.msra.mxu0 %v913
  %3441 = vmatprep.subr.mxu0 0.0
  %3442 = vmatpush1.msra.mxu0 %v912
  %3443 = vmatprep.subr.mxu0 0.0
  %3444 = vmatpush1.msra.mxu0 %v911
  %3445 = vmatprep.subr.mxu0 0.0
  %3446 = vmatpush1.msra.mxu0 %v910
  %3447 = vmatprep.subr.mxu0 0.0
  %3448 = vmatpush1.msra.mxu0 %v909
  %3449 = vmatprep.subr.mxu0 0.0
  %3450 = vmatpush2.msra.mxu0 %v940
  %3451 = vmatprep.subr.mxu0 0.0
  %3452 = vmatpush2.msra.mxu0 %v939
  %3453 = vmatprep.subr.mxu0 0.0
  %3454 = vmatpush2.msra.mxu0 %v938
  %3455 = vmatprep.subr.mxu0 0.0
  %3456 = vmatpush2.msra.mxu0 %v937
  %3457 = vmatprep.subr.mxu0 0.0
  %3458 = vmatpush2.msra.mxu0 %v936
  %3459 = vmatprep.subr.mxu0 0.0
  %3460 = vmatpush2.msra.mxu0 %v935
  %3461 = vmatprep.subr.mxu0 0.0
  %3462 = vmatpush2.msra.mxu0 %v934
  %3463 = vmatprep.subr.mxu0 0.0
  %3464 = vmatpush2.msra.mxu0 %v933
  %3465 = vmatprep.subr.mxu0 0.0
  %3466 = vmatpush2.msra.mxu0 %v932
  %3467 = vmatprep.subr.mxu0 0.0
  %3468 = vmatpush2.msra.mxu0 %v931
  %3469 = vmatprep.subr.mxu0 0.0
  %3470 = vmatpush2.msra.mxu0 %v930
  %3471 = vmatprep.subr.mxu0 0.0
  %3472 = vmatpush2.msra.mxu0 %v929
  %3473 = vmatprep.subr.mxu0 0.0
  %3474 = vmatpush2.msra.mxu0 %v928
  %3475 = vmatprep.subr.mxu0 0.0
  %3476 = vmatpush2.msra.mxu0 %v927
  %3477 = vmatprep.subr.mxu0 0.0
  %3478 = vmatpush2.msra.mxu0 %v926
  %3479 = vmatprep.subr.mxu0 0.0
  %3480 = vmatpush2.msra.mxu0 %v925
  %3481 = vmatprep.mubr.f32.mxu0 %v3376
  %3482 = vmatmul.mubr.f32.gmra.mxu0 %v3375
  %v3483 = vpop.f32.mrf.mxu0
  %v3484 = vadd.f32 0.0, %v3483
  %v3485 = vpop.f32.mrf.mxu0
  %3486 = vmatprep.mubr.f32.mxu0 %v3379
  %3487 = vmatmul.mubr.f32.gmra.mxu0 %v3378
  %v3488 = vpop.f32.mrf.mxu0
  %v3489 = vadd.f32 0.0, %v3488
  %v3490 = vpop.f32.mrf.mxu0
  %3491 = vmatprep.mubr.f32.mxu0 %v3382
  %3492 = vmatmul.mubr.f32.gmra.mxu0 %v3381
  %v3493 = vpop.f32.mrf.mxu0
  %v3494 = vadd.f32 0.0, %v3493
  %v3495 = vpop.f32.mrf.mxu0
  %3496 = vmatprep.mubr.f32.mxu0 %v3385
  %3497 = vmatmul.mubr.f32.gmra.mxu0 %v3384
  %v3498 = vpop.f32.mrf.mxu0
  %v3499 = vadd.f32 0.0, %v3498
  %v3500 = vpop.f32.mrf.mxu0
  %3501 = vmatprep.mubr.f32.mxu0 %v3388
  %3502 = vmatmul.mubr.f32.gmra.mxu0 %v3387
  %v3503 = vpop.f32.mrf.mxu0
  %v3504 = vadd.f32 0.0, %v3503
  %v3505 = vpop.f32.mrf.mxu0
  %3506 = vmatprep.mubr.f32.mxu0 %v3391
  %3507 = vmatmul.mubr.f32.gmra.mxu0 %v3390
  %v3508 = vpop.f32.mrf.mxu0
  %v3509 = vadd.f32 0.0, %v3508
  %v3510 = vpop.f32.mrf.mxu0
  %3511 = vmatprep.mubr.f32.mxu0 %v3394
  %3512 = vmatmul.mubr.f32.gmra.mxu0 %v3393
  %v3513 = vpop.f32.mrf.mxu0
  %v3514 = vadd.f32 0.0, %v3513
  %v3515 = vpop.f32.mrf.mxu0
  %3516 = vdwg.mxu0
  %3517 = vmatprep.subr.mxu0 0.0
  %3518 = vmatpush1.msra.mxu0 0.0
  %3519 = vmatprep.subr.mxu0 0.0
  %3520 = vmatpush1.msra.mxu0 0.0
  %3521 = vmatprep.subr.mxu0 0.0
  %3522 = vmatpush1.msra.mxu0 0.0
  %3523 = vmatprep.subr.mxu0 0.0
  %3524 = vmatpush1.msra.mxu0 0.0
  %3525 = vmatprep.subr.mxu0 0.0
  %3526 = vmatpush1.msra.mxu0 0.0
  %3527 = vmatprep.subr.mxu0 0.0
  %3528 = vmatpush1.msra.mxu0 %v1071
  %3529 = vmatprep.subr.mxu0 0.0
  %3530 = vmatpush1.msra.mxu0 %v950
  %3531 = vmatprep.subr.mxu0 0.0
  %3532 = vmatpush1.msra.mxu0 %v949
  %3533 = vmatprep.subr.mxu0 0.0
  %3534 = vmatpush1.msra.mxu0 %v948
  %3535 = vmatprep.subr.mxu0 0.0
  %3536 = vmatpush1.msra.mxu0 %v947
  %3537 = vmatprep.subr.mxu0 0.0
  %3538 = vmatpush1.msra.mxu0 %v946
  %3539 = vmatprep.subr.mxu0 0.0
  %3540 = vmatpush1.msra.mxu0 %v945
  %3541 = vmatprep.subr.mxu0 0.0
  %3542 = vmatpush1.msra.mxu0 %v944
  %3543 = vmatprep.subr.mxu0 0.0
  %3544 = vmatpush1.msra.mxu0 %v943
  %3545 = vmatprep.subr.mxu0 0.0
  %3546 = vmatpush1.msra.mxu0 %v942
  %3547 = vmatprep.subr.mxu0 0.0
  %3548 = vmatpush1.msra.mxu0 %v941
  %3549 = vmatprep.subr.mxu0 0.0
  %3550 = vmatpush2.msra.mxu0 0.0
  %3551 = vmatprep.subr.mxu0 0.0
  %3552 = vmatpush2.msra.mxu0 0.0
  %3553 = vmatprep.subr.mxu0 0.0
  %3554 = vmatpush2.msra.mxu0 0.0
  %3555 = vmatprep.subr.mxu0 0.0
  %3556 = vmatpush2.msra.mxu0 0.0
  %3557 = vmatprep.subr.mxu0 0.0
  %3558 = vmatpush2.msra.mxu0 0.0
  %3559 = vmatprep.subr.mxu0 0.0
  %3560 = vmatpush2.msra.mxu0 0.0
  %3561 = vmatprep.subr.mxu0 0.0
  %3562 = vmatpush2.msra.mxu0 0.0
  %3563 = vmatprep.subr.mxu0 0.0
  %3564 = vmatpush2.msra.mxu0 0.0
  %3565 = vmatprep.subr.mxu0 0.0
  %3566 = vmatpush2.msra.mxu0 0.0
  %3567 = vmatprep.subr.mxu0 0.0
  %3568 = vmatpush2.msra.mxu0 0.0
  %3569 = vmatprep.subr.mxu0 0.0
  %3570 = vmatpush2.msra.mxu0 0.0
  %3571 = vmatprep.subr.mxu0 0.0
  %3572 = vmatpush2.msra.mxu0 0.0
  %3573 = vmatprep.subr.mxu0 0.0
  %3574 = vmatpush2.msra.mxu0 0.0
  %3575 = vmatprep.subr.mxu0 0.0
  %3576 = vmatpush2.msra.mxu0 0.0
  %3577 = vmatprep.subr.mxu0 0.0
  %3578 = vmatpush2.msra.mxu0 0.0
  %3579 = vmatprep.subr.mxu0 0.0
  %3580 = vmatpush2.msra.mxu0 0.0
  %3581 = vmatprep.mubr.f32.mxu0 0.0
  %3582 = vmatmul.mubr.f32.gmra.mxu0 %v3397
  %v3583 = vpop.f32.mrf.mxu0
  %v3584 = vadd.f32 %v3484, %v3583
  %v3585 = vpop.f32.mrf.mxu0
  %3586 = vmatprep.mubr.f32.mxu0 0.0
  %3587 = vmatmul.mubr.f32.gmra.mxu0 %v3400
  %v3588 = vpop.f32.mrf.mxu0
  %v3589 = vadd.f32 %v3489, %v3588
  %v3590 = vpop.f32.mrf.mxu0
  %3591 = vmatprep.mubr.f32.mxu0 0.0
  %3592 = vmatmul.mubr.f32.gmra.mxu0 %v3403
  %v3593 = vpop.f32.mrf.mxu0
  %v3594 = vadd.f32 %v3494, %v3593
  %v3595 = vpop.f32.mrf.mxu0
  %3596 = vmatprep.mubr.f32.mxu0 0.0
  %3597 = vmatmul.mubr.f32.gmra.mxu0 %v3406
  %v3598 = vpop.f32.mrf.mxu0
  %v3599 = vadd.f32 %v3499, %v3598
  %v3600 = vpop.f32.mrf.mxu0
  %3601 = vmatprep.mubr.f32.mxu0 0.0
  %3602 = vmatmul.mubr.f32.gmra.mxu0 %v3409
  %v3603 = vpop.f32.mrf.mxu0
  %v3604 = vadd.f32 %v3504, %v3603
  %v3605 = vpop.f32.mrf.mxu0
  %3606 = vmatprep.mubr.f32.mxu0 0.0
  %3607 = vmatmul.mubr.f32.gmra.mxu0 %v3412
  %v3608 = vpop.f32.mrf.mxu0
  %v3609 = vadd.f32 %v3509, %v3608
  %v3610 = vpop.f32.mrf.mxu0
  %3611 = vmatprep.mubr.f32.mxu0 0.0
  %3612 = vmatmul.mubr.f32.gmra.mxu0 %v3415
  %v3613 = vpop.f32.mrf.mxu0
  %v3614 = vadd.f32 %v3514, %v3613
  %v3615 = vpop.f32.mrf.mxu0
  %3616 = vdwg.mxu0
  %v3617 = vld [vmem:[%s4 + $0x60] sm:$0xff]
  %v3618 = vld [vmem:[%s4 + $0x68] sm:$0xff]
  %v3620 = vsel %vm81, %v3584, 0
  %v3623 = vsel %vm81, %v3589, 0
  %v3626 = vsel %vm81, %v3594, 0
  %v3629 = vsel %vm81, %v3599, 0
  %v3632 = vsel %vm81, %v3604, 0
  %v3635 = vsel %vm81, %v3609, 0
  %v3638 = vsel %vm81, %v3614, 0
  %3640 = vmatprep.subr.mxu0 0.0
  %3641 = vmatpush1.msra.mxu0 0.0
  %3642 = vmatprep.subr.mxu0 0.0
  %3643 = vmatpush1.msra.mxu0 0.0
  %3644 = vmatprep.subr.mxu0 0.0
  %3645 = vmatpush1.msra.mxu0 0.0
  %3646 = vmatprep.subr.mxu0 0.0
  %3647 = vmatpush1.msra.mxu0 0.0
  %3648 = vmatprep.subr.mxu0 0.0
  %3649 = vmatpush1.msra.mxu0 0.0
  %3650 = vmatprep.subr.mxu0 0.0
  %3651 = vmatpush1.msra.mxu0 0.0
  %3652 = vmatprep.subr.mxu0 0.0
  %3653 = vmatpush1.msra.mxu0 0.0
  %3654 = vmatprep.subr.mxu0 0.0
  %3655 = vmatpush1.msra.mxu0 0.0
  %3656 = vmatprep.subr.mxu0 0.0
  %3657 = vmatpush1.msra.mxu0 0.0
  %3658 = vmatprep.subr.mxu0 0.0
  %3659 = vmatpush1.msra.mxu0 0.0
  %3660 = vmatprep.subr.mxu0 0.0
  %3661 = vmatpush1.msra.mxu0 0.0
  %3662 = vmatprep.subr.mxu0 0.0
  %3663 = vmatpush1.msra.mxu0 0.0
  %3664 = vmatprep.subr.mxu0 0.0
  %3665 = vmatpush1.msra.mxu0 0.0
  %3666 = vmatprep.subr.mxu0 0.0
  %3667 = vmatpush1.msra.mxu0 0.0
  %3668 = vmatprep.subr.mxu0 0.0
  %3669 = vmatpush1.msra.mxu0 %v3618
  %3670 = vmatprep.subr.mxu0 0.0
  %3671 = vmatpush1.msra.mxu0 %v3617
  %3672 = vmatprep.subr.mxu0 0.0
  %3673 = vmatpush2.msra.mxu0 0.0
  %3674 = vmatprep.subr.mxu0 0.0
  %3675 = vmatpush2.msra.mxu0 0.0
  %3676 = vmatprep.subr.mxu0 0.0
  %3677 = vmatpush2.msra.mxu0 0.0
  %3678 = vmatprep.subr.mxu0 0.0
  %3679 = vmatpush2.msra.mxu0 0.0
  %3680 = vmatprep.subr.mxu0 0.0
  %3681 = vmatpush2.msra.mxu0 0.0
  %3682 = vmatprep.subr.mxu0 0.0
  %3683 = vmatpush2.msra.mxu0 0.0
  %3684 = vmatprep.subr.mxu0 0.0
  %3685 = vmatpush2.msra.mxu0 0.0
  %3686 = vmatprep.subr.mxu0 0.0
  %3687 = vmatpush2.msra.mxu0 0.0
  %3688 = vmatprep.subr.mxu0 0.0
  %3689 = vmatpush2.msra.mxu0 0.0
  %3690 = vmatprep.subr.mxu0 0.0
  %3691 = vmatpush2.msra.mxu0 0.0
  %3692 = vmatprep.subr.mxu0 0.0
  %3693 = vmatpush2.msra.mxu0 0.0
  %3694 = vmatprep.subr.mxu0 0.0
  %3695 = vmatpush2.msra.mxu0 0.0
  %3696 = vmatprep.subr.mxu0 0.0
  %3697 = vmatpush2.msra.mxu0 0.0
  %3698 = vmatprep.subr.mxu0 0.0
  %3699 = vmatpush2.msra.mxu0 0.0
  %3700 = vmatprep.subr.mxu0 0.0
  %3701 = vmatpush2.msra.mxu0 0.0
  %3702 = vmatprep.subr.mxu0 0.0
  %3703 = vmatpush2.msra.mxu0 0.0
  %3704 = vmatprep.mubr.f32.mxu0 0.0
  %3705 = vmatmul.mubr.f32.gmra.mxu0 %v3620
  %v3706 = vpop.f32.mrf.mxu0
  %v3707 = vadd.f32 0.0, %v3706
  %v3708 = vpop.f32.mrf.mxu0
  %3709 = vmatprep.mubr.f32.mxu0 0.0
  %3710 = vmatmul.mubr.f32.gmra.mxu0 %v3623
  %v3711 = vpop.f32.mrf.mxu0
  %v3712 = vadd.f32 0.0, %v3711
  %v3713 = vpop.f32.mrf.mxu0
  %3714 = vmatprep.mubr.f32.mxu0 0.0
  %3715 = vmatmul.mubr.f32.gmra.mxu0 %v3626
  %v3716 = vpop.f32.mrf.mxu0
  %v3717 = vadd.f32 0.0, %v3716
  %v3718 = vpop.f32.mrf.mxu0
  %3719 = vmatprep.mubr.f32.mxu0 0.0
  %3720 = vmatmul.mubr.f32.gmra.mxu0 %v3629
  %v3721 = vpop.f32.mrf.mxu0
  %v3722 = vadd.f32 0.0, %v3721
  %v3723 = vpop.f32.mrf.mxu0
  %3724 = vmatprep.mubr.f32.mxu0 0.0
  %3725 = vmatmul.mubr.f32.gmra.mxu0 %v3632
  %v3726 = vpop.f32.mrf.mxu0
  %v3727 = vadd.f32 0.0, %v3726
  %v3728 = vpop.f32.mrf.mxu0
  %3729 = vmatprep.mubr.f32.mxu0 0.0
  %3730 = vmatmul.mubr.f32.gmra.mxu0 %v3635
  %v3731 = vpop.f32.mrf.mxu0
  %v3732 = vadd.f32 0.0, %v3731
  %v3733 = vpop.f32.mrf.mxu0
  %3734 = vmatprep.mubr.f32.mxu0 0.0
  %3735 = vmatmul.mubr.f32.gmra.mxu0 %v3638
  %v3736 = vpop.f32.mrf.mxu0
  %v3737 = vadd.f32 0.0, %v3736
  %v3738 = vpop.f32.mrf.mxu0
  %3739 = vdwg.mxu0
  %v3740 = vadd.f32 %v3347, %v3707
  %v3741 = vadd.f32 %v3348, %v3712
  %v3742 = vadd.f32 %v3349, %v3717
  %v3743 = vadd.f32 %v3350, %v3722
  %v3744 = vadd.f32 %v3351, %v3727
  %v3745 = vadd.f32 %v3352, %v3732
  %v3746 = vadd.f32 %v3353, %v3737
  %vm3747 = vcmp.eq.s32.totalorder %v984, 16
  %vm3748 = vcmp.eq.s32.totalorder %v985, 16
  %vm3749 = vcmp.eq.s32.totalorder %v986, 16
  %vm3750 = vcmp.eq.s32.totalorder %v987, 16
  %vm3751 = vcmp.eq.s32.totalorder %v988, 16
  %vm3752 = vcmp.eq.s32.totalorder %v989, 16
  %vm3753 = vcmp.eq.s32.totalorder %v990, 16
  %vm3754 = vcmp.eq.s32.totalorder %v991, 16
  %vm3755 = vcmp.eq.s32.totalorder %v992, 16
  %vm3756 = vcmp.eq.s32.totalorder %v993, 16
  %vm3757 = vcmp.eq.s32.totalorder %v994, 16
  %vm3758 = vcmp.eq.s32.totalorder %v995, 16
  %vm3759 = vcmp.eq.s32.totalorder %v996, 16
  %vm3760 = vcmp.eq.s32.totalorder %v997, 16
  %vm3761 = vcmp.eq.s32.totalorder %v998, 16
  %vm3762 = vcmp.eq.s32.totalorder %v999, 16
  %vm3763 = vcmp.eq.s32.totalorder %v1000, 16
  %vm3764 = vcmp.eq.s32.totalorder %v1001, 16
  %vm3765 = vcmp.eq.s32.totalorder %v1002, 16
  %vm3766 = vcmp.eq.s32.totalorder %v1003, 16
  %vm3767 = vcmp.eq.s32.totalorder %v1004, 16
  %v3768 = vsel %vm3747, 1.0, 0.0
  %v3769 = vsel %vm3748, 1.0, 0.0
  %v3770 = vsel %vm3749, 1.0, 0.0
  %v3771 = vsel %vm3750, 1.0, 0.0
  %v3772 = vsel %vm3751, 1.0, 0.0
  %v3773 = vsel %vm3752, 1.0, 0.0
  %v3774 = vsel %vm3753, 1.0, 0.0
  %v3775 = vsel %vm3754, 1.0, 0.0
  %v3776 = vsel %vm3755, 1.0, 0.0
  %v3777 = vsel %vm3756, 1.0, 0.0
  %v3778 = vsel %vm3757, 1.0, 0.0
  %v3779 = vsel %vm3758, 1.0, 0.0
  %v3780 = vsel %vm3759, 1.0, 0.0
  %v3781 = vsel %vm3760, 1.0, 0.0
  %v3782 = vsel %vm3761, 1.0, 0.0
  %v3783 = vsel %vm3762, 1.0, 0.0
  %v3784 = vsel %vm3763, 1.0, 0.0
  %v3785 = vsel %vm3764, 1.0, 0.0
  %v3786 = vsel %vm3765, 1.0, 0.0
  %v3787 = vsel %vm3766, 1.0, 0.0
  %v3788 = vsel %vm3767, 1.0, 0.0
  %v3790 = vsel %vm1047, %v3770, 0
  %v3793 = vsel %vm1047, %v3773, 0
  %v3796 = vsel %vm1047, %v3776, 0
  %v3799 = vsel %vm1047, %v3779, 0
  %v3802 = vsel %vm1047, %v3782, 0
  %v3805 = vsel %vm1047, %v3785, 0
  %v3808 = vsel %vm1047, %v3788, 0
  %3810 = vmatprep.subr.mxu0 0.0
  %3811 = vmatpush1.msra.mxu0 %v924
  %3812 = vmatprep.subr.mxu0 0.0
  %3813 = vmatpush1.msra.mxu0 %v923
  %3814 = vmatprep.subr.mxu0 0.0
  %3815 = vmatpush1.msra.mxu0 %v922
  %3816 = vmatprep.subr.mxu0 0.0
  %3817 = vmatpush1.msra.mxu0 %v921
  %3818 = vmatprep.subr.mxu0 0.0
  %3819 = vmatpush1.msra.mxu0 %v920
  %3820 = vmatprep.subr.mxu0 0.0
  %3821 = vmatpush1.msra.mxu0 %v919
  %3822 = vmatprep.subr.mxu0 0.0
  %3823 = vmatpush1.msra.mxu0 %v918
  %3824 = vmatprep.subr.mxu0 0.0
  %3825 = vmatpush1.msra.mxu0 %v917
  %3826 = vmatprep.subr.mxu0 0.0
  %3827 = vmatpush1.msra.mxu0 %v916
  %3828 = vmatprep.subr.mxu0 0.0
  %3829 = vmatpush1.msra.mxu0 %v915
  %3830 = vmatprep.subr.mxu0 0.0
  %3831 = vmatpush1.msra.mxu0 %v914
  %3832 = vmatprep.subr.mxu0 0.0
  %3833 = vmatpush1.msra.mxu0 %v913
  %3834 = vmatprep.subr.mxu0 0.0
  %3835 = vmatpush1.msra.mxu0 %v912
  %3836 = vmatprep.subr.mxu0 0.0
  %3837 = vmatpush1.msra.mxu0 %v911
  %3838 = vmatprep.subr.mxu0 0.0
  %3839 = vmatpush1.msra.mxu0 %v910
  %3840 = vmatprep.subr.mxu0 0.0
  %3841 = vmatpush1.msra.mxu0 %v909
  %3842 = vmatprep.subr.mxu0 0.0
  %3843 = vmatpush2.msra.mxu0 %v940
  %3844 = vmatprep.subr.mxu0 0.0
  %3845 = vmatpush2.msra.mxu0 %v939
  %3846 = vmatprep.subr.mxu0 0.0
  %3847 = vmatpush2.msra.mxu0 %v938
  %3848 = vmatprep.subr.mxu0 0.0
  %3849 = vmatpush2.msra.mxu0 %v937
  %3850 = vmatprep.subr.mxu0 0.0
  %3851 = vmatpush2.msra.mxu0 %v936
  %3852 = vmatprep.subr.mxu0 0.0
  %3853 = vmatpush2.msra.mxu0 %v935
  %3854 = vmatprep.subr.mxu0 0.0
  %3855 = vmatpush2.msra.mxu0 %v934
  %3856 = vmatprep.subr.mxu0 0.0
  %3857 = vmatpush2.msra.mxu0 %v933
  %3858 = vmatprep.subr.mxu0 0.0
  %3859 = vmatpush2.msra.mxu0 %v932
  %3860 = vmatprep.subr.mxu0 0.0
  %3861 = vmatpush2.msra.mxu0 %v931
  %3862 = vmatprep.subr.mxu0 0.0
  %3863 = vmatpush2.msra.mxu0 %v930
  %3864 = vmatprep.subr.mxu0 0.0
  %3865 = vmatpush2.msra.mxu0 %v929
  %3866 = vmatprep.subr.mxu0 0.0
  %3867 = vmatpush2.msra.mxu0 %v928
  %3868 = vmatprep.subr.mxu0 0.0
  %3869 = vmatpush2.msra.mxu0 %v927
  %3870 = vmatprep.subr.mxu0 0.0
  %3871 = vmatpush2.msra.mxu0 %v926
  %3872 = vmatprep.subr.mxu0 0.0
  %3873 = vmatpush2.msra.mxu0 %v925
  %3874 = vmatprep.mubr.f32.mxu0 %v3769
  %3875 = vmatmul.mubr.f32.gmra.mxu0 %v3768
  %v3876 = vpop.f32.mrf.mxu0
  %v3877 = vadd.f32 0.0, %v3876
  %v3878 = vpop.f32.mrf.mxu0
  %3879 = vmatprep.mubr.f32.mxu0 %v3772
  %3880 = vmatmul.mubr.f32.gmra.mxu0 %v3771
  %v3881 = vpop.f32.mrf.mxu0
  %v3882 = vadd.f32 0.0, %v3881
  %v3883 = vpop.f32.mrf.mxu0
  %3884 = vmatprep.mubr.f32.mxu0 %v3775
  %3885 = vmatmul.mubr.f32.gmra.mxu0 %v3774
  %v3886 = vpop.f32.mrf.mxu0
  %v3887 = vadd.f32 0.0, %v3886
  %v3888 = vpop.f32.mrf.mxu0
  %3889 = vmatprep.mubr.f32.mxu0 %v3778
  %3890 = vmatmul.mubr.f32.gmra.mxu0 %v3777
  %v3891 = vpop.f32.mrf.mxu0
  %v3892 = vadd.f32 0.0, %v3891
  %v3893 = vpop.f32.mrf.mxu0
  %3894 = vmatprep.mubr.f32.mxu0 %v3781
  %3895 = vmatmul.mubr.f32.gmra.mxu0 %v3780
  %v3896 = vpop.f32.mrf.mxu0
  %v3897 = vadd.f32 0.0, %v3896
  %v3898 = vpop.f32.mrf.mxu0
  %3899 = vmatprep.mubr.f32.mxu0 %v3784
  %3900 = vmatmul.mubr.f32.gmra.mxu0 %v3783
  %v3901 = vpop.f32.mrf.mxu0
  %v3902 = vadd.f32 0.0, %v3901
  %v3903 = vpop.f32.mrf.mxu0
  %3904 = vmatprep.mubr.f32.mxu0 %v3787
  %3905 = vmatmul.mubr.f32.gmra.mxu0 %v3786
  %v3906 = vpop.f32.mrf.mxu0
  %v3907 = vadd.f32 0.0, %v3906
  %v3908 = vpop.f32.mrf.mxu0
  %3909 = vdwg.mxu0
  %3910 = vmatprep.subr.mxu0 0.0
  %3911 = vmatpush1.msra.mxu0 0.0
  %3912 = vmatprep.subr.mxu0 0.0
  %3913 = vmatpush1.msra.mxu0 0.0
  %3914 = vmatprep.subr.mxu0 0.0
  %3915 = vmatpush1.msra.mxu0 0.0
  %3916 = vmatprep.subr.mxu0 0.0
  %3917 = vmatpush1.msra.mxu0 0.0
  %3918 = vmatprep.subr.mxu0 0.0
  %3919 = vmatpush1.msra.mxu0 0.0
  %3920 = vmatprep.subr.mxu0 0.0
  %3921 = vmatpush1.msra.mxu0 %v1071
  %3922 = vmatprep.subr.mxu0 0.0
  %3923 = vmatpush1.msra.mxu0 %v950
  %3924 = vmatprep.subr.mxu0 0.0
  %3925 = vmatpush1.msra.mxu0 %v949
  %3926 = vmatprep.subr.mxu0 0.0
  %3927 = vmatpush1.msra.mxu0 %v948
  %3928 = vmatprep.subr.mxu0 0.0
  %3929 = vmatpush1.msra.mxu0 %v947
  %3930 = vmatprep.subr.mxu0 0.0
  %3931 = vmatpush1.msra.mxu0 %v946
  %3932 = vmatprep.subr.mxu0 0.0
  %3933 = vmatpush1.msra.mxu0 %v945
  %3934 = vmatprep.subr.mxu0 0.0
  %3935 = vmatpush1.msra.mxu0 %v944
  %3936 = vmatprep.subr.mxu0 0.0
  %3937 = vmatpush1.msra.mxu0 %v943
  %3938 = vmatprep.subr.mxu0 0.0
  %3939 = vmatpush1.msra.mxu0 %v942
  %3940 = vmatprep.subr.mxu0 0.0
  %3941 = vmatpush1.msra.mxu0 %v941
  %3942 = vmatprep.subr.mxu0 0.0
  %3943 = vmatpush2.msra.mxu0 0.0
  %3944 = vmatprep.subr.mxu0 0.0
  %3945 = vmatpush2.msra.mxu0 0.0
  %3946 = vmatprep.subr.mxu0 0.0
  %3947 = vmatpush2.msra.mxu0 0.0
  %3948 = vmatprep.subr.mxu0 0.0
  %3949 = vmatpush2.msra.mxu0 0.0
  %3950 = vmatprep.subr.mxu0 0.0
  %3951 = vmatpush2.msra.mxu0 0.0
  %3952 = vmatprep.subr.mxu0 0.0
  %3953 = vmatpush2.msra.mxu0 0.0
  %3954 = vmatprep.subr.mxu0 0.0
  %3955 = vmatpush2.msra.mxu0 0.0
  %3956 = vmatprep.subr.mxu0 0.0
  %3957 = vmatpush2.msra.mxu0 0.0
  %3958 = vmatprep.subr.mxu0 0.0
  %3959 = vmatpush2.msra.mxu0 0.0
  %3960 = vmatprep.subr.mxu0 0.0
  %3961 = vmatpush2.msra.mxu0 0.0
  %3962 = vmatprep.subr.mxu0 0.0
  %3963 = vmatpush2.msra.mxu0 0.0
  %3964 = vmatprep.subr.mxu0 0.0
  %3965 = vmatpush2.msra.mxu0 0.0
  %3966 = vmatprep.subr.mxu0 0.0
  %3967 = vmatpush2.msra.mxu0 0.0
  %3968 = vmatprep.subr.mxu0 0.0
  %3969 = vmatpush2.msra.mxu0 0.0
  %3970 = vmatprep.subr.mxu0 0.0
  %3971 = vmatpush2.msra.mxu0 0.0
  %3972 = vmatprep.subr.mxu0 0.0
  %3973 = vmatpush2.msra.mxu0 0.0
  %3974 = vmatprep.mubr.f32.mxu0 0.0
  %3975 = vmatmul.mubr.f32.gmra.mxu0 %v3790
  %v3976 = vpop.f32.mrf.mxu0
  %v3977 = vadd.f32 %v3877, %v3976
  %v3978 = vpop.f32.mrf.mxu0
  %3979 = vmatprep.mubr.f32.mxu0 0.0
  %3980 = vmatmul.mubr.f32.gmra.mxu0 %v3793
  %v3981 = vpop.f32.mrf.mxu0
  %v3982 = vadd.f32 %v3882, %v3981
  %v3983 = vpop.f32.mrf.mxu0
  %3984 = vmatprep.mubr.f32.mxu0 0.0
  %3985 = vmatmul.mubr.f32.gmra.mxu0 %v3796
  %v3986 = vpop.f32.mrf.mxu0
  %v3987 = vadd.f32 %v3887, %v3986
  %v3988 = vpop.f32.mrf.mxu0
  %3989 = vmatprep.mubr.f32.mxu0 0.0
  %3990 = vmatmul.mubr.f32.gmra.mxu0 %v3799
  %v3991 = vpop.f32.mrf.mxu0
  %v3992 = vadd.f32 %v3892, %v3991
  %v3993 = vpop.f32.mrf.mxu0
  %3994 = vmatprep.mubr.f32.mxu0 0.0
  %3995 = vmatmul.mubr.f32.gmra.mxu0 %v3802
  %v3996 = vpop.f32.mrf.mxu0
  %v3997 = vadd.f32 %v3897, %v3996
  %v3998 = vpop.f32.mrf.mxu0
  %3999 = vmatprep.mubr.f32.mxu0 0.0
  %4000 = vmatmul.mubr.f32.gmra.mxu0 %v3805
  %v4001 = vpop.f32.mrf.mxu0
  %v4002 = vadd.f32 %v3902, %v4001
  %v4003 = vpop.f32.mrf.mxu0
  %4004 = vmatprep.mubr.f32.mxu0 0.0
  %4005 = vmatmul.mubr.f32.gmra.mxu0 %v3808
  %v4006 = vpop.f32.mrf.mxu0
  %v4007 = vadd.f32 %v3907, %v4006
  %v4008 = vpop.f32.mrf.mxu0
  %4009 = vdwg.mxu0
  %v4010 = vld [vmem:[%s4 + $0x70] sm:$0xff]
  %v4011 = vld [vmem:[%s4 + $0x78] sm:$0xff]
  %v4013 = vsel %vm81, %v3977, 0
  %v4016 = vsel %vm81, %v3982, 0
  %v4019 = vsel %vm81, %v3987, 0
  %v4022 = vsel %vm81, %v3992, 0
  %v4025 = vsel %vm81, %v3997, 0
  %v4028 = vsel %vm81, %v4002, 0
  %v4031 = vsel %vm81, %v4007, 0
  %4033 = vmatprep.subr.mxu0 0.0
  %4034 = vmatpush1.msra.mxu0 0.0
  %4035 = vmatprep.subr.mxu0 0.0
  %4036 = vmatpush1.msra.mxu0 0.0
  %4037 = vmatprep.subr.mxu0 0.0
  %4038 = vmatpush1.msra.mxu0 0.0
  %4039 = vmatprep.subr.mxu0 0.0
  %4040 = vmatpush1.msra.mxu0 0.0
  %4041 = vmatprep.subr.mxu0 0.0
  %4042 = vmatpush1.msra.mxu0 0.0
  %4043 = vmatprep.subr.mxu0 0.0
  %4044 = vmatpush1.msra.mxu0 0.0
  %4045 = vmatprep.subr.mxu0 0.0
  %4046 = vmatpush1.msra.mxu0 0.0
  %4047 = vmatprep.subr.mxu0 0.0
  %4048 = vmatpush1.msra.mxu0 0.0
  %4049 = vmatprep.subr.mxu0 0.0
  %4050 = vmatpush1.msra.mxu0 0.0
  %4051 = vmatprep.subr.mxu0 0.0
  %4052 = vmatpush1.msra.mxu0 0.0
  %4053 = vmatprep.subr.mxu0 0.0
  %4054 = vmatpush1.msra.mxu0 0.0
  %4055 = vmatprep.subr.mxu0 0.0
  %4056 = vmatpush1.msra.mxu0 0.0
  %4057 = vmatprep.subr.mxu0 0.0
  %4058 = vmatpush1.msra.mxu0 0.0
  %4059 = vmatprep.subr.mxu0 0.0
  %4060 = vmatpush1.msra.mxu0 0.0
  %4061 = vmatprep.subr.mxu0 0.0
  %4062 = vmatpush1.msra.mxu0 %v4011
  %4063 = vmatprep.subr.mxu0 0.0
  %4064 = vmatpush1.msra.mxu0 %v4010
  %4065 = vmatprep.subr.mxu0 0.0
  %4066 = vmatpush2.msra.mxu0 0.0
  %4067 = vmatprep.subr.mxu0 0.0
  %4068 = vmatpush2.msra.mxu0 0.0
  %4069 = vmatprep.subr.mxu0 0.0
  %4070 = vmatpush2.msra.mxu0 0.0
  %4071 = vmatprep.subr.mxu0 0.0
  %4072 = vmatpush2.msra.mxu0 0.0
  %4073 = vmatprep.subr.mxu0 0.0
  %4074 = vmatpush2.msra.mxu0 0.0
  %4075 = vmatprep.subr.mxu0 0.0
  %4076 = vmatpush2.msra.mxu0 0.0
  %4077 = vmatprep.subr.mxu0 0.0
  %4078 = vmatpush2.msra.mxu0 0.0
  %4079 = vmatprep.subr.mxu0 0.0
  %4080 = vmatpush2.msra.mxu0 0.0
  %4081 = vmatprep.subr.mxu0 0.0
  %4082 = vmatpush2.msra.mxu0 0.0
  %4083 = vmatprep.subr.mxu0 0.0
  %4084 = vmatpush2.msra.mxu0 0.0
  %4085 = vmatprep.subr.mxu0 0.0
  %4086 = vmatpush2.msra.mxu0 0.0
  %4087 = vmatprep.subr.mxu0 0.0
  %4088 = vmatpush2.msra.mxu0 0.0
  %4089 = vmatprep.subr.mxu0 0.0
  %4090 = vmatpush2.msra.mxu0 0.0
  %4091 = vmatprep.subr.mxu0 0.0
  %4092 = vmatpush2.msra.mxu0 0.0
  %4093 = vmatprep.subr.mxu0 0.0
  %4094 = vmatpush2.msra.mxu0 0.0
  %4095 = vmatprep.subr.mxu0 0.0
  %4096 = vmatpush2.msra.mxu0 0.0
  %4097 = vmatprep.mubr.f32.mxu0 0.0
  %4098 = vmatmul.mubr.f32.gmra.mxu0 %v4013
  %v4099 = vpop.f32.mrf.mxu0
  %v4100 = vadd.f32 0.0, %v4099
  %v4101 = vpop.f32.mrf.mxu0
  %4102 = vmatprep.mubr.f32.mxu0 0.0
  %4103 = vmatmul.mubr.f32.gmra.mxu0 %v4016
  %v4104 = vpop.f32.mrf.mxu0
  %v4105 = vadd.f32 0.0, %v4104
  %v4106 = vpop.f32.mrf.mxu0
  %4107 = vmatprep.mubr.f32.mxu0 0.0
  %4108 = vmatmul.mubr.f32.gmra.mxu0 %v4019
  %v4109 = vpop.f32.mrf.mxu0
  %v4110 = vadd.f32 0.0, %v4109
  %v4111 = vpop.f32.mrf.mxu0
  %4112 = vmatprep.mubr.f32.mxu0 0.0
  %4113 = vmatmul.mubr.f32.gmra.mxu0 %v4022
  %v4114 = vpop.f32.mrf.mxu0
  %v4115 = vadd.f32 0.0, %v4114
  %v4116 = vpop.f32.mrf.mxu0
  %4117 = vmatprep.mubr.f32.mxu0 0.0
  %4118 = vmatmul.mubr.f32.gmra.mxu0 %v4025
  %v4119 = vpop.f32.mrf.mxu0
  %v4120 = vadd.f32 0.0, %v4119
  %v4121 = vpop.f32.mrf.mxu0
  %4122 = vmatprep.mubr.f32.mxu0 0.0
  %4123 = vmatmul.mubr.f32.gmra.mxu0 %v4028
  %v4124 = vpop.f32.mrf.mxu0
  %v4125 = vadd.f32 0.0, %v4124
  %v4126 = vpop.f32.mrf.mxu0
  %4127 = vmatprep.mubr.f32.mxu0 0.0
  %4128 = vmatmul.mubr.f32.gmra.mxu0 %v4031
  %v4129 = vpop.f32.mrf.mxu0
  %v4130 = vadd.f32 0.0, %v4129
  %v4131 = vpop.f32.mrf.mxu0
  %4132 = vdwg.mxu0
  %v4133 = vadd.f32 %v3740, %v4100
  %v4134 = vadd.f32 %v3741, %v4105
  %v4135 = vadd.f32 %v3742, %v4110
  %v4136 = vadd.f32 %v3743, %v4115
  %v4137 = vadd.f32 %v3744, %v4120
  %v4138 = vadd.f32 %v3745, %v4125
  %v4139 = vadd.f32 %v3746, %v4130
  %vm4140 = vcmp.eq.s32.totalorder %v984, 26
  %vm4141 = vcmp.eq.s32.totalorder %v985, 26
  %vm4142 = vcmp.eq.s32.totalorder %v986, 26
  %vm4143 = vcmp.eq.s32.totalorder %v987, 26
  %vm4144 = vcmp.eq.s32.totalorder %v988, 26
  %vm4145 = vcmp.eq.s32.totalorder %v989, 26
  %vm4146 = vcmp.eq.s32.totalorder %v990, 26
  %vm4147 = vcmp.eq.s32.totalorder %v991, 26
  %vm4148 = vcmp.eq.s32.totalorder %v992, 26
  %vm4149 = vcmp.eq.s32.totalorder %v993, 26
  %vm4150 = vcmp.eq.s32.totalorder %v994, 26
  %vm4151 = vcmp.eq.s32.totalorder %v995, 26
  %vm4152 = vcmp.eq.s32.totalorder %v996, 26
  %vm4153 = vcmp.eq.s32.totalorder %v997, 26
  %vm4154 = vcmp.eq.s32.totalorder %v998, 26
  %vm4155 = vcmp.eq.s32.totalorder %v999, 26
  %vm4156 = vcmp.eq.s32.totalorder %v1000, 26
  %vm4157 = vcmp.eq.s32.totalorder %v1001, 26
  %vm4158 = vcmp.eq.s32.totalorder %v1002, 26
  %vm4159 = vcmp.eq.s32.totalorder %v1003, 26
  %vm4160 = vcmp.eq.s32.totalorder %v1004, 26
  %v4161 = vsel %vm4140, 1.0, 0.0
  %v4162 = vsel %vm4141, 1.0, 0.0
  %v4163 = vsel %vm4142, 1.0, 0.0
  %v4164 = vsel %vm4143, 1.0, 0.0
  %v4165 = vsel %vm4144, 1.0, 0.0
  %v4166 = vsel %vm4145, 1.0, 0.0
  %v4167 = vsel %vm4146, 1.0, 0.0
  %v4168 = vsel %vm4147, 1.0, 0.0
  %v4169 = vsel %vm4148, 1.0, 0.0
  %v4170 = vsel %vm4149, 1.0, 0.0
  %v4171 = vsel %vm4150, 1.0, 0.0
  %v4172 = vsel %vm4151, 1.0, 0.0
  %v4173 = vsel %vm4152, 1.0, 0.0
  %v4174 = vsel %vm4153, 1.0, 0.0
  %v4175 = vsel %vm4154, 1.0, 0.0
  %v4176 = vsel %vm4155, 1.0, 0.0
  %v4177 = vsel %vm4156, 1.0, 0.0
  %v4178 = vsel %vm4157, 1.0, 0.0
  %v4179 = vsel %vm4158, 1.0, 0.0
  %v4180 = vsel %vm4159, 1.0, 0.0
  %v4181 = vsel %vm4160, 1.0, 0.0
  %v4183 = vsel %vm1047, %v4163, 0
  %v4186 = vsel %vm1047, %v4166, 0
  %v4189 = vsel %vm1047, %v4169, 0
  %v4192 = vsel %vm1047, %v4172, 0
  %v4195 = vsel %vm1047, %v4175, 0
  %v4198 = vsel %vm1047, %v4178, 0
  %v4201 = vsel %vm1047, %v4181, 0
  %4203 = vmatprep.subr.mxu0 0.0
  %4204 = vmatpush1.msra.mxu0 %v924
  %4205 = vmatprep.subr.mxu0 0.0
  %4206 = vmatpush1.msra.mxu0 %v923
  %4207 = vmatprep.subr.mxu0 0.0
  %4208 = vmatpush1.msra.mxu0 %v922
  %4209 = vmatprep.subr.mxu0 0.0
  %4210 = vmatpush1.msra.mxu0 %v921
  %4211 = vmatprep.subr.mxu0 0.0
  %4212 = vmatpush1.msra.mxu0 %v920
  %4213 = vmatprep.subr.mxu0 0.0
  %4214 = vmatpush1.msra.mxu0 %v919
  %4215 = vmatprep.subr.mxu0 0.0
  %4216 = vmatpush1.msra.mxu0 %v918
  %4217 = vmatprep.subr.mxu0 0.0
  %4218 = vmatpush1.msra.mxu0 %v917
  %4219 = vmatprep.subr.mxu0 0.0
  %4220 = vmatpush1.msra.mxu0 %v916
  %4221 = vmatprep.subr.mxu0 0.0
  %4222 = vmatpush1.msra.mxu0 %v915
  %4223 = vmatprep.subr.mxu0 0.0
  %4224 = vmatpush1.msra.mxu0 %v914
  %4225 = vmatprep.subr.mxu0 0.0
  %4226 = vmatpush1.msra.mxu0 %v913
  %4227 = vmatprep.subr.mxu0 0.0
  %4228 = vmatpush1.msra.mxu0 %v912
  %4229 = vmatprep.subr.mxu0 0.0
  %4230 = vmatpush1.msra.mxu0 %v911
  %4231 = vmatprep.subr.mxu0 0.0
  %4232 = vmatpush1.msra.mxu0 %v910
  %4233 = vmatprep.subr.mxu0 0.0
  %4234 = vmatpush1.msra.mxu0 %v909
  %4235 = vmatprep.subr.mxu0 0.0
  %4236 = vmatpush2.msra.mxu0 %v940
  %4237 = vmatprep.subr.mxu0 0.0
  %4238 = vmatpush2.msra.mxu0 %v939
  %4239 = vmatprep.subr.mxu0 0.0
  %4240 = vmatpush2.msra.mxu0 %v938
  %4241 = vmatprep.subr.mxu0 0.0
  %4242 = vmatpush2.msra.mxu0 %v937
  %4243 = vmatprep.subr.mxu0 0.0
  %4244 = vmatpush2.msra.mxu0 %v936
  %4245 = vmatprep.subr.mxu0 0.0
  %4246 = vmatpush2.msra.mxu0 %v935
  %4247 = vmatprep.subr.mxu0 0.0
  %4248 = vmatpush2.msra.mxu0 %v934
  %4249 = vmatprep.subr.mxu0 0.0
  %4250 = vmatpush2.msra.mxu0 %v933
  %4251 = vmatprep.subr.mxu0 0.0
  %4252 = vmatpush2.msra.mxu0 %v932
  %4253 = vmatprep.subr.mxu0 0.0
  %4254 = vmatpush2.msra.mxu0 %v931
  %4255 = vmatprep.subr.mxu0 0.0
  %4256 = vmatpush2.msra.mxu0 %v930
  %4257 = vmatprep.subr.mxu0 0.0
  %4258 = vmatpush2.msra.mxu0 %v929
  %4259 = vmatprep.subr.mxu0 0.0
  %4260 = vmatpush2.msra.mxu0 %v928
  %4261 = vmatprep.subr.mxu0 0.0
  %4262 = vmatpush2.msra.mxu0 %v927
  %4263 = vmatprep.subr.mxu0 0.0
  %4264 = vmatpush2.msra.mxu0 %v926
  %4265 = vmatprep.subr.mxu0 0.0
  %4266 = vmatpush2.msra.mxu0 %v925
  %4267 = vmatprep.mubr.f32.mxu0 %v4162
  %4268 = vmatmul.mubr.f32.gmra.mxu0 %v4161
  %v4269 = vpop.f32.mrf.mxu0
  %v4270 = vadd.f32 0.0, %v4269
  %v4271 = vpop.f32.mrf.mxu0
  %4272 = vmatprep.mubr.f32.mxu0 %v4165
  %4273 = vmatmul.mubr.f32.gmra.mxu0 %v4164
  %v4274 = vpop.f32.mrf.mxu0
  %v4275 = vadd.f32 0.0, %v4274
  %v4276 = vpop.f32.mrf.mxu0
  %4277 = vmatprep.mubr.f32.mxu0 %v4168
  %4278 = vmatmul.mubr.f32.gmra.mxu0 %v4167
  %v4279 = vpop.f32.mrf.mxu0
  %v4280 = vadd.f32 0.0, %v4279
  %v4281 = vpop.f32.mrf.mxu0
  %4282 = vmatprep.mubr.f32.mxu0 %v4171
  %4283 = vmatmul.mubr.f32.gmra.mxu0 %v4170
  %v4284 = vpop.f32.mrf.mxu0
  %v4285 = vadd.f32 0.0, %v4284
  %v4286 = vpop.f32.mrf.mxu0
  %4287 = vmatprep.mubr.f32.mxu0 %v4174
  %4288 = vmatmul.mubr.f32.gmra.mxu0 %v4173
  %v4289 = vpop.f32.mrf.mxu0
  %v4290 = vadd.f32 0.0, %v4289
  %v4291 = vpop.f32.mrf.mxu0
  %4292 = vmatprep.mubr.f32.mxu0 %v4177
  %4293 = vmatmul.mubr.f32.gmra.mxu0 %v4176
  %v4294 = vpop.f32.mrf.mxu0
  %v4295 = vadd.f32 0.0, %v4294
  %v4296 = vpop.f32.mrf.mxu0
  %4297 = vmatprep.mubr.f32.mxu0 %v4180
  %4298 = vmatmul.mubr.f32.gmra.mxu0 %v4179
  %v4299 = vpop.f32.mrf.mxu0
  %v4300 = vadd.f32 0.0, %v4299
  %v4301 = vpop.f32.mrf.mxu0
  %4302 = vdwg.mxu0
  %4303 = vmatprep.subr.mxu0 0.0
  %4304 = vmatpush1.msra.mxu0 0.0
  %4305 = vmatprep.subr.mxu0 0.0
  %4306 = vmatpush1.msra.mxu0 0.0
  %4307 = vmatprep.subr.mxu0 0.0
  %4308 = vmatpush1.msra.mxu0 0.0
  %4309 = vmatprep.subr.mxu0 0.0
  %4310 = vmatpush1.msra.mxu0 0.0
  %4311 = vmatprep.subr.mxu0 0.0
  %4312 = vmatpush1.msra.mxu0 0.0
  %4313 = vmatprep.subr.mxu0 0.0
  %4314 = vmatpush1.msra.mxu0 %v1071
  %4315 = vmatprep.subr.mxu0 0.0
  %4316 = vmatpush1.msra.mxu0 %v950
  %4317 = vmatprep.subr.mxu0 0.0
  %4318 = vmatpush1.msra.mxu0 %v949
  %4319 = vmatprep.subr.mxu0 0.0
  %4320 = vmatpush1.msra.mxu0 %v948
  %4321 = vmatprep.subr.mxu0 0.0
  %4322 = vmatpush1.msra.mxu0 %v947
  %4323 = vmatprep.subr.mxu0 0.0
  %4324 = vmatpush1.msra.mxu0 %v946
  %4325 = vmatprep.subr.mxu0 0.0
  %4326 = vmatpush1.msra.mxu0 %v945
  %4327 = vmatprep.subr.mxu0 0.0
  %4328 = vmatpush1.msra.mxu0 %v944
  %4329 = vmatprep.subr.mxu0 0.0
  %4330 = vmatpush1.msra.mxu0 %v943
  %4331 = vmatprep.subr.mxu0 0.0
  %4332 = vmatpush1.msra.mxu0 %v942
  %4333 = vmatprep.subr.mxu0 0.0
  %4334 = vmatpush1.msra.mxu0 %v941
  %4335 = vmatprep.subr.mxu0 0.0
  %4336 = vmatpush2.msra.mxu0 0.0
  %4337 = vmatprep.subr.mxu0 0.0
  %4338 = vmatpush2.msra.mxu0 0.0
  %4339 = vmatprep.subr.mxu0 0.0
  %4340 = vmatpush2.msra.mxu0 0.0
  %4341 = vmatprep.subr.mxu0 0.0
  %4342 = vmatpush2.msra.mxu0 0.0
  %4343 = vmatprep.subr.mxu0 0.0
  %4344 = vmatpush2.msra.mxu0 0.0
  %4345 = vmatprep.subr.mxu0 0.0
  %4346 = vmatpush2.msra.mxu0 0.0
  %4347 = vmatprep.subr.mxu0 0.0
  %4348 = vmatpush2.msra.mxu0 0.0
  %4349 = vmatprep.subr.mxu0 0.0
  %4350 = vmatpush2.msra.mxu0 0.0
  %4351 = vmatprep.subr.mxu0 0.0
  %4352 = vmatpush2.msra.mxu0 0.0
  %4353 = vmatprep.subr.mxu0 0.0
  %4354 = vmatpush2.msra.mxu0 0.0
  %4355 = vmatprep.subr.mxu0 0.0
  %4356 = vmatpush2.msra.mxu0 0.0
  %4357 = vmatprep.subr.mxu0 0.0
  %4358 = vmatpush2.msra.mxu0 0.0
  %4359 = vmatprep.subr.mxu0 0.0
  %4360 = vmatpush2.msra.mxu0 0.0
  %4361 = vmatprep.subr.mxu0 0.0
  %4362 = vmatpush2.msra.mxu0 0.0
  %4363 = vmatprep.subr.mxu0 0.0
  %4364 = vmatpush2.msra.mxu0 0.0
  %4365 = vmatprep.subr.mxu0 0.0
  %4366 = vmatpush2.msra.mxu0 0.0
  %4367 = vmatprep.mubr.f32.mxu0 0.0
  %4368 = vmatmul.mubr.f32.gmra.mxu0 %v4183
  %v4369 = vpop.f32.mrf.mxu0
  %v4370 = vadd.f32 %v4270, %v4369
  %v4371 = vpop.f32.mrf.mxu0
  %4372 = vmatprep.mubr.f32.mxu0 0.0
  %4373 = vmatmul.mubr.f32.gmra.mxu0 %v4186
  %v4374 = vpop.f32.mrf.mxu0
  %v4375 = vadd.f32 %v4275, %v4374
  %v4376 = vpop.f32.mrf.mxu0
  %4377 = vmatprep.mubr.f32.mxu0 0.0
  %4378 = vmatmul.mubr.f32.gmra.mxu0 %v4189
  %v4379 = vpop.f32.mrf.mxu0
  %v4380 = vadd.f32 %v4280, %v4379
  %v4381 = vpop.f32.mrf.mxu0
  %4382 = vmatprep.mubr.f32.mxu0 0.0
  %4383 = vmatmul.mubr.f32.gmra.mxu0 %v4192
  %v4384 = vpop.f32.mrf.mxu0
  %v4385 = vadd.f32 %v4285, %v4384
  %v4386 = vpop.f32.mrf.mxu0
  %4387 = vmatprep.mubr.f32.mxu0 0.0
  %4388 = vmatmul.mubr.f32.gmra.mxu0 %v4195
  %v4389 = vpop.f32.mrf.mxu0
  %v4390 = vadd.f32 %v4290, %v4389
  %v4391 = vpop.f32.mrf.mxu0
  %4392 = vmatprep.mubr.f32.mxu0 0.0
  %4393 = vmatmul.mubr.f32.gmra.mxu0 %v4198
  %v4394 = vpop.f32.mrf.mxu0
  %v4395 = vadd.f32 %v4295, %v4394
  %v4396 = vpop.f32.mrf.mxu0
  %4397 = vmatprep.mubr.f32.mxu0 0.0
  %4398 = vmatmul.mubr.f32.gmra.mxu0 %v4201
  %v4399 = vpop.f32.mrf.mxu0
  %v4400 = vadd.f32 %v4300, %v4399
  %v4401 = vpop.f32.mrf.mxu0
  %4402 = vdwg.mxu0
  %v4403 = vld [vmem:[%s4 + $0x80] sm:$0xff]
  %v4404 = vld [vmem:[%s4 + $0x88] sm:$0xff]
  %v4406 = vsel %vm81, %v4370, 0
  %v4409 = vsel %vm81, %v4375, 0
  %v4412 = vsel %vm81, %v4380, 0
  %v4415 = vsel %vm81, %v4385, 0
  %v4418 = vsel %vm81, %v4390, 0
  %v4421 = vsel %vm81, %v4395, 0
  %v4424 = vsel %vm81, %v4400, 0
  %4426 = vmatprep.subr.mxu0 0.0
  %4427 = vmatpush1.msra.mxu0 0.0
  %4428 = vmatprep.subr.mxu0 0.0
  %4429 = vmatpush1.msra.mxu0 0.0
  %4430 = vmatprep.subr.mxu0 0.0
  %4431 = vmatpush1.msra.mxu0 0.0
  %4432 = vmatprep.subr.mxu0 0.0
  %4433 = vmatpush1.msra.mxu0 0.0
  %4434 = vmatprep.subr.mxu0 0.0
  %4435 = vmatpush1.msra.mxu0 0.0
  %4436 = vmatprep.subr.mxu0 0.0
  %4437 = vmatpush1.msra.mxu0 0.0
  %4438 = vmatprep.subr.mxu0 0.0
  %4439 = vmatpush1.msra.mxu0 0.0
  %4440 = vmatprep.subr.mxu0 0.0
  %4441 = vmatpush1.msra.mxu0 0.0
  %4442 = vmatprep.subr.mxu0 0.0
  %4443 = vmatpush1.msra.mxu0 0.0
  %4444 = vmatprep.subr.mxu0 0.0
  %4445 = vmatpush1.msra.mxu0 0.0
  %4446 = vmatprep.subr.mxu0 0.0
  %4447 = vmatpush1.msra.mxu0 0.0
  %4448 = vmatprep.subr.mxu0 0.0
  %4449 = vmatpush1.msra.mxu0 0.0
  %4450 = vmatprep.subr.mxu0 0.0
  %4451 = vmatpush1.msra.mxu0 0.0
  %4452 = vmatprep.subr.mxu0 0.0
  %4453 = vmatpush1.msra.mxu0 0.0
  %4454 = vmatprep.subr.mxu0 0.0
  %4455 = vmatpush1.msra.mxu0 %v4404
  %4456 = vmatprep.subr.mxu0 0.0
  %4457 = vmatpush1.msra.mxu0 %v4403
  %4458 = vmatprep.subr.mxu0 0.0
  %4459 = vmatpush2.msra.mxu0 0.0
  %4460 = vmatprep.subr.mxu0 0.0
  %4461 = vmatpush2.msra.mxu0 0.0
  %4462 = vmatprep.subr.mxu0 0.0
  %4463 = vmatpush2.msra.mxu0 0.0
  %4464 = vmatprep.subr.mxu0 0.0
  %4465 = vmatpush2.msra.mxu0 0.0
  %4466 = vmatprep.subr.mxu0 0.0
  %4467 = vmatpush2.msra.mxu0 0.0
  %4468 = vmatprep.subr.mxu0 0.0
  %4469 = vmatpush2.msra.mxu0 0.0
  %4470 = vmatprep.subr.mxu0 0.0
  %4471 = vmatpush2.msra.mxu0 0.0
  %4472 = vmatprep.subr.mxu0 0.0
  %4473 = vmatpush2.msra.mxu0 0.0
  %4474 = vmatprep.subr.mxu0 0.0
  %4475 = vmatpush2.msra.mxu0 0.0
  %4476 = vmatprep.subr.mxu0 0.0
  %4477 = vmatpush2.msra.mxu0 0.0
  %4478 = vmatprep.subr.mxu0 0.0
  %4479 = vmatpush2.msra.mxu0 0.0
  %4480 = vmatprep.subr.mxu0 0.0
  %4481 = vmatpush2.msra.mxu0 0.0
  %4482 = vmatprep.subr.mxu0 0.0
  %4483 = vmatpush2.msra.mxu0 0.0
  %4484 = vmatprep.subr.mxu0 0.0
  %4485 = vmatpush2.msra.mxu0 0.0
  %4486 = vmatprep.subr.mxu0 0.0
  %4487 = vmatpush2.msra.mxu0 0.0
  %4488 = vmatprep.subr.mxu0 0.0
  %4489 = vmatpush2.msra.mxu0 0.0
  %4490 = vmatprep.mubr.f32.mxu0 0.0
  %4491 = vmatmul.mubr.f32.gmra.mxu0 %v4406
  %v4492 = vpop.f32.mrf.mxu0
  %v4493 = vadd.f32 0.0, %v4492
  %v4494 = vpop.f32.mrf.mxu0
  %4495 = vmatprep.mubr.f32.mxu0 0.0
  %4496 = vmatmul.mubr.f32.gmra.mxu0 %v4409
  %v4497 = vpop.f32.mrf.mxu0
  %v4498 = vadd.f32 0.0, %v4497
  %v4499 = vpop.f32.mrf.mxu0
  %4500 = vmatprep.mubr.f32.mxu0 0.0
  %4501 = vmatmul.mubr.f32.gmra.mxu0 %v4412
  %v4502 = vpop.f32.mrf.mxu0
  %v4503 = vadd.f32 0.0, %v4502
  %v4504 = vpop.f32.mrf.mxu0
  %4505 = vmatprep.mubr.f32.mxu0 0.0
  %4506 = vmatmul.mubr.f32.gmra.mxu0 %v4415
  %v4507 = vpop.f32.mrf.mxu0
  %v4508 = vadd.f32 0.0, %v4507
  %v4509 = vpop.f32.mrf.mxu0
  %4510 = vmatprep.mubr.f32.mxu0 0.0
  %4511 = vmatmul.mubr.f32.gmra.mxu0 %v4418
  %v4512 = vpop.f32.mrf.mxu0
  %v4513 = vadd.f32 0.0, %v4512
  %v4514 = vpop.f32.mrf.mxu0
  %4515 = vmatprep.mubr.f32.mxu0 0.0
  %4516 = vmatmul.mubr.f32.gmra.mxu0 %v4421
  %v4517 = vpop.f32.mrf.mxu0
  %v4518 = vadd.f32 0.0, %v4517
  %v4519 = vpop.f32.mrf.mxu0
  %4520 = vmatprep.mubr.f32.mxu0 0.0
  %4521 = vmatmul.mubr.f32.gmra.mxu0 %v4424
  %v4522 = vpop.f32.mrf.mxu0
  %v4523 = vadd.f32 0.0, %v4522
  %v4524 = vpop.f32.mrf.mxu0
  %4525 = vdwg.mxu0
  %v4526 = vadd.f32 %v4133, %v4493
  %v4527 = vadd.f32 %v4134, %v4498
  %v4528 = vadd.f32 %v4135, %v4503
  %v4529 = vadd.f32 %v4136, %v4508
  %v4530 = vadd.f32 %v4137, %v4513
  %v4531 = vadd.f32 %v4138, %v4518
  %v4532 = vadd.f32 %v4139, %v4523
  %vm4533 = vcmp.eq.s32.totalorder %v984, 27
  %vm4534 = vcmp.eq.s32.totalorder %v985, 27
  %vm4535 = vcmp.eq.s32.totalorder %v986, 27
  %vm4536 = vcmp.eq.s32.totalorder %v987, 27
  %vm4537 = vcmp.eq.s32.totalorder %v988, 27
  %vm4538 = vcmp.eq.s32.totalorder %v989, 27
  %vm4539 = vcmp.eq.s32.totalorder %v990, 27
  %vm4540 = vcmp.eq.s32.totalorder %v991, 27
  %vm4541 = vcmp.eq.s32.totalorder %v992, 27
  %vm4542 = vcmp.eq.s32.totalorder %v993, 27
  %vm4543 = vcmp.eq.s32.totalorder %v994, 27
  %vm4544 = vcmp.eq.s32.totalorder %v995, 27
  %vm4545 = vcmp.eq.s32.totalorder %v996, 27
  %vm4546 = vcmp.eq.s32.totalorder %v997, 27
  %vm4547 = vcmp.eq.s32.totalorder %v998, 27
  %vm4548 = vcmp.eq.s32.totalorder %v999, 27
  %vm4549 = vcmp.eq.s32.totalorder %v1000, 27
  %vm4550 = vcmp.eq.s32.totalorder %v1001, 27
  %vm4551 = vcmp.eq.s32.totalorder %v1002, 27
  %vm4552 = vcmp.eq.s32.totalorder %v1003, 27
  %vm4553 = vcmp.eq.s32.totalorder %v1004, 27
  %v4554 = vsel %vm4533, 1.0, 0.0
  %v4555 = vsel %vm4534, 1.0, 0.0
  %v4556 = vsel %vm4535, 1.0, 0.0
  %v4557 = vsel %vm4536, 1.0, 0.0
  %v4558 = vsel %vm4537, 1.0, 0.0
  %v4559 = vsel %vm4538, 1.0, 0.0
  %v4560 = vsel %vm4539, 1.0, 0.0
  %v4561 = vsel %vm4540, 1.0, 0.0
  %v4562 = vsel %vm4541, 1.0, 0.0
  %v4563 = vsel %vm4542, 1.0, 0.0
  %v4564 = vsel %vm4543, 1.0, 0.0
  %v4565 = vsel %vm4544, 1.0, 0.0
  %v4566 = vsel %vm4545, 1.0, 0.0
  %v4567 = vsel %vm4546, 1.0, 0.0
  %v4568 = vsel %vm4547, 1.0, 0.0
  %v4569 = vsel %vm4548, 1.0, 0.0
  %v4570 = vsel %vm4549, 1.0, 0.0
  %v4571 = vsel %vm4550, 1.0, 0.0
  %v4572 = vsel %vm4551, 1.0, 0.0
  %v4573 = vsel %vm4552, 1.0, 0.0
  %v4574 = vsel %vm4553, 1.0, 0.0
  %v4576 = vsel %vm1047, %v4556, 0
  %v4579 = vsel %vm1047, %v4559, 0
  %v4582 = vsel %vm1047, %v4562, 0
  %v4585 = vsel %vm1047, %v4565, 0
  %v4588 = vsel %vm1047, %v4568, 0
  %v4591 = vsel %vm1047, %v4571, 0
  %v4594 = vsel %vm1047, %v4574, 0
  %4596 = vmatprep.subr.mxu0 0.0
  %4597 = vmatpush1.msra.mxu0 %v924
  %4598 = vmatprep.subr.mxu0 0.0
  %4599 = vmatpush1.msra.mxu0 %v923
  %4600 = vmatprep.subr.mxu0 0.0
  %4601 = vmatpush1.msra.mxu0 %v922
  %4602 = vmatprep.subr.mxu0 0.0
  %4603 = vmatpush1.msra.mxu0 %v921
  %4604 = vmatprep.subr.mxu0 0.0
  %4605 = vmatpush1.msra.mxu0 %v920
  %4606 = vmatprep.subr.mxu0 0.0
  %4607 = vmatpush1.msra.mxu0 %v919
  %4608 = vmatprep.subr.mxu0 0.0
  %4609 = vmatpush1.msra.mxu0 %v918
  %4610 = vmatprep.subr.mxu0 0.0
  %4611 = vmatpush1.msra.mxu0 %v917
  %4612 = vmatprep.subr.mxu0 0.0
  %4613 = vmatpush1.msra.mxu0 %v916
  %4614 = vmatprep.subr.mxu0 0.0
  %4615 = vmatpush1.msra.mxu0 %v915
  %4616 = vmatprep.subr.mxu0 0.0
  %4617 = vmatpush1.msra.mxu0 %v914
  %4618 = vmatprep.subr.mxu0 0.0
  %4619 = vmatpush1.msra.mxu0 %v913
  %4620 = vmatprep.subr.mxu0 0.0
  %4621 = vmatpush1.msra.mxu0 %v912
  %4622 = vmatprep.subr.mxu0 0.0
  %4623 = vmatpush1.msra.mxu0 %v911
  %4624 = vmatprep.subr.mxu0 0.0
  %4625 = vmatpush1.msra.mxu0 %v910
  %4626 = vmatprep.subr.mxu0 0.0
  %4627 = vmatpush1.msra.mxu0 %v909
  %4628 = vmatprep.subr.mxu0 0.0
  %4629 = vmatpush2.msra.mxu0 %v940
  %4630 = vmatprep.subr.mxu0 0.0
  %4631 = vmatpush2.msra.mxu0 %v939
  %4632 = vmatprep.subr.mxu0 0.0
  %4633 = vmatpush2.msra.mxu0 %v938
  %4634 = vmatprep.subr.mxu0 0.0
  %4635 = vmatpush2.msra.mxu0 %v937
  %4636 = vmatprep.subr.mxu0 0.0
  %4637 = vmatpush2.msra.mxu0 %v936
  %4638 = vmatprep.subr.mxu0 0.0
  %4639 = vmatpush2.msra.mxu0 %v935
  %4640 = vmatprep.subr.mxu0 0.0
  %4641 = vmatpush2.msra.mxu0 %v934
  %4642 = vmatprep.subr.mxu0 0.0
  %4643 = vmatpush2.msra.mxu0 %v933
  %4644 = vmatprep.subr.mxu0 0.0
  %4645 = vmatpush2.msra.mxu0 %v932
  %4646 = vmatprep.subr.mxu0 0.0
  %4647 = vmatpush2.msra.mxu0 %v931
  %4648 = vmatprep.subr.mxu0 0.0
  %4649 = vmatpush2.msra.mxu0 %v930
  %4650 = vmatprep.subr.mxu0 0.0
  %4651 = vmatpush2.msra.mxu0 %v929
  %4652 = vmatprep.subr.mxu0 0.0
  %4653 = vmatpush2.msra.mxu0 %v928
  %4654 = vmatprep.subr.mxu0 0.0
  %4655 = vmatpush2.msra.mxu0 %v927
  %4656 = vmatprep.subr.mxu0 0.0
  %4657 = vmatpush2.msra.mxu0 %v926
  %4658 = vmatprep.subr.mxu0 0.0
  %4659 = vmatpush2.msra.mxu0 %v925
  %4660 = vmatprep.mubr.f32.mxu0 %v4555
  %4661 = vmatmul.mubr.f32.gmra.mxu0 %v4554
  %v4662 = vpop.f32.mrf.mxu0
  %v4663 = vadd.f32 0.0, %v4662
  %v4664 = vpop.f32.mrf.mxu0
  %4665 = vmatprep.mubr.f32.mxu0 %v4558
  %4666 = vmatmul.mubr.f32.gmra.mxu0 %v4557
  %v4667 = vpop.f32.mrf.mxu0
  %v4668 = vadd.f32 0.0, %v4667
  %v4669 = vpop.f32.mrf.mxu0
  %4670 = vmatprep.mubr.f32.mxu0 %v4561
  %4671 = vmatmul.mubr.f32.gmra.mxu0 %v4560
  %v4672 = vpop.f32.mrf.mxu0
  %v4673 = vadd.f32 0.0, %v4672
  %v4674 = vpop.f32.mrf.mxu0
  %4675 = vmatprep.mubr.f32.mxu0 %v4564
  %4676 = vmatmul.mubr.f32.gmra.mxu0 %v4563
  %v4677 = vpop.f32.mrf.mxu0
  %v4678 = vadd.f32 0.0, %v4677
  %v4679 = vpop.f32.mrf.mxu0
  %4680 = vmatprep.mubr.f32.mxu0 %v4567
  %4681 = vmatmul.mubr.f32.gmra.mxu0 %v4566
  %v4682 = vpop.f32.mrf.mxu0
  %v4683 = vadd.f32 0.0, %v4682
  %v4684 = vpop.f32.mrf.mxu0
  %4685 = vmatprep.mubr.f32.mxu0 %v4570
  %4686 = vmatmul.mubr.f32.gmra.mxu0 %v4569
  %v4687 = vpop.f32.mrf.mxu0
  %v4688 = vadd.f32 0.0, %v4687
  %v4689 = vpop.f32.mrf.mxu0
  %4690 = vmatprep.mubr.f32.mxu0 %v4573
  %4691 = vmatmul.mubr.f32.gmra.mxu0 %v4572
  %v4692 = vpop.f32.mrf.mxu0
  %v4693 = vadd.f32 0.0, %v4692
  %v4694 = vpop.f32.mrf.mxu0
  %4695 = vdwg.mxu0
  %4696 = vmatprep.subr.mxu0 0.0
  %4697 = vmatpush1.msra.mxu0 0.0
  %4698 = vmatprep.subr.mxu0 0.0
  %4699 = vmatpush1.msra.mxu0 0.0
  %4700 = vmatprep.subr.mxu0 0.0
  %4701 = vmatpush1.msra.mxu0 0.0
  %4702 = vmatprep.subr.mxu0 0.0
  %4703 = vmatpush1.msra.mxu0 0.0
  %4704 = vmatprep.subr.mxu0 0.0
  %4705 = vmatpush1.msra.mxu0 0.0
  %4706 = vmatprep.subr.mxu0 0.0
  %4707 = vmatpush1.msra.mxu0 %v1071
  %4708 = vmatprep.subr.mxu0 0.0
  %4709 = vmatpush1.msra.mxu0 %v950
  %4710 = vmatprep.subr.mxu0 0.0
  %4711 = vmatpush1.msra.mxu0 %v949
  %4712 = vmatprep.subr.mxu0 0.0
  %4713 = vmatpush1.msra.mxu0 %v948
  %4714 = vmatprep.subr.mxu0 0.0
  %4715 = vmatpush1.msra.mxu0 %v947
  %4716 = vmatprep.subr.mxu0 0.0
  %4717 = vmatpush1.msra.mxu0 %v946
  %4718 = vmatprep.subr.mxu0 0.0
  %4719 = vmatpush1.msra.mxu0 %v945
  %4720 = vmatprep.subr.mxu0 0.0
  %4721 = vmatpush1.msra.mxu0 %v944
  %4722 = vmatprep.subr.mxu0 0.0
  %4723 = vmatpush1.msra.mxu0 %v943
  %4724 = vmatprep.subr.mxu0 0.0
  %4725 = vmatpush1.msra.mxu0 %v942
  %4726 = vmatprep.subr.mxu0 0.0
  %4727 = vmatpush1.msra.mxu0 %v941
  %4728 = vmatprep.subr.mxu0 0.0
  %4729 = vmatpush2.msra.mxu0 0.0
  %4730 = vmatprep.subr.mxu0 0.0
  %4731 = vmatpush2.msra.mxu0 0.0
  %4732 = vmatprep.subr.mxu0 0.0
  %4733 = vmatpush2.msra.mxu0 0.0
  %4734 = vmatprep.subr.mxu0 0.0
  %4735 = vmatpush2.msra.mxu0 0.0
  %4736 = vmatprep.subr.mxu0 0.0
  %4737 = vmatpush2.msra.mxu0 0.0
  %4738 = vmatprep.subr.mxu0 0.0
  %4739 = vmatpush2.msra.mxu0 0.0
  %4740 = vmatprep.subr.mxu0 0.0
  %4741 = vmatpush2.msra.mxu0 0.0
  %4742 = vmatprep.subr.mxu0 0.0
  %4743 = vmatpush2.msra.mxu0 0.0
  %4744 = vmatprep.subr.mxu0 0.0
  %4745 = vmatpush2.msra.mxu0 0.0
  %4746 = vmatprep.subr.mxu0 0.0
  %4747 = vmatpush2.msra.mxu0 0.0
  %4748 = vmatprep.subr.mxu0 0.0
  %4749 = vmatpush2.msra.mxu0 0.0
  %4750 = vmatprep.subr.mxu0 0.0
  %4751 = vmatpush2.msra.mxu0 0.0
  %4752 = vmatprep.subr.mxu0 0.0
  %4753 = vmatpush2.msra.mxu0 0.0
  %4754 = vmatprep.subr.mxu0 0.0
  %4755 = vmatpush2.msra.mxu0 0.0
  %4756 = vmatprep.subr.mxu0 0.0
  %4757 = vmatpush2.msra.mxu0 0.0
  %4758 = vmatprep.subr.mxu0 0.0
  %4759 = vmatpush2.msra.mxu0 0.0
  %4760 = vmatprep.mubr.f32.mxu0 0.0
  %4761 = vmatmul.mubr.f32.gmra.mxu0 %v4576
  %v4762 = vpop.f32.mrf.mxu0
  %v4763 = vadd.f32 %v4663, %v4762
  %v4764 = vpop.f32.mrf.mxu0
  %4765 = vmatprep.mubr.f32.mxu0 0.0
  %4766 = vmatmul.mubr.f32.gmra.mxu0 %v4579
  %v4767 = vpop.f32.mrf.mxu0
  %v4768 = vadd.f32 %v4668, %v4767
  %v4769 = vpop.f32.mrf.mxu0
  %4770 = vmatprep.mubr.f32.mxu0 0.0
  %4771 = vmatmul.mubr.f32.gmra.mxu0 %v4582
  %v4772 = vpop.f32.mrf.mxu0
  %v4773 = vadd.f32 %v4673, %v4772
  %v4774 = vpop.f32.mrf.mxu0
  %4775 = vmatprep.mubr.f32.mxu0 0.0
  %4776 = vmatmul.mubr.f32.gmra.mxu0 %v4585
  %v4777 = vpop.f32.mrf.mxu0
  %v4778 = vadd.f32 %v4678, %v4777
  %v4779 = vpop.f32.mrf.mxu0
  %4780 = vmatprep.mubr.f32.mxu0 0.0
  %4781 = vmatmul.mubr.f32.gmra.mxu0 %v4588
  %v4782 = vpop.f32.mrf.mxu0
  %v4783 = vadd.f32 %v4683, %v4782
  %v4784 = vpop.f32.mrf.mxu0
  %4785 = vmatprep.mubr.f32.mxu0 0.0
  %4786 = vmatmul.mubr.f32.gmra.mxu0 %v4591
  %v4787 = vpop.f32.mrf.mxu0
  %v4788 = vadd.f32 %v4688, %v4787
  %v4789 = vpop.f32.mrf.mxu0
  %4790 = vmatprep.mubr.f32.mxu0 0.0
  %4791 = vmatmul.mubr.f32.gmra.mxu0 %v4594
  %v4792 = vpop.f32.mrf.mxu0
  %v4793 = vadd.f32 %v4693, %v4792
  %v4794 = vpop.f32.mrf.mxu0
  %4795 = vdwg.mxu0
  %v4796 = vld [vmem:[%s4 + $0x90] sm:$0xff]
  %v4797 = vld [vmem:[%s4 + $0x98] sm:$0xff]
  %v4799 = vsel %vm81, %v4763, 0
  %v4802 = vsel %vm81, %v4768, 0
  %v4805 = vsel %vm81, %v4773, 0
  %v4808 = vsel %vm81, %v4778, 0
  %v4811 = vsel %vm81, %v4783, 0
  %v4814 = vsel %vm81, %v4788, 0
  %v4817 = vsel %vm81, %v4793, 0
  %4819 = vmatprep.subr.mxu0 0.0
  %4820 = vmatpush1.msra.mxu0 0.0
  %4821 = vmatprep.subr.mxu0 0.0
  %4822 = vmatpush1.msra.mxu0 0.0
  %4823 = vmatprep.subr.mxu0 0.0
  %4824 = vmatpush1.msra.mxu0 0.0
  %4825 = vmatprep.subr.mxu0 0.0
  %4826 = vmatpush1.msra.mxu0 0.0
  %4827 = vmatprep.subr.mxu0 0.0
  %4828 = vmatpush1.msra.mxu0 0.0
  %4829 = vmatprep.subr.mxu0 0.0
  %4830 = vmatpush1.msra.mxu0 0.0
  %4831 = vmatprep.subr.mxu0 0.0
  %4832 = vmatpush1.msra.mxu0 0.0
  %4833 = vmatprep.subr.mxu0 0.0
  %4834 = vmatpush1.msra.mxu0 0.0
  %4835 = vmatprep.subr.mxu0 0.0
  %4836 = vmatpush1.msra.mxu0 0.0
  %4837 = vmatprep.subr.mxu0 0.0
  %4838 = vmatpush1.msra.mxu0 0.0
  %4839 = vmatprep.subr.mxu0 0.0
  %4840 = vmatpush1.msra.mxu0 0.0
  %4841 = vmatprep.subr.mxu0 0.0
  %4842 = vmatpush1.msra.mxu0 0.0
  %4843 = vmatprep.subr.mxu0 0.0
  %4844 = vmatpush1.msra.mxu0 0.0
  %4845 = vmatprep.subr.mxu0 0.0
  %4846 = vmatpush1.msra.mxu0 0.0
  %4847 = vmatprep.subr.mxu0 0.0
  %4848 = vmatpush1.msra.mxu0 %v4797
  %4849 = vmatprep.subr.mxu0 0.0
  %4850 = vmatpush1.msra.mxu0 %v4796
  %4851 = vmatprep.subr.mxu0 0.0
  %4852 = vmatpush2.msra.mxu0 0.0
  %4853 = vmatprep.subr.mxu0 0.0
  %4854 = vmatpush2.msra.mxu0 0.0
  %4855 = vmatprep.subr.mxu0 0.0
  %4856 = vmatpush2.msra.mxu0 0.0
  %4857 = vmatprep.subr.mxu0 0.0
  %4858 = vmatpush2.msra.mxu0 0.0
  %4859 = vmatprep.subr.mxu0 0.0
  %4860 = vmatpush2.msra.mxu0 0.0
  %4861 = vmatprep.subr.mxu0 0.0
  %4862 = vmatpush2.msra.mxu0 0.0
  %4863 = vmatprep.subr.mxu0 0.0
  %4864 = vmatpush2.msra.mxu0 0.0
  %4865 = vmatprep.subr.mxu0 0.0
  %4866 = vmatpush2.msra.mxu0 0.0
  %4867 = vmatprep.subr.mxu0 0.0
  %4868 = vmatpush2.msra.mxu0 0.0
  %4869 = vmatprep.subr.mxu0 0.0
  %4870 = vmatpush2.msra.mxu0 0.0
  %4871 = vmatprep.subr.mxu0 0.0
  %4872 = vmatpush2.msra.mxu0 0.0
  %4873 = vmatprep.subr.mxu0 0.0
  %4874 = vmatpush2.msra.mxu0 0.0
  %4875 = vmatprep.subr.mxu0 0.0
  %4876 = vmatpush2.msra.mxu0 0.0
  %4877 = vmatprep.subr.mxu0 0.0
  %4878 = vmatpush2.msra.mxu0 0.0
  %4879 = vmatprep.subr.mxu0 0.0
  %4880 = vmatpush2.msra.mxu0 0.0
  %4881 = vmatprep.subr.mxu0 0.0
  %4882 = vmatpush2.msra.mxu0 0.0
  %4883 = vmatprep.mubr.f32.mxu0 0.0
  %4884 = vmatmul.mubr.f32.gmra.mxu0 %v4799
  %v4885 = vpop.f32.mrf.mxu0
  %v4886 = vadd.f32 0.0, %v4885
  %v4887 = vpop.f32.mrf.mxu0
  %4888 = vmatprep.mubr.f32.mxu0 0.0
  %4889 = vmatmul.mubr.f32.gmra.mxu0 %v4802
  %v4890 = vpop.f32.mrf.mxu0
  %v4891 = vadd.f32 0.0, %v4890
  %v4892 = vpop.f32.mrf.mxu0
  %4893 = vmatprep.mubr.f32.mxu0 0.0
  %4894 = vmatmul.mubr.f32.gmra.mxu0 %v4805
  %v4895 = vpop.f32.mrf.mxu0
  %v4896 = vadd.f32 0.0, %v4895
  %v4897 = vpop.f32.mrf.mxu0
  %4898 = vmatprep.mubr.f32.mxu0 0.0
  %4899 = vmatmul.mubr.f32.gmra.mxu0 %v4808
  %v4900 = vpop.f32.mrf.mxu0
  %v4901 = vadd.f32 0.0, %v4900
  %v4902 = vpop.f32.mrf.mxu0
  %4903 = vmatprep.mubr.f32.mxu0 0.0
  %4904 = vmatmul.mubr.f32.gmra.mxu0 %v4811
  %v4905 = vpop.f32.mrf.mxu0
  %v4906 = vadd.f32 0.0, %v4905
  %v4907 = vpop.f32.mrf.mxu0
  %4908 = vmatprep.mubr.f32.mxu0 0.0
  %4909 = vmatmul.mubr.f32.gmra.mxu0 %v4814
  %v4910 = vpop.f32.mrf.mxu0
  %v4911 = vadd.f32 0.0, %v4910
  %v4912 = vpop.f32.mrf.mxu0
  %4913 = vmatprep.mubr.f32.mxu0 0.0
  %4914 = vmatmul.mubr.f32.gmra.mxu0 %v4817
  %v4915 = vpop.f32.mrf.mxu0
  %v4916 = vadd.f32 0.0, %v4915
  %v4917 = vpop.f32.mrf.mxu0
  %4918 = vdwg.mxu0
  %v4919 = vadd.f32 %v4526, %v4886
  %v4920 = vadd.f32 %v4527, %v4891
  %v4921 = vadd.f32 %v4528, %v4896
  %v4922 = vadd.f32 %v4529, %v4901
  %v4923 = vadd.f32 %v4530, %v4906
  %v4924 = vadd.f32 %v4531, %v4911
  %v4925 = vadd.f32 %v4532, %v4916
  %vm4926 = vcmp.eq.s32.totalorder %v984, 28
  %vm4927 = vcmp.eq.s32.totalorder %v985, 28
  %vm4928 = vcmp.eq.s32.totalorder %v986, 28
  %vm4929 = vcmp.eq.s32.totalorder %v987, 28
  %vm4930 = vcmp.eq.s32.totalorder %v988, 28
  %vm4931 = vcmp.eq.s32.totalorder %v989, 28
  %vm4932 = vcmp.eq.s32.totalorder %v990, 28
  %vm4933 = vcmp.eq.s32.totalorder %v991, 28
  %vm4934 = vcmp.eq.s32.totalorder %v992, 28
  %vm4935 = vcmp.eq.s32.totalorder %v993, 28
  %vm4936 = vcmp.eq.s32.totalorder %v994, 28
  %vm4937 = vcmp.eq.s32.totalorder %v995, 28
  %vm4938 = vcmp.eq.s32.totalorder %v996, 28
  %vm4939 = vcmp.eq.s32.totalorder %v997, 28
  %vm4940 = vcmp.eq.s32.totalorder %v998, 28
  %vm4941 = vcmp.eq.s32.totalorder %v999, 28
  %vm4942 = vcmp.eq.s32.totalorder %v1000, 28
  %vm4943 = vcmp.eq.s32.totalorder %v1001, 28
  %vm4944 = vcmp.eq.s32.totalorder %v1002, 28
  %vm4945 = vcmp.eq.s32.totalorder %v1003, 28
  %vm4946 = vcmp.eq.s32.totalorder %v1004, 28
  %v4947 = vsel %vm4926, 1.0, 0.0
  %v4948 = vsel %vm4927, 1.0, 0.0
  %v4949 = vsel %vm4928, 1.0, 0.0
  %v4950 = vsel %vm4929, 1.0, 0.0
  %v4951 = vsel %vm4930, 1.0, 0.0
  %v4952 = vsel %vm4931, 1.0, 0.0
  %v4953 = vsel %vm4932, 1.0, 0.0
  %v4954 = vsel %vm4933, 1.0, 0.0
  %v4955 = vsel %vm4934, 1.0, 0.0
  %v4956 = vsel %vm4935, 1.0, 0.0
  %v4957 = vsel %vm4936, 1.0, 0.0
  %v4958 = vsel %vm4937, 1.0, 0.0
  %v4959 = vsel %vm4938, 1.0, 0.0
  %v4960 = vsel %vm4939, 1.0, 0.0
  %v4961 = vsel %vm4940, 1.0, 0.0
  %v4962 = vsel %vm4941, 1.0, 0.0
  %v4963 = vsel %vm4942, 1.0, 0.0
  %v4964 = vsel %vm4943, 1.0, 0.0
  %v4965 = vsel %vm4944, 1.0, 0.0
  %v4966 = vsel %vm4945, 1.0, 0.0
  %v4967 = vsel %vm4946, 1.0, 0.0
  %v4969 = vsel %vm1047, %v4949, 0
  %v4972 = vsel %vm1047, %v4952, 0
  %v4975 = vsel %vm1047, %v4955, 0
  %v4978 = vsel %vm1047, %v4958, 0
  %v4981 = vsel %vm1047, %v4961, 0
  %v4984 = vsel %vm1047, %v4964, 0
  %v4987 = vsel %vm1047, %v4967, 0
  %4989 = vmatprep.subr.mxu0 0.0
  %4990 = vmatpush1.msra.mxu0 %v924
  %4991 = vmatprep.subr.mxu0 0.0
  %4992 = vmatpush1.msra.mxu0 %v923
  %4993 = vmatprep.subr.mxu0 0.0
  %4994 = vmatpush1.msra.mxu0 %v922
  %4995 = vmatprep.subr.mxu0 0.0
  %4996 = vmatpush1.msra.mxu0 %v921
  %4997 = vmatprep.subr.mxu0 0.0
  %4998 = vmatpush1.msra.mxu0 %v920
  %4999 = vmatprep.subr.mxu0 0.0
  %5000 = vmatpush1.msra.mxu0 %v919
  %5001 = vmatprep.subr.mxu0 0.0
  %5002 = vmatpush1.msra.mxu0 %v918
  %5003 = vmatprep.subr.mxu0 0.0
  %5004 = vmatpush1.msra.mxu0 %v917
  %5005 = vmatprep.subr.mxu0 0.0
  %5006 = vmatpush1.msra.mxu0 %v916
  %5007 = vmatprep.subr.mxu0 0.0
  %5008 = vmatpush1.msra.mxu0 %v915
  %5009 = vmatprep.subr.mxu0 0.0
  %5010 = vmatpush1.msra.mxu0 %v914
  %5011 = vmatprep.subr.mxu0 0.0
  %5012 = vmatpush1.msra.mxu0 %v913
  %5013 = vmatprep.subr.mxu0 0.0
  %5014 = vmatpush1.msra.mxu0 %v912
  %5015 = vmatprep.subr.mxu0 0.0
  %5016 = vmatpush1.msra.mxu0 %v911
  %5017 = vmatprep.subr.mxu0 0.0
  %5018 = vmatpush1.msra.mxu0 %v910
  %5019 = vmatprep.subr.mxu0 0.0
  %5020 = vmatpush1.msra.mxu0 %v909
  %5021 = vmatprep.subr.mxu0 0.0
  %5022 = vmatpush2.msra.mxu0 %v940
  %5023 = vmatprep.subr.mxu0 0.0
  %5024 = vmatpush2.msra.mxu0 %v939
  %5025 = vmatprep.subr.mxu0 0.0
  %5026 = vmatpush2.msra.mxu0 %v938
  %5027 = vmatprep.subr.mxu0 0.0
  %5028 = vmatpush2.msra.mxu0 %v937
  %5029 = vmatprep.subr.mxu0 0.0
  %5030 = vmatpush2.msra.mxu0 %v936
  %5031 = vmatprep.subr.mxu0 0.0
  %5032 = vmatpush2.msra.mxu0 %v935
  %5033 = vmatprep.subr.mxu0 0.0
  %5034 = vmatpush2.msra.mxu0 %v934
  %5035 = vmatprep.subr.mxu0 0.0
  %5036 = vmatpush2.msra.mxu0 %v933
  %5037 = vmatprep.subr.mxu0 0.0
  %5038 = vmatpush2.msra.mxu0 %v932
  %5039 = vmatprep.subr.mxu0 0.0
  %5040 = vmatpush2.msra.mxu0 %v931
  %5041 = vmatprep.subr.mxu0 0.0
  %5042 = vmatpush2.msra.mxu0 %v930
  %5043 = vmatprep.subr.mxu0 0.0
  %5044 = vmatpush2.msra.mxu0 %v929
  %5045 = vmatprep.subr.mxu0 0.0
  %5046 = vmatpush2.msra.mxu0 %v928
  %5047 = vmatprep.subr.mxu0 0.0
  %5048 = vmatpush2.msra.mxu0 %v927
  %5049 = vmatprep.subr.mxu0 0.0
  %5050 = vmatpush2.msra.mxu0 %v926
  %5051 = vmatprep.subr.mxu0 0.0
  %5052 = vmatpush2.msra.mxu0 %v925
  %5053 = vmatprep.mubr.f32.mxu0 %v4948
  %5054 = vmatmul.mubr.f32.gmra.mxu0 %v4947
  %v5055 = vpop.f32.mrf.mxu0
  %v5056 = vadd.f32 0.0, %v5055
  %v5057 = vpop.f32.mrf.mxu0
  %5058 = vmatprep.mubr.f32.mxu0 %v4951
  %5059 = vmatmul.mubr.f32.gmra.mxu0 %v4950
  %v5060 = vpop.f32.mrf.mxu0
  %v5061 = vadd.f32 0.0, %v5060
  %v5062 = vpop.f32.mrf.mxu0
  %5063 = vmatprep.mubr.f32.mxu0 %v4954
  %5064 = vmatmul.mubr.f32.gmra.mxu0 %v4953
  %v5065 = vpop.f32.mrf.mxu0
  %v5066 = vadd.f32 0.0, %v5065
  %v5067 = vpop.f32.mrf.mxu0
  %5068 = vmatprep.mubr.f32.mxu0 %v4957
  %5069 = vmatmul.mubr.f32.gmra.mxu0 %v4956
  %v5070 = vpop.f32.mrf.mxu0
  %v5071 = vadd.f32 0.0, %v5070
  %v5072 = vpop.f32.mrf.mxu0
  %5073 = vmatprep.mubr.f32.mxu0 %v4960
  %5074 = vmatmul.mubr.f32.gmra.mxu0 %v4959
  %v5075 = vpop.f32.mrf.mxu0
  %v5076 = vadd.f32 0.0, %v5075
  %v5077 = vpop.f32.mrf.mxu0
  %5078 = vmatprep.mubr.f32.mxu0 %v4963
  %5079 = vmatmul.mubr.f32.gmra.mxu0 %v4962
  %v5080 = vpop.f32.mrf.mxu0
  %v5081 = vadd.f32 0.0, %v5080
  %v5082 = vpop.f32.mrf.mxu0
  %5083 = vmatprep.mubr.f32.mxu0 %v4966
  %5084 = vmatmul.mubr.f32.gmra.mxu0 %v4965
  %v5085 = vpop.f32.mrf.mxu0
  %v5086 = vadd.f32 0.0, %v5085
  %v5087 = vpop.f32.mrf.mxu0
  %5088 = vdwg.mxu0
  %5089 = vmatprep.subr.mxu0 0.0
  %5090 = vmatpush1.msra.mxu0 0.0
  %5091 = vmatprep.subr.mxu0 0.0
  %5092 = vmatpush1.msra.mxu0 0.0
  %5093 = vmatprep.subr.mxu0 0.0
  %5094 = vmatpush1.msra.mxu0 0.0
  %5095 = vmatprep.subr.mxu0 0.0
  %5096 = vmatpush1.msra.mxu0 0.0
  %5097 = vmatprep.subr.mxu0 0.0
  %5098 = vmatpush1.msra.mxu0 0.0
  %5099 = vmatprep.subr.mxu0 0.0
  %5100 = vmatpush1.msra.mxu0 %v1071
  %5101 = vmatprep.subr.mxu0 0.0
  %5102 = vmatpush1.msra.mxu0 %v950
  %5103 = vmatprep.subr.mxu0 0.0
  %5104 = vmatpush1.msra.mxu0 %v949
  %5105 = vmatprep.subr.mxu0 0.0
  %5106 = vmatpush1.msra.mxu0 %v948
  %5107 = vmatprep.subr.mxu0 0.0
  %5108 = vmatpush1.msra.mxu0 %v947
  %5109 = vmatprep.subr.mxu0 0.0
  %5110 = vmatpush1.msra.mxu0 %v946
  %5111 = vmatprep.subr.mxu0 0.0
  %5112 = vmatpush1.msra.mxu0 %v945
  %5113 = vmatprep.subr.mxu0 0.0
  %5114 = vmatpush1.msra.mxu0 %v944
  %5115 = vmatprep.subr.mxu0 0.0
  %5116 = vmatpush1.msra.mxu0 %v943
  %5117 = vmatprep.subr.mxu0 0.0
  %5118 = vmatpush1.msra.mxu0 %v942
  %5119 = vmatprep.subr.mxu0 0.0
  %5120 = vmatpush1.msra.mxu0 %v941
  %5121 = vmatprep.subr.mxu0 0.0
  %5122 = vmatpush2.msra.mxu0 0.0
  %5123 = vmatprep.subr.mxu0 0.0
  %5124 = vmatpush2.msra.mxu0 0.0
  %5125 = vmatprep.subr.mxu0 0.0
  %5126 = vmatpush2.msra.mxu0 0.0
  %5127 = vmatprep.subr.mxu0 0.0
  %5128 = vmatpush2.msra.mxu0 0.0
  %5129 = vmatprep.subr.mxu0 0.0
  %5130 = vmatpush2.msra.mxu0 0.0
  %5131 = vmatprep.subr.mxu0 0.0
  %5132 = vmatpush2.msra.mxu0 0.0
  %5133 = vmatprep.subr.mxu0 0.0
  %5134 = vmatpush2.msra.mxu0 0.0
  %5135 = vmatprep.subr.mxu0 0.0
  %5136 = vmatpush2.msra.mxu0 0.0
  %5137 = vmatprep.subr.mxu0 0.0
  %5138 = vmatpush2.msra.mxu0 0.0
  %5139 = vmatprep.subr.mxu0 0.0
  %5140 = vmatpush2.msra.mxu0 0.0
  %5141 = vmatprep.subr.mxu0 0.0
  %5142 = vmatpush2.msra.mxu0 0.0
  %5143 = vmatprep.subr.mxu0 0.0
  %5144 = vmatpush2.msra.mxu0 0.0
  %5145 = vmatprep.subr.mxu0 0.0
  %5146 = vmatpush2.msra.mxu0 0.0
  %5147 = vmatprep.subr.mxu0 0.0
  %5148 = vmatpush2.msra.mxu0 0.0
  %5149 = vmatprep.subr.mxu0 0.0
  %5150 = vmatpush2.msra.mxu0 0.0
  %5151 = vmatprep.subr.mxu0 0.0
  %5152 = vmatpush2.msra.mxu0 0.0
  %5153 = vmatprep.mubr.f32.mxu0 0.0
  %5154 = vmatmul.mubr.f32.gmra.mxu0 %v4969
  %v5155 = vpop.f32.mrf.mxu0
  %v5156 = vadd.f32 %v5056, %v5155
  %v5157 = vpop.f32.mrf.mxu0
  %5158 = vmatprep.mubr.f32.mxu0 0.0
  %5159 = vmatmul.mubr.f32.gmra.mxu0 %v4972
  %v5160 = vpop.f32.mrf.mxu0
  %v5161 = vadd.f32 %v5061, %v5160
  %v5162 = vpop.f32.mrf.mxu0
  %5163 = vmatprep.mubr.f32.mxu0 0.0
  %5164 = vmatmul.mubr.f32.gmra.mxu0 %v4975
  %v5165 = vpop.f32.mrf.mxu0
  %v5166 = vadd.f32 %v5066, %v5165
  %v5167 = vpop.f32.mrf.mxu0
  %5168 = vmatprep.mubr.f32.mxu0 0.0
  %5169 = vmatmul.mubr.f32.gmra.mxu0 %v4978
  %v5170 = vpop.f32.mrf.mxu0
  %v5171 = vadd.f32 %v5071, %v5170
  %v5172 = vpop.f32.mrf.mxu0
  %5173 = vmatprep.mubr.f32.mxu0 0.0
  %5174 = vmatmul.mubr.f32.gmra.mxu0 %v4981
  %v5175 = vpop.f32.mrf.mxu0
  %v5176 = vadd.f32 %v5076, %v5175
  %v5177 = vpop.f32.mrf.mxu0
  %5178 = vmatprep.mubr.f32.mxu0 0.0
  %5179 = vmatmul.mubr.f32.gmra.mxu0 %v4984
  %v5180 = vpop.f32.mrf.mxu0
  %v5181 = vadd.f32 %v5081, %v5180
  %v5182 = vpop.f32.mrf.mxu0
  %5183 = vmatprep.mubr.f32.mxu0 0.0
  %5184 = vmatmul.mubr.f32.gmra.mxu0 %v4987
  %v5185 = vpop.f32.mrf.mxu0
  %v5186 = vadd.f32 %v5086, %v5185
  %v5187 = vpop.f32.mrf.mxu0
  %5188 = vdwg.mxu0
  %v5189 = vld [vmem:[%s4 + $0xa0] sm:$0xff]
  %v5190 = vld [vmem:[%s4 + $0xa8] sm:$0xff]
  %v5192 = vsel %vm81, %v5156, 0
  %v5195 = vsel %vm81, %v5161, 0
  %v5198 = vsel %vm81, %v5166, 0
  %v5201 = vsel %vm81, %v5171, 0
  %v5204 = vsel %vm81, %v5176, 0
  %v5207 = vsel %vm81, %v5181, 0
  %v5210 = vsel %vm81, %v5186, 0
  %5212 = vmatprep.subr.mxu0 0.0
  %5213 = vmatpush1.msra.mxu0 0.0
  %5214 = vmatprep.subr.mxu0 0.0
  %5215 = vmatpush1.msra.mxu0 0.0
  %5216 = vmatprep.subr.mxu0 0.0
  %5217 = vmatpush1.msra.mxu0 0.0
  %5218 = vmatprep.subr.mxu0 0.0
  %5219 = vmatpush1.msra.mxu0 0.0
  %5220 = vmatprep.subr.mxu0 0.0
  %5221 = vmatpush1.msra.mxu0 0.0
  %5222 = vmatprep.subr.mxu0 0.0
  %5223 = vmatpush1.msra.mxu0 0.0
  %5224 = vmatprep.subr.mxu0 0.0
  %5225 = vmatpush1.msra.mxu0 0.0
  %5226 = vmatprep.subr.mxu0 0.0
  %5227 = vmatpush1.msra.mxu0 0.0
  %5228 = vmatprep.subr.mxu0 0.0
  %5229 = vmatpush1.msra.mxu0 0.0
  %5230 = vmatprep.subr.mxu0 0.0
  %5231 = vmatpush1.msra.mxu0 0.0
  %5232 = vmatprep.subr.mxu0 0.0
  %5233 = vmatpush1.msra.mxu0 0.0
  %5234 = vmatprep.subr.mxu0 0.0
  %5235 = vmatpush1.msra.mxu0 0.0
  %5236 = vmatprep.subr.mxu0 0.0
  %5237 = vmatpush1.msra.mxu0 0.0
  %5238 = vmatprep.subr.mxu0 0.0
  %5239 = vmatpush1.msra.mxu0 0.0
  %5240 = vmatprep.subr.mxu0 0.0
  %5241 = vmatpush1.msra.mxu0 %v5190
  %5242 = vmatprep.subr.mxu0 0.0
  %5243 = vmatpush1.msra.mxu0 %v5189
  %5244 = vmatprep.subr.mxu0 0.0
  %5245 = vmatpush2.msra.mxu0 0.0
  %5246 = vmatprep.subr.mxu0 0.0
  %5247 = vmatpush2.msra.mxu0 0.0
  %5248 = vmatprep.subr.mxu0 0.0
  %5249 = vmatpush2.msra.mxu0 0.0
  %5250 = vmatprep.subr.mxu0 0.0
  %5251 = vmatpush2.msra.mxu0 0.0
  %5252 = vmatprep.subr.mxu0 0.0
  %5253 = vmatpush2.msra.mxu0 0.0
  %5254 = vmatprep.subr.mxu0 0.0
  %5255 = vmatpush2.msra.mxu0 0.0
  %5256 = vmatprep.subr.mxu0 0.0
  %5257 = vmatpush2.msra.mxu0 0.0
  %5258 = vmatprep.subr.mxu0 0.0
  %5259 = vmatpush2.msra.mxu0 0.0
  %5260 = vmatprep.subr.mxu0 0.0
  %5261 = vmatpush2.msra.mxu0 0.0
  %5262 = vmatprep.subr.mxu0 0.0
  %5263 = vmatpush2.msra.mxu0 0.0
  %5264 = vmatprep.subr.mxu0 0.0
  %5265 = vmatpush2.msra.mxu0 0.0
  %5266 = vmatprep.subr.mxu0 0.0
  %5267 = vmatpush2.msra.mxu0 0.0
  %5268 = vmatprep.subr.mxu0 0.0
  %5269 = vmatpush2.msra.mxu0 0.0
  %5270 = vmatprep.subr.mxu0 0.0
  %5271 = vmatpush2.msra.mxu0 0.0
  %5272 = vmatprep.subr.mxu0 0.0
  %5273 = vmatpush2.msra.mxu0 0.0
  %5274 = vmatprep.subr.mxu0 0.0
  %5275 = vmatpush2.msra.mxu0 0.0
  %5276 = vmatprep.mubr.f32.mxu0 0.0
  %5277 = vmatmul.mubr.f32.gmra.mxu0 %v5192
  %v5278 = vpop.f32.mrf.mxu0
  %v5279 = vadd.f32 0.0, %v5278
  %v5280 = vpop.f32.mrf.mxu0
  %5281 = vmatprep.mubr.f32.mxu0 0.0
  %5282 = vmatmul.mubr.f32.gmra.mxu0 %v5195
  %v5283 = vpop.f32.mrf.mxu0
  %v5284 = vadd.f32 0.0, %v5283
  %v5285 = vpop.f32.mrf.mxu0
  %5286 = vmatprep.mubr.f32.mxu0 0.0
  %5287 = vmatmul.mubr.f32.gmra.mxu0 %v5198
  %v5288 = vpop.f32.mrf.mxu0
  %v5289 = vadd.f32 0.0, %v5288
  %v5290 = vpop.f32.mrf.mxu0
  %5291 = vmatprep.mubr.f32.mxu0 0.0
  %5292 = vmatmul.mubr.f32.gmra.mxu0 %v5201
  %v5293 = vpop.f32.mrf.mxu0
  %v5294 = vadd.f32 0.0, %v5293
  %v5295 = vpop.f32.mrf.mxu0
  %5296 = vmatprep.mubr.f32.mxu0 0.0
  %5297 = vmatmul.mubr.f32.gmra.mxu0 %v5204
  %v5298 = vpop.f32.mrf.mxu0
  %v5299 = vadd.f32 0.0, %v5298
  %v5300 = vpop.f32.mrf.mxu0
  %5301 = vmatprep.mubr.f32.mxu0 0.0
  %5302 = vmatmul.mubr.f32.gmra.mxu0 %v5207
  %v5303 = vpop.f32.mrf.mxu0
  %v5304 = vadd.f32 0.0, %v5303
  %v5305 = vpop.f32.mrf.mxu0
  %5306 = vmatprep.mubr.f32.mxu0 0.0
  %5307 = vmatmul.mubr.f32.gmra.mxu0 %v5210
  %v5308 = vpop.f32.mrf.mxu0
  %v5309 = vadd.f32 0.0, %v5308
  %v5310 = vpop.f32.mrf.mxu0
  %5311 = vdwg.mxu0
  %v5312 = vadd.f32 %v4919, %v5279
  %v5313 = vadd.f32 %v4920, %v5284
  %v5314 = vadd.f32 %v4921, %v5289
  %v5315 = vadd.f32 %v4922, %v5294
  %v5316 = vadd.f32 %v4923, %v5299
  %v5317 = vadd.f32 %v4924, %v5304
  %v5318 = vadd.f32 %v4925, %v5309
  %vm5319 = vcmp.eq.s32.totalorder %v984, 29
  %vm5320 = vcmp.eq.s32.totalorder %v985, 29
  %vm5321 = vcmp.eq.s32.totalorder %v986, 29
  %vm5322 = vcmp.eq.s32.totalorder %v987, 29
  %vm5323 = vcmp.eq.s32.totalorder %v988, 29
  %vm5324 = vcmp.eq.s32.totalorder %v989, 29
  %vm5325 = vcmp.eq.s32.totalorder %v990, 29
  %vm5326 = vcmp.eq.s32.totalorder %v991, 29
  %vm5327 = vcmp.eq.s32.totalorder %v992, 29
  %vm5328 = vcmp.eq.s32.totalorder %v993, 29
  %vm5329 = vcmp.eq.s32.totalorder %v994, 29
  %vm5330 = vcmp.eq.s32.totalorder %v995, 29
  %vm5331 = vcmp.eq.s32.totalorder %v996, 29
  %vm5332 = vcmp.eq.s32.totalorder %v997, 29
  %vm5333 = vcmp.eq.s32.totalorder %v998, 29
  %vm5334 = vcmp.eq.s32.totalorder %v999, 29
  %vm5335 = vcmp.eq.s32.totalorder %v1000, 29
  %vm5336 = vcmp.eq.s32.totalorder %v1001, 29
  %vm5337 = vcmp.eq.s32.totalorder %v1002, 29
  %vm5338 = vcmp.eq.s32.totalorder %v1003, 29
  %vm5339 = vcmp.eq.s32.totalorder %v1004, 29
  %v5340 = vsel %vm5319, 1.0, 0.0
  %v5341 = vsel %vm5320, 1.0, 0.0
  %v5342 = vsel %vm5321, 1.0, 0.0
  %v5343 = vsel %vm5322, 1.0, 0.0
  %v5344 = vsel %vm5323, 1.0, 0.0
  %v5345 = vsel %vm5324, 1.0, 0.0
  %v5346 = vsel %vm5325, 1.0, 0.0
  %v5347 = vsel %vm5326, 1.0, 0.0
  %v5348 = vsel %vm5327, 1.0, 0.0
  %v5349 = vsel %vm5328, 1.0, 0.0
  %v5350 = vsel %vm5329, 1.0, 0.0
  %v5351 = vsel %vm5330, 1.0, 0.0
  %v5352 = vsel %vm5331, 1.0, 0.0
  %v5353 = vsel %vm5332, 1.0, 0.0
  %v5354 = vsel %vm5333, 1.0, 0.0
  %v5355 = vsel %vm5334, 1.0, 0.0
  %v5356 = vsel %vm5335, 1.0, 0.0
  %v5357 = vsel %vm5336, 1.0, 0.0
  %v5358 = vsel %vm5337, 1.0, 0.0
  %v5359 = vsel %vm5338, 1.0, 0.0
  %v5360 = vsel %vm5339, 1.0, 0.0
  %v5362 = vsel %vm1047, %v5342, 0
  %v5365 = vsel %vm1047, %v5345, 0
  %v5368 = vsel %vm1047, %v5348, 0
  %v5371 = vsel %vm1047, %v5351, 0
  %v5374 = vsel %vm1047, %v5354, 0
  %v5377 = vsel %vm1047, %v5357, 0
  %v5380 = vsel %vm1047, %v5360, 0
  %5382 = vmatprep.subr.mxu0 0.0
  %5383 = vmatpush1.msra.mxu0 %v924
  %5384 = vmatprep.subr.mxu0 0.0
  %5385 = vmatpush1.msra.mxu0 %v923
  %5386 = vmatprep.subr.mxu0 0.0
  %5387 = vmatpush1.msra.mxu0 %v922
  %5388 = vmatprep.subr.mxu0 0.0
  %5389 = vmatpush1.msra.mxu0 %v921
  %5390 = vmatprep.subr.mxu0 0.0
  %5391 = vmatpush1.msra.mxu0 %v920
  %5392 = vmatprep.subr.mxu0 0.0
  %5393 = vmatpush1.msra.mxu0 %v919
  %5394 = vmatprep.subr.mxu0 0.0
  %5395 = vmatpush1.msra.mxu0 %v918
  %5396 = vmatprep.subr.mxu0 0.0
  %5397 = vmatpush1.msra.mxu0 %v917
  %5398 = vmatprep.subr.mxu0 0.0
  %5399 = vmatpush1.msra.mxu0 %v916
  %5400 = vmatprep.subr.mxu0 0.0
  %5401 = vmatpush1.msra.mxu0 %v915
  %5402 = vmatprep.subr.mxu0 0.0
  %5403 = vmatpush1.msra.mxu0 %v914
  %5404 = vmatprep.subr.mxu0 0.0
  %5405 = vmatpush1.msra.mxu0 %v913
  %5406 = vmatprep.subr.mxu0 0.0
  %5407 = vmatpush1.msra.mxu0 %v912
  %5408 = vmatprep.subr.mxu0 0.0
  %5409 = vmatpush1.msra.mxu0 %v911
  %5410 = vmatprep.subr.mxu0 0.0
  %5411 = vmatpush1.msra.mxu0 %v910
  %5412 = vmatprep.subr.mxu0 0.0
  %5413 = vmatpush1.msra.mxu0 %v909
  %5414 = vmatprep.subr.mxu0 0.0
  %5415 = vmatpush2.msra.mxu0 %v940
  %5416 = vmatprep.subr.mxu0 0.0
  %5417 = vmatpush2.msra.mxu0 %v939
  %5418 = vmatprep.subr.mxu0 0.0
  %5419 = vmatpush2.msra.mxu0 %v938
  %5420 = vmatprep.subr.mxu0 0.0
  %5421 = vmatpush2.msra.mxu0 %v937
  %5422 = vmatprep.subr.mxu0 0.0
  %5423 = vmatpush2.msra.mxu0 %v936
  %5424 = vmatprep.subr.mxu0 0.0
  %5425 = vmatpush2.msra.mxu0 %v935
  %5426 = vmatprep.subr.mxu0 0.0
  %5427 = vmatpush2.msra.mxu0 %v934
  %5428 = vmatprep.subr.mxu0 0.0
  %5429 = vmatpush2.msra.mxu0 %v933
  %5430 = vmatprep.subr.mxu0 0.0
  %5431 = vmatpush2.msra.mxu0 %v932
  %5432 = vmatprep.subr.mxu0 0.0
  %5433 = vmatpush2.msra.mxu0 %v931
  %5434 = vmatprep.subr.mxu0 0.0
  %5435 = vmatpush2.msra.mxu0 %v930
  %5436 = vmatprep.subr.mxu0 0.0
  %5437 = vmatpush2.msra.mxu0 %v929
  %5438 = vmatprep.subr.mxu0 0.0
  %5439 = vmatpush2.msra.mxu0 %v928
  %5440 = vmatprep.subr.mxu0 0.0
  %5441 = vmatpush2.msra.mxu0 %v927
  %5442 = vmatprep.subr.mxu0 0.0
  %5443 = vmatpush2.msra.mxu0 %v926
  %5444 = vmatprep.subr.mxu0 0.0
  %5445 = vmatpush2.msra.mxu0 %v925
  %5446 = vmatprep.mubr.f32.mxu0 %v5341
  %5447 = vmatmul.mubr.f32.gmra.mxu0 %v5340
  %v5448 = vpop.f32.mrf.mxu0
  %v5449 = vadd.f32 0.0, %v5448
  %v5450 = vpop.f32.mrf.mxu0
  %5451 = vmatprep.mubr.f32.mxu0 %v5344
  %5452 = vmatmul.mubr.f32.gmra.mxu0 %v5343
  %v5453 = vpop.f32.mrf.mxu0
  %v5454 = vadd.f32 0.0, %v5453
  %v5455 = vpop.f32.mrf.mxu0
  %5456 = vmatprep.mubr.f32.mxu0 %v5347
  %5457 = vmatmul.mubr.f32.gmra.mxu0 %v5346
  %v5458 = vpop.f32.mrf.mxu0
  %v5459 = vadd.f32 0.0, %v5458
  %v5460 = vpop.f32.mrf.mxu0
  %5461 = vmatprep.mubr.f32.mxu0 %v5350
  %5462 = vmatmul.mubr.f32.gmra.mxu0 %v5349
  %v5463 = vpop.f32.mrf.mxu0
  %v5464 = vadd.f32 0.0, %v5463
  %v5465 = vpop.f32.mrf.mxu0
  %5466 = vmatprep.mubr.f32.mxu0 %v5353
  %5467 = vmatmul.mubr.f32.gmra.mxu0 %v5352
  %v5468 = vpop.f32.mrf.mxu0
  %v5469 = vadd.f32 0.0, %v5468
  %v5470 = vpop.f32.mrf.mxu0
  %5471 = vmatprep.mubr.f32.mxu0 %v5356
  %5472 = vmatmul.mubr.f32.gmra.mxu0 %v5355
  %v5473 = vpop.f32.mrf.mxu0
  %v5474 = vadd.f32 0.0, %v5473
  %v5475 = vpop.f32.mrf.mxu0
  %5476 = vmatprep.mubr.f32.mxu0 %v5359
  %5477 = vmatmul.mubr.f32.gmra.mxu0 %v5358
  %v5478 = vpop.f32.mrf.mxu0
  %v5479 = vadd.f32 0.0, %v5478
  %v5480 = vpop.f32.mrf.mxu0
  %5481 = vdwg.mxu0
  %5482 = vmatprep.subr.mxu0 0.0
  %5483 = vmatpush1.msra.mxu0 0.0
  %5484 = vmatprep.subr.mxu0 0.0
  %5485 = vmatpush1.msra.mxu0 0.0
  %5486 = vmatprep.subr.mxu0 0.0
  %5487 = vmatpush1.msra.mxu0 0.0
  %5488 = vmatprep.subr.mxu0 0.0
  %5489 = vmatpush1.msra.mxu0 0.0
  %5490 = vmatprep.subr.mxu0 0.0
  %5491 = vmatpush1.msra.mxu0 0.0
  %5492 = vmatprep.subr.mxu0 0.0
  %5493 = vmatpush1.msra.mxu0 %v1071
  %5494 = vmatprep.subr.mxu0 0.0
  %5495 = vmatpush1.msra.mxu0 %v950
  %5496 = vmatprep.subr.mxu0 0.0
  %5497 = vmatpush1.msra.mxu0 %v949
  %5498 = vmatprep.subr.mxu0 0.0
  %5499 = vmatpush1.msra.mxu0 %v948
  %5500 = vmatprep.subr.mxu0 0.0
  %5501 = vmatpush1.msra.mxu0 %v947
  %5502 = vmatprep.subr.mxu0 0.0
  %5503 = vmatpush1.msra.mxu0 %v946
  %5504 = vmatprep.subr.mxu0 0.0
  %5505 = vmatpush1.msra.mxu0 %v945
  %5506 = vmatprep.subr.mxu0 0.0
  %5507 = vmatpush1.msra.mxu0 %v944
  %5508 = vmatprep.subr.mxu0 0.0
  %5509 = vmatpush1.msra.mxu0 %v943
  %5510 = vmatprep.subr.mxu0 0.0
  %5511 = vmatpush1.msra.mxu0 %v942
  %5512 = vmatprep.subr.mxu0 0.0
  %5513 = vmatpush1.msra.mxu0 %v941
  %5514 = vmatprep.subr.mxu0 0.0
  %5515 = vmatpush2.msra.mxu0 0.0
  %5516 = vmatprep.subr.mxu0 0.0
  %5517 = vmatpush2.msra.mxu0 0.0
  %5518 = vmatprep.subr.mxu0 0.0
  %5519 = vmatpush2.msra.mxu0 0.0
  %5520 = vmatprep.subr.mxu0 0.0
  %5521 = vmatpush2.msra.mxu0 0.0
  %5522 = vmatprep.subr.mxu0 0.0
  %5523 = vmatpush2.msra.mxu0 0.0
  %5524 = vmatprep.subr.mxu0 0.0
  %5525 = vmatpush2.msra.mxu0 0.0
  %5526 = vmatprep.subr.mxu0 0.0
  %5527 = vmatpush2.msra.mxu0 0.0
  %5528 = vmatprep.subr.mxu0 0.0
  %5529 = vmatpush2.msra.mxu0 0.0
  %5530 = vmatprep.subr.mxu0 0.0
  %5531 = vmatpush2.msra.mxu0 0.0
  %5532 = vmatprep.subr.mxu0 0.0
  %5533 = vmatpush2.msra.mxu0 0.0
  %5534 = vmatprep.subr.mxu0 0.0
  %5535 = vmatpush2.msra.mxu0 0.0
  %5536 = vmatprep.subr.mxu0 0.0
  %5537 = vmatpush2.msra.mxu0 0.0
  %5538 = vmatprep.subr.mxu0 0.0
  %5539 = vmatpush2.msra.mxu0 0.0
  %5540 = vmatprep.subr.mxu0 0.0
  %5541 = vmatpush2.msra.mxu0 0.0
  %5542 = vmatprep.subr.mxu0 0.0
  %5543 = vmatpush2.msra.mxu0 0.0
  %5544 = vmatprep.subr.mxu0 0.0
  %5545 = vmatpush2.msra.mxu0 0.0
  %5546 = vmatprep.mubr.f32.mxu0 0.0
  %5547 = vmatmul.mubr.f32.gmra.mxu0 %v5362
  %v5548 = vpop.f32.mrf.mxu0
  %v5549 = vadd.f32 %v5449, %v5548
  %v5550 = vpop.f32.mrf.mxu0
  %5551 = vmatprep.mubr.f32.mxu0 0.0
  %5552 = vmatmul.mubr.f32.gmra.mxu0 %v5365
  %v5553 = vpop.f32.mrf.mxu0
  %v5554 = vadd.f32 %v5454, %v5553
  %v5555 = vpop.f32.mrf.mxu0
  %5556 = vmatprep.mubr.f32.mxu0 0.0
  %5557 = vmatmul.mubr.f32.gmra.mxu0 %v5368
  %v5558 = vpop.f32.mrf.mxu0
  %v5559 = vadd.f32 %v5459, %v5558
  %v5560 = vpop.f32.mrf.mxu0
  %5561 = vmatprep.mubr.f32.mxu0 0.0
  %5562 = vmatmul.mubr.f32.gmra.mxu0 %v5371
  %v5563 = vpop.f32.mrf.mxu0
  %v5564 = vadd.f32 %v5464, %v5563
  %v5565 = vpop.f32.mrf.mxu0
  %5566 = vmatprep.mubr.f32.mxu0 0.0
  %5567 = vmatmul.mubr.f32.gmra.mxu0 %v5374
  %v5568 = vpop.f32.mrf.mxu0
  %v5569 = vadd.f32 %v5469, %v5568
  %v5570 = vpop.f32.mrf.mxu0
  %5571 = vmatprep.mubr.f32.mxu0 0.0
  %5572 = vmatmul.mubr.f32.gmra.mxu0 %v5377
  %v5573 = vpop.f32.mrf.mxu0
  %v5574 = vadd.f32 %v5474, %v5573
  %v5575 = vpop.f32.mrf.mxu0
  %5576 = vmatprep.mubr.f32.mxu0 0.0
  %5577 = vmatmul.mubr.f32.gmra.mxu0 %v5380
  %v5578 = vpop.f32.mrf.mxu0
  %v5579 = vadd.f32 %v5479, %v5578
  %v5580 = vpop.f32.mrf.mxu0
  %5581 = vdwg.mxu0
  %v5582 = vld [vmem:[%s4 + $0xb0] sm:$0xff]
  %v5583 = vld [vmem:[%s4 + $0xb8] sm:$0xff]
  %v5585 = vsel %vm81, %v5549, 0
  %v5588 = vsel %vm81, %v5554, 0
  %v5591 = vsel %vm81, %v5559, 0
  %v5594 = vsel %vm81, %v5564, 0
  %v5597 = vsel %vm81, %v5569, 0
  %v5600 = vsel %vm81, %v5574, 0
  %v5603 = vsel %vm81, %v5579, 0
  %5605 = vmatprep.subr.mxu0 0.0
  %5606 = vmatpush1.msra.mxu0 0.0
  %5607 = vmatprep.subr.mxu0 0.0
  %5608 = vmatpush1.msra.mxu0 0.0
  %5609 = vmatprep.subr.mxu0 0.0
  %5610 = vmatpush1.msra.mxu0 0.0
  %5611 = vmatprep.subr.mxu0 0.0
  %5612 = vmatpush1.msra.mxu0 0.0
  %5613 = vmatprep.subr.mxu0 0.0
  %5614 = vmatpush1.msra.mxu0 0.0
  %5615 = vmatprep.subr.mxu0 0.0
  %5616 = vmatpush1.msra.mxu0 0.0
  %5617 = vmatprep.subr.mxu0 0.0
  %5618 = vmatpush1.msra.mxu0 0.0
  %5619 = vmatprep.subr.mxu0 0.0
  %5620 = vmatpush1.msra.mxu0 0.0
  %5621 = vmatprep.subr.mxu0 0.0
  %5622 = vmatpush1.msra.mxu0 0.0
  %5623 = vmatprep.subr.mxu0 0.0
  %5624 = vmatpush1.msra.mxu0 0.0
  %5625 = vmatprep.subr.mxu0 0.0
  %5626 = vmatpush1.msra.mxu0 0.0
  %5627 = vmatprep.subr.mxu0 0.0
  %5628 = vmatpush1.msra.mxu0 0.0
  %5629 = vmatprep.subr.mxu0 0.0
  %5630 = vmatpush1.msra.mxu0 0.0
  %5631 = vmatprep.subr.mxu0 0.0
  %5632 = vmatpush1.msra.mxu0 0.0
  %5633 = vmatprep.subr.mxu0 0.0
  %5634 = vmatpush1.msra.mxu0 %v5583
  %5635 = vmatprep.subr.mxu0 0.0
  %5636 = vmatpush1.msra.mxu0 %v5582
  %5637 = vmatprep.subr.mxu0 0.0
  %5638 = vmatpush2.msra.mxu0 0.0
  %5639 = vmatprep.subr.mxu0 0.0
  %5640 = vmatpush2.msra.mxu0 0.0
  %5641 = vmatprep.subr.mxu0 0.0
  %5642 = vmatpush2.msra.mxu0 0.0
  %5643 = vmatprep.subr.mxu0 0.0
  %5644 = vmatpush2.msra.mxu0 0.0
  %5645 = vmatprep.subr.mxu0 0.0
  %5646 = vmatpush2.msra.mxu0 0.0
  %5647 = vmatprep.subr.mxu0 0.0
  %5648 = vmatpush2.msra.mxu0 0.0
  %5649 = vmatprep.subr.mxu0 0.0
  %5650 = vmatpush2.msra.mxu0 0.0
  %5651 = vmatprep.subr.mxu0 0.0
  %5652 = vmatpush2.msra.mxu0 0.0
  %5653 = vmatprep.subr.mxu0 0.0
  %5654 = vmatpush2.msra.mxu0 0.0
  %5655 = vmatprep.subr.mxu0 0.0
  %5656 = vmatpush2.msra.mxu0 0.0
  %5657 = vmatprep.subr.mxu0 0.0
  %5658 = vmatpush2.msra.mxu0 0.0
  %5659 = vmatprep.subr.mxu0 0.0
  %5660 = vmatpush2.msra.mxu0 0.0
  %5661 = vmatprep.subr.mxu0 0.0
  %5662 = vmatpush2.msra.mxu0 0.0
  %5663 = vmatprep.subr.mxu0 0.0
  %5664 = vmatpush2.msra.mxu0 0.0
  %5665 = vmatprep.subr.mxu0 0.0
  %5666 = vmatpush2.msra.mxu0 0.0
  %5667 = vmatprep.subr.mxu0 0.0
  %5668 = vmatpush2.msra.mxu0 0.0
  %5669 = vmatprep.mubr.f32.mxu0 0.0
  %5670 = vmatmul.mubr.f32.gmra.mxu0 %v5585
  %v5671 = vpop.f32.mrf.mxu0
  %v5672 = vadd.f32 0.0, %v5671
  %v5673 = vpop.f32.mrf.mxu0
  %5674 = vmatprep.mubr.f32.mxu0 0.0
  %5675 = vmatmul.mubr.f32.gmra.mxu0 %v5588
  %v5676 = vpop.f32.mrf.mxu0
  %v5677 = vadd.f32 0.0, %v5676
  %v5678 = vpop.f32.mrf.mxu0
  %5679 = vmatprep.mubr.f32.mxu0 0.0
  %5680 = vmatmul.mubr.f32.gmra.mxu0 %v5591
  %v5681 = vpop.f32.mrf.mxu0
  %v5682 = vadd.f32 0.0, %v5681
  %v5683 = vpop.f32.mrf.mxu0
  %5684 = vmatprep.mubr.f32.mxu0 0.0
  %5685 = vmatmul.mubr.f32.gmra.mxu0 %v5594
  %v5686 = vpop.f32.mrf.mxu0
  %v5687 = vadd.f32 0.0, %v5686
  %v5688 = vpop.f32.mrf.mxu0
  %5689 = vmatprep.mubr.f32.mxu0 0.0
  %5690 = vmatmul.mubr.f32.gmra.mxu0 %v5597
  %v5691 = vpop.f32.mrf.mxu0
  %v5692 = vadd.f32 0.0, %v5691
  %v5693 = vpop.f32.mrf.mxu0
  %5694 = vmatprep.mubr.f32.mxu0 0.0
  %5695 = vmatmul.mubr.f32.gmra.mxu0 %v5600
  %v5696 = vpop.f32.mrf.mxu0
  %v5697 = vadd.f32 0.0, %v5696
  %v5698 = vpop.f32.mrf.mxu0
  %5699 = vmatprep.mubr.f32.mxu0 0.0
  %5700 = vmatmul.mubr.f32.gmra.mxu0 %v5603
  %v5701 = vpop.f32.mrf.mxu0
  %v5702 = vadd.f32 0.0, %v5701
  %v5703 = vpop.f32.mrf.mxu0
  %5704 = vdwg.mxu0
  %v5705 = vadd.f32 %v5312, %v5672
  %v5706 = vadd.f32 %v5313, %v5677
  %v5707 = vadd.f32 %v5314, %v5682
  %v5708 = vadd.f32 %v5315, %v5687
  %v5709 = vadd.f32 %v5316, %v5692
  %v5710 = vadd.f32 %v5317, %v5697
  %v5711 = vadd.f32 %v5318, %v5702
  %vm5712 = vcmp.eq.s32.totalorder %v984, 39
  %vm5713 = vcmp.eq.s32.totalorder %v985, 39
  %vm5714 = vcmp.eq.s32.totalorder %v986, 39
  %vm5715 = vcmp.eq.s32.totalorder %v987, 39
  %vm5716 = vcmp.eq.s32.totalorder %v988, 39
  %vm5717 = vcmp.eq.s32.totalorder %v989, 39
  %vm5718 = vcmp.eq.s32.totalorder %v990, 39
  %vm5719 = vcmp.eq.s32.totalorder %v991, 39
  %vm5720 = vcmp.eq.s32.totalorder %v992, 39
  %vm5721 = vcmp.eq.s32.totalorder %v993, 39
  %vm5722 = vcmp.eq.s32.totalorder %v994, 39
  %vm5723 = vcmp.eq.s32.totalorder %v995, 39
  %vm5724 = vcmp.eq.s32.totalorder %v996, 39
  %vm5725 = vcmp.eq.s32.totalorder %v997, 39
  %vm5726 = vcmp.eq.s32.totalorder %v998, 39
  %vm5727 = vcmp.eq.s32.totalorder %v999, 39
  %vm5728 = vcmp.eq.s32.totalorder %v1000, 39
  %vm5729 = vcmp.eq.s32.totalorder %v1001, 39
  %vm5730 = vcmp.eq.s32.totalorder %v1002, 39
  %vm5731 = vcmp.eq.s32.totalorder %v1003, 39
  %vm5732 = vcmp.eq.s32.totalorder %v1004, 39
  %v5733 = vsel %vm5712, 1.0, 0.0
  %v5734 = vsel %vm5713, 1.0, 0.0
  %v5735 = vsel %vm5714, 1.0, 0.0
  %v5736 = vsel %vm5715, 1.0, 0.0
  %v5737 = vsel %vm5716, 1.0, 0.0
  %v5738 = vsel %vm5717, 1.0, 0.0
  %v5739 = vsel %vm5718, 1.0, 0.0
  %v5740 = vsel %vm5719, 1.0, 0.0
  %v5741 = vsel %vm5720, 1.0, 0.0
  %v5742 = vsel %vm5721, 1.0, 0.0
  %v5743 = vsel %vm5722, 1.0, 0.0
  %v5744 = vsel %vm5723, 1.0, 0.0
  %v5745 = vsel %vm5724, 1.0, 0.0
  %v5746 = vsel %vm5725, 1.0, 0.0
  %v5747 = vsel %vm5726, 1.0, 0.0
  %v5748 = vsel %vm5727, 1.0, 0.0
  %v5749 = vsel %vm5728, 1.0, 0.0
  %v5750 = vsel %vm5729, 1.0, 0.0
  %v5751 = vsel %vm5730, 1.0, 0.0
  %v5752 = vsel %vm5731, 1.0, 0.0
  %v5753 = vsel %vm5732, 1.0, 0.0
  %v5755 = vsel %vm1047, %v5735, 0
  %v5758 = vsel %vm1047, %v5738, 0
  %v5761 = vsel %vm1047, %v5741, 0
  %v5764 = vsel %vm1047, %v5744, 0
  %v5767 = vsel %vm1047, %v5747, 0
  %v5770 = vsel %vm1047, %v5750, 0
  %v5773 = vsel %vm1047, %v5753, 0
  %5775 = vmatprep.subr.mxu0 0.0
  %5776 = vmatpush1.msra.mxu0 %v924
  %5777 = vmatprep.subr.mxu0 0.0
  %5778 = vmatpush1.msra.mxu0 %v923
  %5779 = vmatprep.subr.mxu0 0.0
  %5780 = vmatpush1.msra.mxu0 %v922
  %5781 = vmatprep.subr.mxu0 0.0
  %5782 = vmatpush1.msra.mxu0 %v921
  %5783 = vmatprep.subr.mxu0 0.0
  %5784 = vmatpush1.msra.mxu0 %v920
  %5785 = vmatprep.subr.mxu0 0.0
  %5786 = vmatpush1.msra.mxu0 %v919
  %5787 = vmatprep.subr.mxu0 0.0
  %5788 = vmatpush1.msra.mxu0 %v918
  %5789 = vmatprep.subr.mxu0 0.0
  %5790 = vmatpush1.msra.mxu0 %v917
  %5791 = vmatprep.subr.mxu0 0.0
  %5792 = vmatpush1.msra.mxu0 %v916
  %5793 = vmatprep.subr.mxu0 0.0
  %5794 = vmatpush1.msra.mxu0 %v915
  %5795 = vmatprep.subr.mxu0 0.0
  %5796 = vmatpush1.msra.mxu0 %v914
  %5797 = vmatprep.subr.mxu0 0.0
  %5798 = vmatpush1.msra.mxu0 %v913
  %5799 = vmatprep.subr.mxu0 0.0
  %5800 = vmatpush1.msra.mxu0 %v912
  %5801 = vmatprep.subr.mxu0 0.0
  %5802 = vmatpush1.msra.mxu0 %v911
  %5803 = vmatprep.subr.mxu0 0.0
  %5804 = vmatpush1.msra.mxu0 %v910
  %5805 = vmatprep.subr.mxu0 0.0
  %5806 = vmatpush1.msra.mxu0 %v909
  %5807 = vmatprep.subr.mxu0 0.0
  %5808 = vmatpush2.msra.mxu0 %v940
  %5809 = vmatprep.subr.mxu0 0.0
  %5810 = vmatpush2.msra.mxu0 %v939
  %5811 = vmatprep.subr.mxu0 0.0
  %5812 = vmatpush2.msra.mxu0 %v938
  %5813 = vmatprep.subr.mxu0 0.0
  %5814 = vmatpush2.msra.mxu0 %v937
  %5815 = vmatprep.subr.mxu0 0.0
  %5816 = vmatpush2.msra.mxu0 %v936
  %5817 = vmatprep.subr.mxu0 0.0
  %5818 = vmatpush2.msra.mxu0 %v935
  %5819 = vmatprep.subr.mxu0 0.0
  %5820 = vmatpush2.msra.mxu0 %v934
  %5821 = vmatprep.subr.mxu0 0.0
  %5822 = vmatpush2.msra.mxu0 %v933
  %5823 = vmatprep.subr.mxu0 0.0
  %5824 = vmatpush2.msra.mxu0 %v932
  %5825 = vmatprep.subr.mxu0 0.0
  %5826 = vmatpush2.msra.mxu0 %v931
  %5827 = vmatprep.subr.mxu0 0.0
  %5828 = vmatpush2.msra.mxu0 %v930
  %5829 = vmatprep.subr.mxu0 0.0
  %5830 = vmatpush2.msra.mxu0 %v929
  %5831 = vmatprep.subr.mxu0 0.0
  %5832 = vmatpush2.msra.mxu0 %v928
  %5833 = vmatprep.subr.mxu0 0.0
  %5834 = vmatpush2.msra.mxu0 %v927
  %5835 = vmatprep.subr.mxu0 0.0
  %5836 = vmatpush2.msra.mxu0 %v926
  %5837 = vmatprep.subr.mxu0 0.0
  %5838 = vmatpush2.msra.mxu0 %v925
  %5839 = vmatprep.mubr.f32.mxu0 %v5734
  %5840 = vmatmul.mubr.f32.gmra.mxu0 %v5733
  %v5841 = vpop.f32.mrf.mxu0
  %v5842 = vadd.f32 0.0, %v5841
  %v5843 = vpop.f32.mrf.mxu0
  %5844 = vmatprep.mubr.f32.mxu0 %v5737
  %5845 = vmatmul.mubr.f32.gmra.mxu0 %v5736
  %v5846 = vpop.f32.mrf.mxu0
  %v5847 = vadd.f32 0.0, %v5846
  %v5848 = vpop.f32.mrf.mxu0
  %5849 = vmatprep.mubr.f32.mxu0 %v5740
  %5850 = vmatmul.mubr.f32.gmra.mxu0 %v5739
  %v5851 = vpop.f32.mrf.mxu0
  %v5852 = vadd.f32 0.0, %v5851
  %v5853 = vpop.f32.mrf.mxu0
  %5854 = vmatprep.mubr.f32.mxu0 %v5743
  %5855 = vmatmul.mubr.f32.gmra.mxu0 %v5742
  %v5856 = vpop.f32.mrf.mxu0
  %v5857 = vadd.f32 0.0, %v5856
  %v5858 = vpop.f32.mrf.mxu0
  %5859 = vmatprep.mubr.f32.mxu0 %v5746
  %5860 = vmatmul.mubr.f32.gmra.mxu0 %v5745
  %v5861 = vpop.f32.mrf.mxu0
  %v5862 = vadd.f32 0.0, %v5861
  %v5863 = vpop.f32.mrf.mxu0
  %5864 = vmatprep.mubr.f32.mxu0 %v5749
  %5865 = vmatmul.mubr.f32.gmra.mxu0 %v5748
  %v5866 = vpop.f32.mrf.mxu0
  %v5867 = vadd.f32 0.0, %v5866
  %v5868 = vpop.f32.mrf.mxu0
  %5869 = vmatprep.mubr.f32.mxu0 %v5752
  %5870 = vmatmul.mubr.f32.gmra.mxu0 %v5751
  %v5871 = vpop.f32.mrf.mxu0
  %v5872 = vadd.f32 0.0, %v5871
  %v5873 = vpop.f32.mrf.mxu0
  %5874 = vdwg.mxu0
  %5875 = vmatprep.subr.mxu0 0.0
  %5876 = vmatpush1.msra.mxu0 0.0
  %5877 = vmatprep.subr.mxu0 0.0
  %5878 = vmatpush1.msra.mxu0 0.0
  %5879 = vmatprep.subr.mxu0 0.0
  %5880 = vmatpush1.msra.mxu0 0.0
  %5881 = vmatprep.subr.mxu0 0.0
  %5882 = vmatpush1.msra.mxu0 0.0
  %5883 = vmatprep.subr.mxu0 0.0
  %5884 = vmatpush1.msra.mxu0 0.0
  %5885 = vmatprep.subr.mxu0 0.0
  %5886 = vmatpush1.msra.mxu0 %v1071
  %5887 = vmatprep.subr.mxu0 0.0
  %5888 = vmatpush1.msra.mxu0 %v950
  %5889 = vmatprep.subr.mxu0 0.0
  %5890 = vmatpush1.msra.mxu0 %v949
  %5891 = vmatprep.subr.mxu0 0.0
  %5892 = vmatpush1.msra.mxu0 %v948
  %5893 = vmatprep.subr.mxu0 0.0
  %5894 = vmatpush1.msra.mxu0 %v947
  %5895 = vmatprep.subr.mxu0 0.0
  %5896 = vmatpush1.msra.mxu0 %v946
  %5897 = vmatprep.subr.mxu0 0.0
  %5898 = vmatpush1.msra.mxu0 %v945
  %5899 = vmatprep.subr.mxu0 0.0
  %5900 = vmatpush1.msra.mxu0 %v944
  %5901 = vmatprep.subr.mxu0 0.0
  %5902 = vmatpush1.msra.mxu0 %v943
  %5903 = vmatprep.subr.mxu0 0.0
  %5904 = vmatpush1.msra.mxu0 %v942
  %5905 = vmatprep.subr.mxu0 0.0
  %5906 = vmatpush1.msra.mxu0 %v941
  %5907 = vmatprep.subr.mxu0 0.0
  %5908 = vmatpush2.msra.mxu0 0.0
  %5909 = vmatprep.subr.mxu0 0.0
  %5910 = vmatpush2.msra.mxu0 0.0
  %5911 = vmatprep.subr.mxu0 0.0
  %5912 = vmatpush2.msra.mxu0 0.0
  %5913 = vmatprep.subr.mxu0 0.0
  %5914 = vmatpush2.msra.mxu0 0.0
  %5915 = vmatprep.subr.mxu0 0.0
  %5916 = vmatpush2.msra.mxu0 0.0
  %5917 = vmatprep.subr.mxu0 0.0
  %5918 = vmatpush2.msra.mxu0 0.0
  %5919 = vmatprep.subr.mxu0 0.0
  %5920 = vmatpush2.msra.mxu0 0.0
  %5921 = vmatprep.subr.mxu0 0.0
  %5922 = vmatpush2.msra.mxu0 0.0
  %5923 = vmatprep.subr.mxu0 0.0
  %5924 = vmatpush2.msra.mxu0 0.0
  %5925 = vmatprep.subr.mxu0 0.0
  %5926 = vmatpush2.msra.mxu0 0.0
  %5927 = vmatprep.subr.mxu0 0.0
  %5928 = vmatpush2.msra.mxu0 0.0
  %5929 = vmatprep.subr.mxu0 0.0
  %5930 = vmatpush2.msra.mxu0 0.0
  %5931 = vmatprep.subr.mxu0 0.0
  %5932 = vmatpush2.msra.mxu0 0.0
  %5933 = vmatprep.subr.mxu0 0.0
  %5934 = vmatpush2.msra.mxu0 0.0
  %5935 = vmatprep.subr.mxu0 0.0
  %5936 = vmatpush2.msra.mxu0 0.0
  %5937 = vmatprep.subr.mxu0 0.0
  %5938 = vmatpush2.msra.mxu0 0.0
  %5939 = vmatprep.mubr.f32.mxu0 0.0
  %5940 = vmatmul.mubr.f32.gmra.mxu0 %v5755
  %v5941 = vpop.f32.mrf.mxu0
  %v5942 = vadd.f32 %v5842, %v5941
  %v5943 = vpop.f32.mrf.mxu0
  %5944 = vmatprep.mubr.f32.mxu0 0.0
  %5945 = vmatmul.mubr.f32.gmra.mxu0 %v5758
  %v5946 = vpop.f32.mrf.mxu0
  %v5947 = vadd.f32 %v5847, %v5946
  %v5948 = vpop.f32.mrf.mxu0
  %5949 = vmatprep.mubr.f32.mxu0 0.0
  %5950 = vmatmul.mubr.f32.gmra.mxu0 %v5761
  %v5951 = vpop.f32.mrf.mxu0
  %v5952 = vadd.f32 %v5852, %v5951
  %v5953 = vpop.f32.mrf.mxu0
  %5954 = vmatprep.mubr.f32.mxu0 0.0
  %5955 = vmatmul.mubr.f32.gmra.mxu0 %v5764
  %v5956 = vpop.f32.mrf.mxu0
  %v5957 = vadd.f32 %v5857, %v5956
  %v5958 = vpop.f32.mrf.mxu0
  %5959 = vmatprep.mubr.f32.mxu0 0.0
  %5960 = vmatmul.mubr.f32.gmra.mxu0 %v5767
  %v5961 = vpop.f32.mrf.mxu0
  %v5962 = vadd.f32 %v5862, %v5961
  %v5963 = vpop.f32.mrf.mxu0
  %5964 = vmatprep.mubr.f32.mxu0 0.0
  %5965 = vmatmul.mubr.f32.gmra.mxu0 %v5770
  %v5966 = vpop.f32.mrf.mxu0
  %v5967 = vadd.f32 %v5867, %v5966
  %v5968 = vpop.f32.mrf.mxu0
  %5969 = vmatprep.mubr.f32.mxu0 0.0
  %5970 = vmatmul.mubr.f32.gmra.mxu0 %v5773
  %v5971 = vpop.f32.mrf.mxu0
  %v5972 = vadd.f32 %v5872, %v5971
  %v5973 = vpop.f32.mrf.mxu0
  %5974 = vdwg.mxu0
  %v5975 = vld [vmem:[%s4 + $0xc0] sm:$0xff]
  %v5976 = vld [vmem:[%s4 + $0xc8] sm:$0xff]
  %v5978 = vsel %vm81, %v5942, 0
  %v5981 = vsel %vm81, %v5947, 0
  %v5984 = vsel %vm81, %v5952, 0
  %v5987 = vsel %vm81, %v5957, 0
  %v5990 = vsel %vm81, %v5962, 0
  %v5993 = vsel %vm81, %v5967, 0
  %v5996 = vsel %vm81, %v5972, 0
  %5998 = vmatprep.subr.mxu0 0.0
  %5999 = vmatpush1.msra.mxu0 0.0
  %6000 = vmatprep.subr.mxu0 0.0
  %6001 = vmatpush1.msra.mxu0 0.0
  %6002 = vmatprep.subr.mxu0 0.0
  %6003 = vmatpush1.msra.mxu0 0.0
  %6004 = vmatprep.subr.mxu0 0.0
  %6005 = vmatpush1.msra.mxu0 0.0
  %6006 = vmatprep.subr.mxu0 0.0
  %6007 = vmatpush1.msra.mxu0 0.0
  %6008 = vmatprep.subr.mxu0 0.0
  %6009 = vmatpush1.msra.mxu0 0.0
  %6010 = vmatprep.subr.mxu0 0.0
  %6011 = vmatpush1.msra.mxu0 0.0
  %6012 = vmatprep.subr.mxu0 0.0
  %6013 = vmatpush1.msra.mxu0 0.0
  %6014 = vmatprep.subr.mxu0 0.0
  %6015 = vmatpush1.msra.mxu0 0.0
  %6016 = vmatprep.subr.mxu0 0.0
  %6017 = vmatpush1.msra.mxu0 0.0
  %6018 = vmatprep.subr.mxu0 0.0
  %6019 = vmatpush1.msra.mxu0 0.0
  %6020 = vmatprep.subr.mxu0 0.0
  %6021 = vmatpush1.msra.mxu0 0.0
  %6022 = vmatprep.subr.mxu0 0.0
  %6023 = vmatpush1.msra.mxu0 0.0
  %6024 = vmatprep.subr.mxu0 0.0
  %6025 = vmatpush1.msra.mxu0 0.0
  %6026 = vmatprep.subr.mxu0 0.0
  %6027 = vmatpush1.msra.mxu0 %v5976
  %6028 = vmatprep.subr.mxu0 0.0
  %6029 = vmatpush1.msra.mxu0 %v5975
  %6030 = vmatprep.subr.mxu0 0.0
  %6031 = vmatpush2.msra.mxu0 0.0
  %6032 = vmatprep.subr.mxu0 0.0
  %6033 = vmatpush2.msra.mxu0 0.0
  %6034 = vmatprep.subr.mxu0 0.0
  %6035 = vmatpush2.msra.mxu0 0.0
  %6036 = vmatprep.subr.mxu0 0.0
  %6037 = vmatpush2.msra.mxu0 0.0
  %6038 = vmatprep.subr.mxu0 0.0
  %6039 = vmatpush2.msra.mxu0 0.0
  %6040 = vmatprep.subr.mxu0 0.0
  %6041 = vmatpush2.msra.mxu0 0.0
  %6042 = vmatprep.subr.mxu0 0.0
  %6043 = vmatpush2.msra.mxu0 0.0
  %6044 = vmatprep.subr.mxu0 0.0
  %6045 = vmatpush2.msra.mxu0 0.0
  %6046 = vmatprep.subr.mxu0 0.0
  %6047 = vmatpush2.msra.mxu0 0.0
  %6048 = vmatprep.subr.mxu0 0.0
  %6049 = vmatpush2.msra.mxu0 0.0
  %6050 = vmatprep.subr.mxu0 0.0
  %6051 = vmatpush2.msra.mxu0 0.0
  %6052 = vmatprep.subr.mxu0 0.0
  %6053 = vmatpush2.msra.mxu0 0.0
  %6054 = vmatprep.subr.mxu0 0.0
  %6055 = vmatpush2.msra.mxu0 0.0
  %6056 = vmatprep.subr.mxu0 0.0
  %6057 = vmatpush2.msra.mxu0 0.0
  %6058 = vmatprep.subr.mxu0 0.0
  %6059 = vmatpush2.msra.mxu0 0.0
  %6060 = vmatprep.subr.mxu0 0.0
  %6061 = vmatpush2.msra.mxu0 0.0
  %6062 = vmatprep.mubr.f32.mxu0 0.0
  %6063 = vmatmul.mubr.f32.gmra.mxu0 %v5978
  %v6064 = vpop.f32.mrf.mxu0
  %v6065 = vadd.f32 0.0, %v6064
  %v6066 = vpop.f32.mrf.mxu0
  %6067 = vmatprep.mubr.f32.mxu0 0.0
  %6068 = vmatmul.mubr.f32.gmra.mxu0 %v5981
  %v6069 = vpop.f32.mrf.mxu0
  %v6070 = vadd.f32 0.0, %v6069
  %v6071 = vpop.f32.mrf.mxu0
  %6072 = vmatprep.mubr.f32.mxu0 0.0
  %6073 = vmatmul.mubr.f32.gmra.mxu0 %v5984
  %v6074 = vpop.f32.mrf.mxu0
  %v6075 = vadd.f32 0.0, %v6074
  %v6076 = vpop.f32.mrf.mxu0
  %6077 = vmatprep.mubr.f32.mxu0 0.0
  %6078 = vmatmul.mubr.f32.gmra.mxu0 %v5987
  %v6079 = vpop.f32.mrf.mxu0
  %v6080 = vadd.f32 0.0, %v6079
  %v6081 = vpop.f32.mrf.mxu0
  %6082 = vmatprep.mubr.f32.mxu0 0.0
  %6083 = vmatmul.mubr.f32.gmra.mxu0 %v5990
  %v6084 = vpop.f32.mrf.mxu0
  %v6085 = vadd.f32 0.0, %v6084
  %v6086 = vpop.f32.mrf.mxu0
  %6087 = vmatprep.mubr.f32.mxu0 0.0
  %6088 = vmatmul.mubr.f32.gmra.mxu0 %v5993
  %v6089 = vpop.f32.mrf.mxu0
  %v6090 = vadd.f32 0.0, %v6089
  %v6091 = vpop.f32.mrf.mxu0
  %6092 = vmatprep.mubr.f32.mxu0 0.0
  %6093 = vmatmul.mubr.f32.gmra.mxu0 %v5996
  %v6094 = vpop.f32.mrf.mxu0
  %v6095 = vadd.f32 0.0, %v6094
  %v6096 = vpop.f32.mrf.mxu0
  %6097 = vdwg.mxu0
  %v6098 = vadd.f32 %v5705, %v6065
  %v6099 = vadd.f32 %v5706, %v6070
  %v6100 = vadd.f32 %v5707, %v6075
  %v6101 = vadd.f32 %v5708, %v6080
  %v6102 = vadd.f32 %v5709, %v6085
  %v6103 = vadd.f32 %v5710, %v6090
  %v6104 = vadd.f32 %v5711, %v6095
  %vm6105 = vcmp.eq.s32.totalorder %v984, 40
  %vm6106 = vcmp.eq.s32.totalorder %v985, 40
  %vm6107 = vcmp.eq.s32.totalorder %v986, 40
  %vm6108 = vcmp.eq.s32.totalorder %v987, 40
  %vm6109 = vcmp.eq.s32.totalorder %v988, 40
  %vm6110 = vcmp.eq.s32.totalorder %v989, 40
  %vm6111 = vcmp.eq.s32.totalorder %v990, 40
  %vm6112 = vcmp.eq.s32.totalorder %v991, 40
  %vm6113 = vcmp.eq.s32.totalorder %v992, 40
  %vm6114 = vcmp.eq.s32.totalorder %v993, 40
  %vm6115 = vcmp.eq.s32.totalorder %v994, 40
  %vm6116 = vcmp.eq.s32.totalorder %v995, 40
  %vm6117 = vcmp.eq.s32.totalorder %v996, 40
  %vm6118 = vcmp.eq.s32.totalorder %v997, 40
  %vm6119 = vcmp.eq.s32.totalorder %v998, 40
  %vm6120 = vcmp.eq.s32.totalorder %v999, 40
  %vm6121 = vcmp.eq.s32.totalorder %v1000, 40
  %vm6122 = vcmp.eq.s32.totalorder %v1001, 40
  %vm6123 = vcmp.eq.s32.totalorder %v1002, 40
  %vm6124 = vcmp.eq.s32.totalorder %v1003, 40
  %vm6125 = vcmp.eq.s32.totalorder %v1004, 40
  %v6126 = vsel %vm6105, 1.0, 0.0
  %v6127 = vsel %vm6106, 1.0, 0.0
  %v6128 = vsel %vm6107, 1.0, 0.0
  %v6129 = vsel %vm6108, 1.0, 0.0
  %v6130 = vsel %vm6109, 1.0, 0.0
  %v6131 = vsel %vm6110, 1.0, 0.0
  %v6132 = vsel %vm6111, 1.0, 0.0
  %v6133 = vsel %vm6112, 1.0, 0.0
  %v6134 = vsel %vm6113, 1.0, 0.0
  %v6135 = vsel %vm6114, 1.0, 0.0
  %v6136 = vsel %vm6115, 1.0, 0.0
  %v6137 = vsel %vm6116, 1.0, 0.0
  %v6138 = vsel %vm6117, 1.0, 0.0
  %v6139 = vsel %vm6118, 1.0, 0.0
  %v6140 = vsel %vm6119, 1.0, 0.0
  %v6141 = vsel %vm6120, 1.0, 0.0
  %v6142 = vsel %vm6121, 1.0, 0.0
  %v6143 = vsel %vm6122, 1.0, 0.0
  %v6144 = vsel %vm6123, 1.0, 0.0
  %v6145 = vsel %vm6124, 1.0, 0.0
  %v6146 = vsel %vm6125, 1.0, 0.0
  %v6148 = vsel %vm1047, %v6128, 0
  %v6151 = vsel %vm1047, %v6131, 0
  %v6154 = vsel %vm1047, %v6134, 0
  %v6157 = vsel %vm1047, %v6137, 0
  %v6160 = vsel %vm1047, %v6140, 0
  %v6163 = vsel %vm1047, %v6143, 0
  %v6166 = vsel %vm1047, %v6146, 0
  %6168 = vmatprep.subr.mxu0 0.0
  %6169 = vmatpush1.msra.mxu0 %v924
  %6170 = vmatprep.subr.mxu0 0.0
  %6171 = vmatpush1.msra.mxu0 %v923
  %6172 = vmatprep.subr.mxu0 0.0
  %6173 = vmatpush1.msra.mxu0 %v922
  %6174 = vmatprep.subr.mxu0 0.0
  %6175 = vmatpush1.msra.mxu0 %v921
  %6176 = vmatprep.subr.mxu0 0.0
  %6177 = vmatpush1.msra.mxu0 %v920
  %6178 = vmatprep.subr.mxu0 0.0
  %6179 = vmatpush1.msra.mxu0 %v919
  %6180 = vmatprep.subr.mxu0 0.0
  %6181 = vmatpush1.msra.mxu0 %v918
  %6182 = vmatprep.subr.mxu0 0.0
  %6183 = vmatpush1.msra.mxu0 %v917
  %6184 = vmatprep.subr.mxu0 0.0
  %6185 = vmatpush1.msra.mxu0 %v916
  %6186 = vmatprep.subr.mxu0 0.0
  %6187 = vmatpush1.msra.mxu0 %v915
  %6188 = vmatprep.subr.mxu0 0.0
  %6189 = vmatpush1.msra.mxu0 %v914
  %6190 = vmatprep.subr.mxu0 0.0
  %6191 = vmatpush1.msra.mxu0 %v913
  %6192 = vmatprep.subr.mxu0 0.0
  %6193 = vmatpush1.msra.mxu0 %v912
  %6194 = vmatprep.subr.mxu0 0.0
  %6195 = vmatpush1.msra.mxu0 %v911
  %6196 = vmatprep.subr.mxu0 0.0
  %6197 = vmatpush1.msra.mxu0 %v910
  %6198 = vmatprep.subr.mxu0 0.0
  %6199 = vmatpush1.msra.mxu0 %v909
  %6200 = vmatprep.subr.mxu0 0.0
  %6201 = vmatpush2.msra.mxu0 %v940
  %6202 = vmatprep.subr.mxu0 0.0
  %6203 = vmatpush2.msra.mxu0 %v939
  %6204 = vmatprep.subr.mxu0 0.0
  %6205 = vmatpush2.msra.mxu0 %v938
  %6206 = vmatprep.subr.mxu0 0.0
  %6207 = vmatpush2.msra.mxu0 %v937
  %6208 = vmatprep.subr.mxu0 0.0
  %6209 = vmatpush2.msra.mxu0 %v936
  %6210 = vmatprep.subr.mxu0 0.0
  %6211 = vmatpush2.msra.mxu0 %v935
  %6212 = vmatprep.subr.mxu0 0.0
  %6213 = vmatpush2.msra.mxu0 %v934
  %6214 = vmatprep.subr.mxu0 0.0
  %6215 = vmatpush2.msra.mxu0 %v933
  %6216 = vmatprep.subr.mxu0 0.0
  %6217 = vmatpush2.msra.mxu0 %v932
  %6218 = vmatprep.subr.mxu0 0.0
  %6219 = vmatpush2.msra.mxu0 %v931
  %6220 = vmatprep.subr.mxu0 0.0
  %6221 = vmatpush2.msra.mxu0 %v930
  %6222 = vmatprep.subr.mxu0 0.0
  %6223 = vmatpush2.msra.mxu0 %v929
  %6224 = vmatprep.subr.mxu0 0.0
  %6225 = vmatpush2.msra.mxu0 %v928
  %6226 = vmatprep.subr.mxu0 0.0
  %6227 = vmatpush2.msra.mxu0 %v927
  %6228 = vmatprep.subr.mxu0 0.0
  %6229 = vmatpush2.msra.mxu0 %v926
  %6230 = vmatprep.subr.mxu0 0.0
  %6231 = vmatpush2.msra.mxu0 %v925
  %6232 = vmatprep.mubr.f32.mxu0 %v6127
  %6233 = vmatmul.mubr.f32.gmra.mxu0 %v6126
  %v6234 = vpop.f32.mrf.mxu0
  %v6235 = vadd.f32 0.0, %v6234
  %v6236 = vpop.f32.mrf.mxu0
  %6237 = vmatprep.mubr.f32.mxu0 %v6130
  %6238 = vmatmul.mubr.f32.gmra.mxu0 %v6129
  %v6239 = vpop.f32.mrf.mxu0
  %v6240 = vadd.f32 0.0, %v6239
  %v6241 = vpop.f32.mrf.mxu0
  %6242 = vmatprep.mubr.f32.mxu0 %v6133
  %6243 = vmatmul.mubr.f32.gmra.mxu0 %v6132
  %v6244 = vpop.f32.mrf.mxu0
  %v6245 = vadd.f32 0.0, %v6244
  %v6246 = vpop.f32.mrf.mxu0
  %6247 = vmatprep.mubr.f32.mxu0 %v6136
  %6248 = vmatmul.mubr.f32.gmra.mxu0 %v6135
  %v6249 = vpop.f32.mrf.mxu0
  %v6250 = vadd.f32 0.0, %v6249
  %v6251 = vpop.f32.mrf.mxu0
  %6252 = vmatprep.mubr.f32.mxu0 %v6139
  %6253 = vmatmul.mubr.f32.gmra.mxu0 %v6138
  %v6254 = vpop.f32.mrf.mxu0
  %v6255 = vadd.f32 0.0, %v6254
  %v6256 = vpop.f32.mrf.mxu0
  %6257 = vmatprep.mubr.f32.mxu0 %v6142
  %6258 = vmatmul.mubr.f32.gmra.mxu0 %v6141
  %v6259 = vpop.f32.mrf.mxu0
  %v6260 = vadd.f32 0.0, %v6259
  %v6261 = vpop.f32.mrf.mxu0
  %6262 = vmatprep.mubr.f32.mxu0 %v6145
  %6263 = vmatmul.mubr.f32.gmra.mxu0 %v6144
  %v6264 = vpop.f32.mrf.mxu0
  %v6265 = vadd.f32 0.0, %v6264
  %v6266 = vpop.f32.mrf.mxu0
  %6267 = vdwg.mxu0
  %6268 = vmatprep.subr.mxu0 0.0
  %6269 = vmatpush1.msra.mxu0 0.0
  %6270 = vmatprep.subr.mxu0 0.0
  %6271 = vmatpush1.msra.mxu0 0.0
  %6272 = vmatprep.subr.mxu0 0.0
  %6273 = vmatpush1.msra.mxu0 0.0
  %6274 = vmatprep.subr.mxu0 0.0
  %6275 = vmatpush1.msra.mxu0 0.0
  %6276 = vmatprep.subr.mxu0 0.0
  %6277 = vmatpush1.msra.mxu0 0.0
  %6278 = vmatprep.subr.mxu0 0.0
  %6279 = vmatpush1.msra.mxu0 %v1071
  %6280 = vmatprep.subr.mxu0 0.0
  %6281 = vmatpush1.msra.mxu0 %v950
  %6282 = vmatprep.subr.mxu0 0.0
  %6283 = vmatpush1.msra.mxu0 %v949
  %6284 = vmatprep.subr.mxu0 0.0
  %6285 = vmatpush1.msra.mxu0 %v948
  %6286 = vmatprep.subr.mxu0 0.0
  %6287 = vmatpush1.msra.mxu0 %v947
  %6288 = vmatprep.subr.mxu0 0.0
  %6289 = vmatpush1.msra.mxu0 %v946
  %6290 = vmatprep.subr.mxu0 0.0
  %6291 = vmatpush1.msra.mxu0 %v945
  %6292 = vmatprep.subr.mxu0 0.0
  %6293 = vmatpush1.msra.mxu0 %v944
  %6294 = vmatprep.subr.mxu0 0.0
  %6295 = vmatpush1.msra.mxu0 %v943
  %6296 = vmatprep.subr.mxu0 0.0
  %6297 = vmatpush1.msra.mxu0 %v942
  %6298 = vmatprep.subr.mxu0 0.0
  %6299 = vmatpush1.msra.mxu0 %v941
  %6300 = vmatprep.subr.mxu0 0.0
  %6301 = vmatpush2.msra.mxu0 0.0
  %6302 = vmatprep.subr.mxu0 0.0
  %6303 = vmatpush2.msra.mxu0 0.0
  %6304 = vmatprep.subr.mxu0 0.0
  %6305 = vmatpush2.msra.mxu0 0.0
  %6306 = vmatprep.subr.mxu0 0.0
  %6307 = vmatpush2.msra.mxu0 0.0
  %6308 = vmatprep.subr.mxu0 0.0
  %6309 = vmatpush2.msra.mxu0 0.0
  %6310 = vmatprep.subr.mxu0 0.0
  %6311 = vmatpush2.msra.mxu0 0.0
  %6312 = vmatprep.subr.mxu0 0.0
  %6313 = vmatpush2.msra.mxu0 0.0
  %6314 = vmatprep.subr.mxu0 0.0
  %6315 = vmatpush2.msra.mxu0 0.0
  %6316 = vmatprep.subr.mxu0 0.0
  %6317 = vmatpush2.msra.mxu0 0.0
  %6318 = vmatprep.subr.mxu0 0.0
  %6319 = vmatpush2.msra.mxu0 0.0
  %6320 = vmatprep.subr.mxu0 0.0
  %6321 = vmatpush2.msra.mxu0 0.0
  %6322 = vmatprep.subr.mxu0 0.0
  %6323 = vmatpush2.msra.mxu0 0.0
  %6324 = vmatprep.subr.mxu0 0.0
  %6325 = vmatpush2.msra.mxu0 0.0
  %6326 = vmatprep.subr.mxu0 0.0
  %6327 = vmatpush2.msra.mxu0 0.0
  %6328 = vmatprep.subr.mxu0 0.0
  %6329 = vmatpush2.msra.mxu0 0.0
  %6330 = vmatprep.subr.mxu0 0.0
  %6331 = vmatpush2.msra.mxu0 0.0
  %6332 = vmatprep.mubr.f32.mxu0 0.0
  %6333 = vmatmul.mubr.f32.gmra.mxu0 %v6148
  %v6334 = vpop.f32.mrf.mxu0
  %v6335 = vadd.f32 %v6235, %v6334
  %v6336 = vpop.f32.mrf.mxu0
  %6337 = vmatprep.mubr.f32.mxu0 0.0
  %6338 = vmatmul.mubr.f32.gmra.mxu0 %v6151
  %v6339 = vpop.f32.mrf.mxu0
  %v6340 = vadd.f32 %v6240, %v6339
  %v6341 = vpop.f32.mrf.mxu0
  %6342 = vmatprep.mubr.f32.mxu0 0.0
  %6343 = vmatmul.mubr.f32.gmra.mxu0 %v6154
  %v6344 = vpop.f32.mrf.mxu0
  %v6345 = vadd.f32 %v6245, %v6344
  %v6346 = vpop.f32.mrf.mxu0
  %6347 = vmatprep.mubr.f32.mxu0 0.0
  %6348 = vmatmul.mubr.f32.gmra.mxu0 %v6157
  %v6349 = vpop.f32.mrf.mxu0
  %v6350 = vadd.f32 %v6250, %v6349
  %v6351 = vpop.f32.mrf.mxu0
  %6352 = vmatprep.mubr.f32.mxu0 0.0
  %6353 = vmatmul.mubr.f32.gmra.mxu0 %v6160
  %v6354 = vpop.f32.mrf.mxu0
  %v6355 = vadd.f32 %v6255, %v6354
  %v6356 = vpop.f32.mrf.mxu0
  %6357 = vmatprep.mubr.f32.mxu0 0.0
  %6358 = vmatmul.mubr.f32.gmra.mxu0 %v6163
  %v6359 = vpop.f32.mrf.mxu0
  %v6360 = vadd.f32 %v6260, %v6359
  %v6361 = vpop.f32.mrf.mxu0
  %6362 = vmatprep.mubr.f32.mxu0 0.0
  %6363 = vmatmul.mubr.f32.gmra.mxu0 %v6166
  %v6364 = vpop.f32.mrf.mxu0
  %v6365 = vadd.f32 %v6265, %v6364
  %v6366 = vpop.f32.mrf.mxu0
  %6367 = vdwg.mxu0
  %v6368 = vld [vmem:[%s4 + $0xd0] sm:$0xff]
  %v6369 = vld [vmem:[%s4 + $0xd8] sm:$0xff]
  %v6371 = vsel %vm81, %v6335, 0
  %v6374 = vsel %vm81, %v6340, 0
  %v6377 = vsel %vm81, %v6345, 0
  %v6380 = vsel %vm81, %v6350, 0
  %v6383 = vsel %vm81, %v6355, 0
  %v6386 = vsel %vm81, %v6360, 0
  %v6389 = vsel %vm81, %v6365, 0
  %6391 = vmatprep.subr.mxu0 0.0
  %6392 = vmatpush1.msra.mxu0 0.0
  %6393 = vmatprep.subr.mxu0 0.0
  %6394 = vmatpush1.msra.mxu0 0.0
  %6395 = vmatprep.subr.mxu0 0.0
  %6396 = vmatpush1.msra.mxu0 0.0
  %6397 = vmatprep.subr.mxu0 0.0
  %6398 = vmatpush1.msra.mxu0 0.0
  %6399 = vmatprep.subr.mxu0 0.0
  %6400 = vmatpush1.msra.mxu0 0.0
  %6401 = vmatprep.subr.mxu0 0.0
  %6402 = vmatpush1.msra.mxu0 0.0
  %6403 = vmatprep.subr.mxu0 0.0
  %6404 = vmatpush1.msra.mxu0 0.0
  %6405 = vmatprep.subr.mxu0 0.0
  %6406 = vmatpush1.msra.mxu0 0.0
  %6407 = vmatprep.subr.mxu0 0.0
  %6408 = vmatpush1.msra.mxu0 0.0
  %6409 = vmatprep.subr.mxu0 0.0
  %6410 = vmatpush1.msra.mxu0 0.0
  %6411 = vmatprep.subr.mxu0 0.0
  %6412 = vmatpush1.msra.mxu0 0.0
  %6413 = vmatprep.subr.mxu0 0.0
  %6414 = vmatpush1.msra.mxu0 0.0
  %6415 = vmatprep.subr.mxu0 0.0
  %6416 = vmatpush1.msra.mxu0 0.0
  %6417 = vmatprep.subr.mxu0 0.0
  %6418 = vmatpush1.msra.mxu0 0.0
  %6419 = vmatprep.subr.mxu0 0.0
  %6420 = vmatpush1.msra.mxu0 %v6369
  %6421 = vmatprep.subr.mxu0 0.0
  %6422 = vmatpush1.msra.mxu0 %v6368
  %6423 = vmatprep.subr.mxu0 0.0
  %6424 = vmatpush2.msra.mxu0 0.0
  %6425 = vmatprep.subr.mxu0 0.0
  %6426 = vmatpush2.msra.mxu0 0.0
  %6427 = vmatprep.subr.mxu0 0.0
  %6428 = vmatpush2.msra.mxu0 0.0
  %6429 = vmatprep.subr.mxu0 0.0
  %6430 = vmatpush2.msra.mxu0 0.0
  %6431 = vmatprep.subr.mxu0 0.0
  %6432 = vmatpush2.msra.mxu0 0.0
  %6433 = vmatprep.subr.mxu0 0.0
  %6434 = vmatpush2.msra.mxu0 0.0
  %6435 = vmatprep.subr.mxu0 0.0
  %6436 = vmatpush2.msra.mxu0 0.0
  %6437 = vmatprep.subr.mxu0 0.0
  %6438 = vmatpush2.msra.mxu0 0.0
  %6439 = vmatprep.subr.mxu0 0.0
  %6440 = vmatpush2.msra.mxu0 0.0
  %6441 = vmatprep.subr.mxu0 0.0
  %6442 = vmatpush2.msra.mxu0 0.0
  %6443 = vmatprep.subr.mxu0 0.0
  %6444 = vmatpush2.msra.mxu0 0.0
  %6445 = vmatprep.subr.mxu0 0.0
  %6446 = vmatpush2.msra.mxu0 0.0
  %6447 = vmatprep.subr.mxu0 0.0
  %6448 = vmatpush2.msra.mxu0 0.0
  %6449 = vmatprep.subr.mxu0 0.0
  %6450 = vmatpush2.msra.mxu0 0.0
  %6451 = vmatprep.subr.mxu0 0.0
  %6452 = vmatpush2.msra.mxu0 0.0
  %6453 = vmatprep.subr.mxu0 0.0
  %6454 = vmatpush2.msra.mxu0 0.0
  %6455 = vmatprep.mubr.f32.mxu0 0.0
  %6456 = vmatmul.mubr.f32.gmra.mxu0 %v6371
  %v6457 = vpop.f32.mrf.mxu0
  %v6458 = vadd.f32 0.0, %v6457
  %v6459 = vpop.f32.mrf.mxu0
  %6460 = vmatprep.mubr.f32.mxu0 0.0
  %6461 = vmatmul.mubr.f32.gmra.mxu0 %v6374
  %v6462 = vpop.f32.mrf.mxu0
  %v6463 = vadd.f32 0.0, %v6462
  %v6464 = vpop.f32.mrf.mxu0
  %6465 = vmatprep.mubr.f32.mxu0 0.0
  %6466 = vmatmul.mubr.f32.gmra.mxu0 %v6377
  %v6467 = vpop.f32.mrf.mxu0
  %v6468 = vadd.f32 0.0, %v6467
  %v6469 = vpop.f32.mrf.mxu0
  %6470 = vmatprep.mubr.f32.mxu0 0.0
  %6471 = vmatmul.mubr.f32.gmra.mxu0 %v6380
  %v6472 = vpop.f32.mrf.mxu0
  %v6473 = vadd.f32 0.0, %v6472
  %v6474 = vpop.f32.mrf.mxu0
  %6475 = vmatprep.mubr.f32.mxu0 0.0
  %6476 = vmatmul.mubr.f32.gmra.mxu0 %v6383
  %v6477 = vpop.f32.mrf.mxu0
  %v6478 = vadd.f32 0.0, %v6477
  %v6479 = vpop.f32.mrf.mxu0
  %6480 = vmatprep.mubr.f32.mxu0 0.0
  %6481 = vmatmul.mubr.f32.gmra.mxu0 %v6386
  %v6482 = vpop.f32.mrf.mxu0
  %v6483 = vadd.f32 0.0, %v6482
  %v6484 = vpop.f32.mrf.mxu0
  %6485 = vmatprep.mubr.f32.mxu0 0.0
  %6486 = vmatmul.mubr.f32.gmra.mxu0 %v6389
  %v6487 = vpop.f32.mrf.mxu0
  %v6488 = vadd.f32 0.0, %v6487
  %v6489 = vpop.f32.mrf.mxu0
  %6490 = vdwg.mxu0
  %v6491 = vadd.f32 %v6098, %v6458
  %v6492 = vadd.f32 %v6099, %v6463
  %v6493 = vadd.f32 %v6100, %v6468
  %v6494 = vadd.f32 %v6101, %v6473
  %v6495 = vadd.f32 %v6102, %v6478
  %v6496 = vadd.f32 %v6103, %v6483
  %v6497 = vadd.f32 %v6104, %v6488
  %vm6498 = vcmp.eq.s32.totalorder %v984, 41
  %vm6499 = vcmp.eq.s32.totalorder %v985, 41
  %vm6500 = vcmp.eq.s32.totalorder %v986, 41
  %vm6501 = vcmp.eq.s32.totalorder %v987, 41
  %vm6502 = vcmp.eq.s32.totalorder %v988, 41
  %vm6503 = vcmp.eq.s32.totalorder %v989, 41
  %vm6504 = vcmp.eq.s32.totalorder %v990, 41
  %vm6505 = vcmp.eq.s32.totalorder %v991, 41
  %vm6506 = vcmp.eq.s32.totalorder %v992, 41
  %vm6507 = vcmp.eq.s32.totalorder %v993, 41
  %vm6508 = vcmp.eq.s32.totalorder %v994, 41
  %vm6509 = vcmp.eq.s32.totalorder %v995, 41
  %vm6510 = vcmp.eq.s32.totalorder %v996, 41
  %vm6511 = vcmp.eq.s32.totalorder %v997, 41
  %vm6512 = vcmp.eq.s32.totalorder %v998, 41
  %vm6513 = vcmp.eq.s32.totalorder %v999, 41
  %vm6514 = vcmp.eq.s32.totalorder %v1000, 41
  %vm6515 = vcmp.eq.s32.totalorder %v1001, 41
  %vm6516 = vcmp.eq.s32.totalorder %v1002, 41
  %vm6517 = vcmp.eq.s32.totalorder %v1003, 41
  %vm6518 = vcmp.eq.s32.totalorder %v1004, 41
  %v6519 = vsel %vm6498, 1.0, 0.0
  %v6520 = vsel %vm6499, 1.0, 0.0
  %v6521 = vsel %vm6500, 1.0, 0.0
  %v6522 = vsel %vm6501, 1.0, 0.0
  %v6523 = vsel %vm6502, 1.0, 0.0
  %v6524 = vsel %vm6503, 1.0, 0.0
  %v6525 = vsel %vm6504, 1.0, 0.0
  %v6526 = vsel %vm6505, 1.0, 0.0
  %v6527 = vsel %vm6506, 1.0, 0.0
  %v6528 = vsel %vm6507, 1.0, 0.0
  %v6529 = vsel %vm6508, 1.0, 0.0
  %v6530 = vsel %vm6509, 1.0, 0.0
  %v6531 = vsel %vm6510, 1.0, 0.0
  %v6532 = vsel %vm6511, 1.0, 0.0
  %v6533 = vsel %vm6512, 1.0, 0.0
  %v6534 = vsel %vm6513, 1.0, 0.0
  %v6535 = vsel %vm6514, 1.0, 0.0
  %v6536 = vsel %vm6515, 1.0, 0.0
  %v6537 = vsel %vm6516, 1.0, 0.0
  %v6538 = vsel %vm6517, 1.0, 0.0
  %v6539 = vsel %vm6518, 1.0, 0.0
  %v6541 = vsel %vm1047, %v6521, 0
  %v6544 = vsel %vm1047, %v6524, 0
  %v6547 = vsel %vm1047, %v6527, 0
  %v6550 = vsel %vm1047, %v6530, 0
  %v6553 = vsel %vm1047, %v6533, 0
  %v6556 = vsel %vm1047, %v6536, 0
  %v6559 = vsel %vm1047, %v6539, 0
  %6561 = vmatprep.subr.mxu0 0.0
  %6562 = vmatpush1.msra.mxu0 %v924
  %6563 = vmatprep.subr.mxu0 0.0
  %6564 = vmatpush1.msra.mxu0 %v923
  %6565 = vmatprep.subr.mxu0 0.0
  %6566 = vmatpush1.msra.mxu0 %v922
  %6567 = vmatprep.subr.mxu0 0.0
  %6568 = vmatpush1.msra.mxu0 %v921
  %6569 = vmatprep.subr.mxu0 0.0
  %6570 = vmatpush1.msra.mxu0 %v920
  %6571 = vmatprep.subr.mxu0 0.0
  %6572 = vmatpush1.msra.mxu0 %v919
  %6573 = vmatprep.subr.mxu0 0.0
  %6574 = vmatpush1.msra.mxu0 %v918
  %6575 = vmatprep.subr.mxu0 0.0
  %6576 = vmatpush1.msra.mxu0 %v917
  %6577 = vmatprep.subr.mxu0 0.0
  %6578 = vmatpush1.msra.mxu0 %v916
  %6579 = vmatprep.subr.mxu0 0.0
  %6580 = vmatpush1.msra.mxu0 %v915
  %6581 = vmatprep.subr.mxu0 0.0
  %6582 = vmatpush1.msra.mxu0 %v914
  %6583 = vmatprep.subr.mxu0 0.0
  %6584 = vmatpush1.msra.mxu0 %v913
  %6585 = vmatprep.subr.mxu0 0.0
  %6586 = vmatpush1.msra.mxu0 %v912
  %6587 = vmatprep.subr.mxu0 0.0
  %6588 = vmatpush1.msra.mxu0 %v911
  %6589 = vmatprep.subr.mxu0 0.0
  %6590 = vmatpush1.msra.mxu0 %v910
  %6591 = vmatprep.subr.mxu0 0.0
  %6592 = vmatpush1.msra.mxu0 %v909
  %6593 = vmatprep.subr.mxu0 0.0
  %6594 = vmatpush2.msra.mxu0 %v940
  %6595 = vmatprep.subr.mxu0 0.0
  %6596 = vmatpush2.msra.mxu0 %v939
  %6597 = vmatprep.subr.mxu0 0.0
  %6598 = vmatpush2.msra.mxu0 %v938
  %6599 = vmatprep.subr.mxu0 0.0
  %6600 = vmatpush2.msra.mxu0 %v937
  %6601 = vmatprep.subr.mxu0 0.0
  %6602 = vmatpush2.msra.mxu0 %v936
  %6603 = vmatprep.subr.mxu0 0.0
  %6604 = vmatpush2.msra.mxu0 %v935
  %6605 = vmatprep.subr.mxu0 0.0
  %6606 = vmatpush2.msra.mxu0 %v934
  %6607 = vmatprep.subr.mxu0 0.0
  %6608 = vmatpush2.msra.mxu0 %v933
  %6609 = vmatprep.subr.mxu0 0.0
  %6610 = vmatpush2.msra.mxu0 %v932
  %6611 = vmatprep.subr.mxu0 0.0
  %6612 = vmatpush2.msra.mxu0 %v931
  %6613 = vmatprep.subr.mxu0 0.0
  %6614 = vmatpush2.msra.mxu0 %v930
  %6615 = vmatprep.subr.mxu0 0.0
  %6616 = vmatpush2.msra.mxu0 %v929
  %6617 = vmatprep.subr.mxu0 0.0
  %6618 = vmatpush2.msra.mxu0 %v928
  %6619 = vmatprep.subr.mxu0 0.0
  %6620 = vmatpush2.msra.mxu0 %v927
  %6621 = vmatprep.subr.mxu0 0.0
  %6622 = vmatpush2.msra.mxu0 %v926
  %6623 = vmatprep.subr.mxu0 0.0
  %6624 = vmatpush2.msra.mxu0 %v925
  %6625 = vmatprep.mubr.f32.mxu0 %v6520
  %6626 = vmatmul.mubr.f32.gmra.mxu0 %v6519
  %v6627 = vpop.f32.mrf.mxu0
  %v6628 = vadd.f32 0.0, %v6627
  %v6629 = vpop.f32.mrf.mxu0
  %6630 = vmatprep.mubr.f32.mxu0 %v6523
  %6631 = vmatmul.mubr.f32.gmra.mxu0 %v6522
  %v6632 = vpop.f32.mrf.mxu0
  %v6633 = vadd.f32 0.0, %v6632
  %v6634 = vpop.f32.mrf.mxu0
  %6635 = vmatprep.mubr.f32.mxu0 %v6526
  %6636 = vmatmul.mubr.f32.gmra.mxu0 %v6525
  %v6637 = vpop.f32.mrf.mxu0
  %v6638 = vadd.f32 0.0, %v6637
  %v6639 = vpop.f32.mrf.mxu0
  %6640 = vmatprep.mubr.f32.mxu0 %v6529
  %6641 = vmatmul.mubr.f32.gmra.mxu0 %v6528
  %v6642 = vpop.f32.mrf.mxu0
  %v6643 = vadd.f32 0.0, %v6642
  %v6644 = vpop.f32.mrf.mxu0
  %6645 = vmatprep.mubr.f32.mxu0 %v6532
  %6646 = vmatmul.mubr.f32.gmra.mxu0 %v6531
  %v6647 = vpop.f32.mrf.mxu0
  %v6648 = vadd.f32 0.0, %v6647
  %v6649 = vpop.f32.mrf.mxu0
  %6650 = vmatprep.mubr.f32.mxu0 %v6535
  %6651 = vmatmul.mubr.f32.gmra.mxu0 %v6534
  %v6652 = vpop.f32.mrf.mxu0
  %v6653 = vadd.f32 0.0, %v6652
  %v6654 = vpop.f32.mrf.mxu0
  %6655 = vmatprep.mubr.f32.mxu0 %v6538
  %6656 = vmatmul.mubr.f32.gmra.mxu0 %v6537
  %v6657 = vpop.f32.mrf.mxu0
  %v6658 = vadd.f32 0.0, %v6657
  %v6659 = vpop.f32.mrf.mxu0
  %6660 = vdwg.mxu0
  %6661 = vmatprep.subr.mxu0 0.0
  %6662 = vmatpush1.msra.mxu0 0.0
  %6663 = vmatprep.subr.mxu0 0.0
  %6664 = vmatpush1.msra.mxu0 0.0
  %6665 = vmatprep.subr.mxu0 0.0
  %6666 = vmatpush1.msra.mxu0 0.0
  %6667 = vmatprep.subr.mxu0 0.0
  %6668 = vmatpush1.msra.mxu0 0.0
  %6669 = vmatprep.subr.mxu0 0.0
  %6670 = vmatpush1.msra.mxu0 0.0
  %6671 = vmatprep.subr.mxu0 0.0
  %6672 = vmatpush1.msra.mxu0 %v1071
  %6673 = vmatprep.subr.mxu0 0.0
  %6674 = vmatpush1.msra.mxu0 %v950
  %6675 = vmatprep.subr.mxu0 0.0
  %6676 = vmatpush1.msra.mxu0 %v949
  %6677 = vmatprep.subr.mxu0 0.0
  %6678 = vmatpush1.msra.mxu0 %v948
  %6679 = vmatprep.subr.mxu0 0.0
  %6680 = vmatpush1.msra.mxu0 %v947
  %6681 = vmatprep.subr.mxu0 0.0
  %6682 = vmatpush1.msra.mxu0 %v946
  %6683 = vmatprep.subr.mxu0 0.0
  %6684 = vmatpush1.msra.mxu0 %v945
  %6685 = vmatprep.subr.mxu0 0.0
  %6686 = vmatpush1.msra.mxu0 %v944
  %6687 = vmatprep.subr.mxu0 0.0
  %6688 = vmatpush1.msra.mxu0 %v943
  %6689 = vmatprep.subr.mxu0 0.0
  %6690 = vmatpush1.msra.mxu0 %v942
  %6691 = vmatprep.subr.mxu0 0.0
  %6692 = vmatpush1.msra.mxu0 %v941
  %6693 = vmatprep.subr.mxu0 0.0
  %6694 = vmatpush2.msra.mxu0 0.0
  %6695 = vmatprep.subr.mxu0 0.0
  %6696 = vmatpush2.msra.mxu0 0.0
  %6697 = vmatprep.subr.mxu0 0.0
  %6698 = vmatpush2.msra.mxu0 0.0
  %6699 = vmatprep.subr.mxu0 0.0
  %6700 = vmatpush2.msra.mxu0 0.0
  %6701 = vmatprep.subr.mxu0 0.0
  %6702 = vmatpush2.msra.mxu0 0.0
  %6703 = vmatprep.subr.mxu0 0.0
  %6704 = vmatpush2.msra.mxu0 0.0
  %6705 = vmatprep.subr.mxu0 0.0
  %6706 = vmatpush2.msra.mxu0 0.0
  %6707 = vmatprep.subr.mxu0 0.0
  %6708 = vmatpush2.msra.mxu0 0.0
  %6709 = vmatprep.subr.mxu0 0.0
  %6710 = vmatpush2.msra.mxu0 0.0
  %6711 = vmatprep.subr.mxu0 0.0
  %6712 = vmatpush2.msra.mxu0 0.0
  %6713 = vmatprep.subr.mxu0 0.0
  %6714 = vmatpush2.msra.mxu0 0.0
  %6715 = vmatprep.subr.mxu0 0.0
  %6716 = vmatpush2.msra.mxu0 0.0
  %6717 = vmatprep.subr.mxu0 0.0
  %6718 = vmatpush2.msra.mxu0 0.0
  %6719 = vmatprep.subr.mxu0 0.0
  %6720 = vmatpush2.msra.mxu0 0.0
  %6721 = vmatprep.subr.mxu0 0.0
  %6722 = vmatpush2.msra.mxu0 0.0
  %6723 = vmatprep.subr.mxu0 0.0
  %6724 = vmatpush2.msra.mxu0 0.0
  %6725 = vmatprep.mubr.f32.mxu0 0.0
  %6726 = vmatmul.mubr.f32.gmra.mxu0 %v6541
  %v6727 = vpop.f32.mrf.mxu0
  %v6728 = vadd.f32 %v6628, %v6727
  %v6729 = vpop.f32.mrf.mxu0
  %6730 = vmatprep.mubr.f32.mxu0 0.0
  %6731 = vmatmul.mubr.f32.gmra.mxu0 %v6544
  %v6732 = vpop.f32.mrf.mxu0
  %v6733 = vadd.f32 %v6633, %v6732
  %v6734 = vpop.f32.mrf.mxu0
  %6735 = vmatprep.mubr.f32.mxu0 0.0
  %6736 = vmatmul.mubr.f32.gmra.mxu0 %v6547
  %v6737 = vpop.f32.mrf.mxu0
  %v6738 = vadd.f32 %v6638, %v6737
  %v6739 = vpop.f32.mrf.mxu0
  %6740 = vmatprep.mubr.f32.mxu0 0.0
  %6741 = vmatmul.mubr.f32.gmra.mxu0 %v6550
  %v6742 = vpop.f32.mrf.mxu0
  %v6743 = vadd.f32 %v6643, %v6742
  %v6744 = vpop.f32.mrf.mxu0
  %6745 = vmatprep.mubr.f32.mxu0 0.0
  %6746 = vmatmul.mubr.f32.gmra.mxu0 %v6553
  %v6747 = vpop.f32.mrf.mxu0
  %v6748 = vadd.f32 %v6648, %v6747
  %v6749 = vpop.f32.mrf.mxu0
  %6750 = vmatprep.mubr.f32.mxu0 0.0
  %6751 = vmatmul.mubr.f32.gmra.mxu0 %v6556
  %v6752 = vpop.f32.mrf.mxu0
  %v6753 = vadd.f32 %v6653, %v6752
  %v6754 = vpop.f32.mrf.mxu0
  %6755 = vmatprep.mubr.f32.mxu0 0.0
  %6756 = vmatmul.mubr.f32.gmra.mxu0 %v6559
  %v6757 = vpop.f32.mrf.mxu0
  %v6758 = vadd.f32 %v6658, %v6757
  %v6759 = vpop.f32.mrf.mxu0
  %6760 = vdwg.mxu0
  %v6761 = vld [vmem:[%s4 + $0xe0] sm:$0xff]
  %v6762 = vld [vmem:[%s4 + $0xe8] sm:$0xff]
  %v6764 = vsel %vm81, %v6728, 0
  %v6767 = vsel %vm81, %v6733, 0
  %v6770 = vsel %vm81, %v6738, 0
  %v6773 = vsel %vm81, %v6743, 0
  %v6776 = vsel %vm81, %v6748, 0
  %v6779 = vsel %vm81, %v6753, 0
  %v6782 = vsel %vm81, %v6758, 0
  %6784 = vmatprep.subr.mxu0 0.0
  %6785 = vmatpush1.msra.mxu0 0.0
  %6786 = vmatprep.subr.mxu0 0.0
  %6787 = vmatpush1.msra.mxu0 0.0
  %6788 = vmatprep.subr.mxu0 0.0
  %6789 = vmatpush1.msra.mxu0 0.0
  %6790 = vmatprep.subr.mxu0 0.0
  %6791 = vmatpush1.msra.mxu0 0.0
  %6792 = vmatprep.subr.mxu0 0.0
  %6793 = vmatpush1.msra.mxu0 0.0
  %6794 = vmatprep.subr.mxu0 0.0
  %6795 = vmatpush1.msra.mxu0 0.0
  %6796 = vmatprep.subr.mxu0 0.0
  %6797 = vmatpush1.msra.mxu0 0.0
  %6798 = vmatprep.subr.mxu0 0.0
  %6799 = vmatpush1.msra.mxu0 0.0
  %6800 = vmatprep.subr.mxu0 0.0
  %6801 = vmatpush1.msra.mxu0 0.0
  %6802 = vmatprep.subr.mxu0 0.0
  %6803 = vmatpush1.msra.mxu0 0.0
  %6804 = vmatprep.subr.mxu0 0.0
  %6805 = vmatpush1.msra.mxu0 0.0
  %6806 = vmatprep.subr.mxu0 0.0
  %6807 = vmatpush1.msra.mxu0 0.0
  %6808 = vmatprep.subr.mxu0 0.0
  %6809 = vmatpush1.msra.mxu0 0.0
  %6810 = vmatprep.subr.mxu0 0.0
  %6811 = vmatpush1.msra.mxu0 0.0
  %6812 = vmatprep.subr.mxu0 0.0
  %6813 = vmatpush1.msra.mxu0 %v6762
  %6814 = vmatprep.subr.mxu0 0.0
  %6815 = vmatpush1.msra.mxu0 %v6761
  %6816 = vmatprep.subr.mxu0 0.0
  %6817 = vmatpush2.msra.mxu0 0.0
  %6818 = vmatprep.subr.mxu0 0.0
  %6819 = vmatpush2.msra.mxu0 0.0
  %6820 = vmatprep.subr.mxu0 0.0
  %6821 = vmatpush2.msra.mxu0 0.0
  %6822 = vmatprep.subr.mxu0 0.0
  %6823 = vmatpush2.msra.mxu0 0.0
  %6824 = vmatprep.subr.mxu0 0.0
  %6825 = vmatpush2.msra.mxu0 0.0
  %6826 = vmatprep.subr.mxu0 0.0
  %6827 = vmatpush2.msra.mxu0 0.0
  %6828 = vmatprep.subr.mxu0 0.0
  %6829 = vmatpush2.msra.mxu0 0.0
  %6830 = vmatprep.subr.mxu0 0.0
  %6831 = vmatpush2.msra.mxu0 0.0
  %6832 = vmatprep.subr.mxu0 0.0
  %6833 = vmatpush2.msra.mxu0 0.0
  %6834 = vmatprep.subr.mxu0 0.0
  %6835 = vmatpush2.msra.mxu0 0.0
  %6836 = vmatprep.subr.mxu0 0.0
  %6837 = vmatpush2.msra.mxu0 0.0
  %6838 = vmatprep.subr.mxu0 0.0
  %6839 = vmatpush2.msra.mxu0 0.0
  %6840 = vmatprep.subr.mxu0 0.0
  %6841 = vmatpush2.msra.mxu0 0.0
  %6842 = vmatprep.subr.mxu0 0.0
  %6843 = vmatpush2.msra.mxu0 0.0
  %6844 = vmatprep.subr.mxu0 0.0
  %6845 = vmatpush2.msra.mxu0 0.0
  %6846 = vmatprep.subr.mxu0 0.0
  %6847 = vmatpush2.msra.mxu0 0.0
  %6848 = vmatprep.mubr.f32.mxu0 0.0
  %6849 = vmatmul.mubr.f32.gmra.mxu0 %v6764
  %v6850 = vpop.f32.mrf.mxu0
  %v6851 = vadd.f32 0.0, %v6850
  %v6852 = vpop.f32.mrf.mxu0
  %6853 = vmatprep.mubr.f32.mxu0 0.0
  %6854 = vmatmul.mubr.f32.gmra.mxu0 %v6767
  %v6855 = vpop.f32.mrf.mxu0
  %v6856 = vadd.f32 0.0, %v6855
  %v6857 = vpop.f32.mrf.mxu0
  %6858 = vmatprep.mubr.f32.mxu0 0.0
  %6859 = vmatmul.mubr.f32.gmra.mxu0 %v6770
  %v6860 = vpop.f32.mrf.mxu0
  %v6861 = vadd.f32 0.0, %v6860
  %v6862 = vpop.f32.mrf.mxu0
  %6863 = vmatprep.mubr.f32.mxu0 0.0
  %6864 = vmatmul.mubr.f32.gmra.mxu0 %v6773
  %v6865 = vpop.f32.mrf.mxu0
  %v6866 = vadd.f32 0.0, %v6865
  %v6867 = vpop.f32.mrf.mxu0
  %6868 = vmatprep.mubr.f32.mxu0 0.0
  %6869 = vmatmul.mubr.f32.gmra.mxu0 %v6776
  %v6870 = vpop.f32.mrf.mxu0
  %v6871 = vadd.f32 0.0, %v6870
  %v6872 = vpop.f32.mrf.mxu0
  %6873 = vmatprep.mubr.f32.mxu0 0.0
  %6874 = vmatmul.mubr.f32.gmra.mxu0 %v6779
  %v6875 = vpop.f32.mrf.mxu0
  %v6876 = vadd.f32 0.0, %v6875
  %v6877 = vpop.f32.mrf.mxu0
  %6878 = vmatprep.mubr.f32.mxu0 0.0
  %6879 = vmatmul.mubr.f32.gmra.mxu0 %v6782
  %v6880 = vpop.f32.mrf.mxu0
  %v6881 = vadd.f32 0.0, %v6880
  %v6882 = vpop.f32.mrf.mxu0
  %6883 = vdwg.mxu0
  %v6884 = vadd.f32 %v6491, %v6851
  %v6885 = vadd.f32 %v6492, %v6856
  %v6886 = vadd.f32 %v6493, %v6861
  %v6887 = vadd.f32 %v6494, %v6866
  %v6888 = vadd.f32 %v6495, %v6871
  %v6889 = vadd.f32 %v6496, %v6876
  %v6890 = vadd.f32 %v6497, %v6881
  %vm6891 = vcmp.eq.s32.totalorder %v984, 42
  %vm6892 = vcmp.eq.s32.totalorder %v985, 42
  %vm6893 = vcmp.eq.s32.totalorder %v986, 42
  %vm6894 = vcmp.eq.s32.totalorder %v987, 42
  %vm6895 = vcmp.eq.s32.totalorder %v988, 42
  %vm6896 = vcmp.eq.s32.totalorder %v989, 42
  %vm6897 = vcmp.eq.s32.totalorder %v990, 42
  %vm6898 = vcmp.eq.s32.totalorder %v991, 42
  %vm6899 = vcmp.eq.s32.totalorder %v992, 42
  %vm6900 = vcmp.eq.s32.totalorder %v993, 42
  %vm6901 = vcmp.eq.s32.totalorder %v994, 42
  %vm6902 = vcmp.eq.s32.totalorder %v995, 42
  %vm6903 = vcmp.eq.s32.totalorder %v996, 42
  %vm6904 = vcmp.eq.s32.totalorder %v997, 42
  %vm6905 = vcmp.eq.s32.totalorder %v998, 42
  %vm6906 = vcmp.eq.s32.totalorder %v999, 42
  %vm6907 = vcmp.eq.s32.totalorder %v1000, 42
  %vm6908 = vcmp.eq.s32.totalorder %v1001, 42
  %vm6909 = vcmp.eq.s32.totalorder %v1002, 42
  %vm6910 = vcmp.eq.s32.totalorder %v1003, 42
  %vm6911 = vcmp.eq.s32.totalorder %v1004, 42
  %v6912 = vsel %vm6891, 1.0, 0.0
  %v6913 = vsel %vm6892, 1.0, 0.0
  %v6914 = vsel %vm6893, 1.0, 0.0
  %v6915 = vsel %vm6894, 1.0, 0.0
  %v6916 = vsel %vm6895, 1.0, 0.0
  %v6917 = vsel %vm6896, 1.0, 0.0
  %v6918 = vsel %vm6897, 1.0, 0.0
  %v6919 = vsel %vm6898, 1.0, 0.0
  %v6920 = vsel %vm6899, 1.0, 0.0
  %v6921 = vsel %vm6900, 1.0, 0.0
  %v6922 = vsel %vm6901, 1.0, 0.0
  %v6923 = vsel %vm6902, 1.0, 0.0
  %v6924 = vsel %vm6903, 1.0, 0.0
  %v6925 = vsel %vm6904, 1.0, 0.0
  %v6926 = vsel %vm6905, 1.0, 0.0
  %v6927 = vsel %vm6906, 1.0, 0.0
  %v6928 = vsel %vm6907, 1.0, 0.0
  %v6929 = vsel %vm6908, 1.0, 0.0
  %v6930 = vsel %vm6909, 1.0, 0.0
  %v6931 = vsel %vm6910, 1.0, 0.0
  %v6932 = vsel %vm6911, 1.0, 0.0
  %v6934 = vsel %vm1047, %v6914, 0
  %v6937 = vsel %vm1047, %v6917, 0
  %v6940 = vsel %vm1047, %v6920, 0
  %v6943 = vsel %vm1047, %v6923, 0
  %v6946 = vsel %vm1047, %v6926, 0
  %v6949 = vsel %vm1047, %v6929, 0
  %v6952 = vsel %vm1047, %v6932, 0
  %6954 = vmatprep.subr.mxu0 0.0
  %6955 = vmatpush1.msra.mxu0 %v924
  %6956 = vmatprep.subr.mxu0 0.0
  %6957 = vmatpush1.msra.mxu0 %v923
  %6958 = vmatprep.subr.mxu0 0.0
  %6959 = vmatpush1.msra.mxu0 %v922
  %6960 = vmatprep.subr.mxu0 0.0
  %6961 = vmatpush1.msra.mxu0 %v921
  %6962 = vmatprep.subr.mxu0 0.0
  %6963 = vmatpush1.msra.mxu0 %v920
  %6964 = vmatprep.subr.mxu0 0.0
  %6965 = vmatpush1.msra.mxu0 %v919
  %6966 = vmatprep.subr.mxu0 0.0
  %6967 = vmatpush1.msra.mxu0 %v918
  %6968 = vmatprep.subr.mxu0 0.0
  %6969 = vmatpush1.msra.mxu0 %v917
  %6970 = vmatprep.subr.mxu0 0.0
  %6971 = vmatpush1.msra.mxu0 %v916
  %6972 = vmatprep.subr.mxu0 0.0
  %6973 = vmatpush1.msra.mxu0 %v915
  %6974 = vmatprep.subr.mxu0 0.0
  %6975 = vmatpush1.msra.mxu0 %v914
  %6976 = vmatprep.subr.mxu0 0.0
  %6977 = vmatpush1.msra.mxu0 %v913
  %6978 = vmatprep.subr.mxu0 0.0
  %6979 = vmatpush1.msra.mxu0 %v912
  %6980 = vmatprep.subr.mxu0 0.0
  %6981 = vmatpush1.msra.mxu0 %v911
  %6982 = vmatprep.subr.mxu0 0.0
  %6983 = vmatpush1.msra.mxu0 %v910
  %6984 = vmatprep.subr.mxu0 0.0
  %6985 = vmatpush1.msra.mxu0 %v909
  %6986 = vmatprep.subr.mxu0 0.0
  %6987 = vmatpush2.msra.mxu0 %v940
  %6988 = vmatprep.subr.mxu0 0.0
  %6989 = vmatpush2.msra.mxu0 %v939
  %6990 = vmatprep.subr.mxu0 0.0
  %6991 = vmatpush2.msra.mxu0 %v938
  %6992 = vmatprep.subr.mxu0 0.0
  %6993 = vmatpush2.msra.mxu0 %v937
  %6994 = vmatprep.subr.mxu0 0.0
  %6995 = vmatpush2.msra.mxu0 %v936
  %6996 = vmatprep.subr.mxu0 0.0
  %6997 = vmatpush2.msra.mxu0 %v935
  %6998 = vmatprep.subr.mxu0 0.0
  %6999 = vmatpush2.msra.mxu0 %v934
  %7000 = vmatprep.subr.mxu0 0.0
  %7001 = vmatpush2.msra.mxu0 %v933
  %7002 = vmatprep.subr.mxu0 0.0
  %7003 = vmatpush2.msra.mxu0 %v932
  %7004 = vmatprep.subr.mxu0 0.0
  %7005 = vmatpush2.msra.mxu0 %v931
  %7006 = vmatprep.subr.mxu0 0.0
  %7007 = vmatpush2.msra.mxu0 %v930
  %7008 = vmatprep.subr.mxu0 0.0
  %7009 = vmatpush2.msra.mxu0 %v929
  %7010 = vmatprep.subr.mxu0 0.0
  %7011 = vmatpush2.msra.mxu0 %v928
  %7012 = vmatprep.subr.mxu0 0.0
  %7013 = vmatpush2.msra.mxu0 %v927
  %7014 = vmatprep.subr.mxu0 0.0
  %7015 = vmatpush2.msra.mxu0 %v926
  %7016 = vmatprep.subr.mxu0 0.0
  %7017 = vmatpush2.msra.mxu0 %v925
  %7018 = vmatprep.mubr.f32.mxu0 %v6913
  %7019 = vmatmul.mubr.f32.gmra.mxu0 %v6912
  %v7020 = vpop.f32.mrf.mxu0
  %v7021 = vadd.f32 0.0, %v7020
  %v7022 = vpop.f32.mrf.mxu0
  %7023 = vmatprep.mubr.f32.mxu0 %v6916
  %7024 = vmatmul.mubr.f32.gmra.mxu0 %v6915
  %v7025 = vpop.f32.mrf.mxu0
  %v7026 = vadd.f32 0.0, %v7025
  %v7027 = vpop.f32.mrf.mxu0
  %7028 = vmatprep.mubr.f32.mxu0 %v6919
  %7029 = vmatmul.mubr.f32.gmra.mxu0 %v6918
  %v7030 = vpop.f32.mrf.mxu0
  %v7031 = vadd.f32 0.0, %v7030
  %v7032 = vpop.f32.mrf.mxu0
  %7033 = vmatprep.mubr.f32.mxu0 %v6922
  %7034 = vmatmul.mubr.f32.gmra.mxu0 %v6921
  %v7035 = vpop.f32.mrf.mxu0
  %v7036 = vadd.f32 0.0, %v7035
  %v7037 = vpop.f32.mrf.mxu0
  %7038 = vmatprep.mubr.f32.mxu0 %v6925
  %7039 = vmatmul.mubr.f32.gmra.mxu0 %v6924
  %v7040 = vpop.f32.mrf.mxu0
  %v7041 = vadd.f32 0.0, %v7040
  %v7042 = vpop.f32.mrf.mxu0
  %7043 = vmatprep.mubr.f32.mxu0 %v6928
  %7044 = vmatmul.mubr.f32.gmra.mxu0 %v6927
  %v7045 = vpop.f32.mrf.mxu0
  %v7046 = vadd.f32 0.0, %v7045
  %v7047 = vpop.f32.mrf.mxu0
  %7048 = vmatprep.mubr.f32.mxu0 %v6931
  %7049 = vmatmul.mubr.f32.gmra.mxu0 %v6930
  %v7050 = vpop.f32.mrf.mxu0
  %v7051 = vadd.f32 0.0, %v7050
  %v7052 = vpop.f32.mrf.mxu0
  %7053 = vdwg.mxu0
  %7054 = vmatprep.subr.mxu0 0.0
  %7055 = vmatpush1.msra.mxu0 0.0
  %7056 = vmatprep.subr.mxu0 0.0
  %7057 = vmatpush1.msra.mxu0 0.0
  %7058 = vmatprep.subr.mxu0 0.0
  %7059 = vmatpush1.msra.mxu0 0.0
  %7060 = vmatprep.subr.mxu0 0.0
  %7061 = vmatpush1.msra.mxu0 0.0
  %7062 = vmatprep.subr.mxu0 0.0
  %7063 = vmatpush1.msra.mxu0 0.0
  %7064 = vmatprep.subr.mxu0 0.0
  %7065 = vmatpush1.msra.mxu0 %v1071
  %7066 = vmatprep.subr.mxu0 0.0
  %7067 = vmatpush1.msra.mxu0 %v950
  %7068 = vmatprep.subr.mxu0 0.0
  %7069 = vmatpush1.msra.mxu0 %v949
  %7070 = vmatprep.subr.mxu0 0.0
  %7071 = vmatpush1.msra.mxu0 %v948
  %7072 = vmatprep.subr.mxu0 0.0
  %7073 = vmatpush1.msra.mxu0 %v947
  %7074 = vmatprep.subr.mxu0 0.0
  %7075 = vmatpush1.msra.mxu0 %v946
  %7076 = vmatprep.subr.mxu0 0.0
  %7077 = vmatpush1.msra.mxu0 %v945
  %7078 = vmatprep.subr.mxu0 0.0
  %7079 = vmatpush1.msra.mxu0 %v944
  %7080 = vmatprep.subr.mxu0 0.0
  %7081 = vmatpush1.msra.mxu0 %v943
  %7082 = vmatprep.subr.mxu0 0.0
  %7083 = vmatpush1.msra.mxu0 %v942
  %7084 = vmatprep.subr.mxu0 0.0
  %7085 = vmatpush1.msra.mxu0 %v941
  %7086 = vmatprep.subr.mxu0 0.0
  %7087 = vmatpush2.msra.mxu0 0.0
  %7088 = vmatprep.subr.mxu0 0.0
  %7089 = vmatpush2.msra.mxu0 0.0
  %7090 = vmatprep.subr.mxu0 0.0
  %7091 = vmatpush2.msra.mxu0 0.0
  %7092 = vmatprep.subr.mxu0 0.0
  %7093 = vmatpush2.msra.mxu0 0.0
  %7094 = vmatprep.subr.mxu0 0.0
  %7095 = vmatpush2.msra.mxu0 0.0
  %7096 = vmatprep.subr.mxu0 0.0
  %7097 = vmatpush2.msra.mxu0 0.0
  %7098 = vmatprep.subr.mxu0 0.0
  %7099 = vmatpush2.msra.mxu0 0.0
  %7100 = vmatprep.subr.mxu0 0.0
  %7101 = vmatpush2.msra.mxu0 0.0
  %7102 = vmatprep.subr.mxu0 0.0
  %7103 = vmatpush2.msra.mxu0 0.0
  %7104 = vmatprep.subr.mxu0 0.0
  %7105 = vmatpush2.msra.mxu0 0.0
  %7106 = vmatprep.subr.mxu0 0.0
  %7107 = vmatpush2.msra.mxu0 0.0
  %7108 = vmatprep.subr.mxu0 0.0
  %7109 = vmatpush2.msra.mxu0 0.0
  %7110 = vmatprep.subr.mxu0 0.0
  %7111 = vmatpush2.msra.mxu0 0.0
  %7112 = vmatprep.subr.mxu0 0.0
  %7113 = vmatpush2.msra.mxu0 0.0
  %7114 = vmatprep.subr.mxu0 0.0
  %7115 = vmatpush2.msra.mxu0 0.0
  %7116 = vmatprep.subr.mxu0 0.0
  %7117 = vmatpush2.msra.mxu0 0.0
  %7118 = vmatprep.mubr.f32.mxu0 0.0
  %7119 = vmatmul.mubr.f32.gmra.mxu0 %v6934
  %v7120 = vpop.f32.mrf.mxu0
  %v7121 = vadd.f32 %v7021, %v7120
  %v7122 = vpop.f32.mrf.mxu0
  %7123 = vmatprep.mubr.f32.mxu0 0.0
  %7124 = vmatmul.mubr.f32.gmra.mxu0 %v6937
  %v7125 = vpop.f32.mrf.mxu0
  %v7126 = vadd.f32 %v7026, %v7125
  %v7127 = vpop.f32.mrf.mxu0
  %7128 = vmatprep.mubr.f32.mxu0 0.0
  %7129 = vmatmul.mubr.f32.gmra.mxu0 %v6940
  %v7130 = vpop.f32.mrf.mxu0
  %v7131 = vadd.f32 %v7031, %v7130
  %v7132 = vpop.f32.mrf.mxu0
  %7133 = vmatprep.mubr.f32.mxu0 0.0
  %7134 = vmatmul.mubr.f32.gmra.mxu0 %v6943
  %v7135 = vpop.f32.mrf.mxu0
  %v7136 = vadd.f32 %v7036, %v7135
  %v7137 = vpop.f32.mrf.mxu0
  %7138 = vmatprep.mubr.f32.mxu0 0.0
  %7139 = vmatmul.mubr.f32.gmra.mxu0 %v6946
  %v7140 = vpop.f32.mrf.mxu0
  %v7141 = vadd.f32 %v7041, %v7140
  %v7142 = vpop.f32.mrf.mxu0
  %7143 = vmatprep.mubr.f32.mxu0 0.0
  %7144 = vmatmul.mubr.f32.gmra.mxu0 %v6949
  %v7145 = vpop.f32.mrf.mxu0
  %v7146 = vadd.f32 %v7046, %v7145
  %v7147 = vpop.f32.mrf.mxu0
  %7148 = vmatprep.mubr.f32.mxu0 0.0
  %7149 = vmatmul.mubr.f32.gmra.mxu0 %v6952
  %v7150 = vpop.f32.mrf.mxu0
  %v7151 = vadd.f32 %v7051, %v7150
  %v7152 = vpop.f32.mrf.mxu0
  %7153 = vdwg.mxu0
  %v7154 = vld [vmem:[%s4 + $0xf0] sm:$0xff]
  %v7155 = vld [vmem:[%s4 + $0xf8] sm:$0xff]
  %v7157 = vsel %vm81, %v7121, 0
  %v7160 = vsel %vm81, %v7126, 0
  %v7163 = vsel %vm81, %v7131, 0
  %v7166 = vsel %vm81, %v7136, 0
  %v7169 = vsel %vm81, %v7141, 0
  %v7172 = vsel %vm81, %v7146, 0
  %v7175 = vsel %vm81, %v7151, 0
  %7177 = vmatprep.subr.mxu0 0.0
  %7178 = vmatpush1.msra.mxu0 0.0
  %7179 = vmatprep.subr.mxu0 0.0
  %7180 = vmatpush1.msra.mxu0 0.0
  %7181 = vmatprep.subr.mxu0 0.0
  %7182 = vmatpush1.msra.mxu0 0.0
  %7183 = vmatprep.subr.mxu0 0.0
  %7184 = vmatpush1.msra.mxu0 0.0
  %7185 = vmatprep.subr.mxu0 0.0
  %7186 = vmatpush1.msra.mxu0 0.0
  %7187 = vmatprep.subr.mxu0 0.0
  %7188 = vmatpush1.msra.mxu0 0.0
  %7189 = vmatprep.subr.mxu0 0.0
  %7190 = vmatpush1.msra.mxu0 0.0
  %7191 = vmatprep.subr.mxu0 0.0
  %7192 = vmatpush1.msra.mxu0 0.0
  %7193 = vmatprep.subr.mxu0 0.0
  %7194 = vmatpush1.msra.mxu0 0.0
  %7195 = vmatprep.subr.mxu0 0.0
  %7196 = vmatpush1.msra.mxu0 0.0
  %7197 = vmatprep.subr.mxu0 0.0
  %7198 = vmatpush1.msra.mxu0 0.0
  %7199 = vmatprep.subr.mxu0 0.0
  %7200 = vmatpush1.msra.mxu0 0.0
  %7201 = vmatprep.subr.mxu0 0.0
  %7202 = vmatpush1.msra.mxu0 0.0
  %7203 = vmatprep.subr.mxu0 0.0
  %7204 = vmatpush1.msra.mxu0 0.0
  %7205 = vmatprep.subr.mxu0 0.0
  %7206 = vmatpush1.msra.mxu0 %v7155
  %7207 = vmatprep.subr.mxu0 0.0
  %7208 = vmatpush1.msra.mxu0 %v7154
  %7209 = vmatprep.subr.mxu0 0.0
  %7210 = vmatpush2.msra.mxu0 0.0
  %7211 = vmatprep.subr.mxu0 0.0
  %7212 = vmatpush2.msra.mxu0 0.0
  %7213 = vmatprep.subr.mxu0 0.0
  %7214 = vmatpush2.msra.mxu0 0.0
  %7215 = vmatprep.subr.mxu0 0.0
  %7216 = vmatpush2.msra.mxu0 0.0
  %7217 = vmatprep.subr.mxu0 0.0
  %7218 = vmatpush2.msra.mxu0 0.0
  %7219 = vmatprep.subr.mxu0 0.0
  %7220 = vmatpush2.msra.mxu0 0.0
  %7221 = vmatprep.subr.mxu0 0.0
  %7222 = vmatpush2.msra.mxu0 0.0
  %7223 = vmatprep.subr.mxu0 0.0
  %7224 = vmatpush2.msra.mxu0 0.0
  %7225 = vmatprep.subr.mxu0 0.0
  %7226 = vmatpush2.msra.mxu0 0.0
  %7227 = vmatprep.subr.mxu0 0.0
  %7228 = vmatpush2.msra.mxu0 0.0
  %7229 = vmatprep.subr.mxu0 0.0
  %7230 = vmatpush2.msra.mxu0 0.0
  %7231 = vmatprep.subr.mxu0 0.0
  %7232 = vmatpush2.msra.mxu0 0.0
  %7233 = vmatprep.subr.mxu0 0.0
  %7234 = vmatpush2.msra.mxu0 0.0
  %7235 = vmatprep.subr.mxu0 0.0
  %7236 = vmatpush2.msra.mxu0 0.0
  %7237 = vmatprep.subr.mxu0 0.0
  %7238 = vmatpush2.msra.mxu0 0.0
  %7239 = vmatprep.subr.mxu0 0.0
  %7240 = vmatpush2.msra.mxu0 0.0
  %7241 = vmatprep.mubr.f32.mxu0 0.0
  %7242 = vmatmul.mubr.f32.gmra.mxu0 %v7157
  %v7243 = vpop.f32.mrf.mxu0
  %v7244 = vadd.f32 0.0, %v7243
  %v7245 = vpop.f32.mrf.mxu0
  %7246 = vmatprep.mubr.f32.mxu0 0.0
  %7247 = vmatmul.mubr.f32.gmra.mxu0 %v7160
  %v7248 = vpop.f32.mrf.mxu0
  %v7249 = vadd.f32 0.0, %v7248
  %v7250 = vpop.f32.mrf.mxu0
  %7251 = vmatprep.mubr.f32.mxu0 0.0
  %7252 = vmatmul.mubr.f32.gmra.mxu0 %v7163
  %v7253 = vpop.f32.mrf.mxu0
  %v7254 = vadd.f32 0.0, %v7253
  %v7255 = vpop.f32.mrf.mxu0
  %7256 = vmatprep.mubr.f32.mxu0 0.0
  %7257 = vmatmul.mubr.f32.gmra.mxu0 %v7166
  %v7258 = vpop.f32.mrf.mxu0
  %v7259 = vadd.f32 0.0, %v7258
  %v7260 = vpop.f32.mrf.mxu0
  %7261 = vmatprep.mubr.f32.mxu0 0.0
  %7262 = vmatmul.mubr.f32.gmra.mxu0 %v7169
  %v7263 = vpop.f32.mrf.mxu0
  %v7264 = vadd.f32 0.0, %v7263
  %v7265 = vpop.f32.mrf.mxu0
  %7266 = vmatprep.mubr.f32.mxu0 0.0
  %7267 = vmatmul.mubr.f32.gmra.mxu0 %v7172
  %v7268 = vpop.f32.mrf.mxu0
  %v7269 = vadd.f32 0.0, %v7268
  %v7270 = vpop.f32.mrf.mxu0
  %7271 = vmatprep.mubr.f32.mxu0 0.0
  %7272 = vmatmul.mubr.f32.gmra.mxu0 %v7175
  %v7273 = vpop.f32.mrf.mxu0
  %v7274 = vadd.f32 0.0, %v7273
  %v7275 = vpop.f32.mrf.mxu0
  %7276 = vdwg.mxu0
  %v7277 = vadd.f32 %v6884, %v7244
  %v7278 = vadd.f32 %v6885, %v7249
  %v7279 = vadd.f32 %v6886, %v7254
  %v7280 = vadd.f32 %v6887, %v7259
  %v7281 = vadd.f32 %v6888, %v7264
  %v7282 = vadd.f32 %v6889, %v7269
  %v7283 = vadd.f32 %v6890, %v7274
  %v7284 = vld [vmem:[%s5] sm:$0x7]
  %v7285 = vlaneseq
  %v7286 = vshrl.u32 %v7285, 7
  %v7287 = vsub.s32 0, %v7286
  %v7288 = vrot.slane %v7284, %v7287
  %v7289 = vadd.f32 %v7277, %v7288
  %v7290 = vadd.f32 %v7278, %v7288
  %v7291 = vadd.f32 %v7279, %v7288
  %v7292 = vadd.f32 %v7280, %v7288
  %v7293 = vadd.f32 %v7281, %v7288
  %v7294 = vadd.f32 %v7282, %v7288
  %v7295 = vadd.f32 %v7283, %v7288
  %vm7296 = vcmask 261120
  %v7297 = vsel %vm7296, %v7289, 0.0
  %v7298 = vsel %vm7296, %v7290, 0.0
  %v7299 = vadd.f32 %v7297, %v7298
  %v7300 = vsel %vm7296, %v7291, 0.0
  %v7301 = vadd.f32 %v7299, %v7300
  %v7302 = vsel %vm7296, %v7292, 0.0
  %v7303 = vadd.f32 %v7301, %v7302
  %v7304 = vsel %vm7296, %v7293, 0.0
  %v7305 = vadd.f32 %v7303, %v7304
  %v7306 = vsel %vm7296, %v7294, 0.0
  %v7307 = vadd.f32 %v7305, %v7306
  %vm7308 = vcmask 254976
  %v7309 = vsel %vm7308, %v7295, 0.0
  %v7310 = vadd.f32 %v7307, %v7309
  %v7311 = vrot.slane %v7310, 4
  %v7312 = vadd.f32 %v7310, %v7311
  %v7313 = vrot.slane %v7312, 2
  %v7314 = vadd.f32 %v7312, %v7313
  %v7315 = vrot.slane %v7314, 1
  %v7316 = vadd.f32 %v7314, %v7315
  %v7317 = vmul.f32 %v7316, 0.02
  %v7318 = vmul.f32 %v7289, %v7289
  %v7319 = vmul.f32 %v7290, %v7290
  %v7320 = vmul.f32 %v7291, %v7291
  %v7321 = vmul.f32 %v7292, %v7292
  %v7322 = vmul.f32 %v7293, %v7293
  %v7323 = vmul.f32 %v7294, %v7294
  %v7324 = vmul.f32 %v7295, %v7295
  %v7325 = vsel %vm7296, %v7318, 0.0
  %v7326 = vsel %vm7296, %v7319, 0.0
  %v7327 = vadd.f32 %v7325, %v7326
  %v7328 = vsel %vm7296, %v7320, 0.0
  %v7329 = vadd.f32 %v7327, %v7328
  %v7330 = vsel %vm7296, %v7321, 0.0
  %v7331 = vadd.f32 %v7329, %v7330
  %v7332 = vsel %vm7296, %v7322, 0.0
  %v7333 = vadd.f32 %v7331, %v7332
  %v7334 = vsel %vm7296, %v7323, 0.0
  %v7335 = vadd.f32 %v7333, %v7334
  %v7336 = vsel %vm7308, %v7324, 0.0
  %v7337 = vadd.f32 %v7335, %v7336
  %v7338 = vrot.slane %v7337, 4
  %v7339 = vadd.f32 %v7337, %v7338
  %v7340 = vrot.slane %v7339, 2
  %v7341 = vadd.f32 %v7339, %v7340
  %v7342 = vrot.slane %v7341, 1
  %v7343 = vadd.f32 %v7341, %v7342
  %v7344 = vmul.f32 %v7343, 0.02
  %v7345 = vmul.f32 %v7317, %v7317
  %v7346 = vsub.f32 %v7344, %v7345
  %v7347 = vadd.f32 %v7346, 1e-05
  %v7348 = vrsqrt.pop %v7347
  %v7349 = vmul.f32 %v7284, %v7348
  %v7350 = vmul.f32 %v7317, %v7349
  %v7352 = vrot.slane %v7350, 7
  %v7354 = vsub.f32 %v7284, %v7352
  %v7355 = vlaneseq
  %v7356 = vshrl.u32 %v7355, 7
  %v7357 = vsub.s32 1, %v7356
  %v7358 = vrot.slane %v7349, %v7357
  %v7359 = vmul.f32 %v7289, %v7358
  %v7360 = vmul.f32 %v7290, %v7358
  %v7361 = vmul.f32 %v7291, %v7358
  %v7362 = vmul.f32 %v7292, %v7358
  %v7363 = vmul.f32 %v7293, %v7358
  %v7364 = vmul.f32 %v7294, %v7358
  %v7365 = vmul.f32 %v7295, %v7358
  %v7366 = vlaneseq
  %v7367 = vshrl.u32 %v7366, 7
  %v7368 = vsub.s32 2, %v7367
  %v7369 = vrot.slane %v7354, %v7368
  %v7370 = vadd.f32 %v7359, %v7369
  %v7371 = vadd.f32 %v7360, %v7369
  %v7372 = vadd.f32 %v7361, %v7369
  %v7373 = vadd.f32 %v7362, %v7369
  %v7374 = vadd.f32 %v7363, %v7369
  %v7375 = vadd.f32 %v7364, %v7369
  %v7376 = vadd.f32 %v7365, %v7369
  %vm7377 = vcmp.gt.f32.partialorder %v7370, 0.0
  %vm7378 = vcmp.gt.f32.partialorder %v7371, 0.0
  %vm7379 = vcmp.gt.f32.partialorder %v7372, 0.0
  %vm7380 = vcmp.gt.f32.partialorder %v7373, 0.0
  %vm7381 = vcmp.gt.f32.partialorder %v7374, 0.0
  %vm7382 = vcmp.gt.f32.partialorder %v7375, 0.0
  %vm7383 = vcmp.gt.f32.partialorder %v7376, 0.0
  %v7384 = vmul.f32 %v7370, 0.2
  %v7385 = vmul.f32 %v7371, 0.2
  %v7386 = vmul.f32 %v7372, 0.2
  %v7387 = vmul.f32 %v7373, 0.2
  %v7388 = vmul.f32 %v7374, 0.2
  %v7389 = vmul.f32 %v7375, 0.2
  %v7390 = vmul.f32 %v7376, 0.2
  %v7391 = vsel %vm7377, %v7370, %v7384
  %v7392 = vsel %vm7378, %v7371, %v7385
  %v7393 = vsel %vm7379, %v7372, %v7386
  %v7394 = vsel %vm7380, %v7373, %v7387
  %v7395 = vsel %vm7381, %v7374, %v7388
  %v7396 = vsel %vm7382, %v7375, %v7389
  %v7397 = vsel %vm7383, %v7376, %v7390
  %v7398 = vld [vmem:[%s6] sm:$0xff]
  %v7399 = vld [vmem:[%s6 + $0x8] sm:$0xff]
  %v7400 = vld [vmem:[%s6 + $0x10] sm:$0xff]
  %v7401 = vld [vmem:[%s6 + $0x18] sm:$0xff]
  %v7402 = vld [vmem:[%s6 + $0x20] sm:$0xff]
  %v7403 = vld [vmem:[%s6 + $0x28] sm:$0xff]
  %v7404 = vld [vmem:[%s6 + $0x30] sm:$0x3]
  %v7405 = vmul.f32 %v7391, %v7398
  %v7406 = vmul.f32 %v7392, %v7399
  %v7407 = vmul.f32 %v7393, %v7400
  %v7408 = vmul.f32 %v7394, %v7401
  %v7409 = vmul.f32 %v7395, %v7402
  %v7410 = vmul.f32 %v7396, %v7403
  %v7411 = vmul.f32 %v7397, %v7404
  %v7412 = vlaneseq
  %v7413 = vshrl.u32 %v7412, 7
  %v7414 = vmul.u32 %v7413, 25
  %vm7415 = vcmp.ge.s32.totalorder %v953, %v7414
  %v7416 = vadd.s32 %v7413, 1
  %v7417 = vmul.u32 %v7416, 25
  %vm7418 = vcmp.lt.s32.totalorder %v953, %v7417
  %vm7419 = vmand %vm7415, %vm7418
  %v7420 = vsel %vm7419, 1.0, 0.0
  %vm7421 = vcmask 408576
  %v7423 = vsel %vm7421, %v7420, 0
  %v7426 = vsel %vm1069, %v7411, 0
  %7428 = vmatprep.subr.mxu0 0.0
  %7429 = vmatpush1.msra.mxu0 0.0
  %7430 = vmatprep.subr.mxu0 0.0
  %7431 = vmatpush1.msra.mxu0 0.0
  %7432 = vmatprep.subr.mxu0 0.0
  %7433 = vmatpush1.msra.mxu0 0.0
  %7434 = vmatprep.subr.mxu0 0.0
  %7435 = vmatpush1.msra.mxu0 0.0
  %7436 = vmatprep.subr.mxu0 0.0
  %7437 = vmatpush1.msra.mxu0 0.0
  %7438 = vmatprep.subr.mxu0 0.0
  %7439 = vmatpush1.msra.mxu0 0.0
  %7440 = vmatprep.subr.mxu0 0.0
  %7441 = vmatpush1.msra.mxu0 0.0
  %7442 = vmatprep.subr.mxu0 0.0
  %7443 = vmatpush1.msra.mxu0 0.0
  %7444 = vmatprep.subr.mxu0 0.0
  %7445 = vmatpush1.msra.mxu0 0.0
  %7446 = vmatprep.subr.mxu0 0.0
  %7447 = vmatpush1.msra.mxu0 %v7426
  %7448 = vmatprep.subr.mxu0 0.0
  %7449 = vmatpush1.msra.mxu0 %v7410
  %7450 = vmatprep.subr.mxu0 0.0
  %7451 = vmatpush1.msra.mxu0 %v7409
  %7452 = vmatprep.subr.mxu0 0.0
  %7453 = vmatpush1.msra.mxu0 %v7408
  %7454 = vmatprep.subr.mxu0 0.0
  %7455 = vmatpush1.msra.mxu0 %v7407
  %7456 = vmatprep.subr.mxu0 0.0
  %7457 = vmatpush1.msra.mxu0 %v7406
  %7458 = vmatprep.subr.mxu0 0.0
  %7459 = vmatpush1.msra.mxu0 %v7405
  %7460 = vmatprep.subr.mxu0 0.0
  %7461 = vmatpush2.msra.mxu0 0.0
  %7462 = vmatprep.subr.mxu0 0.0
  %7463 = vmatpush2.msra.mxu0 0.0
  %7464 = vmatprep.subr.mxu0 0.0
  %7465 = vmatpush2.msra.mxu0 0.0
  %7466 = vmatprep.subr.mxu0 0.0
  %7467 = vmatpush2.msra.mxu0 0.0
  %7468 = vmatprep.subr.mxu0 0.0
  %7469 = vmatpush2.msra.mxu0 0.0
  %7470 = vmatprep.subr.mxu0 0.0
  %7471 = vmatpush2.msra.mxu0 0.0
  %7472 = vmatprep.subr.mxu0 0.0
  %7473 = vmatpush2.msra.mxu0 0.0
  %7474 = vmatprep.subr.mxu0 0.0
  %7475 = vmatpush2.msra.mxu0 0.0
  %7476 = vmatprep.subr.mxu0 0.0
  %7477 = vmatpush2.msra.mxu0 0.0
  %7478 = vmatprep.subr.mxu0 0.0
  %7479 = vmatpush2.msra.mxu0 0.0
  %7480 = vmatprep.subr.mxu0 0.0
  %7481 = vmatpush2.msra.mxu0 0.0
  %7482 = vmatprep.subr.mxu0 0.0
  %7483 = vmatpush2.msra.mxu0 0.0
  %7484 = vmatprep.subr.mxu0 0.0
  %7485 = vmatpush2.msra.mxu0 0.0
  %7486 = vmatprep.subr.mxu0 0.0
  %7487 = vmatpush2.msra.mxu0 0.0
  %7488 = vmatprep.subr.mxu0 0.0
  %7489 = vmatpush2.msra.mxu0 0.0
  %7490 = vmatprep.subr.mxu0 0.0
  %7491 = vmatpush2.msra.mxu0 0.0
  %7492 = vmatprep.mubr.f32.mxu0 0.0
  %7493 = vmatmul.mubr.f32.gmra.mxu0 %v7423
  %v7494 = vpop.f32.mrf.mxu0
  %v7495 = vadd.f32 0.0, %v7494
  %v7496 = vpop.f32.mrf.mxu0
  %7497 = vdwg.mxu0
  %v7498 = vsel %vm7308, %v7495, 0.0
  %7499 = vadd.xlane.f32.xlu0 %v7498
  %v7500 = vpop.xlane.xlu0 %7499
  %v7501 = vld [vmem:[#allocation2] sm:$0x1]
  %v7503 = vlaneseq
  %v7504 = vshrl.u32 %v7503, 7
  %v7505 = vsub.s32 0, %v7504
  %v7506 = vrot.slane %v7501, %v7505
  %v7508 = vadd.f32 %v7500, %v7506
  %vm7509 = vcmask 1024
  %7510 = vst.msk [vmem:[%s8] sm:$0x3] %vm7509, %v7508
  // Predicated region
  $region34: #{dcgan_discriminator_forward.1} parent=0 // pred_check
    _
  $region35: #{dcgan_discriminator_forward.1} parent=0 // pred_check_branch
    %7512 = sbr.rel (0) target = $region37
  $region36: #{dcgan_discriminator_forward.1} parent=0 // pred_region
    _
  $region37: #{dcgan_discriminator_forward.1} parent=0 // pred_fallthru
    _
  // Predicated region
  $region38: #{dcgan_discriminator_forward.1} parent=0 // pred_check
    _
  $region39: #{dcgan_discriminator_forward.1} parent=0 // pred_check_branch
    %7514 = sbr.rel (0) target = $region41
  $region40: #{dcgan_discriminator_forward.1} parent=0 // pred_region
    _
  $region41: #{dcgan_discriminator_forward.1} parent=0 // pred_fallthru
    _

</llo_original>
